<compile_context>
chip_gen: v6e
topology: v6e:2x2x1
jax: 0.10.0
libtpu: 0.0.40
codegen_flags: <defaults>
</compile_context>

<pallas_src>
import functools
import math

import jax
import jax.numpy as jnp
from jax.experimental import pallas as pl
from jax.experimental.pallas import tpu as pltpu


def _round_up(x, m):
    return (x + m - 1) // m * m


def _cdiv(a, b):
    return -(-a // b)


@functools.lru_cache(maxsize=None)
def _vmem_budget_bytes():
    """Generation-aware scoped-VMEM budget: ~3/4 of physical VMEM, capped at 96 MiB.

    v5e/v6e: 128 MiB physical -> 96 MiB budget; v7x: 64 MiB physical -> 48 MiB budget.
    """
    cap = 64 * 1024 * 1024
    try:
        cap = int(getattr(pltpu.get_tpu_info(), "vmem_capacity_bytes", cap))
    except Exception:
        pass
    return int(min(cap * 3 // 4, 96 * 1024 * 1024))


# ---------------------------------------------------------------------------
# Pallas kernels
# ---------------------------------------------------------------------------

def _stft_mag_kernel(fr_ref, basis_ref, o_ref, *, f_pad):
    """|STFT| for one tile of frames via a single fused (TM, K) @ (K, 2*F_pad) matmul.

    basis = [cos | sin] concatenated on the lane axis, so the frame tile streams
    through the MXU once; Re/Im are 128-aligned halves of the f32 result.
    """
    z = jnp.dot(fr_ref[...], basis_ref[...], preferred_element_type=jnp.float32)
    re = z[:, :f_pad]
    im = z[:, f_pad:]
    o_ref[...] = jnp.sqrt(re * re + im * im).astype(o_ref.dtype)   # sqrt -> EUP slot


def _conv_tap_kernel(x_ref, w_ref, b_ref, o_ref, *, kw, sw, f_pad, tt, lrelu):
    """Direct Conv2d over the KW (time) taps for one (batch, time-tile) grid step.

    x_ref: (1, SW, K1, (TT+qmax)*F_pad) bf16 -- KH(freq)-stacked, stride-phase-split,
           haloed input slab; time tap j is the statically 128-aligned lane slice
           starting at (j // sw) * F_pad of phase (j % sw).
    w_ref: (KW, Cout, K1) bf16 (grid-resident),  b_ref: (Cout, 1) f32 (grid-resident).
    o_ref: (Cout, TT*F_pad) bf16 -- lane-dense, written directly in the canonical
           (C, N, T, F_pad) layout the next layer consumes.
    """
    lout = tt * f_pad
    acc = None
    for j in range(kw):                                   # unrolled: 9 (or 3) MXU matmuls
        p, q = j % sw, j // sw
        rhs = x_ref[0, p, :, pl.ds(q * f_pad, lout)]      # (K1, TT*F_pad), 128-aligned
        part = jnp.dot(w_ref[j], rhs, preferred_element_type=jnp.float32)
        acc = part if acc is None else acc + part
    acc = acc + b_ref[...]                                # (Cout, 1) lane broadcast
    if lrelu:
        acc = jnp.where(acc >= 0.0, acc, 0.2 * acc)       # LeakyReLU(0.2), f32 epilogue
    o_ref[...] = acc.astype(o_ref.dtype)


# ---------------------------------------------------------------------------
# Tile sizing (generation aware)
# ---------------------------------------------------------------------------

def _pick_stft_tile(m, kwin, f_pad, budget):
    """Rows of frames per STFT grid step (multiple of 16, VMEM-budget bound)."""
    per_row = 2 * kwin * 4 + 2 * f_pad * 2 + 3 * 2 * f_pad * 4   # frames x2 f32 + out x2 bf16 + temps
    fixed = kwin * 2 * f_pad * 4 * 2                             # resident cos|sin basis (2 bufs)
    tm = (int(budget * 0.6) - fixed) // max(per_row, 1)
    tm = max(16, min(tm, 2048, _round_up(m, 16)))
    return _round_up(tm, 16)


def _pick_conv_tile(to, n, sw, k1, cout, f_pad, qmax, budget):
    """Output time steps per conv grid step, sized to the VMEM budget."""
    per_tt = (2 * sw * k1 * 2 + 2 * cout * 2 + 2 * cout * 4) * f_pad
    fixed = 2 * sw * k1 * qmax * f_pad * 2
    tt = (int(budget * 0.5) - fixed) // max(per_tt, 1)
    tt = int(max(1, min(tt, to, 256)))
    # v7x megacore: keep >= 2 steps on the "parallel" grid axis whenever possible.
    if n * _cdiv(to, tt) < 2 and to >= 2:
        tt = _cdiv(to, 2)
    return tt


# ---------------------------------------------------------------------------
# Pallas wrappers
# ---------------------------------------------------------------------------

def stft_magnitude(frames2d, basis, f_pad, budget):
    """frames2d: (M, Kwin) f32, basis: (Kwin, 2*F_pad) f32 -> (M, F_pad) bf16 = |STFT|."""
    m, kwin = frames2d.shape
    tm = _pick_stft_tile(m, kwin, f_pad, budget)
    mp = _round_up(m, tm)
    if mp != m:
        frames2d = jnp.pad(frames2d, ((0, mp - m), (0, 0)))
    out = pl.pallas_call(
        functools.partial(_stft_mag_kernel, f_pad=f_pad),
        out_shape=jax.ShapeDtypeStruct((mp, f_pad), jnp.bfloat16),
        grid=(mp // tm,),
        in_specs=[
            pl.BlockSpec((tm, kwin), lambda i: (i, 0)),          # row tile of frames
            pl.BlockSpec((kwin, 2 * f_pad), lambda i: (0, 0)),   # resident fused DFT basis
        ],
        out_specs=pl.BlockSpec((tm, f_pad), lambda i: (i, 0)),   # lane-dense bf16 tile
        compiler_params=pltpu.CompilerParams(
            dimension_semantics=("parallel",),
            vmem_limit_bytes=budget,
        ),
    )(frames2d, basis)
    return out[:m]


def conv2d_pallas(act, t_valid, f_valid, w_oihw, bias, stride, padding, lrelu, budget):
    """Conv2d (freq kernel kh, time kernel kw, time stride sw) on the canonical layout.

    act: (Cin, N, Tg, F_pad) bf16, valid region [:, :, :t_valid, :f_valid].
    Returns (canonical (Cout, N, Tg', F_pad) bf16, t_out).  HBM traffic per layer is
    ~3x the bf16 activation (KH-stack slab) instead of 27x f32 full im2col.
    """
    assert stride[0] == 1, "freq stride is always 1 in DiscriminatorR"
    cin, n, _, f_pad = act.shape
    cout, _, kh, kw = w_oihw.shape
    ph, pw = padding
    sw = stride[1]

    tp = t_valid + 2 * pw
    to = (tp - kw) // sw + 1
    qmax = (kw - 1) // sw
    k1 = cin * kh

    tt = _pick_conv_tile(to, n, sw, k1, cout, f_pad, qmax, budget)
    nb = _cdiv(to, tt)
    ttin = tt + qmax
    td = nb * tt + qmax
    lin = ttin * f_pad
    lout = tt * f_pad

    # --- XLA glue: KH(freq)-stack, stride phase split, halo tiling (bf16, ~3x act) ---
    a = act[:, :, :t_valid, :f_valid]
    a = jnp.pad(a, ((0, 0), (0, 0), (pw, pw), (ph, ph)))                   # time & freq zero pad
    xh = jnp.stack([a[..., i:i + f_valid] for i in range(kh)], axis=1)     # (Cin,KH,N,Tp,F)
    xh = jnp.pad(xh, ((0, 0), (0, 0), (0, 0), (0, 0), (0, f_pad - f_valid)))
    need_t = sw * td
    if need_t > xh.shape[3]:
        xh = jnp.pad(xh, ((0, 0), (0, 0), (0, 0), (0, need_t - xh.shape[3]), (0, 0)))
    phases = jnp.stack(
        [xh[:, :, :, p::sw, :][:, :, :, :td, :] for p in range(sw)], axis=3
    )                                                                       # (Cin,KH,N,SW,Td,F_pad)
    uidx = jnp.arange(nb)[:, None] * tt + jnp.arange(ttin)[None, :]         # (nb, TTin) halo windows
    tiles = phases[:, :, :, :, uidx, :]                                     # (Cin,KH,N,SW,nb,TTin,F_pad)
    tiles = tiles.transpose(2, 4, 3, 0, 1, 5, 6)                            # (N,nb,SW,Cin,KH,TTin,F_pad)
    rhs = tiles.reshape(n * nb, sw, k1, lin).astype(jnp.bfloat16)

    wmat = jnp.transpose(w_oihw, (3, 0, 1, 2)).reshape(kw, cout, k1).astype(jnp.bfloat16)
    b2d = bias.reshape(cout, 1).astype(jnp.float32)

    kern = functools.partial(_conv_tap_kernel, kw=kw, sw=sw, f_pad=f_pad, tt=tt, lrelu=lrelu)
    out = pl.pallas_call(
        kern,
        out_shape=jax.ShapeDtypeStruct((cout, n * nb * lout), jnp.bfloat16),
        grid=(n * nb,),
        in_specs=[
            pl.BlockSpec((1, sw, k1, lin), lambda i: (i, 0, 0, 0)),   # one (batch, time-tile) slab
            pl.BlockSpec((kw, cout, k1), lambda i: (0, 0, 0)),        # resident weights
            pl.BlockSpec((cout, 1), lambda i: (0, 0)),                # resident bias
        ],
        out_specs=pl.BlockSpec((cout, lout), lambda i: (0, i)),       # lane-dense canonical tile
        compiler_params=pltpu.CompilerParams(
            dimension_semantics=("parallel",),
            vmem_limit_bytes=budget,
        ),
    )(rhs, wmat, b2d)

    out = out.reshape(cout, n, nb * tt, f_pad)   # free reshape; valid region [:, :, :to, :f_valid]
    return out, to


# ---------------------------------------------------------------------------
# Plain-JAX glue: weight_norm reparam + parameter init
# ---------------------------------------------------------------------------

def effective_weight(v_oihw, g):
    """weight_norm: w = g * v / ||v||_2, norm per output channel (dim 0, like torch)."""
    norm = jnp.sqrt(jnp.sum(v_oihw * v_oihw, axis=(1, 2, 3), keepdims=True))
    return v_oihw * (g[:, None, None, None] / norm)


def init_conv_params(key, cout, cin, kh, kw):
    k1, k2 = jax.random.split(key)
    fan_in = cin * kh * kw
    bound = 1.0 / math.sqrt(fan_in)
    v = jax.random.uniform(k1, (cout, cin, kh, kw), jnp.float32, -bound, bound)
    g = jnp.sqrt(jnp.sum(v * v, axis=(1, 2, 3)))          # weight_norm init: g = ||v||
    b = jax.random.uniform(k2, (cout,), jnp.float32, -bound, bound)
    return v, g, b


# ---------------------------------------------------------------------------
# DiscriminatorR
# ---------------------------------------------------------------------------

class DiscriminatorRPallas:
    def __init__(self, resolution, key):
        self.resolution = resolution
        n_fft, hop, win = resolution
        self.budget = _vmem_budget_bytes()
        keys = jax.random.split(key, 6)
        cfg = [
            # (cin, cout, kernel, stride, padding) mirrors the torch ModuleList
            (1, 32, (3, 9), (1, 1), (1, 4)),
            (32, 32, (3, 9), (1, 2), (1, 4)),
            (32, 32, (3, 9), (1, 2), (1, 4)),
            (32, 32, (3, 9), (1, 2), (1, 4)),
            (32, 32, (3, 3), (1, 1), (1, 1)),
        ]
        self.convs = []
        for i, (cin, cout, k, s, p) in enumerate(cfg):
            v, g, b = init_conv_params(keys[i], cout, cin, k[0], k[1])
            self.convs.append((v, g, b, s, p))
        v, g, b = init_conv_params(keys[5], 1, 32, 3, 3)
        self.conv_post = (v, g, b, (1, 1), (1, 1))

        # One-sided DFT basis restricted to the win_length live taps (torch.stft with
        # window=None == rectangular ones of length win centered in n_fft); cos|sin fused
        # on the lane axis and freq padded to a multiple of 128.  Kept f32 for parity.
        self.f_bins = n_fft // 2 + 1
        self.f_pad = _round_up(self.f_bins, 128)
        lpad = (n_fft - win) // 2
        self.frame_off = lpad
        self.win = win
        k_idx = jnp.arange(lpad, lpad + win, dtype=jnp.float32)[:, None]
        f_idx = jnp.arange(self.f_bins, dtype=jnp.float32)[None, :]
        ang = 2.0 * jnp.pi * k_idx * f_idx / n_fft
        cos_m = jnp.pad(jnp.cos(ang), ((0, 0), (0, self.f_pad - self.f_bins)))
        sin_m = jnp.pad(jnp.sin(ang), ((0, 0), (0, self.f_pad - self.f_bins)))
        self.basis = jnp.concatenate([cos_m, sin_m], axis=1)     # (win, 2*F_pad) f32

    def spectrogram(self, x):
        """x: (B, 1, L) -> canonical (1, B, T, F_pad) bf16 |STFT| (freq on lanes)."""
        n_fft, hop, win = self.resolution
        pad = int((n_fft - hop) / 2)
        # NOTE: reflect padding (like torch) requires pad < L.
        xp = jnp.pad(x, ((0, 0), (0, 0), (pad, pad)), mode="reflect")[:, 0, :]
        b, lp = xp.shape
        t = 1 + (lp - n_fft) // hop
        # One strided gather over only the `win` live taps per frame (rect window).
        idx = jnp.arange(t)[:, None] * hop + (self.frame_off + jnp.arange(win))[None, :]
        frames = xp[:, idx].reshape(b * t, win).astype(jnp.float32)
        mag = stft_magnitude(frames, self.basis, self.f_pad, self.budget)   # (B*T, F_pad) bf16
        # Already in the layout the first conv consumes: no slice/transpose/cast passes.
        return mag.reshape(b, t, self.f_pad)[None], t

    def _to_nchw(self, act, t_valid):
        """canonical (C, N, T, F_pad) -> torch-layout (N, C, F, T) float32 for fmap."""
        return act[:, :, :t_valid, :self.f_bins].transpose(1, 0, 3, 2).astype(jnp.float32)

    def __call__(self, x):
        fmap = []
        act, t_valid = self.spectrogram(x)                 # (1, B, T, F_pad) bf16
        for (v, g, b, s, p) in self.convs:
            w = effective_weight(v, g)
            act, t_valid = conv2d_pallas(act, t_valid, self.f_bins, w, b, s, p,
                                         lrelu=True, budget=self.budget)
            fmap.append(self._to_nchw(act, t_valid))
        v, g, b, s, p = self.conv_post
        w = effective_weight(v, g)
        act, t_valid = conv2d_pallas(act, t_valid, self.f_bins, w, b, s, p,
                                     lrelu=False, budget=self.budget)
        last = self._to_nchw(act, t_valid)
        fmap.append(last)
        flat = last.reshape(last.shape[0], -1)             # torch.flatten(x, 1, -1)
        return fmap, flat


if __name__ == "__main__":
    key = jax.random.PRNGKey(0)
    k_param, k_x = jax.random.split(key)

    # Small, shape-consistent setup: resolution = (n_fft, hop_length, win_length)
    resolution = (64, 16, 64)
    B, L = 2, 128
    x = jax.random.normal(k_x, (B, 1, L), dtype=jnp.float32)

    disc = DiscriminatorRPallas(resolution, k_param)
    fwd = jax.jit(disc.__call__)       # lets XLA fuse the (small) slab-building glue
    fmap, out = fwd(x)

    out = jax.block_until_ready(out)
    for f in fmap:
        jax.block_until_ready(f)

    # spectrogram -> (B, 33, 8); time: 8 -> 8 -> 4 -> 2 -> 1 -> 1 -> 1; flatten -> (B, 33)
    assert out.shape == (B, 33), out.shape
    assert fmap[0].shape == (B, 32, 33, 8), fmap[0].shape
    assert fmap[-1].shape == (B, 1, 33, 1), fmap[-1].shape
    assert bool(jnp.all(jnp.isfinite(out)))
    assert all(bool(jnp.all(jnp.isfinite(f))) for f in fmap)

    print("KERNEL_OK")
</pallas_src>

<mosaic_0001>
module attributes {stable_mosaic.version = 11 : i64} {
  func.func @_stft_mag_kernel(%arg0: i32, %arg1: memref<16x64xf32, #tpu.memory_space<vmem>>, %arg2: memref<64x256xf32, #tpu.memory_space<vmem>>, %arg3: memref<16x128xbf16, #tpu.memory_space<vmem>>) attributes {dimension_semantics = [#tpu.dimension_semantics<parallel>], iteration_bounds = array<i64: 1>, scalar_prefetch = 0 : i64, scratch_operands = 0 : i64, tpu.core_type = #tpu.core_type<tc>, window_params = [{transform_indices = @transform_0, window_bounds = array<i64: 16, 64>}, {pipeline_mode = #tpu.pipeline_mode<synchronous>, transform_indices = @transform_1, window_bounds = array<i64: 64, 256>}, {transform_indices = @transform_2, window_bounds = array<i64: 16, 128>}]} {
    %c0 = arith.constant 0 : index
    %c0_0 = arith.constant 0 : index
    %0 = vector.load %arg1[%c0, %c0_0] : memref<16x64xf32, #tpu.memory_space<vmem>>, vector<16x64xf32>
    %c0_1 = arith.constant 0 : index
    %c0_2 = arith.constant 0 : index
    %1 = vector.load %arg2[%c0_1, %c0_2] : memref<64x256xf32, #tpu.memory_space<vmem>>, vector<64x256xf32>
    %cst = arith.constant dense<0.000000e+00> : vector<16x256xf32>
    %2 = tpu.matmul %0, %1, %cst {dimension_numbers = #tpu.dot_dimension_numbers<[1], [0], [0], [1], [0, 0, 1, 1], [], []>} : vector<16x64xf32>, vector<64x256xf32>, vector<16x256xf32> -> vector<16x256xf32>
    %3 = vector.extract_strided_slice %2 {offsets = [0, 0], sizes = [16, 128], strides = [1, 1]} : vector<16x256xf32> to vector<16x128xf32>
    %4 = vector.extract_strided_slice %2 {offsets = [0, 128], sizes = [16, 128], strides = [1, 1]} : vector<16x256xf32> to vector<16x128xf32>
    %5 = arith.mulf %3, %3 : vector<16x128xf32>
    %6 = arith.mulf %4, %4 : vector<16x128xf32>
    %7 = arith.addf %5, %6 : vector<16x128xf32>
    %8 = math.sqrt %7 : vector<16x128xf32>
    %9 = arith.truncf %8 : vector<16x128xf32> to vector<16x128xbf16>
    %c0_3 = arith.constant 0 : index
    %c0_4 = arith.constant 0 : index
    %10 = vector.load %arg3[%c0_3, %c0_4] : memref<16x128xbf16, #tpu.memory_space<vmem>>, vector<16x128xbf16>
    tpu.vector_store %arg3[%c0_3, %c0_4], %9 {strides = array<i32>} : memref<16x128xbf16, #tpu.memory_space<vmem>>, vector<16x128xbf16>,
    return
  }
  func.func @transform_0(%arg0: i32) -> (i32, i32) {
    %c0_i32 = arith.constant 0 : i32
    %c0_i32_0 = arith.constant 0 : i32
    return %arg0, %c0_i32 : i32, i32
  }
  func.func @transform_1(%arg0: i32) -> (i32, i32) {
    %c0_i32 = arith.constant 0 : i32
    %c0_i32_0 = arith.constant 0 : i32
    %c0_i32_1 = arith.constant 0 : i32
    return %c0_i32, %c0_i32_0 : i32, i32
  }
  func.func @transform_2(%arg0: i32) -> (i32, i32) {
    %c0_i32 = arith.constant 0 : i32
    %c0_i32_0 = arith.constant 0 : i32
    return %arg0, %c0_i32 : i32, i32
  }
}

module attributes {stable_mosaic.version = 11 : i64} {
  func.func @_conv_tap_kernel(%arg0: i32, %arg1: memref<1x1x3x2048xbf16, #tpu.memory_space<vmem>>, %arg2: memref<9x32x3xbf16, #tpu.memory_space<vmem>>, %arg3: memref<32x1xf32, #tpu.memory_space<vmem>>, %arg4: memref<32x1024xbf16, #tpu.memory_space<vmem>>) attributes {dimension_semantics = [#tpu.dimension_semantics<parallel>], iteration_bounds = array<i64: 2>, scalar_prefetch = 0 : i64, scratch_operands = 0 : i64, tpu.core_type = #tpu.core_type<tc>, window_params = [{transform_indices = @transform_0, window_bounds = array<i64: 1, 1, 3, 2048>}, {pipeline_mode = #tpu.pipeline_mode<synchronous>, transform_indices = @transform_1, window_bounds = array<i64: 9, 32, 3>}, {pipeline_mode = #tpu.pipeline_mode<synchronous>, transform_indices = @transform_2, window_bounds = array<i64: 32, 1>}, {transform_indices = @transform_3, window_bounds = array<i64: 32, 1024>}]} {
    %c0 = arith.constant 0 : index
    %c0_0 = arith.constant 0 : index
    %c0_1 = arith.constant 0 : index
    %c0_2 = arith.constant 0 : index
    %0 = vector.load %arg1[%c0, %c0_0, %c0_1, %c0_2] : memref<1x1x3x2048xbf16, #tpu.memory_space<vmem>>, vector<1x1x3x1024xbf16>
    %1 = vector.shape_cast %0 : vector<1x1x3x1024xbf16> to vector<3x1024xbf16>
    %c0_3 = arith.constant 0 : index
    %c0_4 = arith.constant 0 : index
    %c0_5 = arith.constant 0 : index
    %2 = vector.load %arg2[%c0_3, %c0_4, %c0_5] : memref<9x32x3xbf16, #tpu.memory_space<vmem>>, vector<1x32x3xbf16>
    %3 = vector.shape_cast %2 : vector<1x32x3xbf16> to vector<32x3xbf16>
    %cst = arith.constant dense<0.000000e+00> : vector<32x1024xf32>
    %4 = tpu.matmul %3, %1, %cst {dimension_numbers = #tpu.dot_dimension_numbers<[1], [0], [0], [1], [0, 0, 1, 1], [], []>} : vector<32x3xbf16>, vector<3x1024xbf16>, vector<32x1024xf32> -> vector<32x1024xf32>
    %c0_6 = arith.constant 0 : index
    %c0_7 = arith.constant 0 : index
    %c0_8 = arith.constant 0 : index
    %c128 = arith.constant 128 : index
    %5 = vector.load %arg1[%c0_6, %c0_7, %c0_8, %c128] : memref<1x1x3x2048xbf16, #tpu.memory_space<vmem>>, vector<1x1x3x1024xbf16>
    %6 = vector.shape_cast %5 : vector<1x1x3x1024xbf16> to vector<3x1024xbf16>
    %c1 = arith.constant 1 : index
    %c0_9 = arith.constant 0 : index
    %c0_10 = arith.constant 0 : index
    %7 = vector.load %arg2[%c1, %c0_9, %c0_10] : memref<9x32x3xbf16, #tpu.memory_space<vmem>>, vector<1x32x3xbf16>
    %8 = vector.shape_cast %7 : vector<1x32x3xbf16> to vector<32x3xbf16>
    %cst_11 = arith.constant dense<0.000000e+00> : vector<32x1024xf32>
    %9 = tpu.matmul %8, %6, %cst_11 {dimension_numbers = #tpu.dot_dimension_numbers<[1], [0], [0], [1], [0, 0, 1, 1], [], []>} : vector<32x3xbf16>, vector<3x1024xbf16>, vector<32x1024xf32> -> vector<32x1024xf32>
    %10 = arith.addf %4, %9 : vector<32x1024xf32>
    %c0_12 = arith.constant 0 : index
    %c0_13 = arith.constant 0 : index
    %c0_14 = arith.constant 0 : index
    %c256 = arith.constant 256 : index
    %11 = vector.load %arg1[%c0_12, %c0_13, %c0_14, %c256] : memref<1x1x3x2048xbf16, #tpu.memory_space<vmem>>, vector<1x1x3x1024xbf16>
    %12 = vector.shape_cast %11 : vector<1x1x3x1024xbf16> to vector<3x1024xbf16>
    %c2 = arith.constant 2 : index
    %c0_15 = arith.constant 0 : index
    %c0_16 = arith.constant 0 : index
    %13 = vector.load %arg2[%c2, %c0_15, %c0_16] : memref<9x32x3xbf16, #tpu.memory_space<vmem>>, vector<1x32x3xbf16>
    %14 = vector.shape_cast %13 : vector<1x32x3xbf16> to vector<32x3xbf16>
    %cst_17 = arith.constant dense<0.000000e+00> : vector<32x1024xf32>
    %15 = tpu.matmul %14, %12, %cst_17 {dimension_numbers = #tpu.dot_dimension_numbers<[1], [0], [0], [1], [0, 0, 1, 1], [], []>} : vector<32x3xbf16>, vector<3x1024xbf16>, vector<32x1024xf32> -> vector<32x1024xf32>
    %16 = arith.addf %10, %15 : vector<32x1024xf32>
    %c0_18 = arith.constant 0 : index
    %c0_19 = arith.constant 0 : index
    %c0_20 = arith.constant 0 : index
    %c384 = arith.constant 384 : index
    %17 = vector.load %arg1[%c0_18, %c0_19, %c0_20, %c384] : memref<1x1x3x2048xbf16, #tpu.memory_space<vmem>>, vector<1x1x3x1024xbf16>
    %18 = vector.shape_cast %17 : vector<1x1x3x1024xbf16> to vector<3x1024xbf16>
    %c3 = arith.constant 3 : index
    %c0_21 = arith.constant 0 : index
    %c0_22 = arith.constant 0 : index
    %19 = vector.load %arg2[%c3, %c0_21, %c0_22] : memref<9x32x3xbf16, #tpu.memory_space<vmem>>, vector<1x32x3xbf16>
    %20 = vector.shape_cast %19 : vector<1x32x3xbf16> to vector<32x3xbf16>
    %cst_23 = arith.constant dense<0.000000e+00> : vector<32x1024xf32>
    %21 = tpu.matmul %20, %18, %cst_23 {dimension_numbers = #tpu.dot_dimension_numbers<[1], [0], [0], [1], [0, 0, 1, 1], [], []>} : vector<32x3xbf16>, vector<3x1024xbf16>, vector<32x1024xf32> -> vector<32x1024xf32>
    %22 = arith.addf %16, %21 : vector<32x1024xf32>
    %c0_24 = arith.constant 0 : index
    %c0_25 = arith.constant 0 : index
    %c0_26 = arith.constant 0 : index
    %c512 = arith.constant 512 : index
    %23 = vector.load %arg1[%c0_24, %c0_25, %c0_26, %c512] : memref<1x1x3x2048xbf16, #tpu.memory_space<vmem>>, vector<1x1x3x1024xbf16>
    %24 = vector.shape_cast %23 : vector<1x1x3x1024xbf16> to vector<3x1024xbf16>
    %c4 = arith.constant 4 : index
    %c0_27 = arith.constant 0 : index
    %c0_28 = arith.constant 0 : index
    %25 = vector.load %arg2[%c4, %c0_27, %c0_28] : memref<9x32x3xbf16, #tpu.memory_space<vmem>>, vector<1x32x3xbf16>
    %26 = vector.shape_cast %25 : vector<1x32x3xbf16> to vector<32x3xbf16>
    %cst_29 = arith.constant dense<0.000000e+00> : vector<32x1024xf32>
    %27 = tpu.matmul %26, %24, %cst_29 {dimension_numbers = #tpu.dot_dimension_numbers<[1], [0], [0], [1], [0, 0, 1, 1], [], []>} : vector<32x3xbf16>, vector<3x1024xbf16>, vector<32x1024xf32> -> vector<32x1024xf32>
    %28 = arith.addf %22, %27 : vector<32x1024xf32>
    %c0_30 = arith.constant 0 : index
    %c0_31 = arith.constant 0 : index
    %c0_32 = arith.constant 0 : index
    %c640 = arith.constant 640 : index
    %29 = vector.load %arg1[%c0_30, %c0_31, %c0_32, %c640] : memref<1x1x3x2048xbf16, #tpu.memory_space<vmem>>, vector<1x1x3x1024xbf16>
    %30 = vector.shape_cast %29 : vector<1x1x3x1024xbf16> to vector<3x1024xbf16>
    %c5 = arith.constant 5 : index
    %c0_33 = arith.constant 0 : index
    %c0_34 = arith.constant 0 : index
    %31 = vector.load %arg2[%c5, %c0_33, %c0_34] : memref<9x32x3xbf16, #tpu.memory_space<vmem>>, vector<1x32x3xbf16>
    %32 = vector.shape_cast %31 : vector<1x32x3xbf16> to vector<32x3xbf16>
    %cst_35 = arith.constant dense<0.000000e+00> : vector<32x1024xf32>
    %33 = tpu.matmul %32, %30, %cst_35 {dimension_numbers = #tpu.dot_dimension_numbers<[1], [0], [0], [1], [0, 0, 1, 1], [], []>} : vector<32x3xbf16>, vector<3x1024xbf16>, vector<32x1024xf32> -> vector<32x1024xf32>
    %34 = arith.addf %28, %33 : vector<32x1024xf32>
    %c0_36 = arith.constant 0 : index
    %c0_37 = arith.constant 0 : index
    %c0_38 = arith.constant 0 : index
    %c768 = arith.constant 768 : index
    %35 = vector.load %arg1[%c0_36, %c0_37, %c0_38, %c768] : memref<1x1x3x2048xbf16, #tpu.memory_space<vmem>>, vector<1x1x3x1024xbf16>
    %36 = vector.shape_cast %35 : vector<1x1x3x1024xbf16> to vector<3x1024xbf16>
    %c6 = arith.constant 6 : index
    %c0_39 = arith.constant 0 : index
    %c0_40 = arith.constant 0 : index
    %37 = vector.load %arg2[%c6, %c0_39, %c0_40] : memref<9x32x3xbf16, #tpu.memory_space<vmem>>, vector<1x32x3xbf16>
    %38 = vector.shape_cast %37 : vector<1x32x3xbf16> to vector<32x3xbf16>
    %cst_41 = arith.constant dense<0.000000e+00> : vector<32x1024xf32>
    %39 = tpu.matmul %38, %36, %cst_41 {dimension_numbers = #tpu.dot_dimension_numbers<[1], [0], [0], [1], [0, 0, 1, 1], [], []>} : vector<32x3xbf16>, vector<3x1024xbf16>, vector<32x1024xf32> -> vector<32x1024xf32>
    %40 = arith.addf %34, %39 : vector<32x1024xf32>
    %c0_42 = arith.constant 0 : index
    %c0_43 = arith.constant 0 : index
    %c0_44 = arith.constant 0 : index
    %c896 = arith.constant 896 : index
    %41 = vector.load %arg1[%c0_42, %c0_43, %c0_44, %c896] : memref<1x1x3x2048xbf16, #tpu.memory_space<vmem>>, vector<1x1x3x1024xbf16>
    %42 = vector.shape_cast %41 : vector<1x1x3x1024xbf16> to vector<3x1024xbf16>
    %c7 = arith.constant 7 : index
    %c0_45 = arith.constant 0 : index
    %c0_46 = arith.constant 0 : index
    %43 = vector.load %arg2[%c7, %c0_45, %c0_46] : memref<9x32x3xbf16, #tpu.memory_space<vmem>>, vector<1x32x3xbf16>
    %44 = vector.shape_cast %43 : vector<1x32x3xbf16> to vector<32x3xbf16>
    %cst_47 = arith.constant dense<0.000000e+00> : vector<32x1024xf32>
    %45 = tpu.matmul %44, %42, %cst_47 {dimension_numbers = #tpu.dot_dimension_numbers<[1], [0], [0], [1], [0, 0, 1, 1], [], []>} : vector<32x3xbf16>, vector<3x1024xbf16>, vector<32x1024xf32> -> vector<32x1024xf32>
    %46 = arith.addf %40, %45 : vector<32x1024xf32>
    %c0_48 = arith.constant 0 : index
    %c0_49 = arith.constant 0 : index
    %c0_50 = arith.constant 0 : index
    %c1024 = arith.constant 1024 : index
    %47 = vector.load %arg1[%c0_48, %c0_49, %c0_50, %c1024] : memref<1x1x3x2048xbf16, #tpu.memory_space<vmem>>, vector<1x1x3x1024xbf16>
    %48 = vector.shape_cast %47 : vector<1x1x3x1024xbf16> to vector<3x1024xbf16>
    %c8 = arith.constant 8 : index
    %c0_51 = arith.constant 0 : index
    %c0_52 = arith.constant 0 : index
    %49 = vector.load %arg2[%c8, %c0_51, %c0_52] : memref<9x32x3xbf16, #tpu.memory_space<vmem>>, vector<1x32x3xbf16>
    %50 = vector.shape_cast %49 : vector<1x32x3xbf16> to vector<32x3xbf16>
    %cst_53 = arith.constant dense<0.000000e+00> : vector<32x1024xf32>
    %51 = tpu.matmul %50, %48, %cst_53 {dimension_numbers = #tpu.dot_dimension_numbers<[1], [0], [0], [1], [0, 0, 1, 1], [], []>} : vector<32x3xbf16>, vector<3x1024xbf16>, vector<32x1024xf32> -> vector<32x1024xf32>
    %52 = arith.addf %46, %51 : vector<32x1024xf32>
    %c0_54 = arith.constant 0 : index
    %c0_55 = arith.constant 0 : index
    %53 = vector.load %arg3[%c0_54, %c0_55] : memref<32x1xf32, #tpu.memory_space<vmem>>, vector<32x1xf32>
    %54 = vector.broadcast %53 : vector<32x1xf32> to vector<32x1024xf32>
    %55 = arith.addf %52, %54 : vector<32x1024xf32>
    %cst_56 = arith.constant 0.000000e+00 : f32
    %56 = vector.broadcast %cst_56 : f32 to vector<32x1024xf32>
    %57 = arith.cmpf oge, %55, %56 : vector<32x1024xf32>
    %cst_57 = arith.constant 2.000000e-01 : f32
    %58 = vector.broadcast %cst_57 : f32 to vector<32x1024xf32>
    %59 = arith.mulf %58, %55 : vector<32x1024xf32>
    %60 = arith.select %57, %55, %59 : vector<32x1024xi1>, vector<32x1024xf32>
    %61 = arith.truncf %60 : vector<32x1024xf32> to vector<32x1024xbf16>
    %c0_58 = arith.constant 0 : index
    %c0_59 = arith.constant 0 : index
    %62 = vector.load %arg4[%c0_58, %c0_59] : memref<32x1024xbf16, #tpu.memory_space<vmem>>, vector<32x1024xbf16>
    tpu.vector_store %arg4[%c0_58, %c0_59], %61 {strides = array<i32>} : memref<32x1024xbf16, #tpu.memory_space<vmem>>, vector<32x1024xbf16>,
    return
  }
  func.func @transform_0(%arg0: i32) -> (i32, i32, i32, i32) {
    %c0_i32 = arith.constant 0 : i32
    %c0_i32_0 = arith.constant 0 : i32
    %c0_i32_1 = arith.constant 0 : i32
    %c0_i32_2 = arith.constant 0 : i32
    return %arg0, %c0_i32, %c0_i32_0, %c0_i32_1 : i32, i32, i32, i32
  }
  func.func @transform_1(%arg0: i32) -> (i32, i32, i32) {
    %c0_i32 = arith.constant 0 : i32
    %c0_i32_0 = arith.constant 0 : i32
    %c0_i32_1 = arith.constant 0 : i32
    %c0_i32_2 = arith.constant 0 : i32
    return %c0_i32, %c0_i32_0, %c0_i32_1 : i32, i32, i32
  }
  func.func @transform_2(%arg0: i32) -> (i32, i32) {
    %c0_i32 = arith.constant 0 : i32
    %c0_i32_0 = arith.constant 0 : i32
    %c0_i32_1 = arith.constant 0 : i32
    return %c0_i32, %c0_i32_0 : i32, i32
  }
  func.func @transform_3(%arg0: i32) -> (i32, i32) {
    %c0_i32 = arith.constant 0 : i32
    %c0_i32_0 = arith.constant 0 : i32
    return %c0_i32, %arg0 : i32, i32
  }
}

module attributes {stable_mosaic.version = 11 : i64} {
  func.func @_conv_tap_kernel(%arg0: i32, %arg1: memref<1x2x96x1024xbf16, #tpu.memory_space<vmem>>, %arg2: memref<9x32x96xbf16, #tpu.memory_space<vmem>>, %arg3: memref<32x1xf32, #tpu.memory_space<vmem>>, %arg4: memref<32x512xbf16, #tpu.memory_space<vmem>>) attributes {dimension_semantics = [#tpu.dimension_semantics<parallel>], iteration_bounds = array<i64: 2>, scalar_prefetch = 0 : i64, scratch_operands = 0 : i64, tpu.core_type = #tpu.core_type<tc>, window_params = [{transform_indices = @transform_0, window_bounds = array<i64: 1, 2, 96, 1024>}, {pipeline_mode = #tpu.pipeline_mode<synchronous>, transform_indices = @transform_1, window_bounds = array<i64: 9, 32, 96>}, {pipeline_mode = #tpu.pipeline_mode<synchronous>, transform_indices = @transform_2, window_bounds = array<i64: 32, 1>}, {transform_indices = @transform_3, window_bounds = array<i64: 32, 512>}]} {
    %c0 = arith.constant 0 : index
    %c0_0 = arith.constant 0 : index
    %c0_1 = arith.constant 0 : index
    %c0_2 = arith.constant 0 : index
    %0 = vector.load %arg1[%c0, %c0_0, %c0_1, %c0_2] : memref<1x2x96x1024xbf16, #tpu.memory_space<vmem>>, vector<1x1x96x512xbf16>
    %1 = vector.shape_cast %0 : vector<1x1x96x512xbf16> to vector<96x512xbf16>
    %c0_3 = arith.constant 0 : index
    %c0_4 = arith.constant 0 : index
    %c0_5 = arith.constant 0 : index
    %2 = vector.load %arg2[%c0_3, %c0_4, %c0_5] : memref<9x32x96xbf16, #tpu.memory_space<vmem>>, vector<1x32x96xbf16>
    %3 = vector.shape_cast %2 : vector<1x32x96xbf16> to vector<32x96xbf16>
    %cst = arith.constant dense<0.000000e+00> : vector<32x512xf32>
    %4 = tpu.matmul %3, %1, %cst {dimension_numbers = #tpu.dot_dimension_numbers<[1], [0], [0], [1], [0, 0, 1, 1], [], []>} : vector<32x96xbf16>, vector<96x512xbf16>, vector<32x512xf32> -> vector<32x512xf32>
    %c0_6 = arith.constant 0 : index
    %c1 = arith.constant 1 : index
    %c0_7 = arith.constant 0 : index
    %c0_8 = arith.constant 0 : index
    %5 = vector.load %arg1[%c0_6, %c1, %c0_7, %c0_8] : memref<1x2x96x1024xbf16, #tpu.memory_space<vmem>>, vector<1x1x96x512xbf16>
    %6 = vector.shape_cast %5 : vector<1x1x96x512xbf16> to vector<96x512xbf16>
    %c1_9 = arith.constant 1 : index
    %c0_10 = arith.constant 0 : index
    %c0_11 = arith.constant 0 : index
    %7 = vector.load %arg2[%c1_9, %c0_10, %c0_11] : memref<9x32x96xbf16, #tpu.memory_space<vmem>>, vector<1x32x96xbf16>
    %8 = vector.shape_cast %7 : vector<1x32x96xbf16> to vector<32x96xbf16>
    %cst_12 = arith.constant dense<0.000000e+00> : vector<32x512xf32>
    %9 = tpu.matmul %8, %6, %cst_12 {dimension_numbers = #tpu.dot_dimension_numbers<[1], [0], [0], [1], [0, 0, 1, 1], [], []>} : vector<32x96xbf16>, vector<96x512xbf16>, vector<32x512xf32> -> vector<32x512xf32>
    %10 = arith.addf %4, %9 : vector<32x512xf32>
    %c0_13 = arith.constant 0 : index
    %c0_14 = arith.constant 0 : index
    %c0_15 = arith.constant 0 : index
    %c128 = arith.constant 128 : index
    %11 = vector.load %arg1[%c0_13, %c0_14, %c0_15, %c128] : memref<1x2x96x1024xbf16, #tpu.memory_space<vmem>>, vector<1x1x96x512xbf16>
    %12 = vector.shape_cast %11 : vector<1x1x96x512xbf16> to vector<96x512xbf16>
    %c2 = arith.constant 2 : index
    %c0_16 = arith.constant 0 : index
    %c0_17 = arith.constant 0 : index
    %13 = vector.load %arg2[%c2, %c0_16, %c0_17] : memref<9x32x96xbf16, #tpu.memory_space<vmem>>, vector<1x32x96xbf16>
    %14 = vector.shape_cast %13 : vector<1x32x96xbf16> to vector<32x96xbf16>
    %cst_18 = arith.constant dense<0.000000e+00> : vector<32x512xf32>
    %15 = tpu.matmul %14, %12, %cst_18 {dimension_numbers = #tpu.dot_dimension_numbers<[1], [0], [0], [1], [0, 0, 1, 1], [], []>} : vector<32x96xbf16>, vector<96x512xbf16>, vector<32x512xf32> -> vector<32x512xf32>
    %16 = arith.addf %10, %15 : vector<32x512xf32>
    %c0_19 = arith.constant 0 : index
    %c1_20 = arith.constant 1 : index
    %c0_21 = arith.constant 0 : index
    %c128_22 = arith.constant 128 : index
    %17 = vector.load %arg1[%c0_19, %c1_20, %c0_21, %c128_22] : memref<1x2x96x1024xbf16, #tpu.memory_space<vmem>>, vector<1x1x96x512xbf16>
    %18 = vector.shape_cast %17 : vector<1x1x96x512xbf16> to vector<96x512xbf16>
    %c3 = arith.constant 3 : index
    %c0_23 = arith.constant 0 : index
    %c0_24 = arith.constant 0 : index
    %19 = vector.load %arg2[%c3, %c0_23, %c0_24] : memref<9x32x96xbf16, #tpu.memory_space<vmem>>, vector<1x32x96xbf16>
    %20 = vector.shape_cast %19 : vector<1x32x96xbf16> to vector<32x96xbf16>
    %cst_25 = arith.constant dense<0.000000e+00> : vector<32x512xf32>
    %21 = tpu.matmul %20, %18, %cst_25 {dimension_numbers = #tpu.dot_dimension_numbers<[1], [0], [0], [1], [0, 0, 1, 1], [], []>} : vector<32x96xbf16>, vector<96x512xbf16>, vector<32x512xf32> -> vector<32x512xf32>
    %22 = arith.addf %16, %21 : vector<32x512xf32>
    %c0_26 = arith.constant 0 : index
    %c0_27 = arith.constant 0 : index
    %c0_28 = arith.constant 0 : index
    %c256 = arith.constant 256 : index
    %23 = vector.load %arg1[%c0_26, %c0_27, %c0_28, %c256] : memref<1x2x96x1024xbf16, #tpu.memory_space<vmem>>, vector<1x1x96x512xbf16>
    %24 = vector.shape_cast %23 : vector<1x1x96x512xbf16> to vector<96x512xbf16>
    %c4 = arith.constant 4 : index
    %c0_29 = arith.constant 0 : index
    %c0_30 = arith.constant 0 : index
    %25 = vector.load %arg2[%c4, %c0_29, %c0_30] : memref<9x32x96xbf16, #tpu.memory_space<vmem>>, vector<1x32x96xbf16>
    %26 = vector.shape_cast %25 : vector<1x32x96xbf16> to vector<32x96xbf16>
    %cst_31 = arith.constant dense<0.000000e+00> : vector<32x512xf32>
    %27 = tpu.matmul %26, %24, %cst_31 {dimension_numbers = #tpu.dot_dimension_numbers<[1], [0], [0], [1], [0, 0, 1, 1], [], []>} : vector<32x96xbf16>, vector<96x512xbf16>, vector<32x512xf32> -> vector<32x512xf32>
    %28 = arith.addf %22, %27 : vector<32x512xf32>
    %c0_32 = arith.constant 0 : index
    %c1_33 = arith.constant 1 : index
    %c0_34 = arith.constant 0 : index
    %c256_35 = arith.constant 256 : index
    %29 = vector.load %arg1[%c0_32, %c1_33, %c0_34, %c256_35] : memref<1x2x96x1024xbf16, #tpu.memory_space<vmem>>, vector<1x1x96x512xbf16>
    %30 = vector.shape_cast %29 : vector<1x1x96x512xbf16> to vector<96x512xbf16>
    %c5 = arith.constant 5 : index
    %c0_36 = arith.constant 0 : index
    %c0_37 = arith.constant 0 : index
    %31 = vector.load %arg2[%c5, %c0_36, %c0_37] : memref<9x32x96xbf16, #tpu.memory_space<vmem>>, vector<1x32x96xbf16>
    %32 = vector.shape_cast %31 : vector<1x32x96xbf16> to vector<32x96xbf16>
    %cst_38 = arith.constant dense<0.000000e+00> : vector<32x512xf32>
    %33 = tpu.matmul %32, %30, %cst_38 {dimension_numbers = #tpu.dot_dimension_numbers<[1], [0], [0], [1], [0, 0, 1, 1], [], []>} : vector<32x96xbf16>, vector<96x512xbf16>, vector<32x512xf32> -> vector<32x512xf32>
    %34 = arith.addf %28, %33 : vector<32x512xf32>
    %c0_39 = arith.constant 0 : index
    %c0_40 = arith.constant 0 : index
    %c0_41 = arith.constant 0 : index
    %c384 = arith.constant 384 : index
    %35 = vector.load %arg1[%c0_39, %c0_40, %c0_41, %c384] : memref<1x2x96x1024xbf16, #tpu.memory_space<vmem>>, vector<1x1x96x512xbf16>
    %36 = vector.shape_cast %35 : vector<1x1x96x512xbf16> to vector<96x512xbf16>
    %c6 = arith.constant 6 : index
    %c0_42 = arith.constant 0 : index
    %c0_43 = arith.constant 0 : index
    %37 = vector.load %arg2[%c6, %c0_42, %c0_43] : memref<9x32x96xbf16, #tpu.memory_space<vmem>>, vector<1x32x96xbf16>
    %38 = vector.shape_cast %37 : vector<1x32x96xbf16> to vector<32x96xbf16>
    %cst_44 = arith.constant dense<0.000000e+00> : vector<32x512xf32>
    %39 = tpu.matmul %38, %36, %cst_44 {dimension_numbers = #tpu.dot_dimension_numbers<[1], [0], [0], [1], [0, 0, 1, 1], [], []>} : vector<32x96xbf16>, vector<96x512xbf16>, vector<32x512xf32> -> vector<32x512xf32>
    %40 = arith.addf %34, %39 : vector<32x512xf32>
    %c0_45 = arith.constant 0 : index
    %c1_46 = arith.constant 1 : index
    %c0_47 = arith.constant 0 : index
    %c384_48 = arith.constant 384 : index
    %41 = vector.load %arg1[%c0_45, %c1_46, %c0_47, %c384_48] : memref<1x2x96x1024xbf16, #tpu.memory_space<vmem>>, vector<1x1x96x512xbf16>
    %42 = vector.shape_cast %41 : vector<1x1x96x512xbf16> to vector<96x512xbf16>
    %c7 = arith.constant 7 : index
    %c0_49 = arith.constant 0 : index
    %c0_50 = arith.constant 0 : index
    %43 = vector.load %arg2[%c7, %c0_49, %c0_50] : memref<9x32x96xbf16, #tpu.memory_space<vmem>>, vector<1x32x96xbf16>
    %44 = vector.shape_cast %43 : vector<1x32x96xbf16> to vector<32x96xbf16>
    %cst_51 = arith.constant dense<0.000000e+00> : vector<32x512xf32>
    %45 = tpu.matmul %44, %42, %cst_51 {dimension_numbers = #tpu.dot_dimension_numbers<[1], [0], [0], [1], [0, 0, 1, 1], [], []>} : vector<32x96xbf16>, vector<96x512xbf16>, vector<32x512xf32> -> vector<32x512xf32>
    %46 = arith.addf %40, %45 : vector<32x512xf32>
    %c0_52 = arith.constant 0 : index
    %c0_53 = arith.constant 0 : index
    %c0_54 = arith.constant 0 : index
    %c512 = arith.constant 512 : index
    %47 = vector.load %arg1[%c0_52, %c0_53, %c0_54, %c512] : memref<1x2x96x1024xbf16, #tpu.memory_space<vmem>>, vector<1x1x96x512xbf16>
    %48 = vector.shape_cast %47 : vector<1x1x96x512xbf16> to vector<96x512xbf16>
    %c8 = arith.constant 8 : index
    %c0_55 = arith.constant 0 : index
    %c0_56 = arith.constant 0 : index
    %49 = vector.load %arg2[%c8, %c0_55, %c0_56] : memref<9x32x96xbf16, #tpu.memory_space<vmem>>, vector<1x32x96xbf16>
    %50 = vector.shape_cast %49 : vector<1x32x96xbf16> to vector<32x96xbf16>
    %cst_57 = arith.constant dense<0.000000e+00> : vector<32x512xf32>
    %51 = tpu.matmul %50, %48, %cst_57 {dimension_numbers = #tpu.dot_dimension_numbers<[1], [0], [0], [1], [0, 0, 1, 1], [], []>} : vector<32x96xbf16>, vector<96x512xbf16>, vector<32x512xf32> -> vector<32x512xf32>
    %52 = arith.addf %46, %51 : vector<32x512xf32>
    %c0_58 = arith.constant 0 : index
    %c0_59 = arith.constant 0 : index
    %53 = vector.load %arg3[%c0_58, %c0_59] : memref<32x1xf32, #tpu.memory_space<vmem>>, vector<32x1xf32>
    %54 = vector.broadcast %53 : vector<32x1xf32> to vector<32x512xf32>
    %55 = arith.addf %52, %54 : vector<32x512xf32>
    %cst_60 = arith.constant 0.000000e+00 : f32
    %56 = vector.broadcast %cst_60 : f32 to vector<32x512xf32>
    %57 = arith.cmpf oge, %55, %56 : vector<32x512xf32>
    %cst_61 = arith.constant 2.000000e-01 : f32
    %58 = vector.broadcast %cst_61 : f32 to vector<32x512xf32>
    %59 = arith.mulf %58, %55 : vector<32x512xf32>
    %60 = arith.select %57, %55, %59 : vector<32x512xi1>, vector<32x512xf32>
    %61 = arith.truncf %60 : vector<32x512xf32> to vector<32x512xbf16>
    %c0_62 = arith.constant 0 : index
    %c0_63 = arith.constant 0 : index
    %62 = vector.load %arg4[%c0_62, %c0_63] : memref<32x512xbf16, #tpu.memory_space<vmem>>, vector<32x512xbf16>
    tpu.vector_store %arg4[%c0_62, %c0_63], %61 {strides = array<i32>} : memref<32x512xbf16, #tpu.memory_space<vmem>>, vector<32x512xbf16>,
    return
  }
  func.func @transform_0(%arg0: i32) -> (i32, i32, i32, i32) {
    %c0_i32 = arith.constant 0 : i32
    %c0_i32_0 = arith.constant 0 : i32
    %c0_i32_1 = arith.constant 0 : i32
    %c0_i32_2 = arith.constant 0 : i32
    return %arg0, %c0_i32, %c0_i32_0, %c0_i32_1 : i32, i32, i32, i32
  }
  func.func @transform_1(%arg0: i32) -> (i32, i32, i32) {
    %c0_i32 = arith.constant 0 : i32
    %c0_i32_0 = arith.constant 0 : i32
    %c0_i32_1 = arith.constant 0 : i32
    %c0_i32_2 = arith.constant 0 : i32
    return %c0_i32, %c0_i32_0, %c0_i32_1 : i32, i32, i32
  }
  func.func @transform_2(%arg0: i32) -> (i32, i32) {
    %c0_i32 = arith.constant 0 : i32
    %c0_i32_0 = arith.constant 0 : i32
    %c0_i32_1 = arith.constant 0 : i32
    return %c0_i32, %c0_i32_0 : i32, i32
  }
  func.func @transform_3(%arg0: i32) -> (i32, i32) {
    %c0_i32 = arith.constant 0 : i32
    %c0_i32_0 = arith.constant 0 : i32
    return %c0_i32, %arg0 : i32, i32
  }
}

module attributes {stable_mosaic.version = 11 : i64} {
  func.func @_conv_tap_kernel(%arg0: i32, %arg1: memref<1x2x96x768xbf16, #tpu.memory_space<vmem>>, %arg2: memref<9x32x96xbf16, #tpu.memory_space<vmem>>, %arg3: memref<32x1xf32, #tpu.memory_space<vmem>>, %arg4: memref<32x256xbf16, #tpu.memory_space<vmem>>) attributes {dimension_semantics = [#tpu.dimension_semantics<parallel>], iteration_bounds = array<i64: 2>, scalar_prefetch = 0 : i64, scratch_operands = 0 : i64, tpu.core_type = #tpu.core_type<tc>, window_params = [{transform_indices = @transform_0, window_bounds = array<i64: 1, 2, 96, 768>}, {pipeline_mode = #tpu.pipeline_mode<synchronous>, transform_indices = @transform_1, window_bounds = array<i64: 9, 32, 96>}, {pipeline_mode = #tpu.pipeline_mode<synchronous>, transform_indices = @transform_2, window_bounds = array<i64: 32, 1>}, {transform_indices = @transform_3, window_bounds = array<i64: 32, 256>}]} {
    %c0 = arith.constant 0 : index
    %c0_0 = arith.constant 0 : index
    %c0_1 = arith.constant 0 : index
    %c0_2 = arith.constant 0 : index
    %0 = vector.load %arg1[%c0, %c0_0, %c0_1, %c0_2] : memref<1x2x96x768xbf16, #tpu.memory_space<vmem>>, vector<1x1x96x256xbf16>
    %1 = vector.shape_cast %0 : vector<1x1x96x256xbf16> to vector<96x256xbf16>
    %c0_3 = arith.constant 0 : index
    %c0_4 = arith.constant 0 : index
    %c0_5 = arith.constant 0 : index
    %2 = vector.load %arg2[%c0_3, %c0_4, %c0_5] : memref<9x32x96xbf16, #tpu.memory_space<vmem>>, vector<1x32x96xbf16>
    %3 = vector.shape_cast %2 : vector<1x32x96xbf16> to vector<32x96xbf16>
    %cst = arith.constant dense<0.000000e+00> : vector<32x256xf32>
    %4 = tpu.matmul %3, %1, %cst {dimension_numbers = #tpu.dot_dimension_numbers<[1], [0], [0], [1], [0, 0, 1, 1], [], []>} : vector<32x96xbf16>, vector<96x256xbf16>, vector<32x256xf32> -> vector<32x256xf32>
    %c0_6 = arith.constant 0 : index
    %c1 = arith.constant 1 : index
    %c0_7 = arith.constant 0 : index
    %c0_8 = arith.constant 0 : index
    %5 = vector.load %arg1[%c0_6, %c1, %c0_7, %c0_8] : memref<1x2x96x768xbf16, #tpu.memory_space<vmem>>, vector<1x1x96x256xbf16>
    %6 = vector.shape_cast %5 : vector<1x1x96x256xbf16> to vector<96x256xbf16>
    %c1_9 = arith.constant 1 : index
    %c0_10 = arith.constant 0 : index
    %c0_11 = arith.constant 0 : index
    %7 = vector.load %arg2[%c1_9, %c0_10, %c0_11] : memref<9x32x96xbf16, #tpu.memory_space<vmem>>, vector<1x32x96xbf16>
    %8 = vector.shape_cast %7 : vector<1x32x96xbf16> to vector<32x96xbf16>
    %cst_12 = arith.constant dense<0.000000e+00> : vector<32x256xf32>
    %9 = tpu.matmul %8, %6, %cst_12 {dimension_numbers = #tpu.dot_dimension_numbers<[1], [0], [0], [1], [0, 0, 1, 1], [], []>} : vector<32x96xbf16>, vector<96x256xbf16>, vector<32x256xf32> -> vector<32x256xf32>
    %10 = arith.addf %4, %9 : vector<32x256xf32>
    %c0_13 = arith.constant 0 : index
    %c0_14 = arith.constant 0 : index
    %c0_15 = arith.constant 0 : index
    %c128 = arith.constant 128 : index
    %11 = vector.load %arg1[%c0_13, %c0_14, %c0_15, %c128] : memref<1x2x96x768xbf16, #tpu.memory_space<vmem>>, vector<1x1x96x256xbf16>
    %12 = vector.shape_cast %11 : vector<1x1x96x256xbf16> to vector<96x256xbf16>
    %c2 = arith.constant 2 : index
    %c0_16 = arith.constant 0 : index
    %c0_17 = arith.constant 0 : index
    %13 = vector.load %arg2[%c2, %c0_16, %c0_17] : memref<9x32x96xbf16, #tpu.memory_space<vmem>>, vector<1x32x96xbf16>
    %14 = vector.shape_cast %13 : vector<1x32x96xbf16> to vector<32x96xbf16>
    %cst_18 = arith.constant dense<0.000000e+00> : vector<32x256xf32>
    %15 = tpu.matmul %14, %12, %cst_18 {dimension_numbers = #tpu.dot_dimension_numbers<[1], [0], [0], [1], [0, 0, 1, 1], [], []>} : vector<32x96xbf16>, vector<96x256xbf16>, vector<32x256xf32> -> vector<32x256xf32>
    %16 = arith.addf %10, %15 : vector<32x256xf32>
    %c0_19 = arith.constant 0 : index
    %c1_20 = arith.constant 1 : index
    %c0_21 = arith.constant 0 : index
    %c128_22 = arith.constant 128 : index
    %17 = vector.load %arg1[%c0_19, %c1_20, %c0_21, %c128_22] : memref<1x2x96x768xbf16, #tpu.memory_space<vmem>>, vector<1x1x96x256xbf16>
    %18 = vector.shape_cast %17 : vector<1x1x96x256xbf16> to vector<96x256xbf16>
    %c3 = arith.constant 3 : index
    %c0_23 = arith.constant 0 : index
    %c0_24 = arith.constant 0 : index
    %19 = vector.load %arg2[%c3, %c0_23, %c0_24] : memref<9x32x96xbf16, #tpu.memory_space<vmem>>, vector<1x32x96xbf16>
    %20 = vector.shape_cast %19 : vector<1x32x96xbf16> to vector<32x96xbf16>
    %cst_25 = arith.constant dense<0.000000e+00> : vector<32x256xf32>
    %21 = tpu.matmul %20, %18, %cst_25 {dimension_numbers = #tpu.dot_dimension_numbers<[1], [0], [0], [1], [0, 0, 1, 1], [], []>} : vector<32x96xbf16>, vector<96x256xbf16>, vector<32x256xf32> -> vector<32x256xf32>
    %22 = arith.addf %16, %21 : vector<32x256xf32>
    %c0_26 = arith.constant 0 : index
    %c0_27 = arith.constant 0 : index
    %c0_28 = arith.constant 0 : index
    %c256 = arith.constant 256 : index
    %23 = vector.load %arg1[%c0_26, %c0_27, %c0_28, %c256] : memref<1x2x96x768xbf16, #tpu.memory_space<vmem>>, vector<1x1x96x256xbf16>
    %24 = vector.shape_cast %23 : vector<1x1x96x256xbf16> to vector<96x256xbf16>
    %c4 = arith.constant 4 : index
    %c0_29 = arith.constant 0 : index
    %c0_30 = arith.constant 0 : index
    %25 = vector.load %arg2[%c4, %c0_29, %c0_30] : memref<9x32x96xbf16, #tpu.memory_space<vmem>>, vector<1x32x96xbf16>
    %26 = vector.shape_cast %25 : vector<1x32x96xbf16> to vector<32x96xbf16>
    %cst_31 = arith.constant dense<0.000000e+00> : vector<32x256xf32>
    %27 = tpu.matmul %26, %24, %cst_31 {dimension_numbers = #tpu.dot_dimension_numbers<[1], [0], [0], [1], [0, 0, 1, 1], [], []>} : vector<32x96xbf16>, vector<96x256xbf16>, vector<32x256xf32> -> vector<32x256xf32>
    %28 = arith.addf %22, %27 : vector<32x256xf32>
    %c0_32 = arith.constant 0 : index
    %c1_33 = arith.constant 1 : index
    %c0_34 = arith.constant 0 : index
    %c256_35 = arith.constant 256 : index
    %29 = vector.load %arg1[%c0_32, %c1_33, %c0_34, %c256_35] : memref<1x2x96x768xbf16, #tpu.memory_space<vmem>>, vector<1x1x96x256xbf16>
    %30 = vector.shape_cast %29 : vector<1x1x96x256xbf16> to vector<96x256xbf16>
    %c5 = arith.constant 5 : index
    %c0_36 = arith.constant 0 : index
    %c0_37 = arith.constant 0 : index
    %31 = vector.load %arg2[%c5, %c0_36, %c0_37] : memref<9x32x96xbf16, #tpu.memory_space<vmem>>, vector<1x32x96xbf16>
    %32 = vector.shape_cast %31 : vector<1x32x96xbf16> to vector<32x96xbf16>
    %cst_38 = arith.constant dense<0.000000e+00> : vector<32x256xf32>
    %33 = tpu.matmul %32, %30, %cst_38 {dimension_numbers = #tpu.dot_dimension_numbers<[1], [0], [0], [1], [0, 0, 1, 1], [], []>} : vector<32x96xbf16>, vector<96x256xbf16>, vector<32x256xf32> -> vector<32x256xf32>
    %34 = arith.addf %28, %33 : vector<32x256xf32>
    %c0_39 = arith.constant 0 : index
    %c0_40 = arith.constant 0 : index
    %c0_41 = arith.constant 0 : index
    %c384 = arith.constant 384 : index
    %35 = vector.load %arg1[%c0_39, %c0_40, %c0_41, %c384] : memref<1x2x96x768xbf16, #tpu.memory_space<vmem>>, vector<1x1x96x256xbf16>
    %36 = vector.shape_cast %35 : vector<1x1x96x256xbf16> to vector<96x256xbf16>
    %c6 = arith.constant 6 : index
    %c0_42 = arith.constant 0 : index
    %c0_43 = arith.constant 0 : index
    %37 = vector.load %arg2[%c6, %c0_42, %c0_43] : memref<9x32x96xbf16, #tpu.memory_space<vmem>>, vector<1x32x96xbf16>
    %38 = vector.shape_cast %37 : vector<1x32x96xbf16> to vector<32x96xbf16>
    %cst_44 = arith.constant dense<0.000000e+00> : vector<32x256xf32>
    %39 = tpu.matmul %38, %36, %cst_44 {dimension_numbers = #tpu.dot_dimension_numbers<[1], [0], [0], [1], [0, 0, 1, 1], [], []>} : vector<32x96xbf16>, vector<96x256xbf16>, vector<32x256xf32> -> vector<32x256xf32>
    %40 = arith.addf %34, %39 : vector<32x256xf32>
    %c0_45 = arith.constant 0 : index
    %c1_46 = arith.constant 1 : index
    %c0_47 = arith.constant 0 : index
    %c384_48 = arith.constant 384 : index
    %41 = vector.load %arg1[%c0_45, %c1_46, %c0_47, %c384_48] : memref<1x2x96x768xbf16, #tpu.memory_space<vmem>>, vector<1x1x96x256xbf16>
    %42 = vector.shape_cast %41 : vector<1x1x96x256xbf16> to vector<96x256xbf16>
    %c7 = arith.constant 7 : index
    %c0_49 = arith.constant 0 : index
    %c0_50 = arith.constant 0 : index
    %43 = vector.load %arg2[%c7, %c0_49, %c0_50] : memref<9x32x96xbf16, #tpu.memory_space<vmem>>, vector<1x32x96xbf16>
    %44 = vector.shape_cast %43 : vector<1x32x96xbf16> to vector<32x96xbf16>
    %cst_51 = arith.constant dense<0.000000e+00> : vector<32x256xf32>
    %45 = tpu.matmul %44, %42, %cst_51 {dimension_numbers = #tpu.dot_dimension_numbers<[1], [0], [0], [1], [0, 0, 1, 1], [], []>} : vector<32x96xbf16>, vector<96x256xbf16>, vector<32x256xf32> -> vector<32x256xf32>
    %46 = arith.addf %40, %45 : vector<32x256xf32>
    %c0_52 = arith.constant 0 : index
    %c0_53 = arith.constant 0 : index
    %c0_54 = arith.constant 0 : index
    %c512 = arith.constant 512 : index
    %47 = vector.load %arg1[%c0_52, %c0_53, %c0_54, %c512] : memref<1x2x96x768xbf16, #tpu.memory_space<vmem>>, vector<1x1x96x256xbf16>
    %48 = vector.shape_cast %47 : vector<1x1x96x256xbf16> to vector<96x256xbf16>
    %c8 = arith.constant 8 : index
    %c0_55 = arith.constant 0 : index
    %c0_56 = arith.constant 0 : index
    %49 = vector.load %arg2[%c8, %c0_55, %c0_56] : memref<9x32x96xbf16, #tpu.memory_space<vmem>>, vector<1x32x96xbf16>
    %50 = vector.shape_cast %49 : vector<1x32x96xbf16> to vector<32x96xbf16>
    %cst_57 = arith.constant dense<0.000000e+00> : vector<32x256xf32>
    %51 = tpu.matmul %50, %48, %cst_57 {dimension_numbers = #tpu.dot_dimension_numbers<[1], [0], [0], [1], [0, 0, 1, 1], [], []>} : vector<32x96xbf16>, vector<96x256xbf16>, vector<32x256xf32> -> vector<32x256xf32>
    %52 = arith.addf %46, %51 : vector<32x256xf32>
    %c0_58 = arith.constant 0 : index
    %c0_59 = arith.constant 0 : index
    %53 = vector.load %arg3[%c0_58, %c0_59] : memref<32x1xf32, #tpu.memory_space<vmem>>, vector<32x1xf32>
    %54 = vector.broadcast %53 : vector<32x1xf32> to vector<32x256xf32>
    %55 = arith.addf %52, %54 : vector<32x256xf32>
    %cst_60 = arith.constant 0.000000e+00 : f32
    %56 = vector.broadcast %cst_60 : f32 to vector<32x256xf32>
    %57 = arith.cmpf oge, %55, %56 : vector<32x256xf32>
    %cst_61 = arith.constant 2.000000e-01 : f32
    %58 = vector.broadcast %cst_61 : f32 to vector<32x256xf32>
    %59 = arith.mulf %58, %55 : vector<32x256xf32>
    %60 = arith.select %57, %55, %59 : vector<32x256xi1>, vector<32x256xf32>
    %61 = arith.truncf %60 : vector<32x256xf32> to vector<32x256xbf16>
    %c0_62 = arith.constant 0 : index
    %c0_63 = arith.constant 0 : index
    %62 = vector.load %arg4[%c0_62, %c0_63] : memref<32x256xbf16, #tpu.memory_space<vmem>>, vector<32x256xbf16>
    tpu.vector_store %arg4[%c0_62, %c0_63], %61 {strides = array<i32>} : memref<32x256xbf16, #tpu.memory_space<vmem>>, vector<32x256xbf16>,
    return
  }
  func.func @transform_0(%arg0: i32) -> (i32, i32, i32, i32) {
    %c0_i32 = arith.constant 0 : i32
    %c0_i32_0 = arith.constant 0 : i32
    %c0_i32_1 = arith.constant 0 : i32
    %c0_i32_2 = arith.constant 0 : i32
    return %arg0, %c0_i32, %c0_i32_0, %c0_i32_1 : i32, i32, i32, i32
  }
  func.func @transform_1(%arg0: i32) -> (i32, i32, i32) {
    %c0_i32 = arith.constant 0 : i32
    %c0_i32_0 = arith.constant 0 : i32
    %c0_i32_1 = arith.constant 0 : i32
    %c0_i32_2 = arith.constant 0 : i32
    return %c0_i32, %c0_i32_0, %c0_i32_1 : i32, i32, i32
  }
  func.func @transform_2(%arg0: i32) -> (i32, i32) {
    %c0_i32 = arith.constant 0 : i32
    %c0_i32_0 = arith.constant 0 : i32
    %c0_i32_1 = arith.constant 0 : i32
    return %c0_i32, %c0_i32_0 : i32, i32
  }
  func.func @transform_3(%arg0: i32) -> (i32, i32) {
    %c0_i32 = arith.constant 0 : i32
    %c0_i32_0 = arith.constant 0 : i32
    return %c0_i32, %arg0 : i32, i32
  }
}

module attributes {stable_mosaic.version = 11 : i64} {
  func.func @_conv_tap_kernel(%arg0: i32, %arg1: memref<1x2x96x640xbf16, #tpu.memory_space<vmem>>, %arg2: memref<9x32x96xbf16, #tpu.memory_space<vmem>>, %arg3: memref<32x1xf32, #tpu.memory_space<vmem>>, %arg4: memref<32x128xbf16, #tpu.memory_space<vmem>>) attributes {dimension_semantics = [#tpu.dimension_semantics<parallel>], iteration_bounds = array<i64: 2>, scalar_prefetch = 0 : i64, scratch_operands = 0 : i64, tpu.core_type = #tpu.core_type<tc>, window_params = [{transform_indices = @transform_0, window_bounds = array<i64: 1, 2, 96, 640>}, {pipeline_mode = #tpu.pipeline_mode<synchronous>, transform_indices = @transform_1, window_bounds = array<i64: 9, 32, 96>}, {pipeline_mode = #tpu.pipeline_mode<synchronous>, transform_indices = @transform_2, window_bounds = array<i64: 32, 1>}, {transform_indices = @transform_3, window_bounds = array<i64: 32, 128>}]} {
    %c0 = arith.constant 0 : index
    %c0_0 = arith.constant 0 : index
    %c0_1 = arith.constant 0 : index
    %c0_2 = arith.constant 0 : index
    %0 = vector.load %arg1[%c0, %c0_0, %c0_1, %c0_2] : memref<1x2x96x640xbf16, #tpu.memory_space<vmem>>, vector<1x1x96x128xbf16>
    %1 = vector.shape_cast %0 : vector<1x1x96x128xbf16> to vector<96x128xbf16>
    %c0_3 = arith.constant 0 : index
    %c0_4 = arith.constant 0 : index
    %c0_5 = arith.constant 0 : index
    %2 = vector.load %arg2[%c0_3, %c0_4, %c0_5] : memref<9x32x96xbf16, #tpu.memory_space<vmem>>, vector<1x32x96xbf16>
    %3 = vector.shape_cast %2 : vector<1x32x96xbf16> to vector<32x96xbf16>
    %cst = arith.constant dense<0.000000e+00> : vector<32x128xf32>
    %4 = tpu.matmul %3, %1, %cst {dimension_numbers = #tpu.dot_dimension_numbers<[1], [0], [0], [1], [0, 0, 1, 1], [], []>} : vector<32x96xbf16>, vector<96x128xbf16>, vector<32x128xf32> -> vector<32x128xf32>
    %c0_6 = arith.constant 0 : index
    %c1 = arith.constant 1 : index
    %c0_7 = arith.constant 0 : index
    %c0_8 = arith.constant 0 : index
    %5 = vector.load %arg1[%c0_6, %c1, %c0_7, %c0_8] : memref<1x2x96x640xbf16, #tpu.memory_space<vmem>>, vector<1x1x96x128xbf16>
    %6 = vector.shape_cast %5 : vector<1x1x96x128xbf16> to vector<96x128xbf16>
    %c1_9 = arith.constant 1 : index
    %c0_10 = arith.constant 0 : index
    %c0_11 = arith.constant 0 : index
    %7 = vector.load %arg2[%c1_9, %c0_10, %c0_11] : memref<9x32x96xbf16, #tpu.memory_space<vmem>>, vector<1x32x96xbf16>
    %8 = vector.shape_cast %7 : vector<1x32x96xbf16> to vector<32x96xbf16>
    %cst_12 = arith.constant dense<0.000000e+00> : vector<32x128xf32>
    %9 = tpu.matmul %8, %6, %cst_12 {dimension_numbers = #tpu.dot_dimension_numbers<[1], [0], [0], [1], [0, 0, 1, 1], [], []>} : vector<32x96xbf16>, vector<96x128xbf16>, vector<32x128xf32> -> vector<32x128xf32>
    %10 = arith.addf %4, %9 : vector<32x128xf32>
    %c0_13 = arith.constant 0 : index
    %c0_14 = arith.constant 0 : index
    %c0_15 = arith.constant 0 : index
    %c128 = arith.constant 128 : index
    %11 = vector.load %arg1[%c0_13, %c0_14, %c0_15, %c128] : memref<1x2x96x640xbf16, #tpu.memory_space<vmem>>, vector<1x1x96x128xbf16>
    %12 = vector.shape_cast %11 : vector<1x1x96x128xbf16> to vector<96x128xbf16>
    %c2 = arith.constant 2 : index
    %c0_16 = arith.constant 0 : index
    %c0_17 = arith.constant 0 : index
    %13 = vector.load %arg2[%c2, %c0_16, %c0_17] : memref<9x32x96xbf16, #tpu.memory_space<vmem>>, vector<1x32x96xbf16>
    %14 = vector.shape_cast %13 : vector<1x32x96xbf16> to vector<32x96xbf16>
    %cst_18 = arith.constant dense<0.000000e+00> : vector<32x128xf32>
    %15 = tpu.matmul %14, %12, %cst_18 {dimension_numbers = #tpu.dot_dimension_numbers<[1], [0], [0], [1], [0, 0, 1, 1], [], []>} : vector<32x96xbf16>, vector<96x128xbf16>, vector<32x128xf32> -> vector<32x128xf32>
    %16 = arith.addf %10, %15 : vector<32x128xf32>
    %c0_19 = arith.constant 0 : index
    %c1_20 = arith.constant 1 : index
    %c0_21 = arith.constant 0 : index
    %c128_22 = arith.constant 128 : index
    %17 = vector.load %arg1[%c0_19, %c1_20, %c0_21, %c128_22] : memref<1x2x96x640xbf16, #tpu.memory_space<vmem>>, vector<1x1x96x128xbf16>
    %18 = vector.shape_cast %17 : vector<1x1x96x128xbf16> to vector<96x128xbf16>
    %c3 = arith.constant 3 : index
    %c0_23 = arith.constant 0 : index
    %c0_24 = arith.constant 0 : index
    %19 = vector.load %arg2[%c3, %c0_23, %c0_24] : memref<9x32x96xbf16, #tpu.memory_space<vmem>>, vector<1x32x96xbf16>
    %20 = vector.shape_cast %19 : vector<1x32x96xbf16> to vector<32x96xbf16>
    %cst_25 = arith.constant dense<0.000000e+00> : vector<32x128xf32>
    %21 = tpu.matmul %20, %18, %cst_25 {dimension_numbers = #tpu.dot_dimension_numbers<[1], [0], [0], [1], [0, 0, 1, 1], [], []>} : vector<32x96xbf16>, vector<96x128xbf16>, vector<32x128xf32> -> vector<32x128xf32>
    %22 = arith.addf %16, %21 : vector<32x128xf32>
    %c0_26 = arith.constant 0 : index
    %c0_27 = arith.constant 0 : index
    %c0_28 = arith.constant 0 : index
    %c256 = arith.constant 256 : index
    %23 = vector.load %arg1[%c0_26, %c0_27, %c0_28, %c256] : memref<1x2x96x640xbf16, #tpu.memory_space<vmem>>, vector<1x1x96x128xbf16>
    %24 = vector.shape_cast %23 : vector<1x1x96x128xbf16> to vector<96x128xbf16>
    %c4 = arith.constant 4 : index
    %c0_29 = arith.constant 0 : index
    %c0_30 = arith.constant 0 : index
    %25 = vector.load %arg2[%c4, %c0_29, %c0_30] : memref<9x32x96xbf16, #tpu.memory_space<vmem>>, vector<1x32x96xbf16>
    %26 = vector.shape_cast %25 : vector<1x32x96xbf16> to vector<32x96xbf16>
    %cst_31 = arith.constant dense<0.000000e+00> : vector<32x128xf32>
    %27 = tpu.matmul %26, %24, %cst_31 {dimension_numbers = #tpu.dot_dimension_numbers<[1], [0], [0], [1], [0, 0, 1, 1], [], []>} : vector<32x96xbf16>, vector<96x128xbf16>, vector<32x128xf32> -> vector<32x128xf32>
    %28 = arith.addf %22, %27 : vector<32x128xf32>
    %c0_32 = arith.constant 0 : index
    %c1_33 = arith.constant 1 : index
    %c0_34 = arith.constant 0 : index
    %c256_35 = arith.constant 256 : index
    %29 = vector.load %arg1[%c0_32, %c1_33, %c0_34, %c256_35] : memref<1x2x96x640xbf16, #tpu.memory_space<vmem>>, vector<1x1x96x128xbf16>
    %30 = vector.shape_cast %29 : vector<1x1x96x128xbf16> to vector<96x128xbf16>
    %c5 = arith.constant 5 : index
    %c0_36 = arith.constant 0 : index
    %c0_37 = arith.constant 0 : index
    %31 = vector.load %arg2[%c5, %c0_36, %c0_37] : memref<9x32x96xbf16, #tpu.memory_space<vmem>>, vector<1x32x96xbf16>
    %32 = vector.shape_cast %31 : vector<1x32x96xbf16> to vector<32x96xbf16>
    %cst_38 = arith.constant dense<0.000000e+00> : vector<32x128xf32>
    %33 = tpu.matmul %32, %30, %cst_38 {dimension_numbers = #tpu.dot_dimension_numbers<[1], [0], [0], [1], [0, 0, 1, 1], [], []>} : vector<32x96xbf16>, vector<96x128xbf16>, vector<32x128xf32> -> vector<32x128xf32>
    %34 = arith.addf %28, %33 : vector<32x128xf32>
    %c0_39 = arith.constant 0 : index
    %c0_40 = arith.constant 0 : index
    %c0_41 = arith.constant 0 : index
    %c384 = arith.constant 384 : index
    %35 = vector.load %arg1[%c0_39, %c0_40, %c0_41, %c384] : memref<1x2x96x640xbf16, #tpu.memory_space<vmem>>, vector<1x1x96x128xbf16>
    %36 = vector.shape_cast %35 : vector<1x1x96x128xbf16> to vector<96x128xbf16>
    %c6 = arith.constant 6 : index
    %c0_42 = arith.constant 0 : index
    %c0_43 = arith.constant 0 : index
    %37 = vector.load %arg2[%c6, %c0_42, %c0_43] : memref<9x32x96xbf16, #tpu.memory_space<vmem>>, vector<1x32x96xbf16>
    %38 = vector.shape_cast %37 : vector<1x32x96xbf16> to vector<32x96xbf16>
    %cst_44 = arith.constant dense<0.000000e+00> : vector<32x128xf32>
    %39 = tpu.matmul %38, %36, %cst_44 {dimension_numbers = #tpu.dot_dimension_numbers<[1], [0], [0], [1], [0, 0, 1, 1], [], []>} : vector<32x96xbf16>, vector<96x128xbf16>, vector<32x128xf32> -> vector<32x128xf32>
    %40 = arith.addf %34, %39 : vector<32x128xf32>
    %c0_45 = arith.constant 0 : index
    %c1_46 = arith.constant 1 : index
    %c0_47 = arith.constant 0 : index
    %c384_48 = arith.constant 384 : index
    %41 = vector.load %arg1[%c0_45, %c1_46, %c0_47, %c384_48] : memref<1x2x96x640xbf16, #tpu.memory_space<vmem>>, vector<1x1x96x128xbf16>
    %42 = vector.shape_cast %41 : vector<1x1x96x128xbf16> to vector<96x128xbf16>
    %c7 = arith.constant 7 : index
    %c0_49 = arith.constant 0 : index
    %c0_50 = arith.constant 0 : index
    %43 = vector.load %arg2[%c7, %c0_49, %c0_50] : memref<9x32x96xbf16, #tpu.memory_space<vmem>>, vector<1x32x96xbf16>
    %44 = vector.shape_cast %43 : vector<1x32x96xbf16> to vector<32x96xbf16>
    %cst_51 = arith.constant dense<0.000000e+00> : vector<32x128xf32>
    %45 = tpu.matmul %44, %42, %cst_51 {dimension_numbers = #tpu.dot_dimension_numbers<[1], [0], [0], [1], [0, 0, 1, 1], [], []>} : vector<32x96xbf16>, vector<96x128xbf16>, vector<32x128xf32> -> vector<32x128xf32>
    %46 = arith.addf %40, %45 : vector<32x128xf32>
    %c0_52 = arith.constant 0 : index
    %c0_53 = arith.constant 0 : index
    %c0_54 = arith.constant 0 : index
    %c512 = arith.constant 512 : index
    %47 = vector.load %arg1[%c0_52, %c0_53, %c0_54, %c512] : memref<1x2x96x640xbf16, #tpu.memory_space<vmem>>, vector<1x1x96x128xbf16>
    %48 = vector.shape_cast %47 : vector<1x1x96x128xbf16> to vector<96x128xbf16>
    %c8 = arith.constant 8 : index
    %c0_55 = arith.constant 0 : index
    %c0_56 = arith.constant 0 : index
    %49 = vector.load %arg2[%c8, %c0_55, %c0_56] : memref<9x32x96xbf16, #tpu.memory_space<vmem>>, vector<1x32x96xbf16>
    %50 = vector.shape_cast %49 : vector<1x32x96xbf16> to vector<32x96xbf16>
    %cst_57 = arith.constant dense<0.000000e+00> : vector<32x128xf32>
    %51 = tpu.matmul %50, %48, %cst_57 {dimension_numbers = #tpu.dot_dimension_numbers<[1], [0], [0], [1], [0, 0, 1, 1], [], []>} : vector<32x96xbf16>, vector<96x128xbf16>, vector<32x128xf32> -> vector<32x128xf32>
    %52 = arith.addf %46, %51 : vector<32x128xf32>
    %c0_58 = arith.constant 0 : index
    %c0_59 = arith.constant 0 : index
    %53 = vector.load %arg3[%c0_58, %c0_59] : memref<32x1xf32, #tpu.memory_space<vmem>>, vector<32x1xf32>
    %54 = vector.broadcast %53 : vector<32x1xf32> to vector<32x128xf32>
    %55 = arith.addf %52, %54 : vector<32x128xf32>
    %cst_60 = arith.constant 0.000000e+00 : f32
    %56 = vector.broadcast %cst_60 : f32 to vector<32x128xf32>
    %57 = arith.cmpf oge, %55, %56 : vector<32x128xf32>
    %cst_61 = arith.constant 2.000000e-01 : f32
    %58 = vector.broadcast %cst_61 : f32 to vector<32x128xf32>
    %59 = arith.mulf %58, %55 : vector<32x128xf32>
    %60 = arith.select %57, %55, %59 : vector<32x128xi1>, vector<32x128xf32>
    %61 = arith.truncf %60 : vector<32x128xf32> to vector<32x128xbf16>
    %c0_62 = arith.constant 0 : index
    %c0_63 = arith.constant 0 : index
    %62 = vector.load %arg4[%c0_62, %c0_63] : memref<32x128xbf16, #tpu.memory_space<vmem>>, vector<32x128xbf16>
    tpu.vector_store %arg4[%c0_62, %c0_63], %61 {strides = array<i32>} : memref<32x128xbf16, #tpu.memory_space<vmem>>, vector<32x128xbf16>,
    return
  }
  func.func @transform_0(%arg0: i32) -> (i32, i32, i32, i32) {
    %c0_i32 = arith.constant 0 : i32
    %c0_i32_0 = arith.constant 0 : i32
    %c0_i32_1 = arith.constant 0 : i32
    %c0_i32_2 = arith.constant 0 : i32
    return %arg0, %c0_i32, %c0_i32_0, %c0_i32_1 : i32, i32, i32, i32
  }
  func.func @transform_1(%arg0: i32) -> (i32, i32, i32) {
    %c0_i32 = arith.constant 0 : i32
    %c0_i32_0 = arith.constant 0 : i32
    %c0_i32_1 = arith.constant 0 : i32
    %c0_i32_2 = arith.constant 0 : i32
    return %c0_i32, %c0_i32_0, %c0_i32_1 : i32, i32, i32
  }
  func.func @transform_2(%arg0: i32) -> (i32, i32) {
    %c0_i32 = arith.constant 0 : i32
    %c0_i32_0 = arith.constant 0 : i32
    %c0_i32_1 = arith.constant 0 : i32
    return %c0_i32, %c0_i32_0 : i32, i32
  }
  func.func @transform_3(%arg0: i32) -> (i32, i32) {
    %c0_i32 = arith.constant 0 : i32
    %c0_i32_0 = arith.constant 0 : i32
    return %c0_i32, %arg0 : i32, i32
  }
}

module attributes {stable_mosaic.version = 11 : i64} {
  func.func @_conv_tap_kernel(%arg0: i32, %arg1: memref<1x1x96x384xbf16, #tpu.memory_space<vmem>>, %arg2: memref<3x32x96xbf16, #tpu.memory_space<vmem>>, %arg3: memref<32x1xf32, #tpu.memory_space<vmem>>, %arg4: memref<32x128xbf16, #tpu.memory_space<vmem>>) attributes {dimension_semantics = [#tpu.dimension_semantics<parallel>], iteration_bounds = array<i64: 2>, scalar_prefetch = 0 : i64, scratch_operands = 0 : i64, tpu.core_type = #tpu.core_type<tc>, window_params = [{transform_indices = @transform_0, window_bounds = array<i64: 1, 1, 96, 384>}, {pipeline_mode = #tpu.pipeline_mode<synchronous>, transform_indices = @transform_1, window_bounds = array<i64: 3, 32, 96>}, {pipeline_mode = #tpu.pipeline_mode<synchronous>, transform_indices = @transform_2, window_bounds = array<i64: 32, 1>}, {transform_indices = @transform_3, window_bounds = array<i64: 32, 128>}]} {
    %c0 = arith.constant 0 : index
    %c0_0 = arith.constant 0 : index
    %c0_1 = arith.constant 0 : index
    %c0_2 = arith.constant 0 : index
    %0 = vector.load %arg1[%c0, %c0_0, %c0_1, %c0_2] : memref<1x1x96x384xbf16, #tpu.memory_space<vmem>>, vector<1x1x96x128xbf16>
    %1 = vector.shape_cast %0 : vector<1x1x96x128xbf16> to vector<96x128xbf16>
    %c0_3 = arith.constant 0 : index
    %c0_4 = arith.constant 0 : index
    %c0_5 = arith.constant 0 : index
    %2 = vector.load %arg2[%c0_3, %c0_4, %c0_5] : memref<3x32x96xbf16, #tpu.memory_space<vmem>>, vector<1x32x96xbf16>
    %3 = vector.shape_cast %2 : vector<1x32x96xbf16> to vector<32x96xbf16>
    %cst = arith.constant dense<0.000000e+00> : vector<32x128xf32>
    %4 = tpu.matmul %3, %1, %cst {dimension_numbers = #tpu.dot_dimension_numbers<[1], [0], [0], [1], [0, 0, 1, 1], [], []>} : vector<32x96xbf16>, vector<96x128xbf16>, vector<32x128xf32> -> vector<32x128xf32>
    %c0_6 = arith.constant 0 : index
    %c0_7 = arith.constant 0 : index
    %c0_8 = arith.constant 0 : index
    %c128 = arith.constant 128 : index
    %5 = vector.load %arg1[%c0_6, %c0_7, %c0_8, %c128] : memref<1x1x96x384xbf16, #tpu.memory_space<vmem>>, vector<1x1x96x128xbf16>
    %6 = vector.shape_cast %5 : vector<1x1x96x128xbf16> to vector<96x128xbf16>
    %c1 = arith.constant 1 : index
    %c0_9 = arith.constant 0 : index
    %c0_10 = arith.constant 0 : index
    %7 = vector.load %arg2[%c1, %c0_9, %c0_10] : memref<3x32x96xbf16, #tpu.memory_space<vmem>>, vector<1x32x96xbf16>
    %8 = vector.shape_cast %7 : vector<1x32x96xbf16> to vector<32x96xbf16>
    %cst_11 = arith.constant dense<0.000000e+00> : vector<32x128xf32>
    %9 = tpu.matmul %8, %6, %cst_11 {dimension_numbers = #tpu.dot_dimension_numbers<[1], [0], [0], [1], [0, 0, 1, 1], [], []>} : vector<32x96xbf16>, vector<96x128xbf16>, vector<32x128xf32> -> vector<32x128xf32>
    %10 = arith.addf %4, %9 : vector<32x128xf32>
    %c0_12 = arith.constant 0 : index
    %c0_13 = arith.constant 0 : index
    %c0_14 = arith.constant 0 : index
    %c256 = arith.constant 256 : index
    %11 = vector.load %arg1[%c0_12, %c0_13, %c0_14, %c256] : memref<1x1x96x384xbf16, #tpu.memory_space<vmem>>, vector<1x1x96x128xbf16>
    %12 = vector.shape_cast %11 : vector<1x1x96x128xbf16> to vector<96x128xbf16>
    %c2 = arith.constant 2 : index
    %c0_15 = arith.constant 0 : index
    %c0_16 = arith.constant 0 : index
    %13 = vector.load %arg2[%c2, %c0_15, %c0_16] : memref<3x32x96xbf16, #tpu.memory_space<vmem>>, vector<1x32x96xbf16>
    %14 = vector.shape_cast %13 : vector<1x32x96xbf16> to vector<32x96xbf16>
    %cst_17 = arith.constant dense<0.000000e+00> : vector<32x128xf32>
    %15 = tpu.matmul %14, %12, %cst_17 {dimension_numbers = #tpu.dot_dimension_numbers<[1], [0], [0], [1], [0, 0, 1, 1], [], []>} : vector<32x96xbf16>, vector<96x128xbf16>, vector<32x128xf32> -> vector<32x128xf32>
    %16 = arith.addf %10, %15 : vector<32x128xf32>
    %c0_18 = arith.constant 0 : index
    %c0_19 = arith.constant 0 : index
    %17 = vector.load %arg3[%c0_18, %c0_19] : memref<32x1xf32, #tpu.memory_space<vmem>>, vector<32x1xf32>
    %18 = vector.broadcast %17 : vector<32x1xf32> to vector<32x128xf32>
    %19 = arith.addf %16, %18 : vector<32x128xf32>
    %cst_20 = arith.constant 0.000000e+00 : f32
    %20 = vector.broadcast %cst_20 : f32 to vector<32x128xf32>
    %21 = arith.cmpf oge, %19, %20 : vector<32x128xf32>
    %cst_21 = arith.constant 2.000000e-01 : f32
    %22 = vector.broadcast %cst_21 : f32 to vector<32x128xf32>
    %23 = arith.mulf %22, %19 : vector<32x128xf32>
    %24 = arith.select %21, %19, %23 : vector<32x128xi1>, vector<32x128xf32>
    %25 = arith.truncf %24 : vector<32x128xf32> to vector<32x128xbf16>
    %c0_22 = arith.constant 0 : index
    %c0_23 = arith.constant 0 : index
    %26 = vector.load %arg4[%c0_22, %c0_23] : memref<32x128xbf16, #tpu.memory_space<vmem>>, vector<32x128xbf16>
    tpu.vector_store %arg4[%c0_22, %c0_23], %25 {strides = array<i32>} : memref<32x128xbf16, #tpu.memory_space<vmem>>, vector<32x128xbf16>,
    return
  }
  func.func @transform_0(%arg0: i32) -> (i32, i32, i32, i32) {
    %c0_i32 = arith.constant 0 : i32
    %c0_i32_0 = arith.constant 0 : i32
    %c0_i32_1 = arith.constant 0 : i32
    %c0_i32_2 = arith.constant 0 : i32
    return %arg0, %c0_i32, %c0_i32_0, %c0_i32_1 : i32, i32, i32, i32
  }
  func.func @transform_1(%arg0: i32) -> (i32, i32, i32) {
    %c0_i32 = arith.constant 0 : i32
    %c0_i32_0 = arith.constant 0 : i32
    %c0_i32_1 = arith.constant 0 : i32
    %c0_i32_2 = arith.constant 0 : i32
    return %c0_i32, %c0_i32_0, %c0_i32_1 : i32, i32, i32
  }
  func.func @transform_2(%arg0: i32) -> (i32, i32) {
    %c0_i32 = arith.constant 0 : i32
    %c0_i32_0 = arith.constant 0 : i32
    %c0_i32_1 = arith.constant 0 : i32
    return %c0_i32, %c0_i32_0 : i32, i32
  }
  func.func @transform_3(%arg0: i32) -> (i32, i32) {
    %c0_i32 = arith.constant 0 : i32
    %c0_i32_0 = arith.constant 0 : i32
    return %c0_i32, %arg0 : i32, i32
  }
}

module attributes {stable_mosaic.version = 11 : i64} {
  func.func @_conv_tap_kernel(%arg0: i32, %arg1: memref<1x1x96x384xbf16, #tpu.memory_space<vmem>>, %arg2: memref<3x1x96xbf16, #tpu.memory_space<vmem>>, %arg3: memref<1x1xf32, #tpu.memory_space<vmem>>, %arg4: memref<1x128xbf16, #tpu.memory_space<vmem>>) attributes {dimension_semantics = [#tpu.dimension_semantics<parallel>], iteration_bounds = array<i64: 2>, scalar_prefetch = 0 : i64, scratch_operands = 0 : i64, tpu.core_type = #tpu.core_type<tc>, window_params = [{transform_indices = @transform_0, window_bounds = array<i64: 1, 1, 96, 384>}, {pipeline_mode = #tpu.pipeline_mode<synchronous>, transform_indices = @transform_1, window_bounds = array<i64: 3, 1, 96>}, {pipeline_mode = #tpu.pipeline_mode<synchronous>, transform_indices = @transform_2, window_bounds = array<i64: 1, 1>}, {transform_indices = @transform_3, window_bounds = array<i64: 1, 128>}]} {
    %c0 = arith.constant 0 : index
    %c0_0 = arith.constant 0 : index
    %c0_1 = arith.constant 0 : index
    %c0_2 = arith.constant 0 : index
    %0 = vector.load %arg1[%c0, %c0_0, %c0_1, %c0_2] : memref<1x1x96x384xbf16, #tpu.memory_space<vmem>>, vector<1x1x96x128xbf16>
    %1 = vector.shape_cast %0 : vector<1x1x96x128xbf16> to vector<96x128xbf16>
    %c0_3 = arith.constant 0 : index
    %c0_4 = arith.constant 0 : index
    %c0_5 = arith.constant 0 : index
    %2 = vector.load %arg2[%c0_3, %c0_4, %c0_5] : memref<3x1x96xbf16, #tpu.memory_space<vmem>>, vector<1x1x96xbf16>
    %3 = vector.shape_cast %2 : vector<1x1x96xbf16> to vector<1x96xbf16>
    %cst = arith.constant dense<0.000000e+00> : vector<1x128xf32>
    %4 = tpu.matmul %3, %1, %cst {dimension_numbers = #tpu.dot_dimension_numbers<[1], [0], [0], [1], [0, 0, 1, 1], [], []>} : vector<1x96xbf16>, vector<96x128xbf16>, vector<1x128xf32> -> vector<1x128xf32>
    %c0_6 = arith.constant 0 : index
    %c0_7 = arith.constant 0 : index
    %c0_8 = arith.constant 0 : index
    %c128 = arith.constant 128 : index
    %5 = vector.load %arg1[%c0_6, %c0_7, %c0_8, %c128] : memref<1x1x96x384xbf16, #tpu.memory_space<vmem>>, vector<1x1x96x128xbf16>
    %6 = vector.shape_cast %5 : vector<1x1x96x128xbf16> to vector<96x128xbf16>
    %c1 = arith.constant 1 : index
    %c0_9 = arith.constant 0 : index
    %c0_10 = arith.constant 0 : index
    %7 = vector.load %arg2[%c1, %c0_9, %c0_10] : memref<3x1x96xbf16, #tpu.memory_space<vmem>>, vector<1x1x96xbf16>
    %8 = vector.shape_cast %7 : vector<1x1x96xbf16> to vector<1x96xbf16>
    %cst_11 = arith.constant dense<0.000000e+00> : vector<1x128xf32>
    %9 = tpu.matmul %8, %6, %cst_11 {dimension_numbers = #tpu.dot_dimension_numbers<[1], [0], [0], [1], [0, 0, 1, 1], [], []>} : vector<1x96xbf16>, vector<96x128xbf16>, vector<1x128xf32> -> vector<1x128xf32>
    %10 = arith.addf %4, %9 : vector<1x128xf32>
    %c0_12 = arith.constant 0 : index
    %c0_13 = arith.constant 0 : index
    %c0_14 = arith.constant 0 : index
    %c256 = arith.constant 256 : index
    %11 = vector.load %arg1[%c0_12, %c0_13, %c0_14, %c256] : memref<1x1x96x384xbf16, #tpu.memory_space<vmem>>, vector<1x1x96x128xbf16>
    %12 = vector.shape_cast %11 : vector<1x1x96x128xbf16> to vector<96x128xbf16>
    %c2 = arith.constant 2 : index
    %c0_15 = arith.constant 0 : index
    %c0_16 = arith.constant 0 : index
    %13 = vector.load %arg2[%c2, %c0_15, %c0_16] : memref<3x1x96xbf16, #tpu.memory_space<vmem>>, vector<1x1x96xbf16>
    %14 = vector.shape_cast %13 : vector<1x1x96xbf16> to vector<1x96xbf16>
    %cst_17 = arith.constant dense<0.000000e+00> : vector<1x128xf32>
    %15 = tpu.matmul %14, %12, %cst_17 {dimension_numbers = #tpu.dot_dimension_numbers<[1], [0], [0], [1], [0, 0, 1, 1], [], []>} : vector<1x96xbf16>, vector<96x128xbf16>, vector<1x128xf32> -> vector<1x128xf32>
    %16 = arith.addf %10, %15 : vector<1x128xf32>
    %c0_18 = arith.constant 0 : index
    %c0_19 = arith.constant 0 : index
    %17 = vector.load %arg3[%c0_18, %c0_19] : memref<1x1xf32, #tpu.memory_space<vmem>>, vector<1x1xf32>
    %18 = vector.broadcast %17 : vector<1x1xf32> to vector<1x128xf32>
    %19 = arith.addf %16, %18 : vector<1x128xf32>
    %20 = arith.truncf %19 : vector<1x128xf32> to vector<1x128xbf16>
    %c0_20 = arith.constant 0 : index
    %c0_21 = arith.constant 0 : index
    %21 = vector.load %arg4[%c0_20, %c0_21] : memref<1x128xbf16, #tpu.memory_space<vmem>>, vector<1x128xbf16>
    tpu.vector_store %arg4[%c0_20, %c0_21], %20 {strides = array<i32>} : memref<1x128xbf16, #tpu.memory_space<vmem>>, vector<1x128xbf16>,
    return
  }
  func.func @transform_0(%arg0: i32) -> (i32, i32, i32, i32) {
    %c0_i32 = arith.constant 0 : i32
    %c0_i32_0 = arith.constant 0 : i32
    %c0_i32_1 = arith.constant 0 : i32
    %c0_i32_2 = arith.constant 0 : i32
    return %arg0, %c0_i32, %c0_i32_0, %c0_i32_1 : i32, i32, i32, i32
  }
  func.func @transform_1(%arg0: i32) -> (i32, i32, i32) {
    %c0_i32 = arith.constant 0 : i32
    %c0_i32_0 = arith.constant 0 : i32
    %c0_i32_1 = arith.constant 0 : i32
    %c0_i32_2 = arith.constant 0 : i32
    return %c0_i32, %c0_i32_0, %c0_i32_1 : i32, i32, i32
  }
  func.func @transform_2(%arg0: i32) -> (i32, i32) {
    %c0_i32 = arith.constant 0 : i32
    %c0_i32_0 = arith.constant 0 : i32
    %c0_i32_1 = arith.constant 0 : i32
    return %c0_i32, %c0_i32_0 : i32, i32
  }
  func.func @transform_3(%arg0: i32) -> (i32, i32) {
    %c0_i32 = arith.constant 0 : i32
    %c0_i32_0 = arith.constant 0 : i32
    return %c0_i32, %arg0 : i32, i32
  }
}

</mosaic_0001>

<llo_original>
// kernel: a_call__.7
$region0: #{a_call__.7}
  #allocation0 [shape = 'u32[]', space=smem, size = 0x4, offset = 0x4, fixed_abs, tag = 'smem constant byte address 0x4 - core index']
  #allocation1 [shape = 'u32[144,128]{1,0:T(1,128)}', space=vmem, size = 0x12000, scoped, tag = 'internal scratch']
  %s0 = inlined_call_operand.vmem [shape: f32[16,64], index: 0, kind: input, shape index: {}]
  %s1 = inlined_call_operand.hbm [shape: f32[64,256], index: 1, kind: input, shape index: {}]
  %s2 = inlined_call_operand.vmem [shape: bf16[16,128], index: 2, kind: output, shape index: {}]
  %s3 = sld [smem:[#allocation0]]
  $region22: #{a_call__.7} parent=0
    _
  %s5 = ssub.s32 1, %s3
  %s6 = scalar_select 0, %s5, %s3
  $region1: #{a_call__.7} parent=0
    #allocation2 [shape = 'u8[65536]{0}', space=vmem, size = 0x10000, scoped, tag = 'input window, operand 1, single buffered']
    #allocation3 [shape = 's32[1]{0}', space=sflag, size = 0x4, scoped, tag = 'scoped memory for a_call__.7']
    %7 = vsyncpa [#allocation3], 0
    // Predicated region
    $region2: #{a_call__.7} parent=1 // pred_check
      _
    $region3: #{a_call__.7} parent=1 // pred_check_branch
      %9 = sbr.rel (0) target = $region5
    $region4: #{a_call__.7} parent=1 // pred_region
      _
    $region5: #{a_call__.7} parent=1 // pred_fallthru
      _
    // Predicated region
    $region6: #{a_call__.7} parent=1 // pred_check
      _
    $region7: #{a_call__.7} parent=1 // pred_check_branch
      %11 = sbr.rel (0) target = $region9
    $region8: #{a_call__.7} parent=1 // pred_region
      %s13 = ssub.s32 2048, 2048
      %14 = vsyncadd [#allocation3], %s13
      %s15 = sshll.u32 [#allocation2], 4
      %s16 = int_to_ptr.vmem [resolvable:$true] %s15
      %21 = dma.hbm_to_vmem [thread:$0]  %s1, 2048, %s16, [#allocation3], 256, 256, 16
    $region9: #{a_call__.7} parent=1 // pred_fallthru
      _
    // Predicated region
    $region10: #{a_call__.7} parent=1 // pred_check
      _
    $region11: #{a_call__.7} parent=1 // pred_check_branch
      %23 = sbr.rel (0) target = $region13
    $region12: #{a_call__.7} parent=1 // pred_region
      %24 = dma.done [#allocation3], 2048
    $region13: #{a_call__.7} parent=1 // pred_fallthru
      _
    %v25 = vld [vmem:[%s0] sm:$0xff]
    %v26 = vld [vmem:[%s0 + $0x8] sm:$0xff]
    %v27 = vld [vmem:[#allocation2] sm:$0xff]
    %v28 = vld [vmem:[#allocation2 + $0x8] sm:$0xff]
    %v29 = vld [vmem:[#allocation2 + $0x10] sm:$0xff]
    %v30 = vld [vmem:[#allocation2 + $0x18] sm:$0xff]
    %v31 = vld [vmem:[#allocation2 + $0x20] sm:$0xff]
    %v32 = vld [vmem:[#allocation2 + $0x28] sm:$0xff]
    %v33 = vld [vmem:[#allocation2 + $0x30] sm:$0xff]
    %v34 = vld [vmem:[#allocation2 + $0x38] sm:$0xff]
    %v35 = vld [vmem:[#allocation2 + $0x40] sm:$0xff]
    %v36 = vld [vmem:[#allocation2 + $0x48] sm:$0xff]
    %v37 = vld [vmem:[#allocation2 + $0x50] sm:$0xff]
    %v38 = vld [vmem:[#allocation2 + $0x58] sm:$0xff]
    %v39 = vld [vmem:[#allocation2 + $0x60] sm:$0xff]
    %v40 = vld [vmem:[#allocation2 + $0x68] sm:$0xff]
    %v41 = vld [vmem:[#allocation2 + $0x70] sm:$0xff]
    %v42 = vld [vmem:[#allocation2 + $0x78] sm:$0xff]
    %vm43 = vcmask 523264
    %v45 = vsel %vm43, %v25, 0
    %v48 = vsel %vm43, %v26, 0
    %50 = vmatprep.subr.mxu0 0.0
    %51 = vmatpush1.msra.mxu0 0.0
    %52 = vmatprep.subr.mxu0 0.0
    %53 = vmatpush1.msra.mxu0 0.0
    %54 = vmatprep.subr.mxu0 0.0
    %55 = vmatpush1.msra.mxu0 0.0
    %56 = vmatprep.subr.mxu0 0.0
    %57 = vmatpush1.msra.mxu0 0.0
    %58 = vmatprep.subr.mxu0 0.0
    %59 = vmatpush1.msra.mxu0 0.0
    %60 = vmatprep.subr.mxu0 0.0
    %61 = vmatpush1.msra.mxu0 0.0
    %62 = vmatprep.subr.mxu0 0.0
    %63 = vmatpush1.msra.mxu0 0.0
    %64 = vmatprep.subr.mxu0 0.0
    %65 = vmatpush1.msra.mxu0 0.0
    %66 = vmatprep.subr.mxu0 %v42
    %67 = vmatpush1.msra.mxu0 %v41
    %68 = vmatprep.subr.mxu0 %v40
    %69 = vmatpush1.msra.mxu0 %v39
    %70 = vmatprep.subr.mxu0 %v38
    %71 = vmatpush1.msra.mxu0 %v37
    %72 = vmatprep.subr.mxu0 %v36
    %73 = vmatpush1.msra.mxu0 %v35
    %74 = vmatprep.subr.mxu0 %v34
    %75 = vmatpush1.msra.mxu0 %v33
    %76 = vmatprep.subr.mxu0 %v32
    %77 = vmatpush1.msra.mxu0 %v31
    %78 = vmatprep.subr.mxu0 %v30
    %79 = vmatpush1.msra.mxu0 %v29
    %80 = vmatprep.subr.mxu0 %v28
    %81 = vmatpush1.msra.mxu0 %v27
    %82 = vmatprep.subr.mxu0 0.0
    %83 = vmatpush2.msra.mxu0 0.0
    %84 = vmatprep.subr.mxu0 0.0
    %85 = vmatpush2.msra.mxu0 0.0
    %86 = vmatprep.subr.mxu0 0.0
    %87 = vmatpush2.msra.mxu0 0.0
    %88 = vmatprep.subr.mxu0 0.0
    %89 = vmatpush2.msra.mxu0 0.0
    %90 = vmatprep.subr.mxu0 0.0
    %91 = vmatpush2.msra.mxu0 0.0
    %92 = vmatprep.subr.mxu0 0.0
    %93 = vmatpush2.msra.mxu0 0.0
    %94 = vmatprep.subr.mxu0 0.0
    %95 = vmatpush2.msra.mxu0 0.0
    %96 = vmatprep.subr.mxu0 0.0
    %97 = vmatpush2.msra.mxu0 0.0
    %98 = vmatprep.subr.mxu0 0.0
    %99 = vmatpush2.msra.mxu0 0.0
    %100 = vmatprep.subr.mxu0 0.0
    %101 = vmatpush2.msra.mxu0 0.0
    %102 = vmatprep.subr.mxu0 0.0
    %103 = vmatpush2.msra.mxu0 0.0
    %104 = vmatprep.subr.mxu0 0.0
    %105 = vmatpush2.msra.mxu0 0.0
    %106 = vmatprep.subr.mxu0 0.0
    %107 = vmatpush2.msra.mxu0 0.0
    %108 = vmatprep.subr.mxu0 0.0
    %109 = vmatpush2.msra.mxu0 0.0
    %110 = vmatprep.subr.mxu0 0.0
    %111 = vmatpush2.msra.mxu0 0.0
    %112 = vmatprep.subr.mxu0 0.0
    %113 = vmatpush2.msra.mxu0 0.0
    %114 = vmatprep.mubr.f32.mxu0 0.0
    %115 = vmatmul.mubr.f32.gmra.mxu0 %v45
    %v116 = vpop.f32.mrf.mxu0
    %v117 = vadd.f32 0.0, %v116
    %v118 = vpop.f32.mrf.mxu0
    %v119 = vadd.f32 0.0, %v118
    %120 = vmatprep.mubr.f32.mxu0 0.0
    %121 = vmatmul.mubr.f32.gmra.mxu0 %v48
    %v122 = vpop.f32.mrf.mxu0
    %v123 = vadd.f32 0.0, %v122
    %v124 = vpop.f32.mrf.mxu0
    %v125 = vadd.f32 0.0, %v124
    %126 = vdwg.mxu0
    %v127 = vmul.f32 %v117, %v117
    %v128 = vmul.f32 %v123, %v123
    %v129 = vmul.f32 %v119, %v119
    %v130 = vmul.f32 %v125, %v125
    %v131 = vadd.f32 %v127, %v129
    %v132 = vadd.f32 %v128, %v130
    %v133 = vrsqrt.pop %v131
    %v134 = vmul.f32 %v131, %v133
    %vm135 = vcmp.eq.f32.partialorder %v131, inf
    %v136 = vsel %vm135, %v131, %v134
    %vm137 = vcmp.eq.f32.partialorder %v131, 0.0
    %v138 = vand.u32 %v131, 2147483648
    %v139 = vsel %vm137, %v138, %v136
    %v140 = vrsqrt.pop %v132
    %v141 = vmul.f32 %v132, %v140
    %vm142 = vcmp.eq.f32.partialorder %v132, inf
    %v143 = vsel %vm142, %v132, %v141
    %vm144 = vcmp.eq.f32.partialorder %v132, 0.0
    %v145 = vand.u32 %v132, 2147483648
    %v146 = vsel %vm144, %v145, %v143
    %v147 = vpack.c.bf16 %v146, %v139
    %v149 = vunpack.c.l.b16 %v147
    %v150 = vunpack.c.h.b16 %v147
    %v151 = vpack.c.b16 %v149, %v149
    %v152 = vpack.c.b16 %v150, %v150
    %155 = vst [vmem:[%s2] sm:$0xf] %v151
    %156 = vst [vmem:[%s2 + $0x4] sm:$0xf] %v152
    // Predicated region
    $region14: #{a_call__.7} parent=1 // pred_check
      _
    $region15: #{a_call__.7} parent=1 // pred_check_branch
      %158 = sbr.rel (0) target = $region17
    $region16: #{a_call__.7} parent=1 // pred_region
      _
    $region17: #{a_call__.7} parent=1 // pred_fallthru
      _
    // Predicated region
    $region18: #{a_call__.7} parent=1 // pred_check
      _
    $region19: #{a_call__.7} parent=1 // pred_check_branch
      %160 = sbr.rel (0) target = $region21
    $region20: #{a_call__.7} parent=1 // pred_region
      _
    $region21: #{a_call__.7} parent=1 // pred_fallthru
      _
    %161 = vsyncpa [#allocation3], 1

// kernel: a_call__.8
$region0: #{a_call__.8}
  #allocation0 [shape = 'u32[]', space=smem, size = 0x4, offset = 0x4, fixed_abs, tag = 'smem constant byte address 0x4 - core index']
  #allocation1 [shape = 'u32[144,128]{1,0:T(1,128)}', space=vmem, size = 0x12000, scoped, tag = 'internal scratch']
  %s0 = inlined_call_operand.vmem [shape: bf16[2,1,3,2048], index: 0, kind: input, shape index: {}]
  %s1 = inlined_call_operand.vmem [shape: bf16[9,32,3], index: 1, kind: input, shape index: {}]
  %s2 = inlined_call_operand.vmem [shape: f32[32,1], index: 2, kind: input, shape index: {}]
  %s3 = inlined_call_operand.vmem [shape: bf16[32,2048], index: 3, kind: output, shape index: {}]
  %s4 = sld [smem:[#allocation0]]
  $region64: #{a_call__.8} parent=0
    _
  %s6 = ssub.s32 1, %s4
  %s7 = scalar_select 0, %s6, %s4
  $region1: #{a_call__.8} parent=0
    #allocation2 [shape = 'u8[131072]{0}', space=vmem, size = 0x20000, scoped, tag = 'output window, operand 0']
    loop: start=0, step=1, limit=4
    $region2: #{a_call__.8} parent=1 // loop_pre_header
      _
    $region3: #{a_call__.8} parent=1 // loop_header
      %s9 = sphi 0, %s13
      %p10 = scmp.ge.s32.totalorder %s9, 4
      %s19 = sphi 0, %s21
      %s22 = sphi 0, %s19
      %s23 = sphi 0, %s22
      %s39 = sphi 0, %s23
      %s43 = sphi 0, %s43
      %s45 = sphi 0, %s43
      %s46 = sphi 0, %s45
      %s60 = sphi 0, %s46
      %s64 = sphi 0, %s64
      %s66 = sphi 0, %s64
      %s67 = sphi 0, %s66
      %s81 = sphi 0, %s67
      %s87 = sphi 0, %s89
      %s90 = sphi 0, %s87
      %s91 = sphi 0, %s90
      %s107 = sphi 0, %s91
    $region4: #{a_call__.8} parent=1 // loop_header_branch
      %12 = sbr.rel (%p10) target = $region8
    $region5: #{a_call__.8} parent=1 // loop_body
      %s14 = ssub.s32 %s9, 1
      %s15 = ssub.s32 %s9, 2
      %s16 = sadd.s32 %s9, 1
      %s17 = ssub.s32 %s9, %s16
      %p18 = scmp.eq.s32.totalorder %s17, 0
      %s20 = sadd.s32 %s19, 1
      %s21 = scalar_select %p18, %s19, %s20
      %p24 = pneg %p18
      %p25 = scmp.eq.s32.totalorder %s9, 1
      %p26 = por %p24, %p25
      %p27 = scmp.ne.s32.totalorder %s19, %s22
      %p28 = scmp.eq.s32.totalorder %s9, 0
      %p29 = por %p27, %p28
      %p30 = scmp.ne.s32.totalorder %s19, %s22
      %p31 = scmp.eq.s32.totalorder %s14, 1
      %p32 = por %p30, %p31
      %p33 = scmp.ne.s32.totalorder %s22, %s23
      %p34 = scmp.eq.s32.totalorder %s14, 0
      %p35 = por %p33, %p34
      %p36 = scmp.ne.s32.totalorder %s22, %s23
      %p37 = scmp.eq.s32.totalorder %s15, 1
      %p38 = por %p36, %p37
      %p40 = scmp.ne.s32.totalorder %s23, %s39
      %p41 = scmp.eq.s32.totalorder %s15, 0
      %p42 = por %p40, %p41
      %s44 = sadd.s32 %s43, 1
      %p47 = scmp.eq.s32.totalorder %s9, 1
      %p48 = scmp.ne.s32.totalorder %s43, %s45
      %p49 = scmp.eq.s32.totalorder %s9, 0
      %p50 = por %p48, %p49
      %p51 = scmp.ne.s32.totalorder %s43, %s45
      %p52 = scmp.eq.s32.totalorder %s14, 1
      %p53 = por %p51, %p52
      %p54 = scmp.ne.s32.totalorder %s45, %s46
      %p55 = scmp.eq.s32.totalorder %s14, 0
      %p56 = por %p54, %p55
      %p57 = scmp.ne.s32.totalorder %s45, %s46
      %p58 = scmp.eq.s32.totalorder %s15, 1
      %p59 = por %p57, %p58
      %p61 = scmp.ne.s32.totalorder %s46, %s60
      %p62 = scmp.eq.s32.totalorder %s15, 0
      %p63 = por %p61, %p62
      %s65 = sadd.s32 %s64, 1
      %p68 = scmp.eq.s32.totalorder %s9, 1
      %p69 = scmp.ne.s32.totalorder %s64, %s66
      %p70 = scmp.eq.s32.totalorder %s9, 0
      %p71 = por %p69, %p70
      %p72 = scmp.ne.s32.totalorder %s64, %s66
      %p73 = scmp.eq.s32.totalorder %s14, 1
      %p74 = por %p72, %p73
      %p75 = scmp.ne.s32.totalorder %s66, %s67
      %p76 = scmp.eq.s32.totalorder %s14, 0
      %p77 = por %p75, %p76
      %p78 = scmp.ne.s32.totalorder %s66, %s67
      %p79 = scmp.eq.s32.totalorder %s15, 1
      %p80 = por %p78, %p79
      %p82 = scmp.ne.s32.totalorder %s67, %s81
      %p83 = scmp.eq.s32.totalorder %s15, 0
      %p84 = por %p82, %p83
      %s85 = ssub.s32 %s9, %s16
      %p86 = scmp.eq.s32.totalorder %s85, 0
      %s88 = sadd.s32 %s87, 1
      %s89 = scalar_select %p86, %s87, %s88
      %p92 = pneg %p86
      %p93 = scmp.eq.s32.totalorder %s9, 1
      %p94 = por %p92, %p93
      %p95 = scmp.ne.s32.totalorder %s87, %s90
      %p96 = scmp.eq.s32.totalorder %s9, 0
      %p97 = por %p95, %p96
      %p98 = scmp.ne.s32.totalorder %s87, %s90
      %p99 = scmp.eq.s32.totalorder %s14, 1
      %p100 = por %p98, %p99
      %p101 = scmp.ne.s32.totalorder %s90, %s91
      %p102 = scmp.eq.s32.totalorder %s14, 0
      %p103 = por %p101, %p102
      %p104 = scmp.ne.s32.totalorder %s90, %s91
      %p105 = scmp.eq.s32.totalorder %s15, 1
      %p106 = por %p104, %p105
      %p108 = scmp.ne.s32.totalorder %s91, %s107
      %p109 = scmp.eq.s32.totalorder %s15, 0
      %p110 = por %p108, %p109
      %p111 = scmp.le.s32.totalorder 1, %s9
      %p112 = scmp.lt.s32.totalorder %s9, 3
      %p113 = pnand %p111, %p112
      %p114 = pneg %p113
      // Predicated region
      $region9: #{a_call__.8} parent=5 // pred_check
        _
      $region10: #{a_call__.8} parent=5 // pred_check_branch
        %116 = sbr.rel (%p113) target = $region12
      $region11: #{a_call__.8} parent=5 // pred_region
        %s117 = ssub.s32 %s9, 1
        // Predicated region
        $region13: #{a_call__.8} parent=11 // pred_check
          %p118 = pneg %p56
        $region14: #{a_call__.8} parent=11 // pred_check_branch
          %120 = sbr.rel (%p118) target = $region16
        $region15: #{a_call__.8} parent=11 // pred_region
          _
        $region16: #{a_call__.8} parent=11 // pred_fallthru
          _
        // Predicated region
        $region17: #{a_call__.8} parent=11 // pred_check
          %p121 = pneg %p77
        $region18: #{a_call__.8} parent=11 // pred_check_branch
          %123 = sbr.rel (%p121) target = $region20
        $region19: #{a_call__.8} parent=11 // pred_region
          _
        $region20: #{a_call__.8} parent=11 // pred_fallthru
          _
      $region12: #{a_call__.8} parent=5 // pred_fallthru
        _
      %p124 = scmp.lt.s32.totalorder %s9, 2
      // Predicated region
      $region21: #{a_call__.8} parent=5 // pred_check
        %p125 = pneg %p124
      $region22: #{a_call__.8} parent=5 // pred_check_branch
        %127 = sbr.rel (%p125) target = $region24
      $region23: #{a_call__.8} parent=5 // pred_region
        // Predicated region
        $region25: #{a_call__.8} parent=23 // pred_check
          %p128 = pneg %p29
        $region26: #{a_call__.8} parent=23 // pred_check_branch
          %130 = sbr.rel (%p128) target = $region28
        $region27: #{a_call__.8} parent=23 // pred_region
          %p131 = scmp.lt.s32.totalorder %s9, 1
          %s132 = scalar_select %p131, %s9, 1
          %s133 = smul.addr %s132, 16
          %s134 = smul.addr %s133, 2
          %s135 = scalar_lea.vmem %s0, %s134
        $region28: #{a_call__.8} parent=23 // pred_fallthru
          _
      $region24: #{a_call__.8} parent=5 // pred_fallthru
        _
      %p136 = scmp.le.s32.totalorder 1, %s9
      %p137 = scmp.lt.s32.totalorder %s9, 3
      %p138 = pnand %p136, %p137
      %p139 = pneg %p138
      // Predicated region
      $region29: #{a_call__.8} parent=5 // pred_check
        _
      $region30: #{a_call__.8} parent=5 // pred_check_branch
        %141 = sbr.rel (%p138) target = $region32
      $region31: #{a_call__.8} parent=5 // pred_region
        %s142 = ssub.s32 %s9, 1
        %p143 = scmp.lt.s32.totalorder %s14, 1
        %s144 = scalar_select %p143, %s14, 1
        %s145 = smul.addr %s144, 16
        %s146 = smul.addr %s145, 2
        %s147 = scalar_lea.vmem %s0, %s146
        %p148 = pneg %p35
        %p149 = pneg %p32
        %p150 = pneg %p56
        %p151 = pneg %p53
        %p152 = pneg %p77
        %p153 = pneg %p74
        %p154 = pneg %p103
        %p155 = pneg %p100
        %s156 = sand.u32 %s90, 1
        %s157 = sand.u32 %s90, 1
        %s158 = smul.addr %s157, 128
        %s159 = scalar_lea.vmem [#allocation2], %s158
        %p160 = scmp.lt.s32.totalorder %s14, 1
        %s161 = scalar_select %p160, %s14, 1
        %s162 = smul.addr %s161, 16
        %s163 = smul.addr %s162, 2
        %s164 = scalar_lea.vmem %s0, %s163
        %s165 = smul.u32 8, %s14
        %v167 = vld [vmem:[%s164] sm:$0xff]
        %v168 = vld [vmem:[%s164 + $0x8] sm:$0xff]
        %v169 = vld [vmem:[%s1] sm:$0xf]
        %v170 = vld [vmem:[%s1 + $0x4] sm:$0xf]
        %v171 = vld [vmem:[%s1 + $0x8] sm:$0xf]
        %v172 = vld [vmem:[%s1 + $0xc] sm:$0xf]
        %v173 = vld [vmem:[%s164 + $0x2] sm:$0xff]
        %v174 = vld [vmem:[%s164 + $0xa] sm:$0xff]
        %s175 = scalar_lea.vmem %s1, 16
        %v176 = vld [vmem:[%s175] sm:$0xf]
        %v177 = vld [vmem:[%s175 + $0x4] sm:$0xf]
        %v178 = vld [vmem:[%s175 + $0x8] sm:$0xf]
        %v179 = vld [vmem:[%s175 + $0xc] sm:$0xf]
        %v184 = vunpack.c.l.b16 %v176
        %v185 = vunpack.c.l.b16 %v177
        %v186 = vunpack.c.l.b16 %v178
        %v187 = vunpack.c.l.b16 %v179
        %v188 = vpack.c.b16 %v185, %v184
        %v189 = vpack.c.b16 %v187, %v186
        %v192 = vcombine.high %v173, %v173
        %v194 = vunpack.c.l.s4 1983009808
        %v195 = vunpack.c.0.s8 %v194
        %v196 = vlaneseq
        %v197 = vshrl.u32 %v196, 7
        %v198 = vsub.s32 %v195, %v197
        %v199 = vrot.slane %v173, %v198
        %v201 = vunpack.c.l.s4 1983009808
        %v202 = vunpack.c.0.s8 %v201
        %v203 = vlaneseq
        %v204 = vshrl.u32 %v203, 7
        %v205 = vsub.s32 %v202, %v204
        %v206 = vrot.slane %v192, %v205
        %v207 = vcombine.high %v199, %v199
        %v208 = vcombine.high %v206, %v206
        %v209 = vcombine.high %v174, %v174
        %v211 = vunpack.c.l.s4 1983009808
        %v212 = vunpack.c.0.s8 %v211
        %v213 = vlaneseq
        %v214 = vshrl.u32 %v213, 7
        %v215 = vsub.s32 %v212, %v214
        %v216 = vrot.slane %v174, %v215
        %v218 = vunpack.c.l.s4 1983009808
        %v219 = vunpack.c.0.s8 %v218
        %v220 = vlaneseq
        %v221 = vshrl.u32 %v220, 7
        %v222 = vsub.s32 %v219, %v221
        %v223 = vrot.slane %v209, %v222
        %v224 = vcombine.high %v216, %v216
        %v225 = vcombine.high %v223, %v223
        %vm226 = vcmask 23552
        %v228 = vsel %vm226, %v188, 0
        %v231 = vsel %vm226, %v189, 0
        %vm233 = vcmask 1040384
        %vm234 = vcmask 1041408
        %v235 = vsel %vm233, 4294967295, 65535
        %v236 = vsel %vm234, %v235, 0
        %v238 = vand.u32 %v199, %v236
        %v241 = vand.u32 %v207, %v236
        %v244 = vand.u32 %v206, %v236
        %v247 = vand.u32 %v208, %v236
        %v250 = vand.u32 %v216, %v236
        %v253 = vand.u32 %v224, %v236
        %v256 = vand.u32 %v223, %v236
        %v259 = vand.u32 %v225, %v236
        %261 = vmatprep.subr.bf16.mxu0 0
        %262 = vmatpush1.bf16.msra.mxu0 0
        %263 = vmatprep.subr.bf16.mxu0 0
        %264 = vmatpush1.bf16.msra.mxu0 0
        %265 = vmatprep.subr.bf16.mxu0 0
        %266 = vmatpush1.bf16.msra.mxu0 0
        %267 = vmatprep.subr.bf16.mxu0 0
        %268 = vmatpush1.bf16.msra.mxu0 0
        %269 = vmatprep.subr.bf16.mxu0 0
        %270 = vmatpush1.bf16.msra.mxu0 0
        %271 = vmatprep.subr.bf16.mxu0 0
        %272 = vmatpush1.bf16.msra.mxu0 0
        %273 = vmatprep.subr.bf16.mxu0 0
        %274 = vmatpush1.bf16.msra.mxu0 0
        %275 = vmatprep.subr.bf16.mxu0 %v241
        %276 = vmatpush1.bf16.msra.mxu0 %v238
        %277 = vmatprep.subr.bf16.mxu0 0
        %278 = vmatpush2.bf16.msra.mxu0 0
        %279 = vmatprep.subr.bf16.mxu0 0
        %280 = vmatpush2.bf16.msra.mxu0 0
        %281 = vmatprep.subr.bf16.mxu0 0
        %282 = vmatpush2.bf16.msra.mxu0 0
        %283 = vmatprep.subr.bf16.mxu0 0
        %284 = vmatpush2.bf16.msra.mxu0 0
        %285 = vmatprep.subr.bf16.mxu0 0
        %286 = vmatpush2.bf16.msra.mxu0 0
        %287 = vmatprep.subr.bf16.mxu0 0
        %288 = vmatpush2.bf16.msra.mxu0 0
        %289 = vmatprep.subr.bf16.mxu0 0
        %290 = vmatpush2.bf16.msra.mxu0 0
        %291 = vmatprep.subr.bf16.mxu0 0
        %292 = vmatpush2.bf16.msra.mxu0 0
        %293 = vmatprep.mubr.bf16.mxu0 0
        %294 = vmatmul.mubr.bf16.gmra.mxu0 %v228
        %v295 = vpop.f32.mrf.mxu0
        %v296 = vadd.f32 0.0, %v295
        %v297 = vpop.f32.mrf.mxu0
        %v298 = vadd.f32 0.0, %v297
        %v299 = vpop.f32.mrf.mxu0
        %v300 = vadd.f32 0.0, %v299
        %v301 = vpop.f32.mrf.mxu0
        %v302 = vadd.f32 0.0, %v301
        %303 = vmatprep.mubr.bf16.mxu0 0
        %304 = vmatmul.mubr.bf16.gmra.mxu0 %v231
        %v305 = vpop.f32.mrf.mxu0
        %v306 = vadd.f32 0.0, %v305
        %v307 = vpop.f32.mrf.mxu0
        %v308 = vadd.f32 0.0, %v307
        %v309 = vpop.f32.mrf.mxu0
        %v310 = vadd.f32 0.0, %v309
        %v311 = vpop.f32.mrf.mxu0
        %v312 = vadd.f32 0.0, %v311
        %313 = vdwg.mxu0
        %314 = vmatprep.subr.bf16.mxu0 0
        %315 = vmatpush1.bf16.msra.mxu0 0
        %316 = vmatprep.subr.bf16.mxu0 0
        %317 = vmatpush1.bf16.msra.mxu0 0
        %318 = vmatprep.subr.bf16.mxu0 0
        %319 = vmatpush1.bf16.msra.mxu0 0
        %320 = vmatprep.subr.bf16.mxu0 0
        %321 = vmatpush1.bf16.msra.mxu0 0
        %322 = vmatprep.subr.bf16.mxu0 0
        %323 = vmatpush1.bf16.msra.mxu0 0
        %324 = vmatprep.subr.bf16.mxu0 0
        %325 = vmatpush1.bf16.msra.mxu0 0
        %326 = vmatprep.subr.bf16.mxu0 0
        %327 = vmatpush1.bf16.msra.mxu0 0
        %328 = vmatprep.subr.bf16.mxu0 %v247
        %329 = vmatpush1.bf16.msra.mxu0 %v244
        %330 = vmatprep.subr.bf16.mxu0 0
        %331 = vmatpush2.bf16.msra.mxu0 0
        %332 = vmatprep.subr.bf16.mxu0 0
        %333 = vmatpush2.bf16.msra.mxu0 0
        %334 = vmatprep.subr.bf16.mxu0 0
        %335 = vmatpush2.bf16.msra.mxu0 0
        %336 = vmatprep.subr.bf16.mxu0 0
        %337 = vmatpush2.bf16.msra.mxu0 0
        %338 = vmatprep.subr.bf16.mxu0 0
        %339 = vmatpush2.bf16.msra.mxu0 0
        %340 = vmatprep.subr.bf16.mxu0 0
        %341 = vmatpush2.bf16.msra.mxu0 0
        %342 = vmatprep.subr.bf16.mxu0 0
        %343 = vmatpush2.bf16.msra.mxu0 0
        %344 = vmatprep.subr.bf16.mxu0 0
        %345 = vmatpush2.bf16.msra.mxu0 0
        %346 = vmatprep.mubr.bf16.mxu0 0
        %347 = vmatmul.mubr.bf16.gmra.mxu0 %v228
        %v348 = vpop.f32.mrf.mxu0
        %v349 = vadd.f32 0.0, %v348
        %v350 = vpop.f32.mrf.mxu0
        %v351 = vadd.f32 0.0, %v350
        %v352 = vpop.f32.mrf.mxu0
        %v353 = vadd.f32 0.0, %v352
        %v354 = vpop.f32.mrf.mxu0
        %v355 = vadd.f32 0.0, %v354
        %356 = vmatprep.mubr.bf16.mxu0 0
        %357 = vmatmul.mubr.bf16.gmra.mxu0 %v231
        %v358 = vpop.f32.mrf.mxu0
        %v359 = vadd.f32 0.0, %v358
        %v360 = vpop.f32.mrf.mxu0
        %v361 = vadd.f32 0.0, %v360
        %v362 = vpop.f32.mrf.mxu0
        %v363 = vadd.f32 0.0, %v362
        %v364 = vpop.f32.mrf.mxu0
        %v365 = vadd.f32 0.0, %v364
        %366 = vdwg.mxu0
        %367 = vmatprep.subr.bf16.mxu0 0
        %368 = vmatpush1.bf16.msra.mxu0 0
        %369 = vmatprep.subr.bf16.mxu0 0
        %370 = vmatpush1.bf16.msra.mxu0 0
        %371 = vmatprep.subr.bf16.mxu0 0
        %372 = vmatpush1.bf16.msra.mxu0 0
        %373 = vmatprep.subr.bf16.mxu0 0
        %374 = vmatpush1.bf16.msra.mxu0 0
        %375 = vmatprep.subr.bf16.mxu0 0
        %376 = vmatpush1.bf16.msra.mxu0 0
        %377 = vmatprep.subr.bf16.mxu0 0
        %378 = vmatpush1.bf16.msra.mxu0 0
        %379 = vmatprep.subr.bf16.mxu0 0
        %380 = vmatpush1.bf16.msra.mxu0 0
        %381 = vmatprep.subr.bf16.mxu0 %v253
        %382 = vmatpush1.bf16.msra.mxu0 %v250
        %383 = vmatprep.subr.bf16.mxu0 0
        %384 = vmatpush2.bf16.msra.mxu0 0
        %385 = vmatprep.subr.bf16.mxu0 0
        %386 = vmatpush2.bf16.msra.mxu0 0
        %387 = vmatprep.subr.bf16.mxu0 0
        %388 = vmatpush2.bf16.msra.mxu0 0
        %389 = vmatprep.subr.bf16.mxu0 0
        %390 = vmatpush2.bf16.msra.mxu0 0
        %391 = vmatprep.subr.bf16.mxu0 0
        %392 = vmatpush2.bf16.msra.mxu0 0
        %393 = vmatprep.subr.bf16.mxu0 0
        %394 = vmatpush2.bf16.msra.mxu0 0
        %395 = vmatprep.subr.bf16.mxu0 0
        %396 = vmatpush2.bf16.msra.mxu0 0
        %397 = vmatprep.subr.bf16.mxu0 0
        %398 = vmatpush2.bf16.msra.mxu0 0
        %399 = vmatprep.mubr.bf16.mxu0 0
        %400 = vmatmul.mubr.bf16.gmra.mxu0 %v228
        %v401 = vpop.f32.mrf.mxu0
        %v402 = vadd.f32 0.0, %v401
        %v403 = vpop.f32.mrf.mxu0
        %v404 = vadd.f32 0.0, %v403
        %v405 = vpop.f32.mrf.mxu0
        %v406 = vadd.f32 0.0, %v405
        %v407 = vpop.f32.mrf.mxu0
        %v408 = vadd.f32 0.0, %v407
        %409 = vmatprep.mubr.bf16.mxu0 0
        %410 = vmatmul.mubr.bf16.gmra.mxu0 %v231
        %v411 = vpop.f32.mrf.mxu0
        %v412 = vadd.f32 0.0, %v411
        %v413 = vpop.f32.mrf.mxu0
        %v414 = vadd.f32 0.0, %v413
        %v415 = vpop.f32.mrf.mxu0
        %v416 = vadd.f32 0.0, %v415
        %v417 = vpop.f32.mrf.mxu0
        %v418 = vadd.f32 0.0, %v417
        %419 = vdwg.mxu0
        %420 = vmatprep.subr.bf16.mxu0 0
        %421 = vmatpush1.bf16.msra.mxu0 0
        %422 = vmatprep.subr.bf16.mxu0 0
        %423 = vmatpush1.bf16.msra.mxu0 0
        %424 = vmatprep.subr.bf16.mxu0 0
        %425 = vmatpush1.bf16.msra.mxu0 0
        %426 = vmatprep.subr.bf16.mxu0 0
        %427 = vmatpush1.bf16.msra.mxu0 0
        %428 = vmatprep.subr.bf16.mxu0 0
        %429 = vmatpush1.bf16.msra.mxu0 0
        %430 = vmatprep.subr.bf16.mxu0 0
        %431 = vmatpush1.bf16.msra.mxu0 0
        %432 = vmatprep.subr.bf16.mxu0 0
        %433 = vmatpush1.bf16.msra.mxu0 0
        %434 = vmatprep.subr.bf16.mxu0 %v259
        %435 = vmatpush1.bf16.msra.mxu0 %v256
        %436 = vmatprep.subr.bf16.mxu0 0
        %437 = vmatpush2.bf16.msra.mxu0 0
        %438 = vmatprep.subr.bf16.mxu0 0
        %439 = vmatpush2.bf16.msra.mxu0 0
        %440 = vmatprep.subr.bf16.mxu0 0
        %441 = vmatpush2.bf16.msra.mxu0 0
        %442 = vmatprep.subr.bf16.mxu0 0
        %443 = vmatpush2.bf16.msra.mxu0 0
        %444 = vmatprep.subr.bf16.mxu0 0
        %445 = vmatpush2.bf16.msra.mxu0 0
        %446 = vmatprep.subr.bf16.mxu0 0
        %447 = vmatpush2.bf16.msra.mxu0 0
        %448 = vmatprep.subr.bf16.mxu0 0
        %449 = vmatpush2.bf16.msra.mxu0 0
        %450 = vmatprep.subr.bf16.mxu0 0
        %451 = vmatpush2.bf16.msra.mxu0 0
        %452 = vmatprep.mubr.bf16.mxu0 0
        %453 = vmatmul.mubr.bf16.gmra.mxu0 %v228
        %v454 = vpop.f32.mrf.mxu0
        %v455 = vadd.f32 0.0, %v454
        %v456 = vpop.f32.mrf.mxu0
        %v457 = vadd.f32 0.0, %v456
        %v458 = vpop.f32.mrf.mxu0
        %v459 = vadd.f32 0.0, %v458
        %v460 = vpop.f32.mrf.mxu0
        %v461 = vadd.f32 0.0, %v460
        %462 = vmatprep.mubr.bf16.mxu0 0
        %463 = vmatmul.mubr.bf16.gmra.mxu0 %v231
        %v464 = vpop.f32.mrf.mxu0
        %v465 = vadd.f32 0.0, %v464
        %v466 = vpop.f32.mrf.mxu0
        %v467 = vadd.f32 0.0, %v466
        %v468 = vpop.f32.mrf.mxu0
        %v469 = vadd.f32 0.0, %v468
        %v470 = vpop.f32.mrf.mxu0
        %v471 = vadd.f32 0.0, %v470
        %472 = vdwg.mxu0
        %v477 = vunpack.c.l.b16 %v169
        %v478 = vunpack.c.l.b16 %v170
        %v479 = vunpack.c.l.b16 %v171
        %v480 = vunpack.c.l.b16 %v172
        %v481 = vpack.c.b16 %v478, %v477
        %v482 = vpack.c.b16 %v480, %v479
        %v485 = vcombine.high %v167, %v167
        %v487 = vunpack.c.l.s4 1983009808
        %v488 = vunpack.c.0.s8 %v487
        %v489 = vlaneseq
        %v490 = vshrl.u32 %v489, 7
        %v491 = vsub.s32 %v488, %v490
        %v492 = vrot.slane %v167, %v491
        %v494 = vunpack.c.l.s4 1983009808
        %v495 = vunpack.c.0.s8 %v494
        %v496 = vlaneseq
        %v497 = vshrl.u32 %v496, 7
        %v498 = vsub.s32 %v495, %v497
        %v499 = vrot.slane %v485, %v498
        %v500 = vcombine.high %v492, %v492
        %v501 = vcombine.high %v499, %v499
        %v502 = vcombine.high %v168, %v168
        %v504 = vunpack.c.l.s4 1983009808
        %v505 = vunpack.c.0.s8 %v504
        %v506 = vlaneseq
        %v507 = vshrl.u32 %v506, 7
        %v508 = vsub.s32 %v505, %v507
        %v509 = vrot.slane %v168, %v508
        %v511 = vunpack.c.l.s4 1983009808
        %v512 = vunpack.c.0.s8 %v511
        %v513 = vlaneseq
        %v514 = vshrl.u32 %v513, 7
        %v515 = vsub.s32 %v512, %v514
        %v516 = vrot.slane %v502, %v515
        %v517 = vcombine.high %v509, %v509
        %v518 = vcombine.high %v516, %v516
        %v520 = vsel %vm226, %v481, 0
        %v523 = vsel %vm226, %v482, 0
        %v526 = vand.u32 %v492, %v236
        %v529 = vand.u32 %v500, %v236
        %v532 = vand.u32 %v499, %v236
        %v535 = vand.u32 %v501, %v236
        %v538 = vand.u32 %v509, %v236
        %v541 = vand.u32 %v517, %v236
        %v544 = vand.u32 %v516, %v236
        %v547 = vand.u32 %v518, %v236
        %549 = vmatprep.subr.bf16.mxu0 0
        %550 = vmatpush1.bf16.msra.mxu0 0
        %551 = vmatprep.subr.bf16.mxu0 0
        %552 = vmatpush1.bf16.msra.mxu0 0
        %553 = vmatprep.subr.bf16.mxu0 0
        %554 = vmatpush1.bf16.msra.mxu0 0
        %555 = vmatprep.subr.bf16.mxu0 0
        %556 = vmatpush1.bf16.msra.mxu0 0
        %557 = vmatprep.subr.bf16.mxu0 0
        %558 = vmatpush1.bf16.msra.mxu0 0
        %559 = vmatprep.subr.bf16.mxu0 0
        %560 = vmatpush1.bf16.msra.mxu0 0
        %561 = vmatprep.subr.bf16.mxu0 0
        %562 = vmatpush1.bf16.msra.mxu0 0
        %563 = vmatprep.subr.bf16.mxu0 %v529
        %564 = vmatpush1.bf16.msra.mxu0 %v526
        %565 = vmatprep.subr.bf16.mxu0 0
        %566 = vmatpush2.bf16.msra.mxu0 0
        %567 = vmatprep.subr.bf16.mxu0 0
        %568 = vmatpush2.bf16.msra.mxu0 0
        %569 = vmatprep.subr.bf16.mxu0 0
        %570 = vmatpush2.bf16.msra.mxu0 0
        %571 = vmatprep.subr.bf16.mxu0 0
        %572 = vmatpush2.bf16.msra.mxu0 0
        %573 = vmatprep.subr.bf16.mxu0 0
        %574 = vmatpush2.bf16.msra.mxu0 0
        %575 = vmatprep.subr.bf16.mxu0 0
        %576 = vmatpush2.bf16.msra.mxu0 0
        %577 = vmatprep.subr.bf16.mxu0 0
        %578 = vmatpush2.bf16.msra.mxu0 0
        %579 = vmatprep.subr.bf16.mxu0 0
        %580 = vmatpush2.bf16.msra.mxu0 0
        %581 = vmatprep.mubr.bf16.mxu0 0
        %582 = vmatmul.mubr.bf16.gmra.mxu0 %v520
        %v583 = vpop.f32.mrf.mxu0
        %v584 = vadd.f32 %v296, %v583
        %v585 = vpop.f32.mrf.mxu0
        %v586 = vadd.f32 %v298, %v585
        %v587 = vpop.f32.mrf.mxu0
        %v588 = vadd.f32 %v300, %v587
        %v589 = vpop.f32.mrf.mxu0
        %v590 = vadd.f32 %v302, %v589
        %591 = vmatprep.mubr.bf16.mxu0 0
        %592 = vmatmul.mubr.bf16.gmra.mxu0 %v523
        %v593 = vpop.f32.mrf.mxu0
        %v594 = vadd.f32 %v306, %v593
        %v595 = vpop.f32.mrf.mxu0
        %v596 = vadd.f32 %v308, %v595
        %v597 = vpop.f32.mrf.mxu0
        %v598 = vadd.f32 %v310, %v597
        %v599 = vpop.f32.mrf.mxu0
        %v600 = vadd.f32 %v312, %v599
        %601 = vdwg.mxu0
        %602 = vmatprep.subr.bf16.mxu0 0
        %603 = vmatpush1.bf16.msra.mxu0 0
        %604 = vmatprep.subr.bf16.mxu0 0
        %605 = vmatpush1.bf16.msra.mxu0 0
        %606 = vmatprep.subr.bf16.mxu0 0
        %607 = vmatpush1.bf16.msra.mxu0 0
        %608 = vmatprep.subr.bf16.mxu0 0
        %609 = vmatpush1.bf16.msra.mxu0 0
        %610 = vmatprep.subr.bf16.mxu0 0
        %611 = vmatpush1.bf16.msra.mxu0 0
        %612 = vmatprep.subr.bf16.mxu0 0
        %613 = vmatpush1.bf16.msra.mxu0 0
        %614 = vmatprep.subr.bf16.mxu0 0
        %615 = vmatpush1.bf16.msra.mxu0 0
        %616 = vmatprep.subr.bf16.mxu0 %v535
        %617 = vmatpush1.bf16.msra.mxu0 %v532
        %618 = vmatprep.subr.bf16.mxu0 0
        %619 = vmatpush2.bf16.msra.mxu0 0
        %620 = vmatprep.subr.bf16.mxu0 0
        %621 = vmatpush2.bf16.msra.mxu0 0
        %622 = vmatprep.subr.bf16.mxu0 0
        %623 = vmatpush2.bf16.msra.mxu0 0
        %624 = vmatprep.subr.bf16.mxu0 0
        %625 = vmatpush2.bf16.msra.mxu0 0
        %626 = vmatprep.subr.bf16.mxu0 0
        %627 = vmatpush2.bf16.msra.mxu0 0
        %628 = vmatprep.subr.bf16.mxu0 0
        %629 = vmatpush2.bf16.msra.mxu0 0
        %630 = vmatprep.subr.bf16.mxu0 0
        %631 = vmatpush2.bf16.msra.mxu0 0
        %632 = vmatprep.subr.bf16.mxu0 0
        %633 = vmatpush2.bf16.msra.mxu0 0
        %634 = vmatprep.mubr.bf16.mxu0 0
        %635 = vmatmul.mubr.bf16.gmra.mxu0 %v520
        %v636 = vpop.f32.mrf.mxu0
        %v637 = vadd.f32 %v349, %v636
        %v638 = vpop.f32.mrf.mxu0
        %v639 = vadd.f32 %v351, %v638
        %v640 = vpop.f32.mrf.mxu0
        %v641 = vadd.f32 %v353, %v640
        %v642 = vpop.f32.mrf.mxu0
        %v643 = vadd.f32 %v355, %v642
        %644 = vmatprep.mubr.bf16.mxu0 0
        %645 = vmatmul.mubr.bf16.gmra.mxu0 %v523
        %v646 = vpop.f32.mrf.mxu0
        %v647 = vadd.f32 %v359, %v646
        %v648 = vpop.f32.mrf.mxu0
        %v649 = vadd.f32 %v361, %v648
        %v650 = vpop.f32.mrf.mxu0
        %v651 = vadd.f32 %v363, %v650
        %v652 = vpop.f32.mrf.mxu0
        %v653 = vadd.f32 %v365, %v652
        %654 = vdwg.mxu0
        %655 = vmatprep.subr.bf16.mxu0 0
        %656 = vmatpush1.bf16.msra.mxu0 0
        %657 = vmatprep.subr.bf16.mxu0 0
        %658 = vmatpush1.bf16.msra.mxu0 0
        %659 = vmatprep.subr.bf16.mxu0 0
        %660 = vmatpush1.bf16.msra.mxu0 0
        %661 = vmatprep.subr.bf16.mxu0 0
        %662 = vmatpush1.bf16.msra.mxu0 0
        %663 = vmatprep.subr.bf16.mxu0 0
        %664 = vmatpush1.bf16.msra.mxu0 0
        %665 = vmatprep.subr.bf16.mxu0 0
        %666 = vmatpush1.bf16.msra.mxu0 0
        %667 = vmatprep.subr.bf16.mxu0 0
        %668 = vmatpush1.bf16.msra.mxu0 0
        %669 = vmatprep.subr.bf16.mxu0 %v541
        %670 = vmatpush1.bf16.msra.mxu0 %v538
        %671 = vmatprep.subr.bf16.mxu0 0
        %672 = vmatpush2.bf16.msra.mxu0 0
        %673 = vmatprep.subr.bf16.mxu0 0
        %674 = vmatpush2.bf16.msra.mxu0 0
        %675 = vmatprep.subr.bf16.mxu0 0
        %676 = vmatpush2.bf16.msra.mxu0 0
        %677 = vmatprep.subr.bf16.mxu0 0
        %678 = vmatpush2.bf16.msra.mxu0 0
        %679 = vmatprep.subr.bf16.mxu0 0
        %680 = vmatpush2.bf16.msra.mxu0 0
        %681 = vmatprep.subr.bf16.mxu0 0
        %682 = vmatpush2.bf16.msra.mxu0 0
        %683 = vmatprep.subr.bf16.mxu0 0
        %684 = vmatpush2.bf16.msra.mxu0 0
        %685 = vmatprep.subr.bf16.mxu0 0
        %686 = vmatpush2.bf16.msra.mxu0 0
        %687 = vmatprep.mubr.bf16.mxu0 0
        %688 = vmatmul.mubr.bf16.gmra.mxu0 %v520
        %v689 = vpop.f32.mrf.mxu0
        %v690 = vadd.f32 %v402, %v689
        %v691 = vpop.f32.mrf.mxu0
        %v692 = vadd.f32 %v404, %v691
        %v693 = vpop.f32.mrf.mxu0
        %v694 = vadd.f32 %v406, %v693
        %v695 = vpop.f32.mrf.mxu0
        %v696 = vadd.f32 %v408, %v695
        %697 = vmatprep.mubr.bf16.mxu0 0
        %698 = vmatmul.mubr.bf16.gmra.mxu0 %v523
        %v699 = vpop.f32.mrf.mxu0
        %v700 = vadd.f32 %v412, %v699
        %v701 = vpop.f32.mrf.mxu0
        %v702 = vadd.f32 %v414, %v701
        %v703 = vpop.f32.mrf.mxu0
        %v704 = vadd.f32 %v416, %v703
        %v705 = vpop.f32.mrf.mxu0
        %v706 = vadd.f32 %v418, %v705
        %707 = vdwg.mxu0
        %708 = vmatprep.subr.bf16.mxu0 0
        %709 = vmatpush1.bf16.msra.mxu0 0
        %710 = vmatprep.subr.bf16.mxu0 0
        %711 = vmatpush1.bf16.msra.mxu0 0
        %712 = vmatprep.subr.bf16.mxu0 0
        %713 = vmatpush1.bf16.msra.mxu0 0
        %714 = vmatprep.subr.bf16.mxu0 0
        %715 = vmatpush1.bf16.msra.mxu0 0
        %716 = vmatprep.subr.bf16.mxu0 0
        %717 = vmatpush1.bf16.msra.mxu0 0
        %718 = vmatprep.subr.bf16.mxu0 0
        %719 = vmatpush1.bf16.msra.mxu0 0
        %720 = vmatprep.subr.bf16.mxu0 0
        %721 = vmatpush1.bf16.msra.mxu0 0
        %722 = vmatprep.subr.bf16.mxu0 %v547
        %723 = vmatpush1.bf16.msra.mxu0 %v544
        %724 = vmatprep.subr.bf16.mxu0 0
        %725 = vmatpush2.bf16.msra.mxu0 0
        %726 = vmatprep.subr.bf16.mxu0 0
        %727 = vmatpush2.bf16.msra.mxu0 0
        %728 = vmatprep.subr.bf16.mxu0 0
        %729 = vmatpush2.bf16.msra.mxu0 0
        %730 = vmatprep.subr.bf16.mxu0 0
        %731 = vmatpush2.bf16.msra.mxu0 0
        %732 = vmatprep.subr.bf16.mxu0 0
        %733 = vmatpush2.bf16.msra.mxu0 0
        %734 = vmatprep.subr.bf16.mxu0 0
        %735 = vmatpush2.bf16.msra.mxu0 0
        %736 = vmatprep.subr.bf16.mxu0 0
        %737 = vmatpush2.bf16.msra.mxu0 0
        %738 = vmatprep.subr.bf16.mxu0 0
        %739 = vmatpush2.bf16.msra.mxu0 0
        %740 = vmatprep.mubr.bf16.mxu0 0
        %741 = vmatmul.mubr.bf16.gmra.mxu0 %v520
        %v742 = vpop.f32.mrf.mxu0
        %v743 = vadd.f32 %v455, %v742
        %v744 = vpop.f32.mrf.mxu0
        %v745 = vadd.f32 %v457, %v744
        %v746 = vpop.f32.mrf.mxu0
        %v747 = vadd.f32 %v459, %v746
        %v748 = vpop.f32.mrf.mxu0
        %v749 = vadd.f32 %v461, %v748
        %750 = vmatprep.mubr.bf16.mxu0 0
        %751 = vmatmul.mubr.bf16.gmra.mxu0 %v523
        %v752 = vpop.f32.mrf.mxu0
        %v753 = vadd.f32 %v465, %v752
        %v754 = vpop.f32.mrf.mxu0
        %v755 = vadd.f32 %v467, %v754
        %v756 = vpop.f32.mrf.mxu0
        %v757 = vadd.f32 %v469, %v756
        %v758 = vpop.f32.mrf.mxu0
        %v759 = vadd.f32 %v471, %v758
        %760 = vdwg.mxu0
        %v761 = vld [vmem:[%s164 + $0x4] sm:$0xff]
        %v762 = vld [vmem:[%s164 + $0xc] sm:$0xff]
        %s763 = scalar_lea.vmem %s1, 32
        %v764 = vld [vmem:[%s763] sm:$0xf]
        %v765 = vld [vmem:[%s763 + $0x4] sm:$0xf]
        %v766 = vld [vmem:[%s763 + $0x8] sm:$0xf]
        %v767 = vld [vmem:[%s763 + $0xc] sm:$0xf]
        %v772 = vunpack.c.l.b16 %v764
        %v773 = vunpack.c.l.b16 %v765
        %v774 = vunpack.c.l.b16 %v766
        %v775 = vunpack.c.l.b16 %v767
        %v776 = vpack.c.b16 %v773, %v772
        %v777 = vpack.c.b16 %v775, %v774
        %v780 = vcombine.high %v761, %v761
        %v782 = vunpack.c.l.s4 1983009808
        %v783 = vunpack.c.0.s8 %v782
        %v784 = vlaneseq
        %v785 = vshrl.u32 %v784, 7
        %v786 = vsub.s32 %v783, %v785
        %v787 = vrot.slane %v761, %v786
        %v789 = vunpack.c.l.s4 1983009808
        %v790 = vunpack.c.0.s8 %v789
        %v791 = vlaneseq
        %v792 = vshrl.u32 %v791, 7
        %v793 = vsub.s32 %v790, %v792
        %v794 = vrot.slane %v780, %v793
        %v795 = vcombine.high %v787, %v787
        %v796 = vcombine.high %v794, %v794
        %v797 = vcombine.high %v762, %v762
        %v799 = vunpack.c.l.s4 1983009808
        %v800 = vunpack.c.0.s8 %v799
        %v801 = vlaneseq
        %v802 = vshrl.u32 %v801, 7
        %v803 = vsub.s32 %v800, %v802
        %v804 = vrot.slane %v762, %v803
        %v806 = vunpack.c.l.s4 1983009808
        %v807 = vunpack.c.0.s8 %v806
        %v808 = vlaneseq
        %v809 = vshrl.u32 %v808, 7
        %v810 = vsub.s32 %v807, %v809
        %v811 = vrot.slane %v797, %v810
        %v812 = vcombine.high %v804, %v804
        %v813 = vcombine.high %v811, %v811
        %v815 = vsel %vm226, %v776, 0
        %v818 = vsel %vm226, %v777, 0
        %v821 = vand.u32 %v787, %v236
        %v824 = vand.u32 %v795, %v236
        %v827 = vand.u32 %v794, %v236
        %v830 = vand.u32 %v796, %v236
        %v833 = vand.u32 %v804, %v236
        %v836 = vand.u32 %v812, %v236
        %v839 = vand.u32 %v811, %v236
        %v842 = vand.u32 %v813, %v236
        %844 = vmatprep.subr.bf16.mxu0 0
        %845 = vmatpush1.bf16.msra.mxu0 0
        %846 = vmatprep.subr.bf16.mxu0 0
        %847 = vmatpush1.bf16.msra.mxu0 0
        %848 = vmatprep.subr.bf16.mxu0 0
        %849 = vmatpush1.bf16.msra.mxu0 0
        %850 = vmatprep.subr.bf16.mxu0 0
        %851 = vmatpush1.bf16.msra.mxu0 0
        %852 = vmatprep.subr.bf16.mxu0 0
        %853 = vmatpush1.bf16.msra.mxu0 0
        %854 = vmatprep.subr.bf16.mxu0 0
        %855 = vmatpush1.bf16.msra.mxu0 0
        %856 = vmatprep.subr.bf16.mxu0 0
        %857 = vmatpush1.bf16.msra.mxu0 0
        %858 = vmatprep.subr.bf16.mxu0 %v824
        %859 = vmatpush1.bf16.msra.mxu0 %v821
        %860 = vmatprep.subr.bf16.mxu0 0
        %861 = vmatpush2.bf16.msra.mxu0 0
        %862 = vmatprep.subr.bf16.mxu0 0
        %863 = vmatpush2.bf16.msra.mxu0 0
        %864 = vmatprep.subr.bf16.mxu0 0
        %865 = vmatpush2.bf16.msra.mxu0 0
        %866 = vmatprep.subr.bf16.mxu0 0
        %867 = vmatpush2.bf16.msra.mxu0 0
        %868 = vmatprep.subr.bf16.mxu0 0
        %869 = vmatpush2.bf16.msra.mxu0 0
        %870 = vmatprep.subr.bf16.mxu0 0
        %871 = vmatpush2.bf16.msra.mxu0 0
        %872 = vmatprep.subr.bf16.mxu0 0
        %873 = vmatpush2.bf16.msra.mxu0 0
        %874 = vmatprep.subr.bf16.mxu0 0
        %875 = vmatpush2.bf16.msra.mxu0 0
        %876 = vmatprep.mubr.bf16.mxu0 0
        %877 = vmatmul.mubr.bf16.gmra.mxu0 %v815
        %v878 = vpop.f32.mrf.mxu0
        %v879 = vadd.f32 0.0, %v878
        %v880 = vpop.f32.mrf.mxu0
        %v881 = vadd.f32 0.0, %v880
        %v882 = vpop.f32.mrf.mxu0
        %v883 = vadd.f32 0.0, %v882
        %v884 = vpop.f32.mrf.mxu0
        %v885 = vadd.f32 0.0, %v884
        %886 = vmatprep.mubr.bf16.mxu0 0
        %887 = vmatmul.mubr.bf16.gmra.mxu0 %v818
        %v888 = vpop.f32.mrf.mxu0
        %v889 = vadd.f32 0.0, %v888
        %v890 = vpop.f32.mrf.mxu0
        %v891 = vadd.f32 0.0, %v890
        %v892 = vpop.f32.mrf.mxu0
        %v893 = vadd.f32 0.0, %v892
        %v894 = vpop.f32.mrf.mxu0
        %v895 = vadd.f32 0.0, %v894
        %896 = vdwg.mxu0
        %897 = vmatprep.subr.bf16.mxu0 0
        %898 = vmatpush1.bf16.msra.mxu0 0
        %899 = vmatprep.subr.bf16.mxu0 0
        %900 = vmatpush1.bf16.msra.mxu0 0
        %901 = vmatprep.subr.bf16.mxu0 0
        %902 = vmatpush1.bf16.msra.mxu0 0
        %903 = vmatprep.subr.bf16.mxu0 0
        %904 = vmatpush1.bf16.msra.mxu0 0
        %905 = vmatprep.subr.bf16.mxu0 0
        %906 = vmatpush1.bf16.msra.mxu0 0
        %907 = vmatprep.subr.bf16.mxu0 0
        %908 = vmatpush1.bf16.msra.mxu0 0
        %909 = vmatprep.subr.bf16.mxu0 0
        %910 = vmatpush1.bf16.msra.mxu0 0
        %911 = vmatprep.subr.bf16.mxu0 %v830
        %912 = vmatpush1.bf16.msra.mxu0 %v827
        %913 = vmatprep.subr.bf16.mxu0 0
        %914 = vmatpush2.bf16.msra.mxu0 0
        %915 = vmatprep.subr.bf16.mxu0 0
        %916 = vmatpush2.bf16.msra.mxu0 0
        %917 = vmatprep.subr.bf16.mxu0 0
        %918 = vmatpush2.bf16.msra.mxu0 0
        %919 = vmatprep.subr.bf16.mxu0 0
        %920 = vmatpush2.bf16.msra.mxu0 0
        %921 = vmatprep.subr.bf16.mxu0 0
        %922 = vmatpush2.bf16.msra.mxu0 0
        %923 = vmatprep.subr.bf16.mxu0 0
        %924 = vmatpush2.bf16.msra.mxu0 0
        %925 = vmatprep.subr.bf16.mxu0 0
        %926 = vmatpush2.bf16.msra.mxu0 0
        %927 = vmatprep.subr.bf16.mxu0 0
        %928 = vmatpush2.bf16.msra.mxu0 0
        %929 = vmatprep.mubr.bf16.mxu0 0
        %930 = vmatmul.mubr.bf16.gmra.mxu0 %v815
        %v931 = vpop.f32.mrf.mxu0
        %v932 = vadd.f32 0.0, %v931
        %v933 = vpop.f32.mrf.mxu0
        %v934 = vadd.f32 0.0, %v933
        %v935 = vpop.f32.mrf.mxu0
        %v936 = vadd.f32 0.0, %v935
        %v937 = vpop.f32.mrf.mxu0
        %v938 = vadd.f32 0.0, %v937
        %939 = vmatprep.mubr.bf16.mxu0 0
        %940 = vmatmul.mubr.bf16.gmra.mxu0 %v818
        %v941 = vpop.f32.mrf.mxu0
        %v942 = vadd.f32 0.0, %v941
        %v943 = vpop.f32.mrf.mxu0
        %v944 = vadd.f32 0.0, %v943
        %v945 = vpop.f32.mrf.mxu0
        %v946 = vadd.f32 0.0, %v945
        %v947 = vpop.f32.mrf.mxu0
        %v948 = vadd.f32 0.0, %v947
        %949 = vdwg.mxu0
        %950 = vmatprep.subr.bf16.mxu0 0
        %951 = vmatpush1.bf16.msra.mxu0 0
        %952 = vmatprep.subr.bf16.mxu0 0
        %953 = vmatpush1.bf16.msra.mxu0 0
        %954 = vmatprep.subr.bf16.mxu0 0
        %955 = vmatpush1.bf16.msra.mxu0 0
        %956 = vmatprep.subr.bf16.mxu0 0
        %957 = vmatpush1.bf16.msra.mxu0 0
        %958 = vmatprep.subr.bf16.mxu0 0
        %959 = vmatpush1.bf16.msra.mxu0 0
        %960 = vmatprep.subr.bf16.mxu0 0
        %961 = vmatpush1.bf16.msra.mxu0 0
        %962 = vmatprep.subr.bf16.mxu0 0
        %963 = vmatpush1.bf16.msra.mxu0 0
        %964 = vmatprep.subr.bf16.mxu0 %v836
        %965 = vmatpush1.bf16.msra.mxu0 %v833
        %966 = vmatprep.subr.bf16.mxu0 0
        %967 = vmatpush2.bf16.msra.mxu0 0
        %968 = vmatprep.subr.bf16.mxu0 0
        %969 = vmatpush2.bf16.msra.mxu0 0
        %970 = vmatprep.subr.bf16.mxu0 0
        %971 = vmatpush2.bf16.msra.mxu0 0
        %972 = vmatprep.subr.bf16.mxu0 0
        %973 = vmatpush2.bf16.msra.mxu0 0
        %974 = vmatprep.subr.bf16.mxu0 0
        %975 = vmatpush2.bf16.msra.mxu0 0
        %976 = vmatprep.subr.bf16.mxu0 0
        %977 = vmatpush2.bf16.msra.mxu0 0
        %978 = vmatprep.subr.bf16.mxu0 0
        %979 = vmatpush2.bf16.msra.mxu0 0
        %980 = vmatprep.subr.bf16.mxu0 0
        %981 = vmatpush2.bf16.msra.mxu0 0
        %982 = vmatprep.mubr.bf16.mxu0 0
        %983 = vmatmul.mubr.bf16.gmra.mxu0 %v815
        %v984 = vpop.f32.mrf.mxu0
        %v985 = vadd.f32 0.0, %v984
        %v986 = vpop.f32.mrf.mxu0
        %v987 = vadd.f32 0.0, %v986
        %v988 = vpop.f32.mrf.mxu0
        %v989 = vadd.f32 0.0, %v988
        %v990 = vpop.f32.mrf.mxu0
        %v991 = vadd.f32 0.0, %v990
        %992 = vmatprep.mubr.bf16.mxu0 0
        %993 = vmatmul.mubr.bf16.gmra.mxu0 %v818
        %v994 = vpop.f32.mrf.mxu0
        %v995 = vadd.f32 0.0, %v994
        %v996 = vpop.f32.mrf.mxu0
        %v997 = vadd.f32 0.0, %v996
        %v998 = vpop.f32.mrf.mxu0
        %v999 = vadd.f32 0.0, %v998
        %v1000 = vpop.f32.mrf.mxu0
        %v1001 = vadd.f32 0.0, %v1000
        %1002 = vdwg.mxu0
        %1003 = vmatprep.subr.bf16.mxu0 0
        %1004 = vmatpush1.bf16.msra.mxu0 0
        %1005 = vmatprep.subr.bf16.mxu0 0
        %1006 = vmatpush1.bf16.msra.mxu0 0
        %1007 = vmatprep.subr.bf16.mxu0 0
        %1008 = vmatpush1.bf16.msra.mxu0 0
        %1009 = vmatprep.subr.bf16.mxu0 0
        %1010 = vmatpush1.bf16.msra.mxu0 0
        %1011 = vmatprep.subr.bf16.mxu0 0
        %1012 = vmatpush1.bf16.msra.mxu0 0
        %1013 = vmatprep.subr.bf16.mxu0 0
        %1014 = vmatpush1.bf16.msra.mxu0 0
        %1015 = vmatprep.subr.bf16.mxu0 0
        %1016 = vmatpush1.bf16.msra.mxu0 0
        %1017 = vmatprep.subr.bf16.mxu0 %v842
        %1018 = vmatpush1.bf16.msra.mxu0 %v839
        %1019 = vmatprep.subr.bf16.mxu0 0
        %1020 = vmatpush2.bf16.msra.mxu0 0
        %1021 = vmatprep.subr.bf16.mxu0 0
        %1022 = vmatpush2.bf16.msra.mxu0 0
        %1023 = vmatprep.subr.bf16.mxu0 0
        %1024 = vmatpush2.bf16.msra.mxu0 0
        %1025 = vmatprep.subr.bf16.mxu0 0
        %1026 = vmatpush2.bf16.msra.mxu0 0
        %1027 = vmatprep.subr.bf16.mxu0 0
        %1028 = vmatpush2.bf16.msra.mxu0 0
        %1029 = vmatprep.subr.bf16.mxu0 0
        %1030 = vmatpush2.bf16.msra.mxu0 0
        %1031 = vmatprep.subr.bf16.mxu0 0
        %1032 = vmatpush2.bf16.msra.mxu0 0
        %1033 = vmatprep.subr.bf16.mxu0 0
        %1034 = vmatpush2.bf16.msra.mxu0 0
        %1035 = vmatprep.mubr.bf16.mxu0 0
        %1036 = vmatmul.mubr.bf16.gmra.mxu0 %v815
        %v1037 = vpop.f32.mrf.mxu0
        %v1038 = vadd.f32 0.0, %v1037
        %v1039 = vpop.f32.mrf.mxu0
        %v1040 = vadd.f32 0.0, %v1039
        %v1041 = vpop.f32.mrf.mxu0
        %v1042 = vadd.f32 0.0, %v1041
        %v1043 = vpop.f32.mrf.mxu0
        %v1044 = vadd.f32 0.0, %v1043
        %1045 = vmatprep.mubr.bf16.mxu0 0
        %1046 = vmatmul.mubr.bf16.gmra.mxu0 %v818
        %v1047 = vpop.f32.mrf.mxu0
        %v1048 = vadd.f32 0.0, %v1047
        %v1049 = vpop.f32.mrf.mxu0
        %v1050 = vadd.f32 0.0, %v1049
        %v1051 = vpop.f32.mrf.mxu0
        %v1052 = vadd.f32 0.0, %v1051
        %v1053 = vpop.f32.mrf.mxu0
        %v1054 = vadd.f32 0.0, %v1053
        %1055 = vdwg.mxu0
        %v1056 = vadd.f32 %v584, %v879
        %v1057 = vadd.f32 %v586, %v881
        %v1058 = vadd.f32 %v637, %v932
        %v1059 = vadd.f32 %v639, %v934
        %v1060 = vadd.f32 %v690, %v985
        %v1061 = vadd.f32 %v692, %v987
        %v1062 = vadd.f32 %v743, %v1038
        %v1063 = vadd.f32 %v745, %v1040
        %v1064 = vadd.f32 %v588, %v883
        %v1065 = vadd.f32 %v590, %v885
        %v1066 = vadd.f32 %v641, %v936
        %v1067 = vadd.f32 %v643, %v938
        %v1068 = vadd.f32 %v694, %v989
        %v1069 = vadd.f32 %v696, %v991
        %v1070 = vadd.f32 %v747, %v1042
        %v1071 = vadd.f32 %v749, %v1044
        %v1072 = vadd.f32 %v594, %v889
        %v1073 = vadd.f32 %v596, %v891
        %v1074 = vadd.f32 %v647, %v942
        %v1075 = vadd.f32 %v649, %v944
        %v1076 = vadd.f32 %v700, %v995
        %v1077 = vadd.f32 %v702, %v997
        %v1078 = vadd.f32 %v753, %v1048
        %v1079 = vadd.f32 %v755, %v1050
        %v1080 = vadd.f32 %v598, %v893
        %v1081 = vadd.f32 %v600, %v895
        %v1082 = vadd.f32 %v651, %v946
        %v1083 = vadd.f32 %v653, %v948
        %v1084 = vadd.f32 %v704, %v999
        %v1085 = vadd.f32 %v706, %v1001
        %v1086 = vadd.f32 %v757, %v1052
        %v1087 = vadd.f32 %v759, %v1054
        %v1088 = vld [vmem:[%s164 + $0x6] sm:$0xff]
        %v1089 = vld [vmem:[%s164 + $0xe] sm:$0xff]
        %s1090 = scalar_lea.vmem %s1, 48
        %v1091 = vld [vmem:[%s1090] sm:$0xf]
        %v1092 = vld [vmem:[%s1090 + $0x4] sm:$0xf]
        %v1093 = vld [vmem:[%s1090 + $0x8] sm:$0xf]
        %v1094 = vld [vmem:[%s1090 + $0xc] sm:$0xf]
        %v1099 = vunpack.c.l.b16 %v1091
        %v1100 = vunpack.c.l.b16 %v1092
        %v1101 = vunpack.c.l.b16 %v1093
        %v1102 = vunpack.c.l.b16 %v1094
        %v1103 = vpack.c.b16 %v1100, %v1099
        %v1104 = vpack.c.b16 %v1102, %v1101
        %v1107 = vcombine.high %v1088, %v1088
        %v1109 = vunpack.c.l.s4 1983009808
        %v1110 = vunpack.c.0.s8 %v1109
        %v1111 = vlaneseq
        %v1112 = vshrl.u32 %v1111, 7
        %v1113 = vsub.s32 %v1110, %v1112
        %v1114 = vrot.slane %v1088, %v1113
        %v1116 = vunpack.c.l.s4 1983009808
        %v1117 = vunpack.c.0.s8 %v1116
        %v1118 = vlaneseq
        %v1119 = vshrl.u32 %v1118, 7
        %v1120 = vsub.s32 %v1117, %v1119
        %v1121 = vrot.slane %v1107, %v1120
        %v1122 = vcombine.high %v1114, %v1114
        %v1123 = vcombine.high %v1121, %v1121
        %v1124 = vcombine.high %v1089, %v1089
        %v1126 = vunpack.c.l.s4 1983009808
        %v1127 = vunpack.c.0.s8 %v1126
        %v1128 = vlaneseq
        %v1129 = vshrl.u32 %v1128, 7
        %v1130 = vsub.s32 %v1127, %v1129
        %v1131 = vrot.slane %v1089, %v1130
        %v1133 = vunpack.c.l.s4 1983009808
        %v1134 = vunpack.c.0.s8 %v1133
        %v1135 = vlaneseq
        %v1136 = vshrl.u32 %v1135, 7
        %v1137 = vsub.s32 %v1134, %v1136
        %v1138 = vrot.slane %v1124, %v1137
        %v1139 = vcombine.high %v1131, %v1131
        %v1140 = vcombine.high %v1138, %v1138
        %v1142 = vsel %vm226, %v1103, 0
        %v1145 = vsel %vm226, %v1104, 0
        %v1148 = vand.u32 %v1114, %v236
        %v1151 = vand.u32 %v1122, %v236
        %v1154 = vand.u32 %v1121, %v236
        %v1157 = vand.u32 %v1123, %v236
        %v1160 = vand.u32 %v1131, %v236
        %v1163 = vand.u32 %v1139, %v236
        %v1166 = vand.u32 %v1138, %v236
        %v1169 = vand.u32 %v1140, %v236
        %1171 = vmatprep.subr.bf16.mxu0 0
        %1172 = vmatpush1.bf16.msra.mxu0 0
        %1173 = vmatprep.subr.bf16.mxu0 0
        %1174 = vmatpush1.bf16.msra.mxu0 0
        %1175 = vmatprep.subr.bf16.mxu0 0
        %1176 = vmatpush1.bf16.msra.mxu0 0
        %1177 = vmatprep.subr.bf16.mxu0 0
        %1178 = vmatpush1.bf16.msra.mxu0 0
        %1179 = vmatprep.subr.bf16.mxu0 0
        %1180 = vmatpush1.bf16.msra.mxu0 0
        %1181 = vmatprep.subr.bf16.mxu0 0
        %1182 = vmatpush1.bf16.msra.mxu0 0
        %1183 = vmatprep.subr.bf16.mxu0 0
        %1184 = vmatpush1.bf16.msra.mxu0 0
        %1185 = vmatprep.subr.bf16.mxu0 %v1151
        %1186 = vmatpush1.bf16.msra.mxu0 %v1148
        %1187 = vmatprep.subr.bf16.mxu0 0
        %1188 = vmatpush2.bf16.msra.mxu0 0
        %1189 = vmatprep.subr.bf16.mxu0 0
        %1190 = vmatpush2.bf16.msra.mxu0 0
        %1191 = vmatprep.subr.bf16.mxu0 0
        %1192 = vmatpush2.bf16.msra.mxu0 0
        %1193 = vmatprep.subr.bf16.mxu0 0
        %1194 = vmatpush2.bf16.msra.mxu0 0
        %1195 = vmatprep.subr.bf16.mxu0 0
        %1196 = vmatpush2.bf16.msra.mxu0 0
        %1197 = vmatprep.subr.bf16.mxu0 0
        %1198 = vmatpush2.bf16.msra.mxu0 0
        %1199 = vmatprep.subr.bf16.mxu0 0
        %1200 = vmatpush2.bf16.msra.mxu0 0
        %1201 = vmatprep.subr.bf16.mxu0 0
        %1202 = vmatpush2.bf16.msra.mxu0 0
        %1203 = vmatprep.mubr.bf16.mxu0 0
        %1204 = vmatmul.mubr.bf16.gmra.mxu0 %v1142
        %v1205 = vpop.f32.mrf.mxu0
        %v1206 = vadd.f32 0.0, %v1205
        %v1207 = vpop.f32.mrf.mxu0
        %v1208 = vadd.f32 0.0, %v1207
        %v1209 = vpop.f32.mrf.mxu0
        %v1210 = vadd.f32 0.0, %v1209
        %v1211 = vpop.f32.mrf.mxu0
        %v1212 = vadd.f32 0.0, %v1211
        %1213 = vmatprep.mubr.bf16.mxu0 0
        %1214 = vmatmul.mubr.bf16.gmra.mxu0 %v1145
        %v1215 = vpop.f32.mrf.mxu0
        %v1216 = vadd.f32 0.0, %v1215
        %v1217 = vpop.f32.mrf.mxu0
        %v1218 = vadd.f32 0.0, %v1217
        %v1219 = vpop.f32.mrf.mxu0
        %v1220 = vadd.f32 0.0, %v1219
        %v1221 = vpop.f32.mrf.mxu0
        %v1222 = vadd.f32 0.0, %v1221
        %1223 = vdwg.mxu0
        %1224 = vmatprep.subr.bf16.mxu0 0
        %1225 = vmatpush1.bf16.msra.mxu0 0
        %1226 = vmatprep.subr.bf16.mxu0 0
        %1227 = vmatpush1.bf16.msra.mxu0 0
        %1228 = vmatprep.subr.bf16.mxu0 0
        %1229 = vmatpush1.bf16.msra.mxu0 0
        %1230 = vmatprep.subr.bf16.mxu0 0
        %1231 = vmatpush1.bf16.msra.mxu0 0
        %1232 = vmatprep.subr.bf16.mxu0 0
        %1233 = vmatpush1.bf16.msra.mxu0 0
        %1234 = vmatprep.subr.bf16.mxu0 0
        %1235 = vmatpush1.bf16.msra.mxu0 0
        %1236 = vmatprep.subr.bf16.mxu0 0
        %1237 = vmatpush1.bf16.msra.mxu0 0
        %1238 = vmatprep.subr.bf16.mxu0 %v1157
        %1239 = vmatpush1.bf16.msra.mxu0 %v1154
        %1240 = vmatprep.subr.bf16.mxu0 0
        %1241 = vmatpush2.bf16.msra.mxu0 0
        %1242 = vmatprep.subr.bf16.mxu0 0
        %1243 = vmatpush2.bf16.msra.mxu0 0
        %1244 = vmatprep.subr.bf16.mxu0 0
        %1245 = vmatpush2.bf16.msra.mxu0 0
        %1246 = vmatprep.subr.bf16.mxu0 0
        %1247 = vmatpush2.bf16.msra.mxu0 0
        %1248 = vmatprep.subr.bf16.mxu0 0
        %1249 = vmatpush2.bf16.msra.mxu0 0
        %1250 = vmatprep.subr.bf16.mxu0 0
        %1251 = vmatpush2.bf16.msra.mxu0 0
        %1252 = vmatprep.subr.bf16.mxu0 0
        %1253 = vmatpush2.bf16.msra.mxu0 0
        %1254 = vmatprep.subr.bf16.mxu0 0
        %1255 = vmatpush2.bf16.msra.mxu0 0
        %1256 = vmatprep.mubr.bf16.mxu0 0
        %1257 = vmatmul.mubr.bf16.gmra.mxu0 %v1142
        %v1258 = vpop.f32.mrf.mxu0
        %v1259 = vadd.f32 0.0, %v1258
        %v1260 = vpop.f32.mrf.mxu0
        %v1261 = vadd.f32 0.0, %v1260
        %v1262 = vpop.f32.mrf.mxu0
        %v1263 = vadd.f32 0.0, %v1262
        %v1264 = vpop.f32.mrf.mxu0
        %v1265 = vadd.f32 0.0, %v1264
        %1266 = vmatprep.mubr.bf16.mxu0 0
        %1267 = vmatmul.mubr.bf16.gmra.mxu0 %v1145
        %v1268 = vpop.f32.mrf.mxu0
        %v1269 = vadd.f32 0.0, %v1268
        %v1270 = vpop.f32.mrf.mxu0
        %v1271 = vadd.f32 0.0, %v1270
        %v1272 = vpop.f32.mrf.mxu0
        %v1273 = vadd.f32 0.0, %v1272
        %v1274 = vpop.f32.mrf.mxu0
        %v1275 = vadd.f32 0.0, %v1274
        %1276 = vdwg.mxu0
        %1277 = vmatprep.subr.bf16.mxu0 0
        %1278 = vmatpush1.bf16.msra.mxu0 0
        %1279 = vmatprep.subr.bf16.mxu0 0
        %1280 = vmatpush1.bf16.msra.mxu0 0
        %1281 = vmatprep.subr.bf16.mxu0 0
        %1282 = vmatpush1.bf16.msra.mxu0 0
        %1283 = vmatprep.subr.bf16.mxu0 0
        %1284 = vmatpush1.bf16.msra.mxu0 0
        %1285 = vmatprep.subr.bf16.mxu0 0
        %1286 = vmatpush1.bf16.msra.mxu0 0
        %1287 = vmatprep.subr.bf16.mxu0 0
        %1288 = vmatpush1.bf16.msra.mxu0 0
        %1289 = vmatprep.subr.bf16.mxu0 0
        %1290 = vmatpush1.bf16.msra.mxu0 0
        %1291 = vmatprep.subr.bf16.mxu0 %v1163
        %1292 = vmatpush1.bf16.msra.mxu0 %v1160
        %1293 = vmatprep.subr.bf16.mxu0 0
        %1294 = vmatpush2.bf16.msra.mxu0 0
        %1295 = vmatprep.subr.bf16.mxu0 0
        %1296 = vmatpush2.bf16.msra.mxu0 0
        %1297 = vmatprep.subr.bf16.mxu0 0
        %1298 = vmatpush2.bf16.msra.mxu0 0
        %1299 = vmatprep.subr.bf16.mxu0 0
        %1300 = vmatpush2.bf16.msra.mxu0 0
        %1301 = vmatprep.subr.bf16.mxu0 0
        %1302 = vmatpush2.bf16.msra.mxu0 0
        %1303 = vmatprep.subr.bf16.mxu0 0
        %1304 = vmatpush2.bf16.msra.mxu0 0
        %1305 = vmatprep.subr.bf16.mxu0 0
        %1306 = vmatpush2.bf16.msra.mxu0 0
        %1307 = vmatprep.subr.bf16.mxu0 0
        %1308 = vmatpush2.bf16.msra.mxu0 0
        %1309 = vmatprep.mubr.bf16.mxu0 0
        %1310 = vmatmul.mubr.bf16.gmra.mxu0 %v1142
        %v1311 = vpop.f32.mrf.mxu0
        %v1312 = vadd.f32 0.0, %v1311
        %v1313 = vpop.f32.mrf.mxu0
        %v1314 = vadd.f32 0.0, %v1313
        %v1315 = vpop.f32.mrf.mxu0
        %v1316 = vadd.f32 0.0, %v1315
        %v1317 = vpop.f32.mrf.mxu0
        %v1318 = vadd.f32 0.0, %v1317
        %1319 = vmatprep.mubr.bf16.mxu0 0
        %1320 = vmatmul.mubr.bf16.gmra.mxu0 %v1145
        %v1321 = vpop.f32.mrf.mxu0
        %v1322 = vadd.f32 0.0, %v1321
        %v1323 = vpop.f32.mrf.mxu0
        %v1324 = vadd.f32 0.0, %v1323
        %v1325 = vpop.f32.mrf.mxu0
        %v1326 = vadd.f32 0.0, %v1325
        %v1327 = vpop.f32.mrf.mxu0
        %v1328 = vadd.f32 0.0, %v1327
        %1329 = vdwg.mxu0
        %1330 = vmatprep.subr.bf16.mxu0 0
        %1331 = vmatpush1.bf16.msra.mxu0 0
        %1332 = vmatprep.subr.bf16.mxu0 0
        %1333 = vmatpush1.bf16.msra.mxu0 0
        %1334 = vmatprep.subr.bf16.mxu0 0
        %1335 = vmatpush1.bf16.msra.mxu0 0
        %1336 = vmatprep.subr.bf16.mxu0 0
        %1337 = vmatpush1.bf16.msra.mxu0 0
        %1338 = vmatprep.subr.bf16.mxu0 0
        %1339 = vmatpush1.bf16.msra.mxu0 0
        %1340 = vmatprep.subr.bf16.mxu0 0
        %1341 = vmatpush1.bf16.msra.mxu0 0
        %1342 = vmatprep.subr.bf16.mxu0 0
        %1343 = vmatpush1.bf16.msra.mxu0 0
        %1344 = vmatprep.subr.bf16.mxu0 %v1169
        %1345 = vmatpush1.bf16.msra.mxu0 %v1166
        %1346 = vmatprep.subr.bf16.mxu0 0
        %1347 = vmatpush2.bf16.msra.mxu0 0
        %1348 = vmatprep.subr.bf16.mxu0 0
        %1349 = vmatpush2.bf16.msra.mxu0 0
        %1350 = vmatprep.subr.bf16.mxu0 0
        %1351 = vmatpush2.bf16.msra.mxu0 0
        %1352 = vmatprep.subr.bf16.mxu0 0
        %1353 = vmatpush2.bf16.msra.mxu0 0
        %1354 = vmatprep.subr.bf16.mxu0 0
        %1355 = vmatpush2.bf16.msra.mxu0 0
        %1356 = vmatprep.subr.bf16.mxu0 0
        %1357 = vmatpush2.bf16.msra.mxu0 0
        %1358 = vmatprep.subr.bf16.mxu0 0
        %1359 = vmatpush2.bf16.msra.mxu0 0
        %1360 = vmatprep.subr.bf16.mxu0 0
        %1361 = vmatpush2.bf16.msra.mxu0 0
        %1362 = vmatprep.mubr.bf16.mxu0 0
        %1363 = vmatmul.mubr.bf16.gmra.mxu0 %v1142
        %v1364 = vpop.f32.mrf.mxu0
        %v1365 = vadd.f32 0.0, %v1364
        %v1366 = vpop.f32.mrf.mxu0
        %v1367 = vadd.f32 0.0, %v1366
        %v1368 = vpop.f32.mrf.mxu0
        %v1369 = vadd.f32 0.0, %v1368
        %v1370 = vpop.f32.mrf.mxu0
        %v1371 = vadd.f32 0.0, %v1370
        %1372 = vmatprep.mubr.bf16.mxu0 0
        %1373 = vmatmul.mubr.bf16.gmra.mxu0 %v1145
        %v1374 = vpop.f32.mrf.mxu0
        %v1375 = vadd.f32 0.0, %v1374
        %v1376 = vpop.f32.mrf.mxu0
        %v1377 = vadd.f32 0.0, %v1376
        %v1378 = vpop.f32.mrf.mxu0
        %v1379 = vadd.f32 0.0, %v1378
        %v1380 = vpop.f32.mrf.mxu0
        %v1381 = vadd.f32 0.0, %v1380
        %1382 = vdwg.mxu0
        %v1383 = vadd.f32 %v1056, %v1206
        %v1384 = vadd.f32 %v1057, %v1208
        %v1385 = vadd.f32 %v1058, %v1259
        %v1386 = vadd.f32 %v1059, %v1261
        %v1387 = vadd.f32 %v1060, %v1312
        %v1388 = vadd.f32 %v1061, %v1314
        %v1389 = vadd.f32 %v1062, %v1365
        %v1390 = vadd.f32 %v1063, %v1367
        %v1391 = vadd.f32 %v1064, %v1210
        %v1392 = vadd.f32 %v1065, %v1212
        %v1393 = vadd.f32 %v1066, %v1263
        %v1394 = vadd.f32 %v1067, %v1265
        %v1395 = vadd.f32 %v1068, %v1316
        %v1396 = vadd.f32 %v1069, %v1318
        %v1397 = vadd.f32 %v1070, %v1369
        %v1398 = vadd.f32 %v1071, %v1371
        %v1399 = vadd.f32 %v1072, %v1216
        %v1400 = vadd.f32 %v1073, %v1218
        %v1401 = vadd.f32 %v1074, %v1269
        %v1402 = vadd.f32 %v1075, %v1271
        %v1403 = vadd.f32 %v1076, %v1322
        %v1404 = vadd.f32 %v1077, %v1324
        %v1405 = vadd.f32 %v1078, %v1375
        %v1406 = vadd.f32 %v1079, %v1377
        %v1407 = vadd.f32 %v1080, %v1220
        %v1408 = vadd.f32 %v1081, %v1222
        %v1409 = vadd.f32 %v1082, %v1273
        %v1410 = vadd.f32 %v1083, %v1275
        %v1411 = vadd.f32 %v1084, %v1326
        %v1412 = vadd.f32 %v1085, %v1328
        %v1413 = vadd.f32 %v1086, %v1379
        %v1414 = vadd.f32 %v1087, %v1381
        %v1415 = vld [vmem:[%s164 + $0x8] sm:$0xff]
        %v1416 = vld [vmem:[%s164 + $0x10] sm:$0xff]
        %s1417 = scalar_lea.vmem %s1, 64
        %v1418 = vld [vmem:[%s1417] sm:$0xf]
        %v1419 = vld [vmem:[%s1417 + $0x4] sm:$0xf]
        %v1420 = vld [vmem:[%s1417 + $0x8] sm:$0xf]
        %v1421 = vld [vmem:[%s1417 + $0xc] sm:$0xf]
        %v1426 = vunpack.c.l.b16 %v1418
        %v1427 = vunpack.c.l.b16 %v1419
        %v1428 = vunpack.c.l.b16 %v1420
        %v1429 = vunpack.c.l.b16 %v1421
        %v1430 = vpack.c.b16 %v1427, %v1426
        %v1431 = vpack.c.b16 %v1429, %v1428
        %v1434 = vcombine.high %v1415, %v1415
        %v1436 = vunpack.c.l.s4 1983009808
        %v1437 = vunpack.c.0.s8 %v1436
        %v1438 = vlaneseq
        %v1439 = vshrl.u32 %v1438, 7
        %v1440 = vsub.s32 %v1437, %v1439
        %v1441 = vrot.slane %v1415, %v1440
        %v1443 = vunpack.c.l.s4 1983009808
        %v1444 = vunpack.c.0.s8 %v1443
        %v1445 = vlaneseq
        %v1446 = vshrl.u32 %v1445, 7
        %v1447 = vsub.s32 %v1444, %v1446
        %v1448 = vrot.slane %v1434, %v1447
        %v1449 = vcombine.high %v1441, %v1441
        %v1450 = vcombine.high %v1448, %v1448
        %v1451 = vcombine.high %v1416, %v1416
        %v1453 = vunpack.c.l.s4 1983009808
        %v1454 = vunpack.c.0.s8 %v1453
        %v1455 = vlaneseq
        %v1456 = vshrl.u32 %v1455, 7
        %v1457 = vsub.s32 %v1454, %v1456
        %v1458 = vrot.slane %v1416, %v1457
        %v1460 = vunpack.c.l.s4 1983009808
        %v1461 = vunpack.c.0.s8 %v1460
        %v1462 = vlaneseq
        %v1463 = vshrl.u32 %v1462, 7
        %v1464 = vsub.s32 %v1461, %v1463
        %v1465 = vrot.slane %v1451, %v1464
        %v1466 = vcombine.high %v1458, %v1458
        %v1467 = vcombine.high %v1465, %v1465
        %v1469 = vsel %vm226, %v1430, 0
        %v1472 = vsel %vm226, %v1431, 0
        %v1475 = vand.u32 %v1441, %v236
        %v1478 = vand.u32 %v1449, %v236
        %v1481 = vand.u32 %v1448, %v236
        %v1484 = vand.u32 %v1450, %v236
        %v1487 = vand.u32 %v1458, %v236
        %v1490 = vand.u32 %v1466, %v236
        %v1493 = vand.u32 %v1465, %v236
        %v1496 = vand.u32 %v1467, %v236
        %1498 = vmatprep.subr.bf16.mxu0 0
        %1499 = vmatpush1.bf16.msra.mxu0 0
        %1500 = vmatprep.subr.bf16.mxu0 0
        %1501 = vmatpush1.bf16.msra.mxu0 0
        %1502 = vmatprep.subr.bf16.mxu0 0
        %1503 = vmatpush1.bf16.msra.mxu0 0
        %1504 = vmatprep.subr.bf16.mxu0 0
        %1505 = vmatpush1.bf16.msra.mxu0 0
        %1506 = vmatprep.subr.bf16.mxu0 0
        %1507 = vmatpush1.bf16.msra.mxu0 0
        %1508 = vmatprep.subr.bf16.mxu0 0
        %1509 = vmatpush1.bf16.msra.mxu0 0
        %1510 = vmatprep.subr.bf16.mxu0 0
        %1511 = vmatpush1.bf16.msra.mxu0 0
        %1512 = vmatprep.subr.bf16.mxu0 %v1478
        %1513 = vmatpush1.bf16.msra.mxu0 %v1475
        %1514 = vmatprep.subr.bf16.mxu0 0
        %1515 = vmatpush2.bf16.msra.mxu0 0
        %1516 = vmatprep.subr.bf16.mxu0 0
        %1517 = vmatpush2.bf16.msra.mxu0 0
        %1518 = vmatprep.subr.bf16.mxu0 0
        %1519 = vmatpush2.bf16.msra.mxu0 0
        %1520 = vmatprep.subr.bf16.mxu0 0
        %1521 = vmatpush2.bf16.msra.mxu0 0
        %1522 = vmatprep.subr.bf16.mxu0 0
        %1523 = vmatpush2.bf16.msra.mxu0 0
        %1524 = vmatprep.subr.bf16.mxu0 0
        %1525 = vmatpush2.bf16.msra.mxu0 0
        %1526 = vmatprep.subr.bf16.mxu0 0
        %1527 = vmatpush2.bf16.msra.mxu0 0
        %1528 = vmatprep.subr.bf16.mxu0 0
        %1529 = vmatpush2.bf16.msra.mxu0 0
        %1530 = vmatprep.mubr.bf16.mxu0 0
        %1531 = vmatmul.mubr.bf16.gmra.mxu0 %v1469
        %v1532 = vpop.f32.mrf.mxu0
        %v1533 = vadd.f32 0.0, %v1532
        %v1534 = vpop.f32.mrf.mxu0
        %v1535 = vadd.f32 0.0, %v1534
        %v1536 = vpop.f32.mrf.mxu0
        %v1537 = vadd.f32 0.0, %v1536
        %v1538 = vpop.f32.mrf.mxu0
        %v1539 = vadd.f32 0.0, %v1538
        %1540 = vmatprep.mubr.bf16.mxu0 0
        %1541 = vmatmul.mubr.bf16.gmra.mxu0 %v1472
        %v1542 = vpop.f32.mrf.mxu0
        %v1543 = vadd.f32 0.0, %v1542
        %v1544 = vpop.f32.mrf.mxu0
        %v1545 = vadd.f32 0.0, %v1544
        %v1546 = vpop.f32.mrf.mxu0
        %v1547 = vadd.f32 0.0, %v1546
        %v1548 = vpop.f32.mrf.mxu0
        %v1549 = vadd.f32 0.0, %v1548
        %1550 = vdwg.mxu0
        %1551 = vmatprep.subr.bf16.mxu0 0
        %1552 = vmatpush1.bf16.msra.mxu0 0
        %1553 = vmatprep.subr.bf16.mxu0 0
        %1554 = vmatpush1.bf16.msra.mxu0 0
        %1555 = vmatprep.subr.bf16.mxu0 0
        %1556 = vmatpush1.bf16.msra.mxu0 0
        %1557 = vmatprep.subr.bf16.mxu0 0
        %1558 = vmatpush1.bf16.msra.mxu0 0
        %1559 = vmatprep.subr.bf16.mxu0 0
        %1560 = vmatpush1.bf16.msra.mxu0 0
        %1561 = vmatprep.subr.bf16.mxu0 0
        %1562 = vmatpush1.bf16.msra.mxu0 0
        %1563 = vmatprep.subr.bf16.mxu0 0
        %1564 = vmatpush1.bf16.msra.mxu0 0
        %1565 = vmatprep.subr.bf16.mxu0 %v1484
        %1566 = vmatpush1.bf16.msra.mxu0 %v1481
        %1567 = vmatprep.subr.bf16.mxu0 0
        %1568 = vmatpush2.bf16.msra.mxu0 0
        %1569 = vmatprep.subr.bf16.mxu0 0
        %1570 = vmatpush2.bf16.msra.mxu0 0
        %1571 = vmatprep.subr.bf16.mxu0 0
        %1572 = vmatpush2.bf16.msra.mxu0 0
        %1573 = vmatprep.subr.bf16.mxu0 0
        %1574 = vmatpush2.bf16.msra.mxu0 0
        %1575 = vmatprep.subr.bf16.mxu0 0
        %1576 = vmatpush2.bf16.msra.mxu0 0
        %1577 = vmatprep.subr.bf16.mxu0 0
        %1578 = vmatpush2.bf16.msra.mxu0 0
        %1579 = vmatprep.subr.bf16.mxu0 0
        %1580 = vmatpush2.bf16.msra.mxu0 0
        %1581 = vmatprep.subr.bf16.mxu0 0
        %1582 = vmatpush2.bf16.msra.mxu0 0
        %1583 = vmatprep.mubr.bf16.mxu0 0
        %1584 = vmatmul.mubr.bf16.gmra.mxu0 %v1469
        %v1585 = vpop.f32.mrf.mxu0
        %v1586 = vadd.f32 0.0, %v1585
        %v1587 = vpop.f32.mrf.mxu0
        %v1588 = vadd.f32 0.0, %v1587
        %v1589 = vpop.f32.mrf.mxu0
        %v1590 = vadd.f32 0.0, %v1589
        %v1591 = vpop.f32.mrf.mxu0
        %v1592 = vadd.f32 0.0, %v1591
        %1593 = vmatprep.mubr.bf16.mxu0 0
        %1594 = vmatmul.mubr.bf16.gmra.mxu0 %v1472
        %v1595 = vpop.f32.mrf.mxu0
        %v1596 = vadd.f32 0.0, %v1595
        %v1597 = vpop.f32.mrf.mxu0
        %v1598 = vadd.f32 0.0, %v1597
        %v1599 = vpop.f32.mrf.mxu0
        %v1600 = vadd.f32 0.0, %v1599
        %v1601 = vpop.f32.mrf.mxu0
        %v1602 = vadd.f32 0.0, %v1601
        %1603 = vdwg.mxu0
        %1604 = vmatprep.subr.bf16.mxu0 0
        %1605 = vmatpush1.bf16.msra.mxu0 0
        %1606 = vmatprep.subr.bf16.mxu0 0
        %1607 = vmatpush1.bf16.msra.mxu0 0
        %1608 = vmatprep.subr.bf16.mxu0 0
        %1609 = vmatpush1.bf16.msra.mxu0 0
        %1610 = vmatprep.subr.bf16.mxu0 0
        %1611 = vmatpush1.bf16.msra.mxu0 0
        %1612 = vmatprep.subr.bf16.mxu0 0
        %1613 = vmatpush1.bf16.msra.mxu0 0
        %1614 = vmatprep.subr.bf16.mxu0 0
        %1615 = vmatpush1.bf16.msra.mxu0 0
        %1616 = vmatprep.subr.bf16.mxu0 0
        %1617 = vmatpush1.bf16.msra.mxu0 0
        %1618 = vmatprep.subr.bf16.mxu0 %v1490
        %1619 = vmatpush1.bf16.msra.mxu0 %v1487
        %1620 = vmatprep.subr.bf16.mxu0 0
        %1621 = vmatpush2.bf16.msra.mxu0 0
        %1622 = vmatprep.subr.bf16.mxu0 0
        %1623 = vmatpush2.bf16.msra.mxu0 0
        %1624 = vmatprep.subr.bf16.mxu0 0
        %1625 = vmatpush2.bf16.msra.mxu0 0
        %1626 = vmatprep.subr.bf16.mxu0 0
        %1627 = vmatpush2.bf16.msra.mxu0 0
        %1628 = vmatprep.subr.bf16.mxu0 0
        %1629 = vmatpush2.bf16.msra.mxu0 0
        %1630 = vmatprep.subr.bf16.mxu0 0
        %1631 = vmatpush2.bf16.msra.mxu0 0
        %1632 = vmatprep.subr.bf16.mxu0 0
        %1633 = vmatpush2.bf16.msra.mxu0 0
        %1634 = vmatprep.subr.bf16.mxu0 0
        %1635 = vmatpush2.bf16.msra.mxu0 0
        %1636 = vmatprep.mubr.bf16.mxu0 0
        %1637 = vmatmul.mubr.bf16.gmra.mxu0 %v1469
        %v1638 = vpop.f32.mrf.mxu0
        %v1639 = vadd.f32 0.0, %v1638
        %v1640 = vpop.f32.mrf.mxu0
        %v1641 = vadd.f32 0.0, %v1640
        %v1642 = vpop.f32.mrf.mxu0
        %v1643 = vadd.f32 0.0, %v1642
        %v1644 = vpop.f32.mrf.mxu0
        %v1645 = vadd.f32 0.0, %v1644
        %1646 = vmatprep.mubr.bf16.mxu0 0
        %1647 = vmatmul.mubr.bf16.gmra.mxu0 %v1472
        %v1648 = vpop.f32.mrf.mxu0
        %v1649 = vadd.f32 0.0, %v1648
        %v1650 = vpop.f32.mrf.mxu0
        %v1651 = vadd.f32 0.0, %v1650
        %v1652 = vpop.f32.mrf.mxu0
        %v1653 = vadd.f32 0.0, %v1652
        %v1654 = vpop.f32.mrf.mxu0
        %v1655 = vadd.f32 0.0, %v1654
        %1656 = vdwg.mxu0
        %1657 = vmatprep.subr.bf16.mxu0 0
        %1658 = vmatpush1.bf16.msra.mxu0 0
        %1659 = vmatprep.subr.bf16.mxu0 0
        %1660 = vmatpush1.bf16.msra.mxu0 0
        %1661 = vmatprep.subr.bf16.mxu0 0
        %1662 = vmatpush1.bf16.msra.mxu0 0
        %1663 = vmatprep.subr.bf16.mxu0 0
        %1664 = vmatpush1.bf16.msra.mxu0 0
        %1665 = vmatprep.subr.bf16.mxu0 0
        %1666 = vmatpush1.bf16.msra.mxu0 0
        %1667 = vmatprep.subr.bf16.mxu0 0
        %1668 = vmatpush1.bf16.msra.mxu0 0
        %1669 = vmatprep.subr.bf16.mxu0 0
        %1670 = vmatpush1.bf16.msra.mxu0 0
        %1671 = vmatprep.subr.bf16.mxu0 %v1496
        %1672 = vmatpush1.bf16.msra.mxu0 %v1493
        %1673 = vmatprep.subr.bf16.mxu0 0
        %1674 = vmatpush2.bf16.msra.mxu0 0
        %1675 = vmatprep.subr.bf16.mxu0 0
        %1676 = vmatpush2.bf16.msra.mxu0 0
        %1677 = vmatprep.subr.bf16.mxu0 0
        %1678 = vmatpush2.bf16.msra.mxu0 0
        %1679 = vmatprep.subr.bf16.mxu0 0
        %1680 = vmatpush2.bf16.msra.mxu0 0
        %1681 = vmatprep.subr.bf16.mxu0 0
        %1682 = vmatpush2.bf16.msra.mxu0 0
        %1683 = vmatprep.subr.bf16.mxu0 0
        %1684 = vmatpush2.bf16.msra.mxu0 0
        %1685 = vmatprep.subr.bf16.mxu0 0
        %1686 = vmatpush2.bf16.msra.mxu0 0
        %1687 = vmatprep.subr.bf16.mxu0 0
        %1688 = vmatpush2.bf16.msra.mxu0 0
        %1689 = vmatprep.mubr.bf16.mxu0 0
        %1690 = vmatmul.mubr.bf16.gmra.mxu0 %v1469
        %v1691 = vpop.f32.mrf.mxu0
        %v1692 = vadd.f32 0.0, %v1691
        %v1693 = vpop.f32.mrf.mxu0
        %v1694 = vadd.f32 0.0, %v1693
        %v1695 = vpop.f32.mrf.mxu0
        %v1696 = vadd.f32 0.0, %v1695
        %v1697 = vpop.f32.mrf.mxu0
        %v1698 = vadd.f32 0.0, %v1697
        %1699 = vmatprep.mubr.bf16.mxu0 0
        %1700 = vmatmul.mubr.bf16.gmra.mxu0 %v1472
        %v1701 = vpop.f32.mrf.mxu0
        %v1702 = vadd.f32 0.0, %v1701
        %v1703 = vpop.f32.mrf.mxu0
        %v1704 = vadd.f32 0.0, %v1703
        %v1705 = vpop.f32.mrf.mxu0
        %v1706 = vadd.f32 0.0, %v1705
        %v1707 = vpop.f32.mrf.mxu0
        %v1708 = vadd.f32 0.0, %v1707
        %1709 = vdwg.mxu0
        %v1710 = vadd.f32 %v1383, %v1533
        %v1711 = vadd.f32 %v1384, %v1535
        %v1712 = vadd.f32 %v1385, %v1586
        %v1713 = vadd.f32 %v1386, %v1588
        %v1714 = vadd.f32 %v1387, %v1639
        %v1715 = vadd.f32 %v1388, %v1641
        %v1716 = vadd.f32 %v1389, %v1692
        %v1717 = vadd.f32 %v1390, %v1694
        %v1718 = vadd.f32 %v1391, %v1537
        %v1719 = vadd.f32 %v1392, %v1539
        %v1720 = vadd.f32 %v1393, %v1590
        %v1721 = vadd.f32 %v1394, %v1592
        %v1722 = vadd.f32 %v1395, %v1643
        %v1723 = vadd.f32 %v1396, %v1645
        %v1724 = vadd.f32 %v1397, %v1696
        %v1725 = vadd.f32 %v1398, %v1698
        %v1726 = vadd.f32 %v1399, %v1543
        %v1727 = vadd.f32 %v1400, %v1545
        %v1728 = vadd.f32 %v1401, %v1596
        %v1729 = vadd.f32 %v1402, %v1598
        %v1730 = vadd.f32 %v1403, %v1649
        %v1731 = vadd.f32 %v1404, %v1651
        %v1732 = vadd.f32 %v1405, %v1702
        %v1733 = vadd.f32 %v1406, %v1704
        %v1734 = vadd.f32 %v1407, %v1547
        %v1735 = vadd.f32 %v1408, %v1549
        %v1736 = vadd.f32 %v1409, %v1600
        %v1737 = vadd.f32 %v1410, %v1602
        %v1738 = vadd.f32 %v1411, %v1653
        %v1739 = vadd.f32 %v1412, %v1655
        %v1740 = vadd.f32 %v1413, %v1706
        %v1741 = vadd.f32 %v1414, %v1708
        %v1742 = vld [vmem:[%s164 + $0xa] sm:$0xff]
        %v1743 = vld [vmem:[%s164 + $0x12] sm:$0xff]
        %s1744 = scalar_lea.vmem %s1, 80
        %v1745 = vld [vmem:[%s1744] sm:$0xf]
        %v1746 = vld [vmem:[%s1744 + $0x4] sm:$0xf]
        %v1747 = vld [vmem:[%s1744 + $0x8] sm:$0xf]
        %v1748 = vld [vmem:[%s1744 + $0xc] sm:$0xf]
        %v1753 = vunpack.c.l.b16 %v1745
        %v1754 = vunpack.c.l.b16 %v1746
        %v1755 = vunpack.c.l.b16 %v1747
        %v1756 = vunpack.c.l.b16 %v1748
        %v1757 = vpack.c.b16 %v1754, %v1753
        %v1758 = vpack.c.b16 %v1756, %v1755
        %v1761 = vcombine.high %v1742, %v1742
        %v1763 = vunpack.c.l.s4 1983009808
        %v1764 = vunpack.c.0.s8 %v1763
        %v1765 = vlaneseq
        %v1766 = vshrl.u32 %v1765, 7
        %v1767 = vsub.s32 %v1764, %v1766
        %v1768 = vrot.slane %v1742, %v1767
        %v1770 = vunpack.c.l.s4 1983009808
        %v1771 = vunpack.c.0.s8 %v1770
        %v1772 = vlaneseq
        %v1773 = vshrl.u32 %v1772, 7
        %v1774 = vsub.s32 %v1771, %v1773
        %v1775 = vrot.slane %v1761, %v1774
        %v1776 = vcombine.high %v1768, %v1768
        %v1777 = vcombine.high %v1775, %v1775
        %v1778 = vcombine.high %v1743, %v1743
        %v1780 = vunpack.c.l.s4 1983009808
        %v1781 = vunpack.c.0.s8 %v1780
        %v1782 = vlaneseq
        %v1783 = vshrl.u32 %v1782, 7
        %v1784 = vsub.s32 %v1781, %v1783
        %v1785 = vrot.slane %v1743, %v1784
        %v1787 = vunpack.c.l.s4 1983009808
        %v1788 = vunpack.c.0.s8 %v1787
        %v1789 = vlaneseq
        %v1790 = vshrl.u32 %v1789, 7
        %v1791 = vsub.s32 %v1788, %v1790
        %v1792 = vrot.slane %v1778, %v1791
        %v1793 = vcombine.high %v1785, %v1785
        %v1794 = vcombine.high %v1792, %v1792
        %v1796 = vsel %vm226, %v1757, 0
        %v1799 = vsel %vm226, %v1758, 0
        %v1802 = vand.u32 %v1768, %v236
        %v1805 = vand.u32 %v1776, %v236
        %v1808 = vand.u32 %v1775, %v236
        %v1811 = vand.u32 %v1777, %v236
        %v1814 = vand.u32 %v1785, %v236
        %v1817 = vand.u32 %v1793, %v236
        %v1820 = vand.u32 %v1792, %v236
        %v1823 = vand.u32 %v1794, %v236
        %1825 = vmatprep.subr.bf16.mxu0 0
        %1826 = vmatpush1.bf16.msra.mxu0 0
        %1827 = vmatprep.subr.bf16.mxu0 0
        %1828 = vmatpush1.bf16.msra.mxu0 0
        %1829 = vmatprep.subr.bf16.mxu0 0
        %1830 = vmatpush1.bf16.msra.mxu0 0
        %1831 = vmatprep.subr.bf16.mxu0 0
        %1832 = vmatpush1.bf16.msra.mxu0 0
        %1833 = vmatprep.subr.bf16.mxu0 0
        %1834 = vmatpush1.bf16.msra.mxu0 0
        %1835 = vmatprep.subr.bf16.mxu0 0
        %1836 = vmatpush1.bf16.msra.mxu0 0
        %1837 = vmatprep.subr.bf16.mxu0 0
        %1838 = vmatpush1.bf16.msra.mxu0 0
        %1839 = vmatprep.subr.bf16.mxu0 %v1805
        %1840 = vmatpush1.bf16.msra.mxu0 %v1802
        %1841 = vmatprep.subr.bf16.mxu0 0
        %1842 = vmatpush2.bf16.msra.mxu0 0
        %1843 = vmatprep.subr.bf16.mxu0 0
        %1844 = vmatpush2.bf16.msra.mxu0 0
        %1845 = vmatprep.subr.bf16.mxu0 0
        %1846 = vmatpush2.bf16.msra.mxu0 0
        %1847 = vmatprep.subr.bf16.mxu0 0
        %1848 = vmatpush2.bf16.msra.mxu0 0
        %1849 = vmatprep.subr.bf16.mxu0 0
        %1850 = vmatpush2.bf16.msra.mxu0 0
        %1851 = vmatprep.subr.bf16.mxu0 0
        %1852 = vmatpush2.bf16.msra.mxu0 0
        %1853 = vmatprep.subr.bf16.mxu0 0
        %1854 = vmatpush2.bf16.msra.mxu0 0
        %1855 = vmatprep.subr.bf16.mxu0 0
        %1856 = vmatpush2.bf16.msra.mxu0 0
        %1857 = vmatprep.mubr.bf16.mxu0 0
        %1858 = vmatmul.mubr.bf16.gmra.mxu0 %v1796
        %v1859 = vpop.f32.mrf.mxu0
        %v1860 = vadd.f32 0.0, %v1859
        %v1861 = vpop.f32.mrf.mxu0
        %v1862 = vadd.f32 0.0, %v1861
        %v1863 = vpop.f32.mrf.mxu0
        %v1864 = vadd.f32 0.0, %v1863
        %v1865 = vpop.f32.mrf.mxu0
        %v1866 = vadd.f32 0.0, %v1865
        %1867 = vmatprep.mubr.bf16.mxu0 0
        %1868 = vmatmul.mubr.bf16.gmra.mxu0 %v1799
        %v1869 = vpop.f32.mrf.mxu0
        %v1870 = vadd.f32 0.0, %v1869
        %v1871 = vpop.f32.mrf.mxu0
        %v1872 = vadd.f32 0.0, %v1871
        %v1873 = vpop.f32.mrf.mxu0
        %v1874 = vadd.f32 0.0, %v1873
        %v1875 = vpop.f32.mrf.mxu0
        %v1876 = vadd.f32 0.0, %v1875
        %1877 = vdwg.mxu0
        %1878 = vmatprep.subr.bf16.mxu0 0
        %1879 = vmatpush1.bf16.msra.mxu0 0
        %1880 = vmatprep.subr.bf16.mxu0 0
        %1881 = vmatpush1.bf16.msra.mxu0 0
        %1882 = vmatprep.subr.bf16.mxu0 0
        %1883 = vmatpush1.bf16.msra.mxu0 0
        %1884 = vmatprep.subr.bf16.mxu0 0
        %1885 = vmatpush1.bf16.msra.mxu0 0
        %1886 = vmatprep.subr.bf16.mxu0 0
        %1887 = vmatpush1.bf16.msra.mxu0 0
        %1888 = vmatprep.subr.bf16.mxu0 0
        %1889 = vmatpush1.bf16.msra.mxu0 0
        %1890 = vmatprep.subr.bf16.mxu0 0
        %1891 = vmatpush1.bf16.msra.mxu0 0
        %1892 = vmatprep.subr.bf16.mxu0 %v1811
        %1893 = vmatpush1.bf16.msra.mxu0 %v1808
        %1894 = vmatprep.subr.bf16.mxu0 0
        %1895 = vmatpush2.bf16.msra.mxu0 0
        %1896 = vmatprep.subr.bf16.mxu0 0
        %1897 = vmatpush2.bf16.msra.mxu0 0
        %1898 = vmatprep.subr.bf16.mxu0 0
        %1899 = vmatpush2.bf16.msra.mxu0 0
        %1900 = vmatprep.subr.bf16.mxu0 0
        %1901 = vmatpush2.bf16.msra.mxu0 0
        %1902 = vmatprep.subr.bf16.mxu0 0
        %1903 = vmatpush2.bf16.msra.mxu0 0
        %1904 = vmatprep.subr.bf16.mxu0 0
        %1905 = vmatpush2.bf16.msra.mxu0 0
        %1906 = vmatprep.subr.bf16.mxu0 0
        %1907 = vmatpush2.bf16.msra.mxu0 0
        %1908 = vmatprep.subr.bf16.mxu0 0
        %1909 = vmatpush2.bf16.msra.mxu0 0
        %1910 = vmatprep.mubr.bf16.mxu0 0
        %1911 = vmatmul.mubr.bf16.gmra.mxu0 %v1796
        %v1912 = vpop.f32.mrf.mxu0
        %v1913 = vadd.f32 0.0, %v1912
        %v1914 = vpop.f32.mrf.mxu0
        %v1915 = vadd.f32 0.0, %v1914
        %v1916 = vpop.f32.mrf.mxu0
        %v1917 = vadd.f32 0.0, %v1916
        %v1918 = vpop.f32.mrf.mxu0
        %v1919 = vadd.f32 0.0, %v1918
        %1920 = vmatprep.mubr.bf16.mxu0 0
        %1921 = vmatmul.mubr.bf16.gmra.mxu0 %v1799
        %v1922 = vpop.f32.mrf.mxu0
        %v1923 = vadd.f32 0.0, %v1922
        %v1924 = vpop.f32.mrf.mxu0
        %v1925 = vadd.f32 0.0, %v1924
        %v1926 = vpop.f32.mrf.mxu0
        %v1927 = vadd.f32 0.0, %v1926
        %v1928 = vpop.f32.mrf.mxu0
        %v1929 = vadd.f32 0.0, %v1928
        %1930 = vdwg.mxu0
        %1931 = vmatprep.subr.bf16.mxu0 0
        %1932 = vmatpush1.bf16.msra.mxu0 0
        %1933 = vmatprep.subr.bf16.mxu0 0
        %1934 = vmatpush1.bf16.msra.mxu0 0
        %1935 = vmatprep.subr.bf16.mxu0 0
        %1936 = vmatpush1.bf16.msra.mxu0 0
        %1937 = vmatprep.subr.bf16.mxu0 0
        %1938 = vmatpush1.bf16.msra.mxu0 0
        %1939 = vmatprep.subr.bf16.mxu0 0
        %1940 = vmatpush1.bf16.msra.mxu0 0
        %1941 = vmatprep.subr.bf16.mxu0 0
        %1942 = vmatpush1.bf16.msra.mxu0 0
        %1943 = vmatprep.subr.bf16.mxu0 0
        %1944 = vmatpush1.bf16.msra.mxu0 0
        %1945 = vmatprep.subr.bf16.mxu0 %v1817
        %1946 = vmatpush1.bf16.msra.mxu0 %v1814
        %1947 = vmatprep.subr.bf16.mxu0 0
        %1948 = vmatpush2.bf16.msra.mxu0 0
        %1949 = vmatprep.subr.bf16.mxu0 0
        %1950 = vmatpush2.bf16.msra.mxu0 0
        %1951 = vmatprep.subr.bf16.mxu0 0
        %1952 = vmatpush2.bf16.msra.mxu0 0
        %1953 = vmatprep.subr.bf16.mxu0 0
        %1954 = vmatpush2.bf16.msra.mxu0 0
        %1955 = vmatprep.subr.bf16.mxu0 0
        %1956 = vmatpush2.bf16.msra.mxu0 0
        %1957 = vmatprep.subr.bf16.mxu0 0
        %1958 = vmatpush2.bf16.msra.mxu0 0
        %1959 = vmatprep.subr.bf16.mxu0 0
        %1960 = vmatpush2.bf16.msra.mxu0 0
        %1961 = vmatprep.subr.bf16.mxu0 0
        %1962 = vmatpush2.bf16.msra.mxu0 0
        %1963 = vmatprep.mubr.bf16.mxu0 0
        %1964 = vmatmul.mubr.bf16.gmra.mxu0 %v1796
        %v1965 = vpop.f32.mrf.mxu0
        %v1966 = vadd.f32 0.0, %v1965
        %v1967 = vpop.f32.mrf.mxu0
        %v1968 = vadd.f32 0.0, %v1967
        %v1969 = vpop.f32.mrf.mxu0
        %v1970 = vadd.f32 0.0, %v1969
        %v1971 = vpop.f32.mrf.mxu0
        %v1972 = vadd.f32 0.0, %v1971
        %1973 = vmatprep.mubr.bf16.mxu0 0
        %1974 = vmatmul.mubr.bf16.gmra.mxu0 %v1799
        %v1975 = vpop.f32.mrf.mxu0
        %v1976 = vadd.f32 0.0, %v1975
        %v1977 = vpop.f32.mrf.mxu0
        %v1978 = vadd.f32 0.0, %v1977
        %v1979 = vpop.f32.mrf.mxu0
        %v1980 = vadd.f32 0.0, %v1979
        %v1981 = vpop.f32.mrf.mxu0
        %v1982 = vadd.f32 0.0, %v1981
        %1983 = vdwg.mxu0
        %1984 = vmatprep.subr.bf16.mxu0 0
        %1985 = vmatpush1.bf16.msra.mxu0 0
        %1986 = vmatprep.subr.bf16.mxu0 0
        %1987 = vmatpush1.bf16.msra.mxu0 0
        %1988 = vmatprep.subr.bf16.mxu0 0
        %1989 = vmatpush1.bf16.msra.mxu0 0
        %1990 = vmatprep.subr.bf16.mxu0 0
        %1991 = vmatpush1.bf16.msra.mxu0 0
        %1992 = vmatprep.subr.bf16.mxu0 0
        %1993 = vmatpush1.bf16.msra.mxu0 0
        %1994 = vmatprep.subr.bf16.mxu0 0
        %1995 = vmatpush1.bf16.msra.mxu0 0
        %1996 = vmatprep.subr.bf16.mxu0 0
        %1997 = vmatpush1.bf16.msra.mxu0 0
        %1998 = vmatprep.subr.bf16.mxu0 %v1823
        %1999 = vmatpush1.bf16.msra.mxu0 %v1820
        %2000 = vmatprep.subr.bf16.mxu0 0
        %2001 = vmatpush2.bf16.msra.mxu0 0
        %2002 = vmatprep.subr.bf16.mxu0 0
        %2003 = vmatpush2.bf16.msra.mxu0 0
        %2004 = vmatprep.subr.bf16.mxu0 0
        %2005 = vmatpush2.bf16.msra.mxu0 0
        %2006 = vmatprep.subr.bf16.mxu0 0
        %2007 = vmatpush2.bf16.msra.mxu0 0
        %2008 = vmatprep.subr.bf16.mxu0 0
        %2009 = vmatpush2.bf16.msra.mxu0 0
        %2010 = vmatprep.subr.bf16.mxu0 0
        %2011 = vmatpush2.bf16.msra.mxu0 0
        %2012 = vmatprep.subr.bf16.mxu0 0
        %2013 = vmatpush2.bf16.msra.mxu0 0
        %2014 = vmatprep.subr.bf16.mxu0 0
        %2015 = vmatpush2.bf16.msra.mxu0 0
        %2016 = vmatprep.mubr.bf16.mxu0 0
        %2017 = vmatmul.mubr.bf16.gmra.mxu0 %v1796
        %v2018 = vpop.f32.mrf.mxu0
        %v2019 = vadd.f32 0.0, %v2018
        %v2020 = vpop.f32.mrf.mxu0
        %v2021 = vadd.f32 0.0, %v2020
        %v2022 = vpop.f32.mrf.mxu0
        %v2023 = vadd.f32 0.0, %v2022
        %v2024 = vpop.f32.mrf.mxu0
        %v2025 = vadd.f32 0.0, %v2024
        %2026 = vmatprep.mubr.bf16.mxu0 0
        %2027 = vmatmul.mubr.bf16.gmra.mxu0 %v1799
        %v2028 = vpop.f32.mrf.mxu0
        %v2029 = vadd.f32 0.0, %v2028
        %v2030 = vpop.f32.mrf.mxu0
        %v2031 = vadd.f32 0.0, %v2030
        %v2032 = vpop.f32.mrf.mxu0
        %v2033 = vadd.f32 0.0, %v2032
        %v2034 = vpop.f32.mrf.mxu0
        %v2035 = vadd.f32 0.0, %v2034
        %2036 = vdwg.mxu0
        %v2037 = vadd.f32 %v1710, %v1860
        %v2038 = vadd.f32 %v1711, %v1862
        %v2039 = vadd.f32 %v1712, %v1913
        %v2040 = vadd.f32 %v1713, %v1915
        %v2041 = vadd.f32 %v1714, %v1966
        %v2042 = vadd.f32 %v1715, %v1968
        %v2043 = vadd.f32 %v1716, %v2019
        %v2044 = vadd.f32 %v1717, %v2021
        %v2045 = vadd.f32 %v1718, %v1864
        %v2046 = vadd.f32 %v1719, %v1866
        %v2047 = vadd.f32 %v1720, %v1917
        %v2048 = vadd.f32 %v1721, %v1919
        %v2049 = vadd.f32 %v1722, %v1970
        %v2050 = vadd.f32 %v1723, %v1972
        %v2051 = vadd.f32 %v1724, %v2023
        %v2052 = vadd.f32 %v1725, %v2025
        %v2053 = vadd.f32 %v1726, %v1870
        %v2054 = vadd.f32 %v1727, %v1872
        %v2055 = vadd.f32 %v1728, %v1923
        %v2056 = vadd.f32 %v1729, %v1925
        %v2057 = vadd.f32 %v1730, %v1976
        %v2058 = vadd.f32 %v1731, %v1978
        %v2059 = vadd.f32 %v1732, %v2029
        %v2060 = vadd.f32 %v1733, %v2031
        %v2061 = vadd.f32 %v1734, %v1874
        %v2062 = vadd.f32 %v1735, %v1876
        %v2063 = vadd.f32 %v1736, %v1927
        %v2064 = vadd.f32 %v1737, %v1929
        %v2065 = vadd.f32 %v1738, %v1980
        %v2066 = vadd.f32 %v1739, %v1982
        %v2067 = vadd.f32 %v1740, %v2033
        %v2068 = vadd.f32 %v1741, %v2035
        %v2069 = vld [vmem:[%s164 + $0xc] sm:$0xff]
        %v2070 = vld [vmem:[%s164 + $0x14] sm:$0xff]
        %s2071 = scalar_lea.vmem %s1, 96
        %v2072 = vld [vmem:[%s2071] sm:$0xf]
        %v2073 = vld [vmem:[%s2071 + $0x4] sm:$0xf]
        %v2074 = vld [vmem:[%s2071 + $0x8] sm:$0xf]
        %v2075 = vld [vmem:[%s2071 + $0xc] sm:$0xf]
        %v2080 = vunpack.c.l.b16 %v2072
        %v2081 = vunpack.c.l.b16 %v2073
        %v2082 = vunpack.c.l.b16 %v2074
        %v2083 = vunpack.c.l.b16 %v2075
        %v2084 = vpack.c.b16 %v2081, %v2080
        %v2085 = vpack.c.b16 %v2083, %v2082
        %v2088 = vcombine.high %v2069, %v2069
        %v2090 = vunpack.c.l.s4 1983009808
        %v2091 = vunpack.c.0.s8 %v2090
        %v2092 = vlaneseq
        %v2093 = vshrl.u32 %v2092, 7
        %v2094 = vsub.s32 %v2091, %v2093
        %v2095 = vrot.slane %v2069, %v2094
        %v2097 = vunpack.c.l.s4 1983009808
        %v2098 = vunpack.c.0.s8 %v2097
        %v2099 = vlaneseq
        %v2100 = vshrl.u32 %v2099, 7
        %v2101 = vsub.s32 %v2098, %v2100
        %v2102 = vrot.slane %v2088, %v2101
        %v2103 = vcombine.high %v2095, %v2095
        %v2104 = vcombine.high %v2102, %v2102
        %v2105 = vcombine.high %v2070, %v2070
        %v2107 = vunpack.c.l.s4 1983009808
        %v2108 = vunpack.c.0.s8 %v2107
        %v2109 = vlaneseq
        %v2110 = vshrl.u32 %v2109, 7
        %v2111 = vsub.s32 %v2108, %v2110
        %v2112 = vrot.slane %v2070, %v2111
        %v2114 = vunpack.c.l.s4 1983009808
        %v2115 = vunpack.c.0.s8 %v2114
        %v2116 = vlaneseq
        %v2117 = vshrl.u32 %v2116, 7
        %v2118 = vsub.s32 %v2115, %v2117
        %v2119 = vrot.slane %v2105, %v2118
        %v2120 = vcombine.high %v2112, %v2112
        %v2121 = vcombine.high %v2119, %v2119
        %v2123 = vsel %vm226, %v2084, 0
        %v2126 = vsel %vm226, %v2085, 0
        %v2129 = vand.u32 %v2095, %v236
        %v2132 = vand.u32 %v2103, %v236
        %v2135 = vand.u32 %v2102, %v236
        %v2138 = vand.u32 %v2104, %v236
        %v2141 = vand.u32 %v2112, %v236
        %v2144 = vand.u32 %v2120, %v236
        %v2147 = vand.u32 %v2119, %v236
        %v2150 = vand.u32 %v2121, %v236
        %2152 = vmatprep.subr.bf16.mxu0 0
        %2153 = vmatpush1.bf16.msra.mxu0 0
        %2154 = vmatprep.subr.bf16.mxu0 0
        %2155 = vmatpush1.bf16.msra.mxu0 0
        %2156 = vmatprep.subr.bf16.mxu0 0
        %2157 = vmatpush1.bf16.msra.mxu0 0
        %2158 = vmatprep.subr.bf16.mxu0 0
        %2159 = vmatpush1.bf16.msra.mxu0 0
        %2160 = vmatprep.subr.bf16.mxu0 0
        %2161 = vmatpush1.bf16.msra.mxu0 0
        %2162 = vmatprep.subr.bf16.mxu0 0
        %2163 = vmatpush1.bf16.msra.mxu0 0
        %2164 = vmatprep.subr.bf16.mxu0 0
        %2165 = vmatpush1.bf16.msra.mxu0 0
        %2166 = vmatprep.subr.bf16.mxu0 %v2132
        %2167 = vmatpush1.bf16.msra.mxu0 %v2129
        %2168 = vmatprep.subr.bf16.mxu0 0
        %2169 = vmatpush2.bf16.msra.mxu0 0
        %2170 = vmatprep.subr.bf16.mxu0 0
        %2171 = vmatpush2.bf16.msra.mxu0 0
        %2172 = vmatprep.subr.bf16.mxu0 0
        %2173 = vmatpush2.bf16.msra.mxu0 0
        %2174 = vmatprep.subr.bf16.mxu0 0
        %2175 = vmatpush2.bf16.msra.mxu0 0
        %2176 = vmatprep.subr.bf16.mxu0 0
        %2177 = vmatpush2.bf16.msra.mxu0 0
        %2178 = vmatprep.subr.bf16.mxu0 0
        %2179 = vmatpush2.bf16.msra.mxu0 0
        %2180 = vmatprep.subr.bf16.mxu0 0
        %2181 = vmatpush2.bf16.msra.mxu0 0
        %2182 = vmatprep.subr.bf16.mxu0 0
        %2183 = vmatpush2.bf16.msra.mxu0 0
        %2184 = vmatprep.mubr.bf16.mxu0 0
        %2185 = vmatmul.mubr.bf16.gmra.mxu0 %v2123
        %v2186 = vpop.f32.mrf.mxu0
        %v2187 = vadd.f32 0.0, %v2186
        %v2188 = vpop.f32.mrf.mxu0
        %v2189 = vadd.f32 0.0, %v2188
        %v2190 = vpop.f32.mrf.mxu0
        %v2191 = vadd.f32 0.0, %v2190
        %v2192 = vpop.f32.mrf.mxu0
        %v2193 = vadd.f32 0.0, %v2192
        %2194 = vmatprep.mubr.bf16.mxu0 0
        %2195 = vmatmul.mubr.bf16.gmra.mxu0 %v2126
        %v2196 = vpop.f32.mrf.mxu0
        %v2197 = vadd.f32 0.0, %v2196
        %v2198 = vpop.f32.mrf.mxu0
        %v2199 = vadd.f32 0.0, %v2198
        %v2200 = vpop.f32.mrf.mxu0
        %v2201 = vadd.f32 0.0, %v2200
        %v2202 = vpop.f32.mrf.mxu0
        %v2203 = vadd.f32 0.0, %v2202
        %2204 = vdwg.mxu0
        %2205 = vmatprep.subr.bf16.mxu0 0
        %2206 = vmatpush1.bf16.msra.mxu0 0
        %2207 = vmatprep.subr.bf16.mxu0 0
        %2208 = vmatpush1.bf16.msra.mxu0 0
        %2209 = vmatprep.subr.bf16.mxu0 0
        %2210 = vmatpush1.bf16.msra.mxu0 0
        %2211 = vmatprep.subr.bf16.mxu0 0
        %2212 = vmatpush1.bf16.msra.mxu0 0
        %2213 = vmatprep.subr.bf16.mxu0 0
        %2214 = vmatpush1.bf16.msra.mxu0 0
        %2215 = vmatprep.subr.bf16.mxu0 0
        %2216 = vmatpush1.bf16.msra.mxu0 0
        %2217 = vmatprep.subr.bf16.mxu0 0
        %2218 = vmatpush1.bf16.msra.mxu0 0
        %2219 = vmatprep.subr.bf16.mxu0 %v2138
        %2220 = vmatpush1.bf16.msra.mxu0 %v2135
        %2221 = vmatprep.subr.bf16.mxu0 0
        %2222 = vmatpush2.bf16.msra.mxu0 0
        %2223 = vmatprep.subr.bf16.mxu0 0
        %2224 = vmatpush2.bf16.msra.mxu0 0
        %2225 = vmatprep.subr.bf16.mxu0 0
        %2226 = vmatpush2.bf16.msra.mxu0 0
        %2227 = vmatprep.subr.bf16.mxu0 0
        %2228 = vmatpush2.bf16.msra.mxu0 0
        %2229 = vmatprep.subr.bf16.mxu0 0
        %2230 = vmatpush2.bf16.msra.mxu0 0
        %2231 = vmatprep.subr.bf16.mxu0 0
        %2232 = vmatpush2.bf16.msra.mxu0 0
        %2233 = vmatprep.subr.bf16.mxu0 0
        %2234 = vmatpush2.bf16.msra.mxu0 0
        %2235 = vmatprep.subr.bf16.mxu0 0
        %2236 = vmatpush2.bf16.msra.mxu0 0
        %2237 = vmatprep.mubr.bf16.mxu0 0
        %2238 = vmatmul.mubr.bf16.gmra.mxu0 %v2123
        %v2239 = vpop.f32.mrf.mxu0
        %v2240 = vadd.f32 0.0, %v2239
        %v2241 = vpop.f32.mrf.mxu0
        %v2242 = vadd.f32 0.0, %v2241
        %v2243 = vpop.f32.mrf.mxu0
        %v2244 = vadd.f32 0.0, %v2243
        %v2245 = vpop.f32.mrf.mxu0
        %v2246 = vadd.f32 0.0, %v2245
        %2247 = vmatprep.mubr.bf16.mxu0 0
        %2248 = vmatmul.mubr.bf16.gmra.mxu0 %v2126
        %v2249 = vpop.f32.mrf.mxu0
        %v2250 = vadd.f32 0.0, %v2249
        %v2251 = vpop.f32.mrf.mxu0
        %v2252 = vadd.f32 0.0, %v2251
        %v2253 = vpop.f32.mrf.mxu0
        %v2254 = vadd.f32 0.0, %v2253
        %v2255 = vpop.f32.mrf.mxu0
        %v2256 = vadd.f32 0.0, %v2255
        %2257 = vdwg.mxu0
        %2258 = vmatprep.subr.bf16.mxu0 0
        %2259 = vmatpush1.bf16.msra.mxu0 0
        %2260 = vmatprep.subr.bf16.mxu0 0
        %2261 = vmatpush1.bf16.msra.mxu0 0
        %2262 = vmatprep.subr.bf16.mxu0 0
        %2263 = vmatpush1.bf16.msra.mxu0 0
        %2264 = vmatprep.subr.bf16.mxu0 0
        %2265 = vmatpush1.bf16.msra.mxu0 0
        %2266 = vmatprep.subr.bf16.mxu0 0
        %2267 = vmatpush1.bf16.msra.mxu0 0
        %2268 = vmatprep.subr.bf16.mxu0 0
        %2269 = vmatpush1.bf16.msra.mxu0 0
        %2270 = vmatprep.subr.bf16.mxu0 0
        %2271 = vmatpush1.bf16.msra.mxu0 0
        %2272 = vmatprep.subr.bf16.mxu0 %v2144
        %2273 = vmatpush1.bf16.msra.mxu0 %v2141
        %2274 = vmatprep.subr.bf16.mxu0 0
        %2275 = vmatpush2.bf16.msra.mxu0 0
        %2276 = vmatprep.subr.bf16.mxu0 0
        %2277 = vmatpush2.bf16.msra.mxu0 0
        %2278 = vmatprep.subr.bf16.mxu0 0
        %2279 = vmatpush2.bf16.msra.mxu0 0
        %2280 = vmatprep.subr.bf16.mxu0 0
        %2281 = vmatpush2.bf16.msra.mxu0 0
        %2282 = vmatprep.subr.bf16.mxu0 0
        %2283 = vmatpush2.bf16.msra.mxu0 0
        %2284 = vmatprep.subr.bf16.mxu0 0
        %2285 = vmatpush2.bf16.msra.mxu0 0
        %2286 = vmatprep.subr.bf16.mxu0 0
        %2287 = vmatpush2.bf16.msra.mxu0 0
        %2288 = vmatprep.subr.bf16.mxu0 0
        %2289 = vmatpush2.bf16.msra.mxu0 0
        %2290 = vmatprep.mubr.bf16.mxu0 0
        %2291 = vmatmul.mubr.bf16.gmra.mxu0 %v2123
        %v2292 = vpop.f32.mrf.mxu0
        %v2293 = vadd.f32 0.0, %v2292
        %v2294 = vpop.f32.mrf.mxu0
        %v2295 = vadd.f32 0.0, %v2294
        %v2296 = vpop.f32.mrf.mxu0
        %v2297 = vadd.f32 0.0, %v2296
        %v2298 = vpop.f32.mrf.mxu0
        %v2299 = vadd.f32 0.0, %v2298
        %2300 = vmatprep.mubr.bf16.mxu0 0
        %2301 = vmatmul.mubr.bf16.gmra.mxu0 %v2126
        %v2302 = vpop.f32.mrf.mxu0
        %v2303 = vadd.f32 0.0, %v2302
        %v2304 = vpop.f32.mrf.mxu0
        %v2305 = vadd.f32 0.0, %v2304
        %v2306 = vpop.f32.mrf.mxu0
        %v2307 = vadd.f32 0.0, %v2306
        %v2308 = vpop.f32.mrf.mxu0
        %v2309 = vadd.f32 0.0, %v2308
        %2310 = vdwg.mxu0
        %2311 = vmatprep.subr.bf16.mxu0 0
        %2312 = vmatpush1.bf16.msra.mxu0 0
        %2313 = vmatprep.subr.bf16.mxu0 0
        %2314 = vmatpush1.bf16.msra.mxu0 0
        %2315 = vmatprep.subr.bf16.mxu0 0
        %2316 = vmatpush1.bf16.msra.mxu0 0
        %2317 = vmatprep.subr.bf16.mxu0 0
        %2318 = vmatpush1.bf16.msra.mxu0 0
        %2319 = vmatprep.subr.bf16.mxu0 0
        %2320 = vmatpush1.bf16.msra.mxu0 0
        %2321 = vmatprep.subr.bf16.mxu0 0
        %2322 = vmatpush1.bf16.msra.mxu0 0
        %2323 = vmatprep.subr.bf16.mxu0 0
        %2324 = vmatpush1.bf16.msra.mxu0 0
        %2325 = vmatprep.subr.bf16.mxu0 %v2150
        %2326 = vmatpush1.bf16.msra.mxu0 %v2147
        %2327 = vmatprep.subr.bf16.mxu0 0
        %2328 = vmatpush2.bf16.msra.mxu0 0
        %2329 = vmatprep.subr.bf16.mxu0 0
        %2330 = vmatpush2.bf16.msra.mxu0 0
        %2331 = vmatprep.subr.bf16.mxu0 0
        %2332 = vmatpush2.bf16.msra.mxu0 0
        %2333 = vmatprep.subr.bf16.mxu0 0
        %2334 = vmatpush2.bf16.msra.mxu0 0
        %2335 = vmatprep.subr.bf16.mxu0 0
        %2336 = vmatpush2.bf16.msra.mxu0 0
        %2337 = vmatprep.subr.bf16.mxu0 0
        %2338 = vmatpush2.bf16.msra.mxu0 0
        %2339 = vmatprep.subr.bf16.mxu0 0
        %2340 = vmatpush2.bf16.msra.mxu0 0
        %2341 = vmatprep.subr.bf16.mxu0 0
        %2342 = vmatpush2.bf16.msra.mxu0 0
        %2343 = vmatprep.mubr.bf16.mxu0 0
        %2344 = vmatmul.mubr.bf16.gmra.mxu0 %v2123
        %v2345 = vpop.f32.mrf.mxu0
        %v2346 = vadd.f32 0.0, %v2345
        %v2347 = vpop.f32.mrf.mxu0
        %v2348 = vadd.f32 0.0, %v2347
        %v2349 = vpop.f32.mrf.mxu0
        %v2350 = vadd.f32 0.0, %v2349
        %v2351 = vpop.f32.mrf.mxu0
        %v2352 = vadd.f32 0.0, %v2351
        %2353 = vmatprep.mubr.bf16.mxu0 0
        %2354 = vmatmul.mubr.bf16.gmra.mxu0 %v2126
        %v2355 = vpop.f32.mrf.mxu0
        %v2356 = vadd.f32 0.0, %v2355
        %v2357 = vpop.f32.mrf.mxu0
        %v2358 = vadd.f32 0.0, %v2357
        %v2359 = vpop.f32.mrf.mxu0
        %v2360 = vadd.f32 0.0, %v2359
        %v2361 = vpop.f32.mrf.mxu0
        %v2362 = vadd.f32 0.0, %v2361
        %2363 = vdwg.mxu0
        %v2364 = vadd.f32 %v2037, %v2187
        %v2365 = vadd.f32 %v2038, %v2189
        %v2366 = vadd.f32 %v2039, %v2240
        %v2367 = vadd.f32 %v2040, %v2242
        %v2368 = vadd.f32 %v2041, %v2293
        %v2369 = vadd.f32 %v2042, %v2295
        %v2370 = vadd.f32 %v2043, %v2346
        %v2371 = vadd.f32 %v2044, %v2348
        %v2372 = vadd.f32 %v2045, %v2191
        %v2373 = vadd.f32 %v2046, %v2193
        %v2374 = vadd.f32 %v2047, %v2244
        %v2375 = vadd.f32 %v2048, %v2246
        %v2376 = vadd.f32 %v2049, %v2297
        %v2377 = vadd.f32 %v2050, %v2299
        %v2378 = vadd.f32 %v2051, %v2350
        %v2379 = vadd.f32 %v2052, %v2352
        %v2380 = vadd.f32 %v2053, %v2197
        %v2381 = vadd.f32 %v2054, %v2199
        %v2382 = vadd.f32 %v2055, %v2250
        %v2383 = vadd.f32 %v2056, %v2252
        %v2384 = vadd.f32 %v2057, %v2303
        %v2385 = vadd.f32 %v2058, %v2305
        %v2386 = vadd.f32 %v2059, %v2356
        %v2387 = vadd.f32 %v2060, %v2358
        %v2388 = vadd.f32 %v2061, %v2201
        %v2389 = vadd.f32 %v2062, %v2203
        %v2390 = vadd.f32 %v2063, %v2254
        %v2391 = vadd.f32 %v2064, %v2256
        %v2392 = vadd.f32 %v2065, %v2307
        %v2393 = vadd.f32 %v2066, %v2309
        %v2394 = vadd.f32 %v2067, %v2360
        %v2395 = vadd.f32 %v2068, %v2362
        %v2396 = vld [vmem:[%s164 + $0xe] sm:$0xff]
        %v2397 = vld [vmem:[%s164 + $0x16] sm:$0xff]
        %s2398 = scalar_lea.vmem %s1, 112
        %v2399 = vld [vmem:[%s2398] sm:$0xf]
        %v2400 = vld [vmem:[%s2398 + $0x4] sm:$0xf]
        %v2401 = vld [vmem:[%s2398 + $0x8] sm:$0xf]
        %v2402 = vld [vmem:[%s2398 + $0xc] sm:$0xf]
        %v2407 = vunpack.c.l.b16 %v2399
        %v2408 = vunpack.c.l.b16 %v2400
        %v2409 = vunpack.c.l.b16 %v2401
        %v2410 = vunpack.c.l.b16 %v2402
        %v2411 = vpack.c.b16 %v2408, %v2407
        %v2412 = vpack.c.b16 %v2410, %v2409
        %v2415 = vcombine.high %v2396, %v2396
        %v2417 = vunpack.c.l.s4 1983009808
        %v2418 = vunpack.c.0.s8 %v2417
        %v2419 = vlaneseq
        %v2420 = vshrl.u32 %v2419, 7
        %v2421 = vsub.s32 %v2418, %v2420
        %v2422 = vrot.slane %v2396, %v2421
        %v2424 = vunpack.c.l.s4 1983009808
        %v2425 = vunpack.c.0.s8 %v2424
        %v2426 = vlaneseq
        %v2427 = vshrl.u32 %v2426, 7
        %v2428 = vsub.s32 %v2425, %v2427
        %v2429 = vrot.slane %v2415, %v2428
        %v2430 = vcombine.high %v2422, %v2422
        %v2431 = vcombine.high %v2429, %v2429
        %v2432 = vcombine.high %v2397, %v2397
        %v2434 = vunpack.c.l.s4 1983009808
        %v2435 = vunpack.c.0.s8 %v2434
        %v2436 = vlaneseq
        %v2437 = vshrl.u32 %v2436, 7
        %v2438 = vsub.s32 %v2435, %v2437
        %v2439 = vrot.slane %v2397, %v2438
        %v2441 = vunpack.c.l.s4 1983009808
        %v2442 = vunpack.c.0.s8 %v2441
        %v2443 = vlaneseq
        %v2444 = vshrl.u32 %v2443, 7
        %v2445 = vsub.s32 %v2442, %v2444
        %v2446 = vrot.slane %v2432, %v2445
        %v2447 = vcombine.high %v2439, %v2439
        %v2448 = vcombine.high %v2446, %v2446
        %v2450 = vsel %vm226, %v2411, 0
        %v2453 = vsel %vm226, %v2412, 0
        %v2456 = vand.u32 %v2422, %v236
        %v2459 = vand.u32 %v2430, %v236
        %v2462 = vand.u32 %v2429, %v236
        %v2465 = vand.u32 %v2431, %v236
        %v2468 = vand.u32 %v2439, %v236
        %v2471 = vand.u32 %v2447, %v236
        %v2474 = vand.u32 %v2446, %v236
        %v2477 = vand.u32 %v2448, %v236
        %2479 = vmatprep.subr.bf16.mxu0 0
        %2480 = vmatpush1.bf16.msra.mxu0 0
        %2481 = vmatprep.subr.bf16.mxu0 0
        %2482 = vmatpush1.bf16.msra.mxu0 0
        %2483 = vmatprep.subr.bf16.mxu0 0
        %2484 = vmatpush1.bf16.msra.mxu0 0
        %2485 = vmatprep.subr.bf16.mxu0 0
        %2486 = vmatpush1.bf16.msra.mxu0 0
        %2487 = vmatprep.subr.bf16.mxu0 0
        %2488 = vmatpush1.bf16.msra.mxu0 0
        %2489 = vmatprep.subr.bf16.mxu0 0
        %2490 = vmatpush1.bf16.msra.mxu0 0
        %2491 = vmatprep.subr.bf16.mxu0 0
        %2492 = vmatpush1.bf16.msra.mxu0 0
        %2493 = vmatprep.subr.bf16.mxu0 %v2459
        %2494 = vmatpush1.bf16.msra.mxu0 %v2456
        %2495 = vmatprep.subr.bf16.mxu0 0
        %2496 = vmatpush2.bf16.msra.mxu0 0
        %2497 = vmatprep.subr.bf16.mxu0 0
        %2498 = vmatpush2.bf16.msra.mxu0 0
        %2499 = vmatprep.subr.bf16.mxu0 0
        %2500 = vmatpush2.bf16.msra.mxu0 0
        %2501 = vmatprep.subr.bf16.mxu0 0
        %2502 = vmatpush2.bf16.msra.mxu0 0
        %2503 = vmatprep.subr.bf16.mxu0 0
        %2504 = vmatpush2.bf16.msra.mxu0 0
        %2505 = vmatprep.subr.bf16.mxu0 0
        %2506 = vmatpush2.bf16.msra.mxu0 0
        %2507 = vmatprep.subr.bf16.mxu0 0
        %2508 = vmatpush2.bf16.msra.mxu0 0
        %2509 = vmatprep.subr.bf16.mxu0 0
        %2510 = vmatpush2.bf16.msra.mxu0 0
        %2511 = vmatprep.mubr.bf16.mxu0 0
        %2512 = vmatmul.mubr.bf16.gmra.mxu0 %v2450
        %v2513 = vpop.f32.mrf.mxu0
        %v2514 = vadd.f32 0.0, %v2513
        %v2515 = vpop.f32.mrf.mxu0
        %v2516 = vadd.f32 0.0, %v2515
        %v2517 = vpop.f32.mrf.mxu0
        %v2518 = vadd.f32 0.0, %v2517
        %v2519 = vpop.f32.mrf.mxu0
        %v2520 = vadd.f32 0.0, %v2519
        %2521 = vmatprep.mubr.bf16.mxu0 0
        %2522 = vmatmul.mubr.bf16.gmra.mxu0 %v2453
        %v2523 = vpop.f32.mrf.mxu0
        %v2524 = vadd.f32 0.0, %v2523
        %v2525 = vpop.f32.mrf.mxu0
        %v2526 = vadd.f32 0.0, %v2525
        %v2527 = vpop.f32.mrf.mxu0
        %v2528 = vadd.f32 0.0, %v2527
        %v2529 = vpop.f32.mrf.mxu0
        %v2530 = vadd.f32 0.0, %v2529
        %2531 = vdwg.mxu0
        %2532 = vmatprep.subr.bf16.mxu0 0
        %2533 = vmatpush1.bf16.msra.mxu0 0
        %2534 = vmatprep.subr.bf16.mxu0 0
        %2535 = vmatpush1.bf16.msra.mxu0 0
        %2536 = vmatprep.subr.bf16.mxu0 0
        %2537 = vmatpush1.bf16.msra.mxu0 0
        %2538 = vmatprep.subr.bf16.mxu0 0
        %2539 = vmatpush1.bf16.msra.mxu0 0
        %2540 = vmatprep.subr.bf16.mxu0 0
        %2541 = vmatpush1.bf16.msra.mxu0 0
        %2542 = vmatprep.subr.bf16.mxu0 0
        %2543 = vmatpush1.bf16.msra.mxu0 0
        %2544 = vmatprep.subr.bf16.mxu0 0
        %2545 = vmatpush1.bf16.msra.mxu0 0
        %2546 = vmatprep.subr.bf16.mxu0 %v2465
        %2547 = vmatpush1.bf16.msra.mxu0 %v2462
        %2548 = vmatprep.subr.bf16.mxu0 0
        %2549 = vmatpush2.bf16.msra.mxu0 0
        %2550 = vmatprep.subr.bf16.mxu0 0
        %2551 = vmatpush2.bf16.msra.mxu0 0
        %2552 = vmatprep.subr.bf16.mxu0 0
        %2553 = vmatpush2.bf16.msra.mxu0 0
        %2554 = vmatprep.subr.bf16.mxu0 0
        %2555 = vmatpush2.bf16.msra.mxu0 0
        %2556 = vmatprep.subr.bf16.mxu0 0
        %2557 = vmatpush2.bf16.msra.mxu0 0
        %2558 = vmatprep.subr.bf16.mxu0 0
        %2559 = vmatpush2.bf16.msra.mxu0 0
        %2560 = vmatprep.subr.bf16.mxu0 0
        %2561 = vmatpush2.bf16.msra.mxu0 0
        %2562 = vmatprep.subr.bf16.mxu0 0
        %2563 = vmatpush2.bf16.msra.mxu0 0
        %2564 = vmatprep.mubr.bf16.mxu0 0
        %2565 = vmatmul.mubr.bf16.gmra.mxu0 %v2450
        %v2566 = vpop.f32.mrf.mxu0
        %v2567 = vadd.f32 0.0, %v2566
        %v2568 = vpop.f32.mrf.mxu0
        %v2569 = vadd.f32 0.0, %v2568
        %v2570 = vpop.f32.mrf.mxu0
        %v2571 = vadd.f32 0.0, %v2570
        %v2572 = vpop.f32.mrf.mxu0
        %v2573 = vadd.f32 0.0, %v2572
        %2574 = vmatprep.mubr.bf16.mxu0 0
        %2575 = vmatmul.mubr.bf16.gmra.mxu0 %v2453
        %v2576 = vpop.f32.mrf.mxu0
        %v2577 = vadd.f32 0.0, %v2576
        %v2578 = vpop.f32.mrf.mxu0
        %v2579 = vadd.f32 0.0, %v2578
        %v2580 = vpop.f32.mrf.mxu0
        %v2581 = vadd.f32 0.0, %v2580
        %v2582 = vpop.f32.mrf.mxu0
        %v2583 = vadd.f32 0.0, %v2582
        %2584 = vdwg.mxu0
        %2585 = vmatprep.subr.bf16.mxu0 0
        %2586 = vmatpush1.bf16.msra.mxu0 0
        %2587 = vmatprep.subr.bf16.mxu0 0
        %2588 = vmatpush1.bf16.msra.mxu0 0
        %2589 = vmatprep.subr.bf16.mxu0 0
        %2590 = vmatpush1.bf16.msra.mxu0 0
        %2591 = vmatprep.subr.bf16.mxu0 0
        %2592 = vmatpush1.bf16.msra.mxu0 0
        %2593 = vmatprep.subr.bf16.mxu0 0
        %2594 = vmatpush1.bf16.msra.mxu0 0
        %2595 = vmatprep.subr.bf16.mxu0 0
        %2596 = vmatpush1.bf16.msra.mxu0 0
        %2597 = vmatprep.subr.bf16.mxu0 0
        %2598 = vmatpush1.bf16.msra.mxu0 0
        %2599 = vmatprep.subr.bf16.mxu0 %v2471
        %2600 = vmatpush1.bf16.msra.mxu0 %v2468
        %2601 = vmatprep.subr.bf16.mxu0 0
        %2602 = vmatpush2.bf16.msra.mxu0 0
        %2603 = vmatprep.subr.bf16.mxu0 0
        %2604 = vmatpush2.bf16.msra.mxu0 0
        %2605 = vmatprep.subr.bf16.mxu0 0
        %2606 = vmatpush2.bf16.msra.mxu0 0
        %2607 = vmatprep.subr.bf16.mxu0 0
        %2608 = vmatpush2.bf16.msra.mxu0 0
        %2609 = vmatprep.subr.bf16.mxu0 0
        %2610 = vmatpush2.bf16.msra.mxu0 0
        %2611 = vmatprep.subr.bf16.mxu0 0
        %2612 = vmatpush2.bf16.msra.mxu0 0
        %2613 = vmatprep.subr.bf16.mxu0 0
        %2614 = vmatpush2.bf16.msra.mxu0 0
        %2615 = vmatprep.subr.bf16.mxu0 0
        %2616 = vmatpush2.bf16.msra.mxu0 0
        %2617 = vmatprep.mubr.bf16.mxu0 0
        %2618 = vmatmul.mubr.bf16.gmra.mxu0 %v2450
        %v2619 = vpop.f32.mrf.mxu0
        %v2620 = vadd.f32 0.0, %v2619
        %v2621 = vpop.f32.mrf.mxu0
        %v2622 = vadd.f32 0.0, %v2621
        %v2623 = vpop.f32.mrf.mxu0
        %v2624 = vadd.f32 0.0, %v2623
        %v2625 = vpop.f32.mrf.mxu0
        %v2626 = vadd.f32 0.0, %v2625
        %2627 = vmatprep.mubr.bf16.mxu0 0
        %2628 = vmatmul.mubr.bf16.gmra.mxu0 %v2453
        %v2629 = vpop.f32.mrf.mxu0
        %v2630 = vadd.f32 0.0, %v2629
        %v2631 = vpop.f32.mrf.mxu0
        %v2632 = vadd.f32 0.0, %v2631
        %v2633 = vpop.f32.mrf.mxu0
        %v2634 = vadd.f32 0.0, %v2633
        %v2635 = vpop.f32.mrf.mxu0
        %v2636 = vadd.f32 0.0, %v2635
        %2637 = vdwg.mxu0
        %2638 = vmatprep.subr.bf16.mxu0 0
        %2639 = vmatpush1.bf16.msra.mxu0 0
        %2640 = vmatprep.subr.bf16.mxu0 0
        %2641 = vmatpush1.bf16.msra.mxu0 0
        %2642 = vmatprep.subr.bf16.mxu0 0
        %2643 = vmatpush1.bf16.msra.mxu0 0
        %2644 = vmatprep.subr.bf16.mxu0 0
        %2645 = vmatpush1.bf16.msra.mxu0 0
        %2646 = vmatprep.subr.bf16.mxu0 0
        %2647 = vmatpush1.bf16.msra.mxu0 0
        %2648 = vmatprep.subr.bf16.mxu0 0
        %2649 = vmatpush1.bf16.msra.mxu0 0
        %2650 = vmatprep.subr.bf16.mxu0 0
        %2651 = vmatpush1.bf16.msra.mxu0 0
        %2652 = vmatprep.subr.bf16.mxu0 %v2477
        %2653 = vmatpush1.bf16.msra.mxu0 %v2474
        %2654 = vmatprep.subr.bf16.mxu0 0
        %2655 = vmatpush2.bf16.msra.mxu0 0
        %2656 = vmatprep.subr.bf16.mxu0 0
        %2657 = vmatpush2.bf16.msra.mxu0 0
        %2658 = vmatprep.subr.bf16.mxu0 0
        %2659 = vmatpush2.bf16.msra.mxu0 0
        %2660 = vmatprep.subr.bf16.mxu0 0
        %2661 = vmatpush2.bf16.msra.mxu0 0
        %2662 = vmatprep.subr.bf16.mxu0 0
        %2663 = vmatpush2.bf16.msra.mxu0 0
        %2664 = vmatprep.subr.bf16.mxu0 0
        %2665 = vmatpush2.bf16.msra.mxu0 0
        %2666 = vmatprep.subr.bf16.mxu0 0
        %2667 = vmatpush2.bf16.msra.mxu0 0
        %2668 = vmatprep.subr.bf16.mxu0 0
        %2669 = vmatpush2.bf16.msra.mxu0 0
        %2670 = vmatprep.mubr.bf16.mxu0 0
        %2671 = vmatmul.mubr.bf16.gmra.mxu0 %v2450
        %v2672 = vpop.f32.mrf.mxu0
        %v2673 = vadd.f32 0.0, %v2672
        %v2674 = vpop.f32.mrf.mxu0
        %v2675 = vadd.f32 0.0, %v2674
        %v2676 = vpop.f32.mrf.mxu0
        %v2677 = vadd.f32 0.0, %v2676
        %v2678 = vpop.f32.mrf.mxu0
        %v2679 = vadd.f32 0.0, %v2678
        %2680 = vmatprep.mubr.bf16.mxu0 0
        %2681 = vmatmul.mubr.bf16.gmra.mxu0 %v2453
        %v2682 = vpop.f32.mrf.mxu0
        %v2683 = vadd.f32 0.0, %v2682
        %v2684 = vpop.f32.mrf.mxu0
        %v2685 = vadd.f32 0.0, %v2684
        %v2686 = vpop.f32.mrf.mxu0
        %v2687 = vadd.f32 0.0, %v2686
        %v2688 = vpop.f32.mrf.mxu0
        %v2689 = vadd.f32 0.0, %v2688
        %2690 = vdwg.mxu0
        %v2691 = vadd.f32 %v2364, %v2514
        %v2692 = vadd.f32 %v2365, %v2516
        %v2693 = vadd.f32 %v2366, %v2567
        %v2694 = vadd.f32 %v2367, %v2569
        %v2695 = vadd.f32 %v2368, %v2620
        %v2696 = vadd.f32 %v2369, %v2622
        %v2697 = vadd.f32 %v2370, %v2673
        %v2698 = vadd.f32 %v2371, %v2675
        %v2699 = vadd.f32 %v2372, %v2518
        %v2700 = vadd.f32 %v2373, %v2520
        %v2701 = vadd.f32 %v2374, %v2571
        %v2702 = vadd.f32 %v2375, %v2573
        %v2703 = vadd.f32 %v2376, %v2624
        %v2704 = vadd.f32 %v2377, %v2626
        %v2705 = vadd.f32 %v2378, %v2677
        %v2706 = vadd.f32 %v2379, %v2679
        %v2707 = vadd.f32 %v2380, %v2524
        %v2708 = vadd.f32 %v2381, %v2526
        %v2709 = vadd.f32 %v2382, %v2577
        %v2710 = vadd.f32 %v2383, %v2579
        %v2711 = vadd.f32 %v2384, %v2630
        %v2712 = vadd.f32 %v2385, %v2632
        %v2713 = vadd.f32 %v2386, %v2683
        %v2714 = vadd.f32 %v2387, %v2685
        %v2715 = vadd.f32 %v2388, %v2528
        %v2716 = vadd.f32 %v2389, %v2530
        %v2717 = vadd.f32 %v2390, %v2581
        %v2718 = vadd.f32 %v2391, %v2583
        %v2719 = vadd.f32 %v2392, %v2634
        %v2720 = vadd.f32 %v2393, %v2636
        %v2721 = vadd.f32 %v2394, %v2687
        %v2722 = vadd.f32 %v2395, %v2689
        %v2723 = vld [vmem:[%s164 + $0x10] sm:$0xff]
        %v2724 = vld [vmem:[%s164 + $0x18] sm:$0xff]
        %s2725 = scalar_lea.vmem %s1, 128
        %v2726 = vld [vmem:[%s2725] sm:$0xf]
        %v2727 = vld [vmem:[%s2725 + $0x4] sm:$0xf]
        %v2728 = vld [vmem:[%s2725 + $0x8] sm:$0xf]
        %v2729 = vld [vmem:[%s2725 + $0xc] sm:$0xf]
        %v2734 = vunpack.c.l.b16 %v2726
        %v2735 = vunpack.c.l.b16 %v2727
        %v2736 = vunpack.c.l.b16 %v2728
        %v2737 = vunpack.c.l.b16 %v2729
        %v2738 = vpack.c.b16 %v2735, %v2734
        %v2739 = vpack.c.b16 %v2737, %v2736
        %v2742 = vcombine.high %v2723, %v2723
        %v2744 = vunpack.c.l.s4 1983009808
        %v2745 = vunpack.c.0.s8 %v2744
        %v2746 = vlaneseq
        %v2747 = vshrl.u32 %v2746, 7
        %v2748 = vsub.s32 %v2745, %v2747
        %v2749 = vrot.slane %v2723, %v2748
        %v2751 = vunpack.c.l.s4 1983009808
        %v2752 = vunpack.c.0.s8 %v2751
        %v2753 = vlaneseq
        %v2754 = vshrl.u32 %v2753, 7
        %v2755 = vsub.s32 %v2752, %v2754
        %v2756 = vrot.slane %v2742, %v2755
        %v2757 = vcombine.high %v2749, %v2749
        %v2758 = vcombine.high %v2756, %v2756
        %v2759 = vcombine.high %v2724, %v2724
        %v2761 = vunpack.c.l.s4 1983009808
        %v2762 = vunpack.c.0.s8 %v2761
        %v2763 = vlaneseq
        %v2764 = vshrl.u32 %v2763, 7
        %v2765 = vsub.s32 %v2762, %v2764
        %v2766 = vrot.slane %v2724, %v2765
        %v2768 = vunpack.c.l.s4 1983009808
        %v2769 = vunpack.c.0.s8 %v2768
        %v2770 = vlaneseq
        %v2771 = vshrl.u32 %v2770, 7
        %v2772 = vsub.s32 %v2769, %v2771
        %v2773 = vrot.slane %v2759, %v2772
        %v2774 = vcombine.high %v2766, %v2766
        %v2775 = vcombine.high %v2773, %v2773
        %v2777 = vsel %vm226, %v2738, 0
        %v2780 = vsel %vm226, %v2739, 0
        %v2783 = vand.u32 %v2749, %v236
        %v2786 = vand.u32 %v2757, %v236
        %v2789 = vand.u32 %v2756, %v236
        %v2792 = vand.u32 %v2758, %v236
        %v2795 = vand.u32 %v2766, %v236
        %v2798 = vand.u32 %v2774, %v236
        %v2801 = vand.u32 %v2773, %v236
        %v2804 = vand.u32 %v2775, %v236
        %2806 = vmatprep.subr.bf16.mxu0 0
        %2807 = vmatpush1.bf16.msra.mxu0 0
        %2808 = vmatprep.subr.bf16.mxu0 0
        %2809 = vmatpush1.bf16.msra.mxu0 0
        %2810 = vmatprep.subr.bf16.mxu0 0
        %2811 = vmatpush1.bf16.msra.mxu0 0
        %2812 = vmatprep.subr.bf16.mxu0 0
        %2813 = vmatpush1.bf16.msra.mxu0 0
        %2814 = vmatprep.subr.bf16.mxu0 0
        %2815 = vmatpush1.bf16.msra.mxu0 0
        %2816 = vmatprep.subr.bf16.mxu0 0
        %2817 = vmatpush1.bf16.msra.mxu0 0
        %2818 = vmatprep.subr.bf16.mxu0 0
        %2819 = vmatpush1.bf16.msra.mxu0 0
        %2820 = vmatprep.subr.bf16.mxu0 %v2786
        %2821 = vmatpush1.bf16.msra.mxu0 %v2783
        %2822 = vmatprep.subr.bf16.mxu0 0
        %2823 = vmatpush2.bf16.msra.mxu0 0
        %2824 = vmatprep.subr.bf16.mxu0 0
        %2825 = vmatpush2.bf16.msra.mxu0 0
        %2826 = vmatprep.subr.bf16.mxu0 0
        %2827 = vmatpush2.bf16.msra.mxu0 0
        %2828 = vmatprep.subr.bf16.mxu0 0
        %2829 = vmatpush2.bf16.msra.mxu0 0
        %2830 = vmatprep.subr.bf16.mxu0 0
        %2831 = vmatpush2.bf16.msra.mxu0 0
        %2832 = vmatprep.subr.bf16.mxu0 0
        %2833 = vmatpush2.bf16.msra.mxu0 0
        %2834 = vmatprep.subr.bf16.mxu0 0
        %2835 = vmatpush2.bf16.msra.mxu0 0
        %2836 = vmatprep.subr.bf16.mxu0 0
        %2837 = vmatpush2.bf16.msra.mxu0 0
        %2838 = vmatprep.mubr.bf16.mxu0 0
        %2839 = vmatmul.mubr.bf16.gmra.mxu0 %v2777
        %v2840 = vpop.f32.mrf.mxu0
        %v2841 = vadd.f32 0.0, %v2840
        %v2842 = vpop.f32.mrf.mxu0
        %v2843 = vadd.f32 0.0, %v2842
        %v2844 = vpop.f32.mrf.mxu0
        %v2845 = vadd.f32 0.0, %v2844
        %v2846 = vpop.f32.mrf.mxu0
        %v2847 = vadd.f32 0.0, %v2846
        %2848 = vmatprep.mubr.bf16.mxu0 0
        %2849 = vmatmul.mubr.bf16.gmra.mxu0 %v2780
        %v2850 = vpop.f32.mrf.mxu0
        %v2851 = vadd.f32 0.0, %v2850
        %v2852 = vpop.f32.mrf.mxu0
        %v2853 = vadd.f32 0.0, %v2852
        %v2854 = vpop.f32.mrf.mxu0
        %v2855 = vadd.f32 0.0, %v2854
        %v2856 = vpop.f32.mrf.mxu0
        %v2857 = vadd.f32 0.0, %v2856
        %2858 = vdwg.mxu0
        %2859 = vmatprep.subr.bf16.mxu0 0
        %2860 = vmatpush1.bf16.msra.mxu0 0
        %2861 = vmatprep.subr.bf16.mxu0 0
        %2862 = vmatpush1.bf16.msra.mxu0 0
        %2863 = vmatprep.subr.bf16.mxu0 0
        %2864 = vmatpush1.bf16.msra.mxu0 0
        %2865 = vmatprep.subr.bf16.mxu0 0
        %2866 = vmatpush1.bf16.msra.mxu0 0
        %2867 = vmatprep.subr.bf16.mxu0 0
        %2868 = vmatpush1.bf16.msra.mxu0 0
        %2869 = vmatprep.subr.bf16.mxu0 0
        %2870 = vmatpush1.bf16.msra.mxu0 0
        %2871 = vmatprep.subr.bf16.mxu0 0
        %2872 = vmatpush1.bf16.msra.mxu0 0
        %2873 = vmatprep.subr.bf16.mxu0 %v2792
        %2874 = vmatpush1.bf16.msra.mxu0 %v2789
        %2875 = vmatprep.subr.bf16.mxu0 0
        %2876 = vmatpush2.bf16.msra.mxu0 0
        %2877 = vmatprep.subr.bf16.mxu0 0
        %2878 = vmatpush2.bf16.msra.mxu0 0
        %2879 = vmatprep.subr.bf16.mxu0 0
        %2880 = vmatpush2.bf16.msra.mxu0 0
        %2881 = vmatprep.subr.bf16.mxu0 0
        %2882 = vmatpush2.bf16.msra.mxu0 0
        %2883 = vmatprep.subr.bf16.mxu0 0
        %2884 = vmatpush2.bf16.msra.mxu0 0
        %2885 = vmatprep.subr.bf16.mxu0 0
        %2886 = vmatpush2.bf16.msra.mxu0 0
        %2887 = vmatprep.subr.bf16.mxu0 0
        %2888 = vmatpush2.bf16.msra.mxu0 0
        %2889 = vmatprep.subr.bf16.mxu0 0
        %2890 = vmatpush2.bf16.msra.mxu0 0
        %2891 = vmatprep.mubr.bf16.mxu0 0
        %2892 = vmatmul.mubr.bf16.gmra.mxu0 %v2777
        %v2893 = vpop.f32.mrf.mxu0
        %v2894 = vadd.f32 0.0, %v2893
        %v2895 = vpop.f32.mrf.mxu0
        %v2896 = vadd.f32 0.0, %v2895
        %v2897 = vpop.f32.mrf.mxu0
        %v2898 = vadd.f32 0.0, %v2897
        %v2899 = vpop.f32.mrf.mxu0
        %v2900 = vadd.f32 0.0, %v2899
        %2901 = vmatprep.mubr.bf16.mxu0 0
        %2902 = vmatmul.mubr.bf16.gmra.mxu0 %v2780
        %v2903 = vpop.f32.mrf.mxu0
        %v2904 = vadd.f32 0.0, %v2903
        %v2905 = vpop.f32.mrf.mxu0
        %v2906 = vadd.f32 0.0, %v2905
        %v2907 = vpop.f32.mrf.mxu0
        %v2908 = vadd.f32 0.0, %v2907
        %v2909 = vpop.f32.mrf.mxu0
        %v2910 = vadd.f32 0.0, %v2909
        %2911 = vdwg.mxu0
        %2912 = vmatprep.subr.bf16.mxu0 0
        %2913 = vmatpush1.bf16.msra.mxu0 0
        %2914 = vmatprep.subr.bf16.mxu0 0
        %2915 = vmatpush1.bf16.msra.mxu0 0
        %2916 = vmatprep.subr.bf16.mxu0 0
        %2917 = vmatpush1.bf16.msra.mxu0 0
        %2918 = vmatprep.subr.bf16.mxu0 0
        %2919 = vmatpush1.bf16.msra.mxu0 0
        %2920 = vmatprep.subr.bf16.mxu0 0
        %2921 = vmatpush1.bf16.msra.mxu0 0
        %2922 = vmatprep.subr.bf16.mxu0 0
        %2923 = vmatpush1.bf16.msra.mxu0 0
        %2924 = vmatprep.subr.bf16.mxu0 0
        %2925 = vmatpush1.bf16.msra.mxu0 0
        %2926 = vmatprep.subr.bf16.mxu0 %v2798
        %2927 = vmatpush1.bf16.msra.mxu0 %v2795
        %2928 = vmatprep.subr.bf16.mxu0 0
        %2929 = vmatpush2.bf16.msra.mxu0 0
        %2930 = vmatprep.subr.bf16.mxu0 0
        %2931 = vmatpush2.bf16.msra.mxu0 0
        %2932 = vmatprep.subr.bf16.mxu0 0
        %2933 = vmatpush2.bf16.msra.mxu0 0
        %2934 = vmatprep.subr.bf16.mxu0 0
        %2935 = vmatpush2.bf16.msra.mxu0 0
        %2936 = vmatprep.subr.bf16.mxu0 0
        %2937 = vmatpush2.bf16.msra.mxu0 0
        %2938 = vmatprep.subr.bf16.mxu0 0
        %2939 = vmatpush2.bf16.msra.mxu0 0
        %2940 = vmatprep.subr.bf16.mxu0 0
        %2941 = vmatpush2.bf16.msra.mxu0 0
        %2942 = vmatprep.subr.bf16.mxu0 0
        %2943 = vmatpush2.bf16.msra.mxu0 0
        %2944 = vmatprep.mubr.bf16.mxu0 0
        %2945 = vmatmul.mubr.bf16.gmra.mxu0 %v2777
        %v2946 = vpop.f32.mrf.mxu0
        %v2947 = vadd.f32 0.0, %v2946
        %v2948 = vpop.f32.mrf.mxu0
        %v2949 = vadd.f32 0.0, %v2948
        %v2950 = vpop.f32.mrf.mxu0
        %v2951 = vadd.f32 0.0, %v2950
        %v2952 = vpop.f32.mrf.mxu0
        %v2953 = vadd.f32 0.0, %v2952
        %2954 = vmatprep.mubr.bf16.mxu0 0
        %2955 = vmatmul.mubr.bf16.gmra.mxu0 %v2780
        %v2956 = vpop.f32.mrf.mxu0
        %v2957 = vadd.f32 0.0, %v2956
        %v2958 = vpop.f32.mrf.mxu0
        %v2959 = vadd.f32 0.0, %v2958
        %v2960 = vpop.f32.mrf.mxu0
        %v2961 = vadd.f32 0.0, %v2960
        %v2962 = vpop.f32.mrf.mxu0
        %v2963 = vadd.f32 0.0, %v2962
        %2964 = vdwg.mxu0
        %2965 = vmatprep.subr.bf16.mxu0 0
        %2966 = vmatpush1.bf16.msra.mxu0 0
        %2967 = vmatprep.subr.bf16.mxu0 0
        %2968 = vmatpush1.bf16.msra.mxu0 0
        %2969 = vmatprep.subr.bf16.mxu0 0
        %2970 = vmatpush1.bf16.msra.mxu0 0
        %2971 = vmatprep.subr.bf16.mxu0 0
        %2972 = vmatpush1.bf16.msra.mxu0 0
        %2973 = vmatprep.subr.bf16.mxu0 0
        %2974 = vmatpush1.bf16.msra.mxu0 0
        %2975 = vmatprep.subr.bf16.mxu0 0
        %2976 = vmatpush1.bf16.msra.mxu0 0
        %2977 = vmatprep.subr.bf16.mxu0 0
        %2978 = vmatpush1.bf16.msra.mxu0 0
        %2979 = vmatprep.subr.bf16.mxu0 %v2804
        %2980 = vmatpush1.bf16.msra.mxu0 %v2801
        %2981 = vmatprep.subr.bf16.mxu0 0
        %2982 = vmatpush2.bf16.msra.mxu0 0
        %2983 = vmatprep.subr.bf16.mxu0 0
        %2984 = vmatpush2.bf16.msra.mxu0 0
        %2985 = vmatprep.subr.bf16.mxu0 0
        %2986 = vmatpush2.bf16.msra.mxu0 0
        %2987 = vmatprep.subr.bf16.mxu0 0
        %2988 = vmatpush2.bf16.msra.mxu0 0
        %2989 = vmatprep.subr.bf16.mxu0 0
        %2990 = vmatpush2.bf16.msra.mxu0 0
        %2991 = vmatprep.subr.bf16.mxu0 0
        %2992 = vmatpush2.bf16.msra.mxu0 0
        %2993 = vmatprep.subr.bf16.mxu0 0
        %2994 = vmatpush2.bf16.msra.mxu0 0
        %2995 = vmatprep.subr.bf16.mxu0 0
        %2996 = vmatpush2.bf16.msra.mxu0 0
        %2997 = vmatprep.mubr.bf16.mxu0 0
        %2998 = vmatmul.mubr.bf16.gmra.mxu0 %v2777
        %v2999 = vpop.f32.mrf.mxu0
        %v3000 = vadd.f32 0.0, %v2999
        %v3001 = vpop.f32.mrf.mxu0
        %v3002 = vadd.f32 0.0, %v3001
        %v3003 = vpop.f32.mrf.mxu0
        %v3004 = vadd.f32 0.0, %v3003
        %v3005 = vpop.f32.mrf.mxu0
        %v3006 = vadd.f32 0.0, %v3005
        %3007 = vmatprep.mubr.bf16.mxu0 0
        %3008 = vmatmul.mubr.bf16.gmra.mxu0 %v2780
        %v3009 = vpop.f32.mrf.mxu0
        %v3010 = vadd.f32 0.0, %v3009
        %v3011 = vpop.f32.mrf.mxu0
        %v3012 = vadd.f32 0.0, %v3011
        %v3013 = vpop.f32.mrf.mxu0
        %v3014 = vadd.f32 0.0, %v3013
        %v3015 = vpop.f32.mrf.mxu0
        %v3016 = vadd.f32 0.0, %v3015
        %3017 = vdwg.mxu0
        %v3018 = vadd.f32 %v2691, %v2841
        %v3019 = vadd.f32 %v2692, %v2843
        %v3020 = vadd.f32 %v2693, %v2894
        %v3021 = vadd.f32 %v2694, %v2896
        %v3022 = vadd.f32 %v2695, %v2947
        %v3023 = vadd.f32 %v2696, %v2949
        %v3024 = vadd.f32 %v2697, %v3000
        %v3025 = vadd.f32 %v2698, %v3002
        %v3026 = vadd.f32 %v2699, %v2845
        %v3027 = vadd.f32 %v2700, %v2847
        %v3028 = vadd.f32 %v2701, %v2898
        %v3029 = vadd.f32 %v2702, %v2900
        %v3030 = vadd.f32 %v2703, %v2951
        %v3031 = vadd.f32 %v2704, %v2953
        %v3032 = vadd.f32 %v2705, %v3004
        %v3033 = vadd.f32 %v2706, %v3006
        %v3034 = vadd.f32 %v2707, %v2851
        %v3035 = vadd.f32 %v2708, %v2853
        %v3036 = vadd.f32 %v2709, %v2904
        %v3037 = vadd.f32 %v2710, %v2906
        %v3038 = vadd.f32 %v2711, %v2957
        %v3039 = vadd.f32 %v2712, %v2959
        %v3040 = vadd.f32 %v2713, %v3010
        %v3041 = vadd.f32 %v2714, %v3012
        %v3042 = vadd.f32 %v2715, %v2855
        %v3043 = vadd.f32 %v2716, %v2857
        %v3044 = vadd.f32 %v2717, %v2908
        %v3045 = vadd.f32 %v2718, %v2910
        %v3046 = vadd.f32 %v2719, %v2961
        %v3047 = vadd.f32 %v2720, %v2963
        %v3048 = vadd.f32 %v2721, %v3014
        %v3049 = vadd.f32 %v2722, %v3016
        %v3050 = vld [vmem:[%s2] sm:$0xff]
        %v3051 = vld [vmem:[%s2 + $0x8] sm:$0xff]
        %v3052 = vld [vmem:[%s2 + $0x10] sm:$0xff]
        %v3053 = vld [vmem:[%s2 + $0x18] sm:$0xff]
        %3055 = vset.pattern.permute.xlu0 0
        %3056 = vperm.xlu0 %3055, %v3050
        %v3057 = vpop.permute.xlu0 %3056
        %3060 = vset.pattern.permute.xlu0 0
        %3061 = vperm.xlu0 %3060, %v3051
        %v3062 = vpop.permute.xlu0 %3061
        %3065 = vset.pattern.permute.xlu0 0
        %3066 = vperm.xlu0 %3065, %v3052
        %v3067 = vpop.permute.xlu0 %3066
        %3070 = vset.pattern.permute.xlu0 0
        %3071 = vperm.xlu0 %3070, %v3053
        %v3072 = vpop.permute.xlu0 %3071
        %v3074 = vadd.f32 %v3018, %v3057
        %v3075 = vadd.f32 %v3019, %v3057
        %v3076 = vadd.f32 %v3020, %v3057
        %v3077 = vadd.f32 %v3021, %v3057
        %v3078 = vadd.f32 %v3022, %v3057
        %v3079 = vadd.f32 %v3023, %v3057
        %v3080 = vadd.f32 %v3024, %v3057
        %v3081 = vadd.f32 %v3025, %v3057
        %v3082 = vadd.f32 %v3026, %v3062
        %v3083 = vadd.f32 %v3027, %v3062
        %v3084 = vadd.f32 %v3028, %v3062
        %v3085 = vadd.f32 %v3029, %v3062
        %v3086 = vadd.f32 %v3030, %v3062
        %v3087 = vadd.f32 %v3031, %v3062
        %v3088 = vadd.f32 %v3032, %v3062
        %v3089 = vadd.f32 %v3033, %v3062
        %v3090 = vadd.f32 %v3034, %v3067
        %v3091 = vadd.f32 %v3035, %v3067
        %v3092 = vadd.f32 %v3036, %v3067
        %v3093 = vadd.f32 %v3037, %v3067
        %v3094 = vadd.f32 %v3038, %v3067
        %v3095 = vadd.f32 %v3039, %v3067
        %v3096 = vadd.f32 %v3040, %v3067
        %v3097 = vadd.f32 %v3041, %v3067
        %v3098 = vadd.f32 %v3042, %v3072
        %v3099 = vadd.f32 %v3043, %v3072
        %v3100 = vadd.f32 %v3044, %v3072
        %v3101 = vadd.f32 %v3045, %v3072
        %v3102 = vadd.f32 %v3046, %v3072
        %v3103 = vadd.f32 %v3047, %v3072
        %v3104 = vadd.f32 %v3048, %v3072
        %v3105 = vadd.f32 %v3049, %v3072
        %vm3106 = vcmp.ge.f32.partialorder %v3074, 0.0
        %vm3107 = vcmp.ge.f32.partialorder %v3075, 0.0
        %vm3108 = vcmp.ge.f32.partialorder %v3076, 0.0
        %vm3109 = vcmp.ge.f32.partialorder %v3077, 0.0
        %vm3110 = vcmp.ge.f32.partialorder %v3078, 0.0
        %vm3111 = vcmp.ge.f32.partialorder %v3079, 0.0
        %vm3112 = vcmp.ge.f32.partialorder %v3080, 0.0
        %vm3113 = vcmp.ge.f32.partialorder %v3081, 0.0
        %vm3114 = vcmp.ge.f32.partialorder %v3082, 0.0
        %vm3115 = vcmp.ge.f32.partialorder %v3083, 0.0
        %vm3116 = vcmp.ge.f32.partialorder %v3084, 0.0
        %vm3117 = vcmp.ge.f32.partialorder %v3085, 0.0
        %vm3118 = vcmp.ge.f32.partialorder %v3086, 0.0
        %vm3119 = vcmp.ge.f32.partialorder %v3087, 0.0
        %vm3120 = vcmp.ge.f32.partialorder %v3088, 0.0
        %vm3121 = vcmp.ge.f32.partialorder %v3089, 0.0
        %vm3122 = vcmp.ge.f32.partialorder %v3090, 0.0
        %vm3123 = vcmp.ge.f32.partialorder %v3091, 0.0
        %vm3124 = vcmp.ge.f32.partialorder %v3092, 0.0
        %vm3125 = vcmp.ge.f32.partialorder %v3093, 0.0
        %vm3126 = vcmp.ge.f32.partialorder %v3094, 0.0
        %vm3127 = vcmp.ge.f32.partialorder %v3095, 0.0
        %vm3128 = vcmp.ge.f32.partialorder %v3096, 0.0
        %vm3129 = vcmp.ge.f32.partialorder %v3097, 0.0
        %vm3130 = vcmp.ge.f32.partialorder %v3098, 0.0
        %vm3131 = vcmp.ge.f32.partialorder %v3099, 0.0
        %vm3132 = vcmp.ge.f32.partialorder %v3100, 0.0
        %vm3133 = vcmp.ge.f32.partialorder %v3101, 0.0
        %vm3134 = vcmp.ge.f32.partialorder %v3102, 0.0
        %vm3135 = vcmp.ge.f32.partialorder %v3103, 0.0
        %vm3136 = vcmp.ge.f32.partialorder %v3104, 0.0
        %vm3137 = vcmp.ge.f32.partialorder %v3105, 0.0
        %v3138 = vmul.f32 %v3074, 0.2
        %v3139 = vmul.f32 %v3075, 0.2
        %v3140 = vmul.f32 %v3076, 0.2
        %v3141 = vmul.f32 %v3077, 0.2
        %v3142 = vmul.f32 %v3078, 0.2
        %v3143 = vmul.f32 %v3079, 0.2
        %v3144 = vmul.f32 %v3080, 0.2
        %v3145 = vmul.f32 %v3081, 0.2
        %v3146 = vmul.f32 %v3082, 0.2
        %v3147 = vmul.f32 %v3083, 0.2
        %v3148 = vmul.f32 %v3084, 0.2
        %v3149 = vmul.f32 %v3085, 0.2
        %v3150 = vmul.f32 %v3086, 0.2
        %v3151 = vmul.f32 %v3087, 0.2
        %v3152 = vmul.f32 %v3088, 0.2
        %v3153 = vmul.f32 %v3089, 0.2
        %v3154 = vmul.f32 %v3090, 0.2
        %v3155 = vmul.f32 %v3091, 0.2
        %v3156 = vmul.f32 %v3092, 0.2
        %v3157 = vmul.f32 %v3093, 0.2
        %v3158 = vmul.f32 %v3094, 0.2
        %v3159 = vmul.f32 %v3095, 0.2
        %v3160 = vmul.f32 %v3096, 0.2
        %v3161 = vmul.f32 %v3097, 0.2
        %v3162 = vmul.f32 %v3098, 0.2
        %v3163 = vmul.f32 %v3099, 0.2
        %v3164 = vmul.f32 %v3100, 0.2
        %v3165 = vmul.f32 %v3101, 0.2
        %v3166 = vmul.f32 %v3102, 0.2
        %v3167 = vmul.f32 %v3103, 0.2
        %v3168 = vmul.f32 %v3104, 0.2
        %v3169 = vmul.f32 %v3105, 0.2
        %v3170 = vsel %vm3106, %v3074, %v3138
        %v3171 = vsel %vm3107, %v3075, %v3139
        %v3172 = vsel %vm3108, %v3076, %v3140
        %v3173 = vsel %vm3109, %v3077, %v3141
        %v3174 = vsel %vm3110, %v3078, %v3142
        %v3175 = vsel %vm3111, %v3079, %v3143
        %v3176 = vsel %vm3112, %v3080, %v3144
        %v3177 = vsel %vm3113, %v3081, %v3145
        %v3178 = vsel %vm3114, %v3082, %v3146
        %v3179 = vsel %vm3115, %v3083, %v3147
        %v3180 = vsel %vm3116, %v3084, %v3148
        %v3181 = vsel %vm3117, %v3085, %v3149
        %v3182 = vsel %vm3118, %v3086, %v3150
        %v3183 = vsel %vm3119, %v3087, %v3151
        %v3184 = vsel %vm3120, %v3088, %v3152
        %v3185 = vsel %vm3121, %v3089, %v3153
        %v3186 = vsel %vm3122, %v3090, %v3154
        %v3187 = vsel %vm3123, %v3091, %v3155
        %v3188 = vsel %vm3124, %v3092, %v3156
        %v3189 = vsel %vm3125, %v3093, %v3157
        %v3190 = vsel %vm3126, %v3094, %v3158
        %v3191 = vsel %vm3127, %v3095, %v3159
        %v3192 = vsel %vm3128, %v3096, %v3160
        %v3193 = vsel %vm3129, %v3097, %v3161
        %v3194 = vsel %vm3130, %v3098, %v3162
        %v3195 = vsel %vm3131, %v3099, %v3163
        %v3196 = vsel %vm3132, %v3100, %v3164
        %v3197 = vsel %vm3133, %v3101, %v3165
        %v3198 = vsel %vm3134, %v3102, %v3166
        %v3199 = vsel %vm3135, %v3103, %v3167
        %v3200 = vsel %vm3136, %v3104, %v3168
        %v3201 = vsel %vm3137, %v3105, %v3169
        %v3202 = vpack.c.bf16 %v3178, %v3170
        %v3203 = vpack.c.bf16 %v3179, %v3171
        %v3204 = vpack.c.bf16 %v3180, %v3172
        %v3205 = vpack.c.bf16 %v3181, %v3173
        %v3206 = vpack.c.bf16 %v3182, %v3174
        %v3207 = vpack.c.bf16 %v3183, %v3175
        %v3208 = vpack.c.bf16 %v3184, %v3176
        %v3209 = vpack.c.bf16 %v3185, %v3177
        %v3210 = vpack.c.bf16 %v3194, %v3186
        %v3211 = vpack.c.bf16 %v3195, %v3187
        %v3212 = vpack.c.bf16 %v3196, %v3188
        %v3213 = vpack.c.bf16 %v3197, %v3189
        %v3214 = vpack.c.bf16 %v3198, %v3190
        %v3215 = vpack.c.bf16 %v3199, %v3191
        %v3216 = vpack.c.bf16 %v3200, %v3192
        %v3217 = vpack.c.bf16 %v3201, %v3193
        %v3234 = vunpack.c.l.b16 %v3202
        %v3235 = vunpack.c.l.b16 %v3203
        %v3236 = vunpack.c.l.b16 %v3204
        %v3237 = vunpack.c.l.b16 %v3205
        %v3238 = vunpack.c.l.b16 %v3206
        %v3239 = vunpack.c.l.b16 %v3207
        %v3240 = vunpack.c.l.b16 %v3208
        %v3241 = vunpack.c.l.b16 %v3209
        %v3242 = vunpack.c.h.b16 %v3202
        %v3243 = vunpack.c.h.b16 %v3203
        %v3244 = vunpack.c.h.b16 %v3204
        %v3245 = vunpack.c.h.b16 %v3205
        %v3246 = vunpack.c.h.b16 %v3206
        %v3247 = vunpack.c.h.b16 %v3207
        %v3248 = vunpack.c.h.b16 %v3208
        %v3249 = vunpack.c.h.b16 %v3209
        %v3250 = vunpack.c.l.b16 %v3210
        %v3251 = vunpack.c.l.b16 %v3211
        %v3252 = vunpack.c.l.b16 %v3212
        %v3253 = vunpack.c.l.b16 %v3213
        %v3254 = vunpack.c.l.b16 %v3214
        %v3255 = vunpack.c.l.b16 %v3215
        %v3256 = vunpack.c.l.b16 %v3216
        %v3257 = vunpack.c.l.b16 %v3217
        %v3258 = vunpack.c.h.b16 %v3210
        %v3259 = vunpack.c.h.b16 %v3211
        %v3260 = vunpack.c.h.b16 %v3212
        %v3261 = vunpack.c.h.b16 %v3213
        %v3262 = vunpack.c.h.b16 %v3214
        %v3263 = vunpack.c.h.b16 %v3215
        %v3264 = vunpack.c.h.b16 %v3216
        %v3265 = vunpack.c.h.b16 %v3217
        %v3266 = vpack.c.b16 %v3235, %v3234
        %v3267 = vpack.c.b16 %v3237, %v3236
        %v3268 = vpack.c.b16 %v3239, %v3238
        %v3269 = vpack.c.b16 %v3241, %v3240
        %v3270 = vpack.c.b16 %v3243, %v3242
        %v3271 = vpack.c.b16 %v3245, %v3244
        %v3272 = vpack.c.b16 %v3247, %v3246
        %v3273 = vpack.c.b16 %v3249, %v3248
        %v3274 = vpack.c.b16 %v3251, %v3250
        %v3275 = vpack.c.b16 %v3253, %v3252
        %v3276 = vpack.c.b16 %v3255, %v3254
        %v3277 = vpack.c.b16 %v3257, %v3256
        %v3278 = vpack.c.b16 %v3259, %v3258
        %v3279 = vpack.c.b16 %v3261, %v3260
        %v3280 = vpack.c.b16 %v3263, %v3262
        %v3281 = vpack.c.b16 %v3265, %v3264
        %3298 = vst [vmem:[%s159] sm:$0xff] %v3266
        %3299 = vst [vmem:[%s159 + $0x8] sm:$0xff] %v3267
        %3300 = vst [vmem:[%s159 + $0x10] sm:$0xff] %v3268
        %3301 = vst [vmem:[%s159 + $0x18] sm:$0xff] %v3269
        %3302 = vst [vmem:[%s159 + $0x20] sm:$0xff] %v3270
        %3303 = vst [vmem:[%s159 + $0x28] sm:$0xff] %v3271
        %3304 = vst [vmem:[%s159 + $0x30] sm:$0xff] %v3272
        %3305 = vst [vmem:[%s159 + $0x38] sm:$0xff] %v3273
        %3306 = vst [vmem:[%s159 + $0x40] sm:$0xff] %v3274
        %3307 = vst [vmem:[%s159 + $0x48] sm:$0xff] %v3275
        %3308 = vst [vmem:[%s159 + $0x50] sm:$0xff] %v3276
        %3309 = vst [vmem:[%s159 + $0x58] sm:$0xff] %v3277
        %3310 = vst [vmem:[%s159 + $0x60] sm:$0xff] %v3278
        %3311 = vst [vmem:[%s159 + $0x68] sm:$0xff] %v3279
        %3312 = vst [vmem:[%s159 + $0x70] sm:$0xff] %v3280
        %3313 = vst [vmem:[%s159 + $0x78] sm:$0xff] %v3281
        %s3314 = sand.u32 %s90, 1
        %s3315 = sand.u32 %s90, 1
        %s3316 = smul.addr %s3315, 128
        %s3317 = scalar_lea.vmem [#allocation2], %s3316
        // Predicated region
        $region33: #{a_call__.8} parent=31 // pred_check
          %p3318 = pneg %p100
        $region34: #{a_call__.8} parent=31 // pred_check_branch
          %3320 = sbr.rel (%p3318) target = $region36
        $region35: #{a_call__.8} parent=31 // pred_region
          %s3321 = smul.u32 8, %s14
          %s3322 = smul.addr %s3321, 4
          %s3323 = scalar_lea.vmem %s3, %s3322
          // Predicated region
          $region37: #{a_call__.8} parent=35 // pred_check
            _
          $region38: #{a_call__.8} parent=35 // pred_check_branch
            %3325 = sbr.rel (0) target = $region40
          $region39: #{a_call__.8} parent=35 // pred_region
            // Predicated region
            $region41: #{a_call__.8} parent=39 // pred_check
              _
            $region42: #{a_call__.8} parent=39 // pred_check_branch
              %3327 = sbr.rel (0) target = $region44
            $region43: #{a_call__.8} parent=39 // pred_region
              loop: start=0, step=1, limit=1
              $region45: #{a_call__.8} parent=43 // loop_pre_header
                _
              $region46: #{a_call__.8} parent=43 // loop_header
                %s3329 = sphi 0, %s3333
                %p3330 = scmp.ge.s32.totalorder %s3329, 1
                %s3334 = sphi %s3317, %s3317
                %s3335 = sphi %s3323, %s3323
              $region47: #{a_call__.8} parent=43 // loop_header_branch
                %3332 = sbr.rel (%p3330) target = $region51
              $region48: #{a_call__.8} parent=43 // loop_body
                %v3336 = vld [vmem:[%s3334] sm:$0xff]
                %3337 = vst [vmem:[%s3335] sm:$0xff] %v3336
                %v3338 = vld [vmem:[%s3334 + $0x8] sm:$0xff]
                %3339 = vst [vmem:[%s3335 + $0x8] sm:$0xff] %v3338
                %v3340 = vld [vmem:[%s3334 + $0x10] sm:$0xff]
                %3341 = vst [vmem:[%s3335 + $0x10] sm:$0xff] %v3340
                %v3342 = vld [vmem:[%s3334 + $0x18] sm:$0xff]
                %3343 = vst [vmem:[%s3335 + $0x18] sm:$0xff] %v3342
                %v3344 = vld [vmem:[%s3334 + $0x20] sm:$0xff]
                %3345 = vst [vmem:[%s3335 + $0x40] sm:$0xff] %v3344
                %v3346 = vld [vmem:[%s3334 + $0x28] sm:$0xff]
                %3347 = vst [vmem:[%s3335 + $0x48] sm:$0xff] %v3346
                %v3348 = vld [vmem:[%s3334 + $0x30] sm:$0xff]
                %3349 = vst [vmem:[%s3335 + $0x50] sm:$0xff] %v3348
                %v3350 = vld [vmem:[%s3334 + $0x38] sm:$0xff]
                %3351 = vst [vmem:[%s3335 + $0x58] sm:$0xff] %v3350
                %v3352 = vld [vmem:[%s3334 + $0x40] sm:$0xff]
                %3353 = vst [vmem:[%s3335 + $0x80] sm:$0xff] %v3352
                %v3354 = vld [vmem:[%s3334 + $0x48] sm:$0xff]
                %3355 = vst [vmem:[%s3335 + $0x88] sm:$0xff] %v3354
                %v3356 = vld [vmem:[%s3334 + $0x50] sm:$0xff]
                %3357 = vst [vmem:[%s3335 + $0x90] sm:$0xff] %v3356
                %v3358 = vld [vmem:[%s3334 + $0x58] sm:$0xff]
                %3359 = vst [vmem:[%s3335 + $0x98] sm:$0xff] %v3358
                %v3360 = vld [vmem:[%s3334 + $0x60] sm:$0xff]
                %3361 = vst [vmem:[%s3335 + $0xc0] sm:$0xff] %v3360
                %v3362 = vld [vmem:[%s3334 + $0x68] sm:$0xff]
                %3363 = vst [vmem:[%s3335 + $0xc8] sm:$0xff] %v3362
                %v3364 = vld [vmem:[%s3334 + $0x70] sm:$0xff]
                %3365 = vst [vmem:[%s3335 + $0xd0] sm:$0xff] %v3364
                %v3366 = vld [vmem:[%s3334 + $0x78] sm:$0xff]
                %3367 = vst [vmem:[%s3335 + $0xd8] sm:$0xff] %v3366
              $region49: #{a_call__.8} parent=43 // loop_footer
                %s3333 = sadd.s32 1, %s3329
              $region50: #{a_call__.8} parent=43 // loop_footer_branch
                %3328 = sbr.rel target = $region46
              $region51: #{a_call__.8} parent=43 // loop_exit
                _
            $region44: #{a_call__.8} parent=39 // pred_fallthru
              _
            // Predicated region
            $region52: #{a_call__.8} parent=39 // pred_check
              _
            $region53: #{a_call__.8} parent=39 // pred_check_branch
              %3369 = sbr.rel target = $region55
            $region54: #{a_call__.8} parent=39 // pred_region
              _
            $region55: #{a_call__.8} parent=39 // pred_fallthru
              _
          $region40: #{a_call__.8} parent=35 // pred_fallthru
            _
          %3370 = vnop
        $region36: #{a_call__.8} parent=31 // pred_fallthru
          _
      $region32: #{a_call__.8} parent=5 // pred_fallthru
        _
      %p3371 = scmp.le.s32.totalorder 2, %s9
      // Predicated region
      $region56: #{a_call__.8} parent=5 // pred_check
        %p3372 = pneg %p3371
      $region57: #{a_call__.8} parent=5 // pred_check_branch
        %3374 = sbr.rel (%p3372) target = $region59
      $region58: #{a_call__.8} parent=5 // pred_region
        %s3375 = ssub.s32 %s9, 2
        // Predicated region
        $region60: #{a_call__.8} parent=58 // pred_check
          %p3376 = pneg %p106
        $region61: #{a_call__.8} parent=58 // pred_check_branch
          %3378 = sbr.rel (%p3376) target = $region63
        $region62: #{a_call__.8} parent=58 // pred_region
          %s3379 = sand.u32 %s91, 1
          %s3380 = sand.u32 %s91, 1
          %s3381 = smul.addr %s3380, 128
          %s3382 = scalar_lea.vmem [#allocation2], %s3381
        $region63: #{a_call__.8} parent=58 // pred_fallthru
          _
      $region59: #{a_call__.8} parent=5 // pred_fallthru
        _
    $region6: #{a_call__.8} parent=1 // loop_footer
      %s13 = sadd.s32 1, %s9
    $region7: #{a_call__.8} parent=1 // loop_footer_branch
      %8 = sbr.rel target = $region3
    $region8: #{a_call__.8} parent=1 // loop_exit
      _

// kernel: a_call__.9
$region0: #{a_call__.9}
  #allocation0 [shape = 'u32[]', space=smem, size = 0x4, offset = 0x4, fixed_abs, tag = 'smem constant byte address 0x4 - core index']
  #allocation1 [shape = 'u32[144,128]{1,0:T(1,128)}', space=vmem, size = 0x12000, scoped, tag = 'internal scratch']
  %s0 = inlined_call_operand.vmem [shape: bf16[2,2,96,1024], index: 0, kind: input, shape index: {}]
  %s1 = inlined_call_operand.vmem [shape: bf16[9,32,96], index: 1, kind: input, shape index: {}]
  %s2 = inlined_call_operand.vmem [shape: f32[32,1], index: 2, kind: input, shape index: {}]
  %s3 = inlined_call_operand.vmem [shape: bf16[32,1024], index: 3, kind: output, shape index: {}]
  %s4 = sld [smem:[#allocation0]]
  $region64: #{a_call__.9} parent=0
    _
  %s6 = ssub.s32 1, %s4
  %s7 = scalar_select 0, %s6, %s4
  $region1: #{a_call__.9} parent=0
    #allocation2 [shape = 'u8[65536]{0}', space=vmem, size = 0x10000, scoped, tag = 'output window, operand 0']
    loop: start=0, step=1, limit=4
    $region2: #{a_call__.9} parent=1 // loop_pre_header
      _
    $region3: #{a_call__.9} parent=1 // loop_header
      %s9 = sphi 0, %s13
      %p10 = scmp.ge.s32.totalorder %s9, 4
      %s19 = sphi 0, %s21
      %s22 = sphi 0, %s19
      %s23 = sphi 0, %s22
      %s39 = sphi 0, %s23
      %s43 = sphi 0, %s43
      %s45 = sphi 0, %s43
      %s46 = sphi 0, %s45
      %s60 = sphi 0, %s46
      %s64 = sphi 0, %s64
      %s66 = sphi 0, %s64
      %s67 = sphi 0, %s66
      %s81 = sphi 0, %s67
      %s87 = sphi 0, %s89
      %s90 = sphi 0, %s87
      %s91 = sphi 0, %s90
      %s107 = sphi 0, %s91
    $region4: #{a_call__.9} parent=1 // loop_header_branch
      %12 = sbr.rel (%p10) target = $region8
    $region5: #{a_call__.9} parent=1 // loop_body
      %s14 = ssub.s32 %s9, 1
      %s15 = ssub.s32 %s9, 2
      %s16 = sadd.s32 %s9, 1
      %s17 = ssub.s32 %s9, %s16
      %p18 = scmp.eq.s32.totalorder %s17, 0
      %s20 = sadd.s32 %s19, 1
      %s21 = scalar_select %p18, %s19, %s20
      %p24 = pneg %p18
      %p25 = scmp.eq.s32.totalorder %s9, 1
      %p26 = por %p24, %p25
      %p27 = scmp.ne.s32.totalorder %s19, %s22
      %p28 = scmp.eq.s32.totalorder %s9, 0
      %p29 = por %p27, %p28
      %p30 = scmp.ne.s32.totalorder %s19, %s22
      %p31 = scmp.eq.s32.totalorder %s14, 1
      %p32 = por %p30, %p31
      %p33 = scmp.ne.s32.totalorder %s22, %s23
      %p34 = scmp.eq.s32.totalorder %s14, 0
      %p35 = por %p33, %p34
      %p36 = scmp.ne.s32.totalorder %s22, %s23
      %p37 = scmp.eq.s32.totalorder %s15, 1
      %p38 = por %p36, %p37
      %p40 = scmp.ne.s32.totalorder %s23, %s39
      %p41 = scmp.eq.s32.totalorder %s15, 0
      %p42 = por %p40, %p41
      %s44 = sadd.s32 %s43, 1
      %p47 = scmp.eq.s32.totalorder %s9, 1
      %p48 = scmp.ne.s32.totalorder %s43, %s45
      %p49 = scmp.eq.s32.totalorder %s9, 0
      %p50 = por %p48, %p49
      %p51 = scmp.ne.s32.totalorder %s43, %s45
      %p52 = scmp.eq.s32.totalorder %s14, 1
      %p53 = por %p51, %p52
      %p54 = scmp.ne.s32.totalorder %s45, %s46
      %p55 = scmp.eq.s32.totalorder %s14, 0
      %p56 = por %p54, %p55
      %p57 = scmp.ne.s32.totalorder %s45, %s46
      %p58 = scmp.eq.s32.totalorder %s15, 1
      %p59 = por %p57, %p58
      %p61 = scmp.ne.s32.totalorder %s46, %s60
      %p62 = scmp.eq.s32.totalorder %s15, 0
      %p63 = por %p61, %p62
      %s65 = sadd.s32 %s64, 1
      %p68 = scmp.eq.s32.totalorder %s9, 1
      %p69 = scmp.ne.s32.totalorder %s64, %s66
      %p70 = scmp.eq.s32.totalorder %s9, 0
      %p71 = por %p69, %p70
      %p72 = scmp.ne.s32.totalorder %s64, %s66
      %p73 = scmp.eq.s32.totalorder %s14, 1
      %p74 = por %p72, %p73
      %p75 = scmp.ne.s32.totalorder %s66, %s67
      %p76 = scmp.eq.s32.totalorder %s14, 0
      %p77 = por %p75, %p76
      %p78 = scmp.ne.s32.totalorder %s66, %s67
      %p79 = scmp.eq.s32.totalorder %s15, 1
      %p80 = por %p78, %p79
      %p82 = scmp.ne.s32.totalorder %s67, %s81
      %p83 = scmp.eq.s32.totalorder %s15, 0
      %p84 = por %p82, %p83
      %s85 = ssub.s32 %s9, %s16
      %p86 = scmp.eq.s32.totalorder %s85, 0
      %s88 = sadd.s32 %s87, 1
      %s89 = scalar_select %p86, %s87, %s88
      %p92 = pneg %p86
      %p93 = scmp.eq.s32.totalorder %s9, 1
      %p94 = por %p92, %p93
      %p95 = scmp.ne.s32.totalorder %s87, %s90
      %p96 = scmp.eq.s32.totalorder %s9, 0
      %p97 = por %p95, %p96
      %p98 = scmp.ne.s32.totalorder %s87, %s90
      %p99 = scmp.eq.s32.totalorder %s14, 1
      %p100 = por %p98, %p99
      %p101 = scmp.ne.s32.totalorder %s90, %s91
      %p102 = scmp.eq.s32.totalorder %s14, 0
      %p103 = por %p101, %p102
      %p104 = scmp.ne.s32.totalorder %s90, %s91
      %p105 = scmp.eq.s32.totalorder %s15, 1
      %p106 = por %p104, %p105
      %p108 = scmp.ne.s32.totalorder %s91, %s107
      %p109 = scmp.eq.s32.totalorder %s15, 0
      %p110 = por %p108, %p109
      %p111 = scmp.le.s32.totalorder 1, %s9
      %p112 = scmp.lt.s32.totalorder %s9, 3
      %p113 = pnand %p111, %p112
      %p114 = pneg %p113
      // Predicated region
      $region9: #{a_call__.9} parent=5 // pred_check
        _
      $region10: #{a_call__.9} parent=5 // pred_check_branch
        %116 = sbr.rel (%p113) target = $region12
      $region11: #{a_call__.9} parent=5 // pred_region
        %s117 = ssub.s32 %s9, 1
        // Predicated region
        $region13: #{a_call__.9} parent=11 // pred_check
          %p118 = pneg %p56
        $region14: #{a_call__.9} parent=11 // pred_check_branch
          %120 = sbr.rel (%p118) target = $region16
        $region15: #{a_call__.9} parent=11 // pred_region
          _
        $region16: #{a_call__.9} parent=11 // pred_fallthru
          _
        // Predicated region
        $region17: #{a_call__.9} parent=11 // pred_check
          %p121 = pneg %p77
        $region18: #{a_call__.9} parent=11 // pred_check_branch
          %123 = sbr.rel (%p121) target = $region20
        $region19: #{a_call__.9} parent=11 // pred_region
          _
        $region20: #{a_call__.9} parent=11 // pred_fallthru
          _
      $region12: #{a_call__.9} parent=5 // pred_fallthru
        _
      %p124 = scmp.lt.s32.totalorder %s9, 2
      // Predicated region
      $region21: #{a_call__.9} parent=5 // pred_check
        %p125 = pneg %p124
      $region22: #{a_call__.9} parent=5 // pred_check_branch
        %127 = sbr.rel (%p125) target = $region24
      $region23: #{a_call__.9} parent=5 // pred_region
        // Predicated region
        $region25: #{a_call__.9} parent=23 // pred_check
          %p128 = pneg %p29
        $region26: #{a_call__.9} parent=23 // pred_check_branch
          %130 = sbr.rel (%p128) target = $region28
        $region27: #{a_call__.9} parent=23 // pred_region
          %p131 = scmp.lt.s32.totalorder %s9, 1
          %s132 = scalar_select %p131, %s9, 1
          %s133 = smul.addr %s132, 192
          %s134 = smul.addr %s133, 4
          %s135 = scalar_lea.vmem %s0, %s134
        $region28: #{a_call__.9} parent=23 // pred_fallthru
          _
      $region24: #{a_call__.9} parent=5 // pred_fallthru
        _
      %p136 = scmp.le.s32.totalorder 1, %s9
      %p137 = scmp.lt.s32.totalorder %s9, 3
      %p138 = pnand %p136, %p137
      %p139 = pneg %p138
      // Predicated region
      $region29: #{a_call__.9} parent=5 // pred_check
        _
      $region30: #{a_call__.9} parent=5 // pred_check_branch
        %141 = sbr.rel (%p138) target = $region32
      $region31: #{a_call__.9} parent=5 // pred_region
        %s142 = ssub.s32 %s9, 1
        %p143 = scmp.lt.s32.totalorder %s14, 1
        %s144 = scalar_select %p143, %s14, 1
        %s145 = smul.addr %s144, 192
        %s146 = smul.addr %s145, 4
        %s147 = scalar_lea.vmem %s0, %s146
        %p148 = pneg %p35
        %p149 = pneg %p32
        %p150 = pneg %p56
        %p151 = pneg %p53
        %p152 = pneg %p77
        %p153 = pneg %p74
        %p154 = pneg %p103
        %p155 = pneg %p100
        %s156 = sand.u32 %s90, 1
        %s157 = sand.u32 %s90, 1
        %s158 = smul.addr %s157, 64
        %s159 = scalar_lea.vmem [#allocation2], %s158
        %p160 = scmp.lt.s32.totalorder %s14, 1
        %s161 = scalar_select %p160, %s14, 1
        %s162 = smul.addr %s161, 192
        %s163 = smul.addr %s162, 4
        %s164 = scalar_lea.vmem %s0, %s163
        %s165 = smul.u32 4, %s14
        %v167 = vld [vmem:[%s164] sm:$0xff]
        %v168 = vld [vmem:[%s164 + $0x8] sm:$0xff]
        %v169 = vld [vmem:[%s164 + $0x20] sm:$0xff]
        %v170 = vld [vmem:[%s164 + $0x28] sm:$0xff]
        %v171 = vld [vmem:[%s164 + $0x40] sm:$0xff]
        %v172 = vld [vmem:[%s164 + $0x48] sm:$0xff]
        %v173 = vld [vmem:[%s164 + $0x60] sm:$0xff]
        %v174 = vld [vmem:[%s164 + $0x68] sm:$0xff]
        %v175 = vld [vmem:[%s164 + $0x80] sm:$0xff]
        %v176 = vld [vmem:[%s164 + $0x88] sm:$0xff]
        %v177 = vld [vmem:[%s164 + $0xa0] sm:$0xff]
        %v178 = vld [vmem:[%s164 + $0xa8] sm:$0xff]
        %v179 = vld [vmem:[%s164 + $0xc0] sm:$0xff]
        %v180 = vld [vmem:[%s164 + $0xc8] sm:$0xff]
        %v181 = vld [vmem:[%s164 + $0xe0] sm:$0xff]
        %v182 = vld [vmem:[%s164 + $0xe8] sm:$0xff]
        %v183 = vld [vmem:[%s164 + $0x100] sm:$0xff]
        %v184 = vld [vmem:[%s164 + $0x108] sm:$0xff]
        %v185 = vld [vmem:[%s164 + $0x120] sm:$0xff]
        %v186 = vld [vmem:[%s164 + $0x128] sm:$0xff]
        %v187 = vld [vmem:[%s164 + $0x140] sm:$0xff]
        %v188 = vld [vmem:[%s164 + $0x148] sm:$0xff]
        %v189 = vld [vmem:[%s164 + $0x160] sm:$0xff]
        %v190 = vld [vmem:[%s164 + $0x168] sm:$0xff]
        %v191 = vld [vmem:[%s1] sm:$0xf]
        %v192 = vld [vmem:[%s1 + $0x4] sm:$0xf]
        %v193 = vld [vmem:[%s1 + $0x8] sm:$0xf]
        %v194 = vld [vmem:[%s1 + $0xc] sm:$0xf]
        %s195 = scalar_lea.vmem %s164, 384
        %v196 = vld [vmem:[%s195] sm:$0xff]
        %v197 = vld [vmem:[%s195 + $0x8] sm:$0xff]
        %v198 = vld [vmem:[%s195 + $0x20] sm:$0xff]
        %v199 = vld [vmem:[%s195 + $0x28] sm:$0xff]
        %v200 = vld [vmem:[%s195 + $0x40] sm:$0xff]
        %v201 = vld [vmem:[%s195 + $0x48] sm:$0xff]
        %v202 = vld [vmem:[%s195 + $0x60] sm:$0xff]
        %v203 = vld [vmem:[%s195 + $0x68] sm:$0xff]
        %v204 = vld [vmem:[%s195 + $0x80] sm:$0xff]
        %v205 = vld [vmem:[%s195 + $0x88] sm:$0xff]
        %v206 = vld [vmem:[%s195 + $0xa0] sm:$0xff]
        %v207 = vld [vmem:[%s195 + $0xa8] sm:$0xff]
        %v208 = vld [vmem:[%s195 + $0xc0] sm:$0xff]
        %v209 = vld [vmem:[%s195 + $0xc8] sm:$0xff]
        %v210 = vld [vmem:[%s195 + $0xe0] sm:$0xff]
        %v211 = vld [vmem:[%s195 + $0xe8] sm:$0xff]
        %v212 = vld [vmem:[%s195 + $0x100] sm:$0xff]
        %v213 = vld [vmem:[%s195 + $0x108] sm:$0xff]
        %v214 = vld [vmem:[%s195 + $0x120] sm:$0xff]
        %v215 = vld [vmem:[%s195 + $0x128] sm:$0xff]
        %v216 = vld [vmem:[%s195 + $0x140] sm:$0xff]
        %v217 = vld [vmem:[%s195 + $0x148] sm:$0xff]
        %v218 = vld [vmem:[%s195 + $0x160] sm:$0xff]
        %v219 = vld [vmem:[%s195 + $0x168] sm:$0xff]
        %s220 = scalar_lea.vmem %s1, 16
        %v221 = vld [vmem:[%s220] sm:$0xf]
        %v222 = vld [vmem:[%s220 + $0x4] sm:$0xf]
        %v223 = vld [vmem:[%s220 + $0x8] sm:$0xf]
        %v224 = vld [vmem:[%s220 + $0xc] sm:$0xf]
        %v229 = vunpack.c.l.b16 %v221
        %v230 = vunpack.c.l.b16 %v222
        %v231 = vunpack.c.l.b16 %v223
        %v232 = vunpack.c.l.b16 %v224
        %v233 = vpack.c.b16 %v230, %v229
        %v234 = vpack.c.b16 %v232, %v231
        %v259 = vunpack.c.l.b16 %v196
        %v260 = vunpack.c.h.b16 %v196
        %v261 = vunpack.c.l.b16 %v197
        %v262 = vunpack.c.h.b16 %v197
        %v263 = vunpack.c.l.b16 %v198
        %v264 = vunpack.c.h.b16 %v198
        %v265 = vunpack.c.l.b16 %v199
        %v266 = vunpack.c.h.b16 %v199
        %v267 = vunpack.c.l.b16 %v200
        %v268 = vunpack.c.h.b16 %v200
        %v269 = vunpack.c.l.b16 %v201
        %v270 = vunpack.c.h.b16 %v201
        %v271 = vunpack.c.l.b16 %v202
        %v272 = vunpack.c.h.b16 %v202
        %v273 = vunpack.c.l.b16 %v203
        %v274 = vunpack.c.h.b16 %v203
        %v275 = vunpack.c.l.b16 %v204
        %v276 = vunpack.c.h.b16 %v204
        %v277 = vunpack.c.l.b16 %v205
        %v278 = vunpack.c.h.b16 %v205
        %v279 = vunpack.c.l.b16 %v206
        %v280 = vunpack.c.h.b16 %v206
        %v281 = vunpack.c.l.b16 %v207
        %v282 = vunpack.c.h.b16 %v207
        %v283 = vunpack.c.l.b16 %v208
        %v284 = vunpack.c.h.b16 %v208
        %v285 = vunpack.c.l.b16 %v209
        %v286 = vunpack.c.h.b16 %v209
        %v287 = vunpack.c.l.b16 %v210
        %v288 = vunpack.c.h.b16 %v210
        %v289 = vunpack.c.l.b16 %v211
        %v290 = vunpack.c.h.b16 %v211
        %v291 = vunpack.c.l.b16 %v212
        %v292 = vunpack.c.h.b16 %v212
        %v293 = vunpack.c.l.b16 %v213
        %v294 = vunpack.c.h.b16 %v213
        %v295 = vunpack.c.l.b16 %v214
        %v296 = vunpack.c.h.b16 %v214
        %v297 = vunpack.c.l.b16 %v215
        %v298 = vunpack.c.h.b16 %v215
        %v299 = vunpack.c.l.b16 %v216
        %v300 = vunpack.c.h.b16 %v216
        %v301 = vunpack.c.l.b16 %v217
        %v302 = vunpack.c.h.b16 %v217
        %v303 = vunpack.c.l.b16 %v218
        %v304 = vunpack.c.h.b16 %v218
        %v305 = vunpack.c.l.b16 %v219
        %v306 = vunpack.c.h.b16 %v219
        %v307 = vpack.c.b16 %v263, %v259
        %v308 = vpack.c.b16 %v264, %v260
        %v309 = vpack.c.b16 %v265, %v261
        %v310 = vpack.c.b16 %v266, %v262
        %v311 = vpack.c.b16 %v271, %v267
        %v312 = vpack.c.b16 %v272, %v268
        %v313 = vpack.c.b16 %v273, %v269
        %v314 = vpack.c.b16 %v274, %v270
        %v315 = vpack.c.b16 %v279, %v275
        %v316 = vpack.c.b16 %v280, %v276
        %v317 = vpack.c.b16 %v281, %v277
        %v318 = vpack.c.b16 %v282, %v278
        %v319 = vpack.c.b16 %v287, %v283
        %v320 = vpack.c.b16 %v288, %v284
        %v321 = vpack.c.b16 %v289, %v285
        %v322 = vpack.c.b16 %v290, %v286
        %v323 = vpack.c.b16 %v295, %v291
        %v324 = vpack.c.b16 %v296, %v292
        %v325 = vpack.c.b16 %v297, %v293
        %v326 = vpack.c.b16 %v298, %v294
        %v327 = vpack.c.b16 %v303, %v299
        %v328 = vpack.c.b16 %v304, %v300
        %v329 = vpack.c.b16 %v305, %v301
        %v330 = vpack.c.b16 %v306, %v302
        %vm355 = vcmask 785408
        %v357 = vsel %vm355, %v233, 0
        %v360 = vsel %vm355, %v234, 0
        %362 = vmatprep.subr.bf16.mxu0 0
        %363 = vmatpush1.bf16.msra.mxu0 0
        %364 = vmatprep.subr.bf16.mxu0 0
        %365 = vmatpush1.bf16.msra.mxu0 0
        %366 = vmatprep.subr.bf16.mxu0 %v328
        %367 = vmatpush1.bf16.msra.mxu0 %v327
        %368 = vmatprep.subr.bf16.mxu0 %v324
        %369 = vmatpush1.bf16.msra.mxu0 %v323
        %370 = vmatprep.subr.bf16.mxu0 %v320
        %371 = vmatpush1.bf16.msra.mxu0 %v319
        %372 = vmatprep.subr.bf16.mxu0 %v316
        %373 = vmatpush1.bf16.msra.mxu0 %v315
        %374 = vmatprep.subr.bf16.mxu0 %v312
        %375 = vmatpush1.bf16.msra.mxu0 %v311
        %376 = vmatprep.subr.bf16.mxu0 %v308
        %377 = vmatpush1.bf16.msra.mxu0 %v307
        %378 = vmatprep.subr.bf16.mxu0 0
        %379 = vmatpush2.bf16.msra.mxu0 0
        %380 = vmatprep.subr.bf16.mxu0 0
        %381 = vmatpush2.bf16.msra.mxu0 0
        %382 = vmatprep.subr.bf16.mxu0 0
        %383 = vmatpush2.bf16.msra.mxu0 0
        %384 = vmatprep.subr.bf16.mxu0 0
        %385 = vmatpush2.bf16.msra.mxu0 0
        %386 = vmatprep.subr.bf16.mxu0 0
        %387 = vmatpush2.bf16.msra.mxu0 0
        %388 = vmatprep.subr.bf16.mxu0 0
        %389 = vmatpush2.bf16.msra.mxu0 0
        %390 = vmatprep.subr.bf16.mxu0 0
        %391 = vmatpush2.bf16.msra.mxu0 0
        %392 = vmatprep.subr.bf16.mxu0 0
        %393 = vmatpush2.bf16.msra.mxu0 0
        %394 = vmatprep.mubr.bf16.mxu0 0
        %395 = vmatmul.mubr.bf16.gmra.mxu0 %v357
        %v396 = vpop.f32.mrf.mxu0
        %v397 = vadd.f32 0.0, %v396
        %v398 = vpop.f32.mrf.mxu0
        %v399 = vadd.f32 0.0, %v398
        %v400 = vpop.f32.mrf.mxu0
        %v401 = vadd.f32 0.0, %v400
        %v402 = vpop.f32.mrf.mxu0
        %v403 = vadd.f32 0.0, %v402
        %404 = vmatprep.mubr.bf16.mxu0 0
        %405 = vmatmul.mubr.bf16.gmra.mxu0 %v360
        %v406 = vpop.f32.mrf.mxu0
        %v407 = vadd.f32 0.0, %v406
        %v408 = vpop.f32.mrf.mxu0
        %v409 = vadd.f32 0.0, %v408
        %v410 = vpop.f32.mrf.mxu0
        %v411 = vadd.f32 0.0, %v410
        %v412 = vpop.f32.mrf.mxu0
        %v413 = vadd.f32 0.0, %v412
        %414 = vdwg.mxu0
        %415 = vmatprep.subr.bf16.mxu0 0
        %416 = vmatpush1.bf16.msra.mxu0 0
        %417 = vmatprep.subr.bf16.mxu0 0
        %418 = vmatpush1.bf16.msra.mxu0 0
        %419 = vmatprep.subr.bf16.mxu0 %v330
        %420 = vmatpush1.bf16.msra.mxu0 %v329
        %421 = vmatprep.subr.bf16.mxu0 %v326
        %422 = vmatpush1.bf16.msra.mxu0 %v325
        %423 = vmatprep.subr.bf16.mxu0 %v322
        %424 = vmatpush1.bf16.msra.mxu0 %v321
        %425 = vmatprep.subr.bf16.mxu0 %v318
        %426 = vmatpush1.bf16.msra.mxu0 %v317
        %427 = vmatprep.subr.bf16.mxu0 %v314
        %428 = vmatpush1.bf16.msra.mxu0 %v313
        %429 = vmatprep.subr.bf16.mxu0 %v310
        %430 = vmatpush1.bf16.msra.mxu0 %v309
        %431 = vmatprep.subr.bf16.mxu0 0
        %432 = vmatpush2.bf16.msra.mxu0 0
        %433 = vmatprep.subr.bf16.mxu0 0
        %434 = vmatpush2.bf16.msra.mxu0 0
        %435 = vmatprep.subr.bf16.mxu0 0
        %436 = vmatpush2.bf16.msra.mxu0 0
        %437 = vmatprep.subr.bf16.mxu0 0
        %438 = vmatpush2.bf16.msra.mxu0 0
        %439 = vmatprep.subr.bf16.mxu0 0
        %440 = vmatpush2.bf16.msra.mxu0 0
        %441 = vmatprep.subr.bf16.mxu0 0
        %442 = vmatpush2.bf16.msra.mxu0 0
        %443 = vmatprep.subr.bf16.mxu0 0
        %444 = vmatpush2.bf16.msra.mxu0 0
        %445 = vmatprep.subr.bf16.mxu0 0
        %446 = vmatpush2.bf16.msra.mxu0 0
        %447 = vmatprep.mubr.bf16.mxu0 0
        %448 = vmatmul.mubr.bf16.gmra.mxu0 %v357
        %v449 = vpop.f32.mrf.mxu0
        %v450 = vadd.f32 0.0, %v449
        %v451 = vpop.f32.mrf.mxu0
        %v452 = vadd.f32 0.0, %v451
        %v453 = vpop.f32.mrf.mxu0
        %v454 = vadd.f32 0.0, %v453
        %v455 = vpop.f32.mrf.mxu0
        %v456 = vadd.f32 0.0, %v455
        %457 = vmatprep.mubr.bf16.mxu0 0
        %458 = vmatmul.mubr.bf16.gmra.mxu0 %v360
        %v459 = vpop.f32.mrf.mxu0
        %v460 = vadd.f32 0.0, %v459
        %v461 = vpop.f32.mrf.mxu0
        %v462 = vadd.f32 0.0, %v461
        %v463 = vpop.f32.mrf.mxu0
        %v464 = vadd.f32 0.0, %v463
        %v465 = vpop.f32.mrf.mxu0
        %v466 = vadd.f32 0.0, %v465
        %467 = vdwg.mxu0
        %v472 = vunpack.c.l.b16 %v191
        %v473 = vunpack.c.l.b16 %v192
        %v474 = vunpack.c.l.b16 %v193
        %v475 = vunpack.c.l.b16 %v194
        %v476 = vpack.c.b16 %v473, %v472
        %v477 = vpack.c.b16 %v475, %v474
        %v502 = vunpack.c.l.b16 %v167
        %v503 = vunpack.c.h.b16 %v167
        %v504 = vunpack.c.l.b16 %v168
        %v505 = vunpack.c.h.b16 %v168
        %v506 = vunpack.c.l.b16 %v169
        %v507 = vunpack.c.h.b16 %v169
        %v508 = vunpack.c.l.b16 %v170
        %v509 = vunpack.c.h.b16 %v170
        %v510 = vunpack.c.l.b16 %v171
        %v511 = vunpack.c.h.b16 %v171
        %v512 = vunpack.c.l.b16 %v172
        %v513 = vunpack.c.h.b16 %v172
        %v514 = vunpack.c.l.b16 %v173
        %v515 = vunpack.c.h.b16 %v173
        %v516 = vunpack.c.l.b16 %v174
        %v517 = vunpack.c.h.b16 %v174
        %v518 = vunpack.c.l.b16 %v175
        %v519 = vunpack.c.h.b16 %v175
        %v520 = vunpack.c.l.b16 %v176
        %v521 = vunpack.c.h.b16 %v176
        %v522 = vunpack.c.l.b16 %v177
        %v523 = vunpack.c.h.b16 %v177
        %v524 = vunpack.c.l.b16 %v178
        %v525 = vunpack.c.h.b16 %v178
        %v526 = vunpack.c.l.b16 %v179
        %v527 = vunpack.c.h.b16 %v179
        %v528 = vunpack.c.l.b16 %v180
        %v529 = vunpack.c.h.b16 %v180
        %v530 = vunpack.c.l.b16 %v181
        %v531 = vunpack.c.h.b16 %v181
        %v532 = vunpack.c.l.b16 %v182
        %v533 = vunpack.c.h.b16 %v182
        %v534 = vunpack.c.l.b16 %v183
        %v535 = vunpack.c.h.b16 %v183
        %v536 = vunpack.c.l.b16 %v184
        %v537 = vunpack.c.h.b16 %v184
        %v538 = vunpack.c.l.b16 %v185
        %v539 = vunpack.c.h.b16 %v185
        %v540 = vunpack.c.l.b16 %v186
        %v541 = vunpack.c.h.b16 %v186
        %v542 = vunpack.c.l.b16 %v187
        %v543 = vunpack.c.h.b16 %v187
        %v544 = vunpack.c.l.b16 %v188
        %v545 = vunpack.c.h.b16 %v188
        %v546 = vunpack.c.l.b16 %v189
        %v547 = vunpack.c.h.b16 %v189
        %v548 = vunpack.c.l.b16 %v190
        %v549 = vunpack.c.h.b16 %v190
        %v550 = vpack.c.b16 %v506, %v502
        %v551 = vpack.c.b16 %v507, %v503
        %v552 = vpack.c.b16 %v508, %v504
        %v553 = vpack.c.b16 %v509, %v505
        %v554 = vpack.c.b16 %v514, %v510
        %v555 = vpack.c.b16 %v515, %v511
        %v556 = vpack.c.b16 %v516, %v512
        %v557 = vpack.c.b16 %v517, %v513
        %v558 = vpack.c.b16 %v522, %v518
        %v559 = vpack.c.b16 %v523, %v519
        %v560 = vpack.c.b16 %v524, %v520
        %v561 = vpack.c.b16 %v525, %v521
        %v562 = vpack.c.b16 %v530, %v526
        %v563 = vpack.c.b16 %v531, %v527
        %v564 = vpack.c.b16 %v532, %v528
        %v565 = vpack.c.b16 %v533, %v529
        %v566 = vpack.c.b16 %v538, %v534
        %v567 = vpack.c.b16 %v539, %v535
        %v568 = vpack.c.b16 %v540, %v536
        %v569 = vpack.c.b16 %v541, %v537
        %v570 = vpack.c.b16 %v546, %v542
        %v571 = vpack.c.b16 %v547, %v543
        %v572 = vpack.c.b16 %v548, %v544
        %v573 = vpack.c.b16 %v549, %v545
        %v599 = vsel %vm355, %v476, 0
        %v602 = vsel %vm355, %v477, 0
        %604 = vmatprep.subr.bf16.mxu0 0
        %605 = vmatpush1.bf16.msra.mxu0 0
        %606 = vmatprep.subr.bf16.mxu0 0
        %607 = vmatpush1.bf16.msra.mxu0 0
        %608 = vmatprep.subr.bf16.mxu0 %v571
        %609 = vmatpush1.bf16.msra.mxu0 %v570
        %610 = vmatprep.subr.bf16.mxu0 %v567
        %611 = vmatpush1.bf16.msra.mxu0 %v566
        %612 = vmatprep.subr.bf16.mxu0 %v563
        %613 = vmatpush1.bf16.msra.mxu0 %v562
        %614 = vmatprep.subr.bf16.mxu0 %v559
        %615 = vmatpush1.bf16.msra.mxu0 %v558
        %616 = vmatprep.subr.bf16.mxu0 %v555
        %617 = vmatpush1.bf16.msra.mxu0 %v554
        %618 = vmatprep.subr.bf16.mxu0 %v551
        %619 = vmatpush1.bf16.msra.mxu0 %v550
        %620 = vmatprep.subr.bf16.mxu0 0
        %621 = vmatpush2.bf16.msra.mxu0 0
        %622 = vmatprep.subr.bf16.mxu0 0
        %623 = vmatpush2.bf16.msra.mxu0 0
        %624 = vmatprep.subr.bf16.mxu0 0
        %625 = vmatpush2.bf16.msra.mxu0 0
        %626 = vmatprep.subr.bf16.mxu0 0
        %627 = vmatpush2.bf16.msra.mxu0 0
        %628 = vmatprep.subr.bf16.mxu0 0
        %629 = vmatpush2.bf16.msra.mxu0 0
        %630 = vmatprep.subr.bf16.mxu0 0
        %631 = vmatpush2.bf16.msra.mxu0 0
        %632 = vmatprep.subr.bf16.mxu0 0
        %633 = vmatpush2.bf16.msra.mxu0 0
        %634 = vmatprep.subr.bf16.mxu0 0
        %635 = vmatpush2.bf16.msra.mxu0 0
        %636 = vmatprep.mubr.bf16.mxu0 0
        %637 = vmatmul.mubr.bf16.gmra.mxu0 %v599
        %v638 = vpop.f32.mrf.mxu0
        %v639 = vadd.f32 %v397, %v638
        %v640 = vpop.f32.mrf.mxu0
        %v641 = vadd.f32 %v399, %v640
        %v642 = vpop.f32.mrf.mxu0
        %v643 = vadd.f32 %v401, %v642
        %v644 = vpop.f32.mrf.mxu0
        %v645 = vadd.f32 %v403, %v644
        %646 = vmatprep.mubr.bf16.mxu0 0
        %647 = vmatmul.mubr.bf16.gmra.mxu0 %v602
        %v648 = vpop.f32.mrf.mxu0
        %v649 = vadd.f32 %v407, %v648
        %v650 = vpop.f32.mrf.mxu0
        %v651 = vadd.f32 %v409, %v650
        %v652 = vpop.f32.mrf.mxu0
        %v653 = vadd.f32 %v411, %v652
        %v654 = vpop.f32.mrf.mxu0
        %v655 = vadd.f32 %v413, %v654
        %656 = vdwg.mxu0
        %657 = vmatprep.subr.bf16.mxu0 0
        %658 = vmatpush1.bf16.msra.mxu0 0
        %659 = vmatprep.subr.bf16.mxu0 0
        %660 = vmatpush1.bf16.msra.mxu0 0
        %661 = vmatprep.subr.bf16.mxu0 %v573
        %662 = vmatpush1.bf16.msra.mxu0 %v572
        %663 = vmatprep.subr.bf16.mxu0 %v569
        %664 = vmatpush1.bf16.msra.mxu0 %v568
        %665 = vmatprep.subr.bf16.mxu0 %v565
        %666 = vmatpush1.bf16.msra.mxu0 %v564
        %667 = vmatprep.subr.bf16.mxu0 %v561
        %668 = vmatpush1.bf16.msra.mxu0 %v560
        %669 = vmatprep.subr.bf16.mxu0 %v557
        %670 = vmatpush1.bf16.msra.mxu0 %v556
        %671 = vmatprep.subr.bf16.mxu0 %v553
        %672 = vmatpush1.bf16.msra.mxu0 %v552
        %673 = vmatprep.subr.bf16.mxu0 0
        %674 = vmatpush2.bf16.msra.mxu0 0
        %675 = vmatprep.subr.bf16.mxu0 0
        %676 = vmatpush2.bf16.msra.mxu0 0
        %677 = vmatprep.subr.bf16.mxu0 0
        %678 = vmatpush2.bf16.msra.mxu0 0
        %679 = vmatprep.subr.bf16.mxu0 0
        %680 = vmatpush2.bf16.msra.mxu0 0
        %681 = vmatprep.subr.bf16.mxu0 0
        %682 = vmatpush2.bf16.msra.mxu0 0
        %683 = vmatprep.subr.bf16.mxu0 0
        %684 = vmatpush2.bf16.msra.mxu0 0
        %685 = vmatprep.subr.bf16.mxu0 0
        %686 = vmatpush2.bf16.msra.mxu0 0
        %687 = vmatprep.subr.bf16.mxu0 0
        %688 = vmatpush2.bf16.msra.mxu0 0
        %689 = vmatprep.mubr.bf16.mxu0 0
        %690 = vmatmul.mubr.bf16.gmra.mxu0 %v599
        %v691 = vpop.f32.mrf.mxu0
        %v692 = vadd.f32 %v450, %v691
        %v693 = vpop.f32.mrf.mxu0
        %v694 = vadd.f32 %v452, %v693
        %v695 = vpop.f32.mrf.mxu0
        %v696 = vadd.f32 %v454, %v695
        %v697 = vpop.f32.mrf.mxu0
        %v698 = vadd.f32 %v456, %v697
        %699 = vmatprep.mubr.bf16.mxu0 0
        %700 = vmatmul.mubr.bf16.gmra.mxu0 %v602
        %v701 = vpop.f32.mrf.mxu0
        %v702 = vadd.f32 %v460, %v701
        %v703 = vpop.f32.mrf.mxu0
        %v704 = vadd.f32 %v462, %v703
        %v705 = vpop.f32.mrf.mxu0
        %v706 = vadd.f32 %v464, %v705
        %v707 = vpop.f32.mrf.mxu0
        %v708 = vadd.f32 %v466, %v707
        %709 = vdwg.mxu0
        %v710 = vld [vmem:[%s164 + $0x4] sm:$0xff]
        %v711 = vld [vmem:[%s164 + $0xc] sm:$0xff]
        %v712 = vld [vmem:[%s164 + $0x24] sm:$0xff]
        %v713 = vld [vmem:[%s164 + $0x2c] sm:$0xff]
        %v714 = vld [vmem:[%s164 + $0x44] sm:$0xff]
        %v715 = vld [vmem:[%s164 + $0x4c] sm:$0xff]
        %v716 = vld [vmem:[%s164 + $0x64] sm:$0xff]
        %v717 = vld [vmem:[%s164 + $0x6c] sm:$0xff]
        %v718 = vld [vmem:[%s164 + $0x84] sm:$0xff]
        %v719 = vld [vmem:[%s164 + $0x8c] sm:$0xff]
        %v720 = vld [vmem:[%s164 + $0xa4] sm:$0xff]
        %v721 = vld [vmem:[%s164 + $0xac] sm:$0xff]
        %v722 = vld [vmem:[%s164 + $0xc4] sm:$0xff]
        %v723 = vld [vmem:[%s164 + $0xcc] sm:$0xff]
        %v724 = vld [vmem:[%s164 + $0xe4] sm:$0xff]
        %v725 = vld [vmem:[%s164 + $0xec] sm:$0xff]
        %v726 = vld [vmem:[%s164 + $0x104] sm:$0xff]
        %v727 = vld [vmem:[%s164 + $0x10c] sm:$0xff]
        %v728 = vld [vmem:[%s164 + $0x124] sm:$0xff]
        %v729 = vld [vmem:[%s164 + $0x12c] sm:$0xff]
        %v730 = vld [vmem:[%s164 + $0x144] sm:$0xff]
        %v731 = vld [vmem:[%s164 + $0x14c] sm:$0xff]
        %v732 = vld [vmem:[%s164 + $0x164] sm:$0xff]
        %v733 = vld [vmem:[%s164 + $0x16c] sm:$0xff]
        %s734 = scalar_lea.vmem %s1, 32
        %v735 = vld [vmem:[%s734] sm:$0xf]
        %v736 = vld [vmem:[%s734 + $0x4] sm:$0xf]
        %v737 = vld [vmem:[%s734 + $0x8] sm:$0xf]
        %v738 = vld [vmem:[%s734 + $0xc] sm:$0xf]
        %v743 = vunpack.c.l.b16 %v735
        %v744 = vunpack.c.l.b16 %v736
        %v745 = vunpack.c.l.b16 %v737
        %v746 = vunpack.c.l.b16 %v738
        %v747 = vpack.c.b16 %v744, %v743
        %v748 = vpack.c.b16 %v746, %v745
        %v773 = vunpack.c.l.b16 %v710
        %v774 = vunpack.c.h.b16 %v710
        %v775 = vunpack.c.l.b16 %v711
        %v776 = vunpack.c.h.b16 %v711
        %v777 = vunpack.c.l.b16 %v712
        %v778 = vunpack.c.h.b16 %v712
        %v779 = vunpack.c.l.b16 %v713
        %v780 = vunpack.c.h.b16 %v713
        %v781 = vunpack.c.l.b16 %v714
        %v782 = vunpack.c.h.b16 %v714
        %v783 = vunpack.c.l.b16 %v715
        %v784 = vunpack.c.h.b16 %v715
        %v785 = vunpack.c.l.b16 %v716
        %v786 = vunpack.c.h.b16 %v716
        %v787 = vunpack.c.l.b16 %v717
        %v788 = vunpack.c.h.b16 %v717
        %v789 = vunpack.c.l.b16 %v718
        %v790 = vunpack.c.h.b16 %v718
        %v791 = vunpack.c.l.b16 %v719
        %v792 = vunpack.c.h.b16 %v719
        %v793 = vunpack.c.l.b16 %v720
        %v794 = vunpack.c.h.b16 %v720
        %v795 = vunpack.c.l.b16 %v721
        %v796 = vunpack.c.h.b16 %v721
        %v797 = vunpack.c.l.b16 %v722
        %v798 = vunpack.c.h.b16 %v722
        %v799 = vunpack.c.l.b16 %v723
        %v800 = vunpack.c.h.b16 %v723
        %v801 = vunpack.c.l.b16 %v724
        %v802 = vunpack.c.h.b16 %v724
        %v803 = vunpack.c.l.b16 %v725
        %v804 = vunpack.c.h.b16 %v725
        %v805 = vunpack.c.l.b16 %v726
        %v806 = vunpack.c.h.b16 %v726
        %v807 = vunpack.c.l.b16 %v727
        %v808 = vunpack.c.h.b16 %v727
        %v809 = vunpack.c.l.b16 %v728
        %v810 = vunpack.c.h.b16 %v728
        %v811 = vunpack.c.l.b16 %v729
        %v812 = vunpack.c.h.b16 %v729
        %v813 = vunpack.c.l.b16 %v730
        %v814 = vunpack.c.h.b16 %v730
        %v815 = vunpack.c.l.b16 %v731
        %v816 = vunpack.c.h.b16 %v731
        %v817 = vunpack.c.l.b16 %v732
        %v818 = vunpack.c.h.b16 %v732
        %v819 = vunpack.c.l.b16 %v733
        %v820 = vunpack.c.h.b16 %v733
        %v821 = vpack.c.b16 %v777, %v773
        %v822 = vpack.c.b16 %v778, %v774
        %v823 = vpack.c.b16 %v779, %v775
        %v824 = vpack.c.b16 %v780, %v776
        %v825 = vpack.c.b16 %v785, %v781
        %v826 = vpack.c.b16 %v786, %v782
        %v827 = vpack.c.b16 %v787, %v783
        %v828 = vpack.c.b16 %v788, %v784
        %v829 = vpack.c.b16 %v793, %v789
        %v830 = vpack.c.b16 %v794, %v790
        %v831 = vpack.c.b16 %v795, %v791
        %v832 = vpack.c.b16 %v796, %v792
        %v833 = vpack.c.b16 %v801, %v797
        %v834 = vpack.c.b16 %v802, %v798
        %v835 = vpack.c.b16 %v803, %v799
        %v836 = vpack.c.b16 %v804, %v800
        %v837 = vpack.c.b16 %v809, %v805
        %v838 = vpack.c.b16 %v810, %v806
        %v839 = vpack.c.b16 %v811, %v807
        %v840 = vpack.c.b16 %v812, %v808
        %v841 = vpack.c.b16 %v817, %v813
        %v842 = vpack.c.b16 %v818, %v814
        %v843 = vpack.c.b16 %v819, %v815
        %v844 = vpack.c.b16 %v820, %v816
        %v870 = vsel %vm355, %v747, 0
        %v873 = vsel %vm355, %v748, 0
        %875 = vmatprep.subr.bf16.mxu0 0
        %876 = vmatpush1.bf16.msra.mxu0 0
        %877 = vmatprep.subr.bf16.mxu0 0
        %878 = vmatpush1.bf16.msra.mxu0 0
        %879 = vmatprep.subr.bf16.mxu0 %v842
        %880 = vmatpush1.bf16.msra.mxu0 %v841
        %881 = vmatprep.subr.bf16.mxu0 %v838
        %882 = vmatpush1.bf16.msra.mxu0 %v837
        %883 = vmatprep.subr.bf16.mxu0 %v834
        %884 = vmatpush1.bf16.msra.mxu0 %v833
        %885 = vmatprep.subr.bf16.mxu0 %v830
        %886 = vmatpush1.bf16.msra.mxu0 %v829
        %887 = vmatprep.subr.bf16.mxu0 %v826
        %888 = vmatpush1.bf16.msra.mxu0 %v825
        %889 = vmatprep.subr.bf16.mxu0 %v822
        %890 = vmatpush1.bf16.msra.mxu0 %v821
        %891 = vmatprep.subr.bf16.mxu0 0
        %892 = vmatpush2.bf16.msra.mxu0 0
        %893 = vmatprep.subr.bf16.mxu0 0
        %894 = vmatpush2.bf16.msra.mxu0 0
        %895 = vmatprep.subr.bf16.mxu0 0
        %896 = vmatpush2.bf16.msra.mxu0 0
        %897 = vmatprep.subr.bf16.mxu0 0
        %898 = vmatpush2.bf16.msra.mxu0 0
        %899 = vmatprep.subr.bf16.mxu0 0
        %900 = vmatpush2.bf16.msra.mxu0 0
        %901 = vmatprep.subr.bf16.mxu0 0
        %902 = vmatpush2.bf16.msra.mxu0 0
        %903 = vmatprep.subr.bf16.mxu0 0
        %904 = vmatpush2.bf16.msra.mxu0 0
        %905 = vmatprep.subr.bf16.mxu0 0
        %906 = vmatpush2.bf16.msra.mxu0 0
        %907 = vmatprep.mubr.bf16.mxu0 0
        %908 = vmatmul.mubr.bf16.gmra.mxu0 %v870
        %v909 = vpop.f32.mrf.mxu0
        %v910 = vadd.f32 0.0, %v909
        %v911 = vpop.f32.mrf.mxu0
        %v912 = vadd.f32 0.0, %v911
        %v913 = vpop.f32.mrf.mxu0
        %v914 = vadd.f32 0.0, %v913
        %v915 = vpop.f32.mrf.mxu0
        %v916 = vadd.f32 0.0, %v915
        %917 = vmatprep.mubr.bf16.mxu0 0
        %918 = vmatmul.mubr.bf16.gmra.mxu0 %v873
        %v919 = vpop.f32.mrf.mxu0
        %v920 = vadd.f32 0.0, %v919
        %v921 = vpop.f32.mrf.mxu0
        %v922 = vadd.f32 0.0, %v921
        %v923 = vpop.f32.mrf.mxu0
        %v924 = vadd.f32 0.0, %v923
        %v925 = vpop.f32.mrf.mxu0
        %v926 = vadd.f32 0.0, %v925
        %927 = vdwg.mxu0
        %928 = vmatprep.subr.bf16.mxu0 0
        %929 = vmatpush1.bf16.msra.mxu0 0
        %930 = vmatprep.subr.bf16.mxu0 0
        %931 = vmatpush1.bf16.msra.mxu0 0
        %932 = vmatprep.subr.bf16.mxu0 %v844
        %933 = vmatpush1.bf16.msra.mxu0 %v843
        %934 = vmatprep.subr.bf16.mxu0 %v840
        %935 = vmatpush1.bf16.msra.mxu0 %v839
        %936 = vmatprep.subr.bf16.mxu0 %v836
        %937 = vmatpush1.bf16.msra.mxu0 %v835
        %938 = vmatprep.subr.bf16.mxu0 %v832
        %939 = vmatpush1.bf16.msra.mxu0 %v831
        %940 = vmatprep.subr.bf16.mxu0 %v828
        %941 = vmatpush1.bf16.msra.mxu0 %v827
        %942 = vmatprep.subr.bf16.mxu0 %v824
        %943 = vmatpush1.bf16.msra.mxu0 %v823
        %944 = vmatprep.subr.bf16.mxu0 0
        %945 = vmatpush2.bf16.msra.mxu0 0
        %946 = vmatprep.subr.bf16.mxu0 0
        %947 = vmatpush2.bf16.msra.mxu0 0
        %948 = vmatprep.subr.bf16.mxu0 0
        %949 = vmatpush2.bf16.msra.mxu0 0
        %950 = vmatprep.subr.bf16.mxu0 0
        %951 = vmatpush2.bf16.msra.mxu0 0
        %952 = vmatprep.subr.bf16.mxu0 0
        %953 = vmatpush2.bf16.msra.mxu0 0
        %954 = vmatprep.subr.bf16.mxu0 0
        %955 = vmatpush2.bf16.msra.mxu0 0
        %956 = vmatprep.subr.bf16.mxu0 0
        %957 = vmatpush2.bf16.msra.mxu0 0
        %958 = vmatprep.subr.bf16.mxu0 0
        %959 = vmatpush2.bf16.msra.mxu0 0
        %960 = vmatprep.mubr.bf16.mxu0 0
        %961 = vmatmul.mubr.bf16.gmra.mxu0 %v870
        %v962 = vpop.f32.mrf.mxu0
        %v963 = vadd.f32 0.0, %v962
        %v964 = vpop.f32.mrf.mxu0
        %v965 = vadd.f32 0.0, %v964
        %v966 = vpop.f32.mrf.mxu0
        %v967 = vadd.f32 0.0, %v966
        %v968 = vpop.f32.mrf.mxu0
        %v969 = vadd.f32 0.0, %v968
        %970 = vmatprep.mubr.bf16.mxu0 0
        %971 = vmatmul.mubr.bf16.gmra.mxu0 %v873
        %v972 = vpop.f32.mrf.mxu0
        %v973 = vadd.f32 0.0, %v972
        %v974 = vpop.f32.mrf.mxu0
        %v975 = vadd.f32 0.0, %v974
        %v976 = vpop.f32.mrf.mxu0
        %v977 = vadd.f32 0.0, %v976
        %v978 = vpop.f32.mrf.mxu0
        %v979 = vadd.f32 0.0, %v978
        %980 = vdwg.mxu0
        %v981 = vadd.f32 %v639, %v910
        %v982 = vadd.f32 %v641, %v912
        %v983 = vadd.f32 %v692, %v963
        %v984 = vadd.f32 %v694, %v965
        %v985 = vadd.f32 %v643, %v914
        %v986 = vadd.f32 %v645, %v916
        %v987 = vadd.f32 %v696, %v967
        %v988 = vadd.f32 %v698, %v969
        %v989 = vadd.f32 %v649, %v920
        %v990 = vadd.f32 %v651, %v922
        %v991 = vadd.f32 %v702, %v973
        %v992 = vadd.f32 %v704, %v975
        %v993 = vadd.f32 %v653, %v924
        %v994 = vadd.f32 %v655, %v926
        %v995 = vadd.f32 %v706, %v977
        %v996 = vadd.f32 %v708, %v979
        %v997 = vld [vmem:[%s195 + $0x4] sm:$0xff]
        %v998 = vld [vmem:[%s195 + $0xc] sm:$0xff]
        %v999 = vld [vmem:[%s195 + $0x24] sm:$0xff]
        %v1000 = vld [vmem:[%s195 + $0x2c] sm:$0xff]
        %v1001 = vld [vmem:[%s195 + $0x44] sm:$0xff]
        %v1002 = vld [vmem:[%s195 + $0x4c] sm:$0xff]
        %v1003 = vld [vmem:[%s195 + $0x64] sm:$0xff]
        %v1004 = vld [vmem:[%s195 + $0x6c] sm:$0xff]
        %v1005 = vld [vmem:[%s195 + $0x84] sm:$0xff]
        %v1006 = vld [vmem:[%s195 + $0x8c] sm:$0xff]
        %v1007 = vld [vmem:[%s195 + $0xa4] sm:$0xff]
        %v1008 = vld [vmem:[%s195 + $0xac] sm:$0xff]
        %v1009 = vld [vmem:[%s195 + $0xc4] sm:$0xff]
        %v1010 = vld [vmem:[%s195 + $0xcc] sm:$0xff]
        %v1011 = vld [vmem:[%s195 + $0xe4] sm:$0xff]
        %v1012 = vld [vmem:[%s195 + $0xec] sm:$0xff]
        %v1013 = vld [vmem:[%s195 + $0x104] sm:$0xff]
        %v1014 = vld [vmem:[%s195 + $0x10c] sm:$0xff]
        %v1015 = vld [vmem:[%s195 + $0x124] sm:$0xff]
        %v1016 = vld [vmem:[%s195 + $0x12c] sm:$0xff]
        %v1017 = vld [vmem:[%s195 + $0x144] sm:$0xff]
        %v1018 = vld [vmem:[%s195 + $0x14c] sm:$0xff]
        %v1019 = vld [vmem:[%s195 + $0x164] sm:$0xff]
        %v1020 = vld [vmem:[%s195 + $0x16c] sm:$0xff]
        %s1021 = scalar_lea.vmem %s1, 48
        %v1022 = vld [vmem:[%s1021] sm:$0xf]
        %v1023 = vld [vmem:[%s1021 + $0x4] sm:$0xf]
        %v1024 = vld [vmem:[%s1021 + $0x8] sm:$0xf]
        %v1025 = vld [vmem:[%s1021 + $0xc] sm:$0xf]
        %v1030 = vunpack.c.l.b16 %v1022
        %v1031 = vunpack.c.l.b16 %v1023
        %v1032 = vunpack.c.l.b16 %v1024
        %v1033 = vunpack.c.l.b16 %v1025
        %v1034 = vpack.c.b16 %v1031, %v1030
        %v1035 = vpack.c.b16 %v1033, %v1032
        %v1060 = vunpack.c.l.b16 %v997
        %v1061 = vunpack.c.h.b16 %v997
        %v1062 = vunpack.c.l.b16 %v998
        %v1063 = vunpack.c.h.b16 %v998
        %v1064 = vunpack.c.l.b16 %v999
        %v1065 = vunpack.c.h.b16 %v999
        %v1066 = vunpack.c.l.b16 %v1000
        %v1067 = vunpack.c.h.b16 %v1000
        %v1068 = vunpack.c.l.b16 %v1001
        %v1069 = vunpack.c.h.b16 %v1001
        %v1070 = vunpack.c.l.b16 %v1002
        %v1071 = vunpack.c.h.b16 %v1002
        %v1072 = vunpack.c.l.b16 %v1003
        %v1073 = vunpack.c.h.b16 %v1003
        %v1074 = vunpack.c.l.b16 %v1004
        %v1075 = vunpack.c.h.b16 %v1004
        %v1076 = vunpack.c.l.b16 %v1005
        %v1077 = vunpack.c.h.b16 %v1005
        %v1078 = vunpack.c.l.b16 %v1006
        %v1079 = vunpack.c.h.b16 %v1006
        %v1080 = vunpack.c.l.b16 %v1007
        %v1081 = vunpack.c.h.b16 %v1007
        %v1082 = vunpack.c.l.b16 %v1008
        %v1083 = vunpack.c.h.b16 %v1008
        %v1084 = vunpack.c.l.b16 %v1009
        %v1085 = vunpack.c.h.b16 %v1009
        %v1086 = vunpack.c.l.b16 %v1010
        %v1087 = vunpack.c.h.b16 %v1010
        %v1088 = vunpack.c.l.b16 %v1011
        %v1089 = vunpack.c.h.b16 %v1011
        %v1090 = vunpack.c.l.b16 %v1012
        %v1091 = vunpack.c.h.b16 %v1012
        %v1092 = vunpack.c.l.b16 %v1013
        %v1093 = vunpack.c.h.b16 %v1013
        %v1094 = vunpack.c.l.b16 %v1014
        %v1095 = vunpack.c.h.b16 %v1014
        %v1096 = vunpack.c.l.b16 %v1015
        %v1097 = vunpack.c.h.b16 %v1015
        %v1098 = vunpack.c.l.b16 %v1016
        %v1099 = vunpack.c.h.b16 %v1016
        %v1100 = vunpack.c.l.b16 %v1017
        %v1101 = vunpack.c.h.b16 %v1017
        %v1102 = vunpack.c.l.b16 %v1018
        %v1103 = vunpack.c.h.b16 %v1018
        %v1104 = vunpack.c.l.b16 %v1019
        %v1105 = vunpack.c.h.b16 %v1019
        %v1106 = vunpack.c.l.b16 %v1020
        %v1107 = vunpack.c.h.b16 %v1020
        %v1108 = vpack.c.b16 %v1064, %v1060
        %v1109 = vpack.c.b16 %v1065, %v1061
        %v1110 = vpack.c.b16 %v1066, %v1062
        %v1111 = vpack.c.b16 %v1067, %v1063
        %v1112 = vpack.c.b16 %v1072, %v1068
        %v1113 = vpack.c.b16 %v1073, %v1069
        %v1114 = vpack.c.b16 %v1074, %v1070
        %v1115 = vpack.c.b16 %v1075, %v1071
        %v1116 = vpack.c.b16 %v1080, %v1076
        %v1117 = vpack.c.b16 %v1081, %v1077
        %v1118 = vpack.c.b16 %v1082, %v1078
        %v1119 = vpack.c.b16 %v1083, %v1079
        %v1120 = vpack.c.b16 %v1088, %v1084
        %v1121 = vpack.c.b16 %v1089, %v1085
        %v1122 = vpack.c.b16 %v1090, %v1086
        %v1123 = vpack.c.b16 %v1091, %v1087
        %v1124 = vpack.c.b16 %v1096, %v1092
        %v1125 = vpack.c.b16 %v1097, %v1093
        %v1126 = vpack.c.b16 %v1098, %v1094
        %v1127 = vpack.c.b16 %v1099, %v1095
        %v1128 = vpack.c.b16 %v1104, %v1100
        %v1129 = vpack.c.b16 %v1105, %v1101
        %v1130 = vpack.c.b16 %v1106, %v1102
        %v1131 = vpack.c.b16 %v1107, %v1103
        %v1157 = vsel %vm355, %v1034, 0
        %v1160 = vsel %vm355, %v1035, 0
        %1162 = vmatprep.subr.bf16.mxu0 0
        %1163 = vmatpush1.bf16.msra.mxu0 0
        %1164 = vmatprep.subr.bf16.mxu0 0
        %1165 = vmatpush1.bf16.msra.mxu0 0
        %1166 = vmatprep.subr.bf16.mxu0 %v1129
        %1167 = vmatpush1.bf16.msra.mxu0 %v1128
        %1168 = vmatprep.subr.bf16.mxu0 %v1125
        %1169 = vmatpush1.bf16.msra.mxu0 %v1124
        %1170 = vmatprep.subr.bf16.mxu0 %v1121
        %1171 = vmatpush1.bf16.msra.mxu0 %v1120
        %1172 = vmatprep.subr.bf16.mxu0 %v1117
        %1173 = vmatpush1.bf16.msra.mxu0 %v1116
        %1174 = vmatprep.subr.bf16.mxu0 %v1113
        %1175 = vmatpush1.bf16.msra.mxu0 %v1112
        %1176 = vmatprep.subr.bf16.mxu0 %v1109
        %1177 = vmatpush1.bf16.msra.mxu0 %v1108
        %1178 = vmatprep.subr.bf16.mxu0 0
        %1179 = vmatpush2.bf16.msra.mxu0 0
        %1180 = vmatprep.subr.bf16.mxu0 0
        %1181 = vmatpush2.bf16.msra.mxu0 0
        %1182 = vmatprep.subr.bf16.mxu0 0
        %1183 = vmatpush2.bf16.msra.mxu0 0
        %1184 = vmatprep.subr.bf16.mxu0 0
        %1185 = vmatpush2.bf16.msra.mxu0 0
        %1186 = vmatprep.subr.bf16.mxu0 0
        %1187 = vmatpush2.bf16.msra.mxu0 0
        %1188 = vmatprep.subr.bf16.mxu0 0
        %1189 = vmatpush2.bf16.msra.mxu0 0
        %1190 = vmatprep.subr.bf16.mxu0 0
        %1191 = vmatpush2.bf16.msra.mxu0 0
        %1192 = vmatprep.subr.bf16.mxu0 0
        %1193 = vmatpush2.bf16.msra.mxu0 0
        %1194 = vmatprep.mubr.bf16.mxu0 0
        %1195 = vmatmul.mubr.bf16.gmra.mxu0 %v1157
        %v1196 = vpop.f32.mrf.mxu0
        %v1197 = vadd.f32 0.0, %v1196
        %v1198 = vpop.f32.mrf.mxu0
        %v1199 = vadd.f32 0.0, %v1198
        %v1200 = vpop.f32.mrf.mxu0
        %v1201 = vadd.f32 0.0, %v1200
        %v1202 = vpop.f32.mrf.mxu0
        %v1203 = vadd.f32 0.0, %v1202
        %1204 = vmatprep.mubr.bf16.mxu0 0
        %1205 = vmatmul.mubr.bf16.gmra.mxu0 %v1160
        %v1206 = vpop.f32.mrf.mxu0
        %v1207 = vadd.f32 0.0, %v1206
        %v1208 = vpop.f32.mrf.mxu0
        %v1209 = vadd.f32 0.0, %v1208
        %v1210 = vpop.f32.mrf.mxu0
        %v1211 = vadd.f32 0.0, %v1210
        %v1212 = vpop.f32.mrf.mxu0
        %v1213 = vadd.f32 0.0, %v1212
        %1214 = vdwg.mxu0
        %1215 = vmatprep.subr.bf16.mxu0 0
        %1216 = vmatpush1.bf16.msra.mxu0 0
        %1217 = vmatprep.subr.bf16.mxu0 0
        %1218 = vmatpush1.bf16.msra.mxu0 0
        %1219 = vmatprep.subr.bf16.mxu0 %v1131
        %1220 = vmatpush1.bf16.msra.mxu0 %v1130
        %1221 = vmatprep.subr.bf16.mxu0 %v1127
        %1222 = vmatpush1.bf16.msra.mxu0 %v1126
        %1223 = vmatprep.subr.bf16.mxu0 %v1123
        %1224 = vmatpush1.bf16.msra.mxu0 %v1122
        %1225 = vmatprep.subr.bf16.mxu0 %v1119
        %1226 = vmatpush1.bf16.msra.mxu0 %v1118
        %1227 = vmatprep.subr.bf16.mxu0 %v1115
        %1228 = vmatpush1.bf16.msra.mxu0 %v1114
        %1229 = vmatprep.subr.bf16.mxu0 %v1111
        %1230 = vmatpush1.bf16.msra.mxu0 %v1110
        %1231 = vmatprep.subr.bf16.mxu0 0
        %1232 = vmatpush2.bf16.msra.mxu0 0
        %1233 = vmatprep.subr.bf16.mxu0 0
        %1234 = vmatpush2.bf16.msra.mxu0 0
        %1235 = vmatprep.subr.bf16.mxu0 0
        %1236 = vmatpush2.bf16.msra.mxu0 0
        %1237 = vmatprep.subr.bf16.mxu0 0
        %1238 = vmatpush2.bf16.msra.mxu0 0
        %1239 = vmatprep.subr.bf16.mxu0 0
        %1240 = vmatpush2.bf16.msra.mxu0 0
        %1241 = vmatprep.subr.bf16.mxu0 0
        %1242 = vmatpush2.bf16.msra.mxu0 0
        %1243 = vmatprep.subr.bf16.mxu0 0
        %1244 = vmatpush2.bf16.msra.mxu0 0
        %1245 = vmatprep.subr.bf16.mxu0 0
        %1246 = vmatpush2.bf16.msra.mxu0 0
        %1247 = vmatprep.mubr.bf16.mxu0 0
        %1248 = vmatmul.mubr.bf16.gmra.mxu0 %v1157
        %v1249 = vpop.f32.mrf.mxu0
        %v1250 = vadd.f32 0.0, %v1249
        %v1251 = vpop.f32.mrf.mxu0
        %v1252 = vadd.f32 0.0, %v1251
        %v1253 = vpop.f32.mrf.mxu0
        %v1254 = vadd.f32 0.0, %v1253
        %v1255 = vpop.f32.mrf.mxu0
        %v1256 = vadd.f32 0.0, %v1255
        %1257 = vmatprep.mubr.bf16.mxu0 0
        %1258 = vmatmul.mubr.bf16.gmra.mxu0 %v1160
        %v1259 = vpop.f32.mrf.mxu0
        %v1260 = vadd.f32 0.0, %v1259
        %v1261 = vpop.f32.mrf.mxu0
        %v1262 = vadd.f32 0.0, %v1261
        %v1263 = vpop.f32.mrf.mxu0
        %v1264 = vadd.f32 0.0, %v1263
        %v1265 = vpop.f32.mrf.mxu0
        %v1266 = vadd.f32 0.0, %v1265
        %1267 = vdwg.mxu0
        %v1268 = vadd.f32 %v981, %v1197
        %v1269 = vadd.f32 %v982, %v1199
        %v1270 = vadd.f32 %v983, %v1250
        %v1271 = vadd.f32 %v984, %v1252
        %v1272 = vadd.f32 %v985, %v1201
        %v1273 = vadd.f32 %v986, %v1203
        %v1274 = vadd.f32 %v987, %v1254
        %v1275 = vadd.f32 %v988, %v1256
        %v1276 = vadd.f32 %v989, %v1207
        %v1277 = vadd.f32 %v990, %v1209
        %v1278 = vadd.f32 %v991, %v1260
        %v1279 = vadd.f32 %v992, %v1262
        %v1280 = vadd.f32 %v993, %v1211
        %v1281 = vadd.f32 %v994, %v1213
        %v1282 = vadd.f32 %v995, %v1264
        %v1283 = vadd.f32 %v996, %v1266
        %v1284 = vld [vmem:[%s164 + $0x8] sm:$0xff]
        %v1285 = vld [vmem:[%s164 + $0x10] sm:$0xff]
        %v1286 = vld [vmem:[%s164 + $0x28] sm:$0xff]
        %v1287 = vld [vmem:[%s164 + $0x30] sm:$0xff]
        %v1288 = vld [vmem:[%s164 + $0x48] sm:$0xff]
        %v1289 = vld [vmem:[%s164 + $0x50] sm:$0xff]
        %v1290 = vld [vmem:[%s164 + $0x68] sm:$0xff]
        %v1291 = vld [vmem:[%s164 + $0x70] sm:$0xff]
        %v1292 = vld [vmem:[%s164 + $0x88] sm:$0xff]
        %v1293 = vld [vmem:[%s164 + $0x90] sm:$0xff]
        %v1294 = vld [vmem:[%s164 + $0xa8] sm:$0xff]
        %v1295 = vld [vmem:[%s164 + $0xb0] sm:$0xff]
        %v1296 = vld [vmem:[%s164 + $0xc8] sm:$0xff]
        %v1297 = vld [vmem:[%s164 + $0xd0] sm:$0xff]
        %v1298 = vld [vmem:[%s164 + $0xe8] sm:$0xff]
        %v1299 = vld [vmem:[%s164 + $0xf0] sm:$0xff]
        %v1300 = vld [vmem:[%s164 + $0x108] sm:$0xff]
        %v1301 = vld [vmem:[%s164 + $0x110] sm:$0xff]
        %v1302 = vld [vmem:[%s164 + $0x128] sm:$0xff]
        %v1303 = vld [vmem:[%s164 + $0x130] sm:$0xff]
        %v1304 = vld [vmem:[%s164 + $0x148] sm:$0xff]
        %v1305 = vld [vmem:[%s164 + $0x150] sm:$0xff]
        %v1306 = vld [vmem:[%s164 + $0x168] sm:$0xff]
        %v1307 = vld [vmem:[%s164 + $0x170] sm:$0xff]
        %s1308 = scalar_lea.vmem %s1, 64
        %v1309 = vld [vmem:[%s1308] sm:$0xf]
        %v1310 = vld [vmem:[%s1308 + $0x4] sm:$0xf]
        %v1311 = vld [vmem:[%s1308 + $0x8] sm:$0xf]
        %v1312 = vld [vmem:[%s1308 + $0xc] sm:$0xf]
        %v1317 = vunpack.c.l.b16 %v1309
        %v1318 = vunpack.c.l.b16 %v1310
        %v1319 = vunpack.c.l.b16 %v1311
        %v1320 = vunpack.c.l.b16 %v1312
        %v1321 = vpack.c.b16 %v1318, %v1317
        %v1322 = vpack.c.b16 %v1320, %v1319
        %v1347 = vunpack.c.l.b16 %v1284
        %v1348 = vunpack.c.h.b16 %v1284
        %v1349 = vunpack.c.l.b16 %v1285
        %v1350 = vunpack.c.h.b16 %v1285
        %v1351 = vunpack.c.l.b16 %v1286
        %v1352 = vunpack.c.h.b16 %v1286
        %v1353 = vunpack.c.l.b16 %v1287
        %v1354 = vunpack.c.h.b16 %v1287
        %v1355 = vunpack.c.l.b16 %v1288
        %v1356 = vunpack.c.h.b16 %v1288
        %v1357 = vunpack.c.l.b16 %v1289
        %v1358 = vunpack.c.h.b16 %v1289
        %v1359 = vunpack.c.l.b16 %v1290
        %v1360 = vunpack.c.h.b16 %v1290
        %v1361 = vunpack.c.l.b16 %v1291
        %v1362 = vunpack.c.h.b16 %v1291
        %v1363 = vunpack.c.l.b16 %v1292
        %v1364 = vunpack.c.h.b16 %v1292
        %v1365 = vunpack.c.l.b16 %v1293
        %v1366 = vunpack.c.h.b16 %v1293
        %v1367 = vunpack.c.l.b16 %v1294
        %v1368 = vunpack.c.h.b16 %v1294
        %v1369 = vunpack.c.l.b16 %v1295
        %v1370 = vunpack.c.h.b16 %v1295
        %v1371 = vunpack.c.l.b16 %v1296
        %v1372 = vunpack.c.h.b16 %v1296
        %v1373 = vunpack.c.l.b16 %v1297
        %v1374 = vunpack.c.h.b16 %v1297
        %v1375 = vunpack.c.l.b16 %v1298
        %v1376 = vunpack.c.h.b16 %v1298
        %v1377 = vunpack.c.l.b16 %v1299
        %v1378 = vunpack.c.h.b16 %v1299
        %v1379 = vunpack.c.l.b16 %v1300
        %v1380 = vunpack.c.h.b16 %v1300
        %v1381 = vunpack.c.l.b16 %v1301
        %v1382 = vunpack.c.h.b16 %v1301
        %v1383 = vunpack.c.l.b16 %v1302
        %v1384 = vunpack.c.h.b16 %v1302
        %v1385 = vunpack.c.l.b16 %v1303
        %v1386 = vunpack.c.h.b16 %v1303
        %v1387 = vunpack.c.l.b16 %v1304
        %v1388 = vunpack.c.h.b16 %v1304
        %v1389 = vunpack.c.l.b16 %v1305
        %v1390 = vunpack.c.h.b16 %v1305
        %v1391 = vunpack.c.l.b16 %v1306
        %v1392 = vunpack.c.h.b16 %v1306
        %v1393 = vunpack.c.l.b16 %v1307
        %v1394 = vunpack.c.h.b16 %v1307
        %v1395 = vpack.c.b16 %v1351, %v1347
        %v1396 = vpack.c.b16 %v1352, %v1348
        %v1397 = vpack.c.b16 %v1353, %v1349
        %v1398 = vpack.c.b16 %v1354, %v1350
        %v1399 = vpack.c.b16 %v1359, %v1355
        %v1400 = vpack.c.b16 %v1360, %v1356
        %v1401 = vpack.c.b16 %v1361, %v1357
        %v1402 = vpack.c.b16 %v1362, %v1358
        %v1403 = vpack.c.b16 %v1367, %v1363
        %v1404 = vpack.c.b16 %v1368, %v1364
        %v1405 = vpack.c.b16 %v1369, %v1365
        %v1406 = vpack.c.b16 %v1370, %v1366
        %v1407 = vpack.c.b16 %v1375, %v1371
        %v1408 = vpack.c.b16 %v1376, %v1372
        %v1409 = vpack.c.b16 %v1377, %v1373
        %v1410 = vpack.c.b16 %v1378, %v1374
        %v1411 = vpack.c.b16 %v1383, %v1379
        %v1412 = vpack.c.b16 %v1384, %v1380
        %v1413 = vpack.c.b16 %v1385, %v1381
        %v1414 = vpack.c.b16 %v1386, %v1382
        %v1415 = vpack.c.b16 %v1391, %v1387
        %v1416 = vpack.c.b16 %v1392, %v1388
        %v1417 = vpack.c.b16 %v1393, %v1389
        %v1418 = vpack.c.b16 %v1394, %v1390
        %v1444 = vsel %vm355, %v1321, 0
        %v1447 = vsel %vm355, %v1322, 0
        %1449 = vmatprep.subr.bf16.mxu0 0
        %1450 = vmatpush1.bf16.msra.mxu0 0
        %1451 = vmatprep.subr.bf16.mxu0 0
        %1452 = vmatpush1.bf16.msra.mxu0 0
        %1453 = vmatprep.subr.bf16.mxu0 %v1416
        %1454 = vmatpush1.bf16.msra.mxu0 %v1415
        %1455 = vmatprep.subr.bf16.mxu0 %v1412
        %1456 = vmatpush1.bf16.msra.mxu0 %v1411
        %1457 = vmatprep.subr.bf16.mxu0 %v1408
        %1458 = vmatpush1.bf16.msra.mxu0 %v1407
        %1459 = vmatprep.subr.bf16.mxu0 %v1404
        %1460 = vmatpush1.bf16.msra.mxu0 %v1403
        %1461 = vmatprep.subr.bf16.mxu0 %v1400
        %1462 = vmatpush1.bf16.msra.mxu0 %v1399
        %1463 = vmatprep.subr.bf16.mxu0 %v1396
        %1464 = vmatpush1.bf16.msra.mxu0 %v1395
        %1465 = vmatprep.subr.bf16.mxu0 0
        %1466 = vmatpush2.bf16.msra.mxu0 0
        %1467 = vmatprep.subr.bf16.mxu0 0
        %1468 = vmatpush2.bf16.msra.mxu0 0
        %1469 = vmatprep.subr.bf16.mxu0 0
        %1470 = vmatpush2.bf16.msra.mxu0 0
        %1471 = vmatprep.subr.bf16.mxu0 0
        %1472 = vmatpush2.bf16.msra.mxu0 0
        %1473 = vmatprep.subr.bf16.mxu0 0
        %1474 = vmatpush2.bf16.msra.mxu0 0
        %1475 = vmatprep.subr.bf16.mxu0 0
        %1476 = vmatpush2.bf16.msra.mxu0 0
        %1477 = vmatprep.subr.bf16.mxu0 0
        %1478 = vmatpush2.bf16.msra.mxu0 0
        %1479 = vmatprep.subr.bf16.mxu0 0
        %1480 = vmatpush2.bf16.msra.mxu0 0
        %1481 = vmatprep.mubr.bf16.mxu0 0
        %1482 = vmatmul.mubr.bf16.gmra.mxu0 %v1444
        %v1483 = vpop.f32.mrf.mxu0
        %v1484 = vadd.f32 0.0, %v1483
        %v1485 = vpop.f32.mrf.mxu0
        %v1486 = vadd.f32 0.0, %v1485
        %v1487 = vpop.f32.mrf.mxu0
        %v1488 = vadd.f32 0.0, %v1487
        %v1489 = vpop.f32.mrf.mxu0
        %v1490 = vadd.f32 0.0, %v1489
        %1491 = vmatprep.mubr.bf16.mxu0 0
        %1492 = vmatmul.mubr.bf16.gmra.mxu0 %v1447
        %v1493 = vpop.f32.mrf.mxu0
        %v1494 = vadd.f32 0.0, %v1493
        %v1495 = vpop.f32.mrf.mxu0
        %v1496 = vadd.f32 0.0, %v1495
        %v1497 = vpop.f32.mrf.mxu0
        %v1498 = vadd.f32 0.0, %v1497
        %v1499 = vpop.f32.mrf.mxu0
        %v1500 = vadd.f32 0.0, %v1499
        %1501 = vdwg.mxu0
        %1502 = vmatprep.subr.bf16.mxu0 0
        %1503 = vmatpush1.bf16.msra.mxu0 0
        %1504 = vmatprep.subr.bf16.mxu0 0
        %1505 = vmatpush1.bf16.msra.mxu0 0
        %1506 = vmatprep.subr.bf16.mxu0 %v1418
        %1507 = vmatpush1.bf16.msra.mxu0 %v1417
        %1508 = vmatprep.subr.bf16.mxu0 %v1414
        %1509 = vmatpush1.bf16.msra.mxu0 %v1413
        %1510 = vmatprep.subr.bf16.mxu0 %v1410
        %1511 = vmatpush1.bf16.msra.mxu0 %v1409
        %1512 = vmatprep.subr.bf16.mxu0 %v1406
        %1513 = vmatpush1.bf16.msra.mxu0 %v1405
        %1514 = vmatprep.subr.bf16.mxu0 %v1402
        %1515 = vmatpush1.bf16.msra.mxu0 %v1401
        %1516 = vmatprep.subr.bf16.mxu0 %v1398
        %1517 = vmatpush1.bf16.msra.mxu0 %v1397
        %1518 = vmatprep.subr.bf16.mxu0 0
        %1519 = vmatpush2.bf16.msra.mxu0 0
        %1520 = vmatprep.subr.bf16.mxu0 0
        %1521 = vmatpush2.bf16.msra.mxu0 0
        %1522 = vmatprep.subr.bf16.mxu0 0
        %1523 = vmatpush2.bf16.msra.mxu0 0
        %1524 = vmatprep.subr.bf16.mxu0 0
        %1525 = vmatpush2.bf16.msra.mxu0 0
        %1526 = vmatprep.subr.bf16.mxu0 0
        %1527 = vmatpush2.bf16.msra.mxu0 0
        %1528 = vmatprep.subr.bf16.mxu0 0
        %1529 = vmatpush2.bf16.msra.mxu0 0
        %1530 = vmatprep.subr.bf16.mxu0 0
        %1531 = vmatpush2.bf16.msra.mxu0 0
        %1532 = vmatprep.subr.bf16.mxu0 0
        %1533 = vmatpush2.bf16.msra.mxu0 0
        %1534 = vmatprep.mubr.bf16.mxu0 0
        %1535 = vmatmul.mubr.bf16.gmra.mxu0 %v1444
        %v1536 = vpop.f32.mrf.mxu0
        %v1537 = vadd.f32 0.0, %v1536
        %v1538 = vpop.f32.mrf.mxu0
        %v1539 = vadd.f32 0.0, %v1538
        %v1540 = vpop.f32.mrf.mxu0
        %v1541 = vadd.f32 0.0, %v1540
        %v1542 = vpop.f32.mrf.mxu0
        %v1543 = vadd.f32 0.0, %v1542
        %1544 = vmatprep.mubr.bf16.mxu0 0
        %1545 = vmatmul.mubr.bf16.gmra.mxu0 %v1447
        %v1546 = vpop.f32.mrf.mxu0
        %v1547 = vadd.f32 0.0, %v1546
        %v1548 = vpop.f32.mrf.mxu0
        %v1549 = vadd.f32 0.0, %v1548
        %v1550 = vpop.f32.mrf.mxu0
        %v1551 = vadd.f32 0.0, %v1550
        %v1552 = vpop.f32.mrf.mxu0
        %v1553 = vadd.f32 0.0, %v1552
        %1554 = vdwg.mxu0
        %v1555 = vadd.f32 %v1268, %v1484
        %v1556 = vadd.f32 %v1269, %v1486
        %v1557 = vadd.f32 %v1270, %v1537
        %v1558 = vadd.f32 %v1271, %v1539
        %v1559 = vadd.f32 %v1272, %v1488
        %v1560 = vadd.f32 %v1273, %v1490
        %v1561 = vadd.f32 %v1274, %v1541
        %v1562 = vadd.f32 %v1275, %v1543
        %v1563 = vadd.f32 %v1276, %v1494
        %v1564 = vadd.f32 %v1277, %v1496
        %v1565 = vadd.f32 %v1278, %v1547
        %v1566 = vadd.f32 %v1279, %v1549
        %v1567 = vadd.f32 %v1280, %v1498
        %v1568 = vadd.f32 %v1281, %v1500
        %v1569 = vadd.f32 %v1282, %v1551
        %v1570 = vadd.f32 %v1283, %v1553
        %v1571 = vld [vmem:[%s195 + $0x8] sm:$0xff]
        %v1572 = vld [vmem:[%s195 + $0x10] sm:$0xff]
        %v1573 = vld [vmem:[%s195 + $0x28] sm:$0xff]
        %v1574 = vld [vmem:[%s195 + $0x30] sm:$0xff]
        %v1575 = vld [vmem:[%s195 + $0x48] sm:$0xff]
        %v1576 = vld [vmem:[%s195 + $0x50] sm:$0xff]
        %v1577 = vld [vmem:[%s195 + $0x68] sm:$0xff]
        %v1578 = vld [vmem:[%s195 + $0x70] sm:$0xff]
        %v1579 = vld [vmem:[%s195 + $0x88] sm:$0xff]
        %v1580 = vld [vmem:[%s195 + $0x90] sm:$0xff]
        %v1581 = vld [vmem:[%s195 + $0xa8] sm:$0xff]
        %v1582 = vld [vmem:[%s195 + $0xb0] sm:$0xff]
        %v1583 = vld [vmem:[%s195 + $0xc8] sm:$0xff]
        %v1584 = vld [vmem:[%s195 + $0xd0] sm:$0xff]
        %v1585 = vld [vmem:[%s195 + $0xe8] sm:$0xff]
        %v1586 = vld [vmem:[%s195 + $0xf0] sm:$0xff]
        %v1587 = vld [vmem:[%s195 + $0x108] sm:$0xff]
        %v1588 = vld [vmem:[%s195 + $0x110] sm:$0xff]
        %v1589 = vld [vmem:[%s195 + $0x128] sm:$0xff]
        %v1590 = vld [vmem:[%s195 + $0x130] sm:$0xff]
        %v1591 = vld [vmem:[%s195 + $0x148] sm:$0xff]
        %v1592 = vld [vmem:[%s195 + $0x150] sm:$0xff]
        %v1593 = vld [vmem:[%s195 + $0x168] sm:$0xff]
        %v1594 = vld [vmem:[%s195 + $0x170] sm:$0xff]
        %s1595 = scalar_lea.vmem %s1, 80
        %v1596 = vld [vmem:[%s1595] sm:$0xf]
        %v1597 = vld [vmem:[%s1595 + $0x4] sm:$0xf]
        %v1598 = vld [vmem:[%s1595 + $0x8] sm:$0xf]
        %v1599 = vld [vmem:[%s1595 + $0xc] sm:$0xf]
        %v1604 = vunpack.c.l.b16 %v1596
        %v1605 = vunpack.c.l.b16 %v1597
        %v1606 = vunpack.c.l.b16 %v1598
        %v1607 = vunpack.c.l.b16 %v1599
        %v1608 = vpack.c.b16 %v1605, %v1604
        %v1609 = vpack.c.b16 %v1607, %v1606
        %v1634 = vunpack.c.l.b16 %v1571
        %v1635 = vunpack.c.h.b16 %v1571
        %v1636 = vunpack.c.l.b16 %v1572
        %v1637 = vunpack.c.h.b16 %v1572
        %v1638 = vunpack.c.l.b16 %v1573
        %v1639 = vunpack.c.h.b16 %v1573
        %v1640 = vunpack.c.l.b16 %v1574
        %v1641 = vunpack.c.h.b16 %v1574
        %v1642 = vunpack.c.l.b16 %v1575
        %v1643 = vunpack.c.h.b16 %v1575
        %v1644 = vunpack.c.l.b16 %v1576
        %v1645 = vunpack.c.h.b16 %v1576
        %v1646 = vunpack.c.l.b16 %v1577
        %v1647 = vunpack.c.h.b16 %v1577
        %v1648 = vunpack.c.l.b16 %v1578
        %v1649 = vunpack.c.h.b16 %v1578
        %v1650 = vunpack.c.l.b16 %v1579
        %v1651 = vunpack.c.h.b16 %v1579
        %v1652 = vunpack.c.l.b16 %v1580
        %v1653 = vunpack.c.h.b16 %v1580
        %v1654 = vunpack.c.l.b16 %v1581
        %v1655 = vunpack.c.h.b16 %v1581
        %v1656 = vunpack.c.l.b16 %v1582
        %v1657 = vunpack.c.h.b16 %v1582
        %v1658 = vunpack.c.l.b16 %v1583
        %v1659 = vunpack.c.h.b16 %v1583
        %v1660 = vunpack.c.l.b16 %v1584
        %v1661 = vunpack.c.h.b16 %v1584
        %v1662 = vunpack.c.l.b16 %v1585
        %v1663 = vunpack.c.h.b16 %v1585
        %v1664 = vunpack.c.l.b16 %v1586
        %v1665 = vunpack.c.h.b16 %v1586
        %v1666 = vunpack.c.l.b16 %v1587
        %v1667 = vunpack.c.h.b16 %v1587
        %v1668 = vunpack.c.l.b16 %v1588
        %v1669 = vunpack.c.h.b16 %v1588
        %v1670 = vunpack.c.l.b16 %v1589
        %v1671 = vunpack.c.h.b16 %v1589
        %v1672 = vunpack.c.l.b16 %v1590
        %v1673 = vunpack.c.h.b16 %v1590
        %v1674 = vunpack.c.l.b16 %v1591
        %v1675 = vunpack.c.h.b16 %v1591
        %v1676 = vunpack.c.l.b16 %v1592
        %v1677 = vunpack.c.h.b16 %v1592
        %v1678 = vunpack.c.l.b16 %v1593
        %v1679 = vunpack.c.h.b16 %v1593
        %v1680 = vunpack.c.l.b16 %v1594
        %v1681 = vunpack.c.h.b16 %v1594
        %v1682 = vpack.c.b16 %v1638, %v1634
        %v1683 = vpack.c.b16 %v1639, %v1635
        %v1684 = vpack.c.b16 %v1640, %v1636
        %v1685 = vpack.c.b16 %v1641, %v1637
        %v1686 = vpack.c.b16 %v1646, %v1642
        %v1687 = vpack.c.b16 %v1647, %v1643
        %v1688 = vpack.c.b16 %v1648, %v1644
        %v1689 = vpack.c.b16 %v1649, %v1645
        %v1690 = vpack.c.b16 %v1654, %v1650
        %v1691 = vpack.c.b16 %v1655, %v1651
        %v1692 = vpack.c.b16 %v1656, %v1652
        %v1693 = vpack.c.b16 %v1657, %v1653
        %v1694 = vpack.c.b16 %v1662, %v1658
        %v1695 = vpack.c.b16 %v1663, %v1659
        %v1696 = vpack.c.b16 %v1664, %v1660
        %v1697 = vpack.c.b16 %v1665, %v1661
        %v1698 = vpack.c.b16 %v1670, %v1666
        %v1699 = vpack.c.b16 %v1671, %v1667
        %v1700 = vpack.c.b16 %v1672, %v1668
        %v1701 = vpack.c.b16 %v1673, %v1669
        %v1702 = vpack.c.b16 %v1678, %v1674
        %v1703 = vpack.c.b16 %v1679, %v1675
        %v1704 = vpack.c.b16 %v1680, %v1676
        %v1705 = vpack.c.b16 %v1681, %v1677
        %v1731 = vsel %vm355, %v1608, 0
        %v1734 = vsel %vm355, %v1609, 0
        %1736 = vmatprep.subr.bf16.mxu0 0
        %1737 = vmatpush1.bf16.msra.mxu0 0
        %1738 = vmatprep.subr.bf16.mxu0 0
        %1739 = vmatpush1.bf16.msra.mxu0 0
        %1740 = vmatprep.subr.bf16.mxu0 %v1703
        %1741 = vmatpush1.bf16.msra.mxu0 %v1702
        %1742 = vmatprep.subr.bf16.mxu0 %v1699
        %1743 = vmatpush1.bf16.msra.mxu0 %v1698
        %1744 = vmatprep.subr.bf16.mxu0 %v1695
        %1745 = vmatpush1.bf16.msra.mxu0 %v1694
        %1746 = vmatprep.subr.bf16.mxu0 %v1691
        %1747 = vmatpush1.bf16.msra.mxu0 %v1690
        %1748 = vmatprep.subr.bf16.mxu0 %v1687
        %1749 = vmatpush1.bf16.msra.mxu0 %v1686
        %1750 = vmatprep.subr.bf16.mxu0 %v1683
        %1751 = vmatpush1.bf16.msra.mxu0 %v1682
        %1752 = vmatprep.subr.bf16.mxu0 0
        %1753 = vmatpush2.bf16.msra.mxu0 0
        %1754 = vmatprep.subr.bf16.mxu0 0
        %1755 = vmatpush2.bf16.msra.mxu0 0
        %1756 = vmatprep.subr.bf16.mxu0 0
        %1757 = vmatpush2.bf16.msra.mxu0 0
        %1758 = vmatprep.subr.bf16.mxu0 0
        %1759 = vmatpush2.bf16.msra.mxu0 0
        %1760 = vmatprep.subr.bf16.mxu0 0
        %1761 = vmatpush2.bf16.msra.mxu0 0
        %1762 = vmatprep.subr.bf16.mxu0 0
        %1763 = vmatpush2.bf16.msra.mxu0 0
        %1764 = vmatprep.subr.bf16.mxu0 0
        %1765 = vmatpush2.bf16.msra.mxu0 0
        %1766 = vmatprep.subr.bf16.mxu0 0
        %1767 = vmatpush2.bf16.msra.mxu0 0
        %1768 = vmatprep.mubr.bf16.mxu0 0
        %1769 = vmatmul.mubr.bf16.gmra.mxu0 %v1731
        %v1770 = vpop.f32.mrf.mxu0
        %v1771 = vadd.f32 0.0, %v1770
        %v1772 = vpop.f32.mrf.mxu0
        %v1773 = vadd.f32 0.0, %v1772
        %v1774 = vpop.f32.mrf.mxu0
        %v1775 = vadd.f32 0.0, %v1774
        %v1776 = vpop.f32.mrf.mxu0
        %v1777 = vadd.f32 0.0, %v1776
        %1778 = vmatprep.mubr.bf16.mxu0 0
        %1779 = vmatmul.mubr.bf16.gmra.mxu0 %v1734
        %v1780 = vpop.f32.mrf.mxu0
        %v1781 = vadd.f32 0.0, %v1780
        %v1782 = vpop.f32.mrf.mxu0
        %v1783 = vadd.f32 0.0, %v1782
        %v1784 = vpop.f32.mrf.mxu0
        %v1785 = vadd.f32 0.0, %v1784
        %v1786 = vpop.f32.mrf.mxu0
        %v1787 = vadd.f32 0.0, %v1786
        %1788 = vdwg.mxu0
        %1789 = vmatprep.subr.bf16.mxu0 0
        %1790 = vmatpush1.bf16.msra.mxu0 0
        %1791 = vmatprep.subr.bf16.mxu0 0
        %1792 = vmatpush1.bf16.msra.mxu0 0
        %1793 = vmatprep.subr.bf16.mxu0 %v1705
        %1794 = vmatpush1.bf16.msra.mxu0 %v1704
        %1795 = vmatprep.subr.bf16.mxu0 %v1701
        %1796 = vmatpush1.bf16.msra.mxu0 %v1700
        %1797 = vmatprep.subr.bf16.mxu0 %v1697
        %1798 = vmatpush1.bf16.msra.mxu0 %v1696
        %1799 = vmatprep.subr.bf16.mxu0 %v1693
        %1800 = vmatpush1.bf16.msra.mxu0 %v1692
        %1801 = vmatprep.subr.bf16.mxu0 %v1689
        %1802 = vmatpush1.bf16.msra.mxu0 %v1688
        %1803 = vmatprep.subr.bf16.mxu0 %v1685
        %1804 = vmatpush1.bf16.msra.mxu0 %v1684
        %1805 = vmatprep.subr.bf16.mxu0 0
        %1806 = vmatpush2.bf16.msra.mxu0 0
        %1807 = vmatprep.subr.bf16.mxu0 0
        %1808 = vmatpush2.bf16.msra.mxu0 0
        %1809 = vmatprep.subr.bf16.mxu0 0
        %1810 = vmatpush2.bf16.msra.mxu0 0
        %1811 = vmatprep.subr.bf16.mxu0 0
        %1812 = vmatpush2.bf16.msra.mxu0 0
        %1813 = vmatprep.subr.bf16.mxu0 0
        %1814 = vmatpush2.bf16.msra.mxu0 0
        %1815 = vmatprep.subr.bf16.mxu0 0
        %1816 = vmatpush2.bf16.msra.mxu0 0
        %1817 = vmatprep.subr.bf16.mxu0 0
        %1818 = vmatpush2.bf16.msra.mxu0 0
        %1819 = vmatprep.subr.bf16.mxu0 0
        %1820 = vmatpush2.bf16.msra.mxu0 0
        %1821 = vmatprep.mubr.bf16.mxu0 0
        %1822 = vmatmul.mubr.bf16.gmra.mxu0 %v1731
        %v1823 = vpop.f32.mrf.mxu0
        %v1824 = vadd.f32 0.0, %v1823
        %v1825 = vpop.f32.mrf.mxu0
        %v1826 = vadd.f32 0.0, %v1825
        %v1827 = vpop.f32.mrf.mxu0
        %v1828 = vadd.f32 0.0, %v1827
        %v1829 = vpop.f32.mrf.mxu0
        %v1830 = vadd.f32 0.0, %v1829
        %1831 = vmatprep.mubr.bf16.mxu0 0
        %1832 = vmatmul.mubr.bf16.gmra.mxu0 %v1734
        %v1833 = vpop.f32.mrf.mxu0
        %v1834 = vadd.f32 0.0, %v1833
        %v1835 = vpop.f32.mrf.mxu0
        %v1836 = vadd.f32 0.0, %v1835
        %v1837 = vpop.f32.mrf.mxu0
        %v1838 = vadd.f32 0.0, %v1837
        %v1839 = vpop.f32.mrf.mxu0
        %v1840 = vadd.f32 0.0, %v1839
        %1841 = vdwg.mxu0
        %v1842 = vadd.f32 %v1555, %v1771
        %v1843 = vadd.f32 %v1556, %v1773
        %v1844 = vadd.f32 %v1557, %v1824
        %v1845 = vadd.f32 %v1558, %v1826
        %v1846 = vadd.f32 %v1559, %v1775
        %v1847 = vadd.f32 %v1560, %v1777
        %v1848 = vadd.f32 %v1561, %v1828
        %v1849 = vadd.f32 %v1562, %v1830
        %v1850 = vadd.f32 %v1563, %v1781
        %v1851 = vadd.f32 %v1564, %v1783
        %v1852 = vadd.f32 %v1565, %v1834
        %v1853 = vadd.f32 %v1566, %v1836
        %v1854 = vadd.f32 %v1567, %v1785
        %v1855 = vadd.f32 %v1568, %v1787
        %v1856 = vadd.f32 %v1569, %v1838
        %v1857 = vadd.f32 %v1570, %v1840
        %v1858 = vld [vmem:[%s164 + $0xc] sm:$0xff]
        %v1859 = vld [vmem:[%s164 + $0x14] sm:$0xff]
        %v1860 = vld [vmem:[%s164 + $0x2c] sm:$0xff]
        %v1861 = vld [vmem:[%s164 + $0x34] sm:$0xff]
        %v1862 = vld [vmem:[%s164 + $0x4c] sm:$0xff]
        %v1863 = vld [vmem:[%s164 + $0x54] sm:$0xff]
        %v1864 = vld [vmem:[%s164 + $0x6c] sm:$0xff]
        %v1865 = vld [vmem:[%s164 + $0x74] sm:$0xff]
        %v1866 = vld [vmem:[%s164 + $0x8c] sm:$0xff]
        %v1867 = vld [vmem:[%s164 + $0x94] sm:$0xff]
        %v1868 = vld [vmem:[%s164 + $0xac] sm:$0xff]
        %v1869 = vld [vmem:[%s164 + $0xb4] sm:$0xff]
        %v1870 = vld [vmem:[%s164 + $0xcc] sm:$0xff]
        %v1871 = vld [vmem:[%s164 + $0xd4] sm:$0xff]
        %v1872 = vld [vmem:[%s164 + $0xec] sm:$0xff]
        %v1873 = vld [vmem:[%s164 + $0xf4] sm:$0xff]
        %v1874 = vld [vmem:[%s164 + $0x10c] sm:$0xff]
        %v1875 = vld [vmem:[%s164 + $0x114] sm:$0xff]
        %v1876 = vld [vmem:[%s164 + $0x12c] sm:$0xff]
        %v1877 = vld [vmem:[%s164 + $0x134] sm:$0xff]
        %v1878 = vld [vmem:[%s164 + $0x14c] sm:$0xff]
        %v1879 = vld [vmem:[%s164 + $0x154] sm:$0xff]
        %v1880 = vld [vmem:[%s164 + $0x16c] sm:$0xff]
        %v1881 = vld [vmem:[%s164 + $0x174] sm:$0xff]
        %s1882 = scalar_lea.vmem %s1, 96
        %v1883 = vld [vmem:[%s1882] sm:$0xf]
        %v1884 = vld [vmem:[%s1882 + $0x4] sm:$0xf]
        %v1885 = vld [vmem:[%s1882 + $0x8] sm:$0xf]
        %v1886 = vld [vmem:[%s1882 + $0xc] sm:$0xf]
        %v1891 = vunpack.c.l.b16 %v1883
        %v1892 = vunpack.c.l.b16 %v1884
        %v1893 = vunpack.c.l.b16 %v1885
        %v1894 = vunpack.c.l.b16 %v1886
        %v1895 = vpack.c.b16 %v1892, %v1891
        %v1896 = vpack.c.b16 %v1894, %v1893
        %v1921 = vunpack.c.l.b16 %v1858
        %v1922 = vunpack.c.h.b16 %v1858
        %v1923 = vunpack.c.l.b16 %v1859
        %v1924 = vunpack.c.h.b16 %v1859
        %v1925 = vunpack.c.l.b16 %v1860
        %v1926 = vunpack.c.h.b16 %v1860
        %v1927 = vunpack.c.l.b16 %v1861
        %v1928 = vunpack.c.h.b16 %v1861
        %v1929 = vunpack.c.l.b16 %v1862
        %v1930 = vunpack.c.h.b16 %v1862
        %v1931 = vunpack.c.l.b16 %v1863
        %v1932 = vunpack.c.h.b16 %v1863
        %v1933 = vunpack.c.l.b16 %v1864
        %v1934 = vunpack.c.h.b16 %v1864
        %v1935 = vunpack.c.l.b16 %v1865
        %v1936 = vunpack.c.h.b16 %v1865
        %v1937 = vunpack.c.l.b16 %v1866
        %v1938 = vunpack.c.h.b16 %v1866
        %v1939 = vunpack.c.l.b16 %v1867
        %v1940 = vunpack.c.h.b16 %v1867
        %v1941 = vunpack.c.l.b16 %v1868
        %v1942 = vunpack.c.h.b16 %v1868
        %v1943 = vunpack.c.l.b16 %v1869
        %v1944 = vunpack.c.h.b16 %v1869
        %v1945 = vunpack.c.l.b16 %v1870
        %v1946 = vunpack.c.h.b16 %v1870
        %v1947 = vunpack.c.l.b16 %v1871
        %v1948 = vunpack.c.h.b16 %v1871
        %v1949 = vunpack.c.l.b16 %v1872
        %v1950 = vunpack.c.h.b16 %v1872
        %v1951 = vunpack.c.l.b16 %v1873
        %v1952 = vunpack.c.h.b16 %v1873
        %v1953 = vunpack.c.l.b16 %v1874
        %v1954 = vunpack.c.h.b16 %v1874
        %v1955 = vunpack.c.l.b16 %v1875
        %v1956 = vunpack.c.h.b16 %v1875
        %v1957 = vunpack.c.l.b16 %v1876
        %v1958 = vunpack.c.h.b16 %v1876
        %v1959 = vunpack.c.l.b16 %v1877
        %v1960 = vunpack.c.h.b16 %v1877
        %v1961 = vunpack.c.l.b16 %v1878
        %v1962 = vunpack.c.h.b16 %v1878
        %v1963 = vunpack.c.l.b16 %v1879
        %v1964 = vunpack.c.h.b16 %v1879
        %v1965 = vunpack.c.l.b16 %v1880
        %v1966 = vunpack.c.h.b16 %v1880
        %v1967 = vunpack.c.l.b16 %v1881
        %v1968 = vunpack.c.h.b16 %v1881
        %v1969 = vpack.c.b16 %v1925, %v1921
        %v1970 = vpack.c.b16 %v1926, %v1922
        %v1971 = vpack.c.b16 %v1927, %v1923
        %v1972 = vpack.c.b16 %v1928, %v1924
        %v1973 = vpack.c.b16 %v1933, %v1929
        %v1974 = vpack.c.b16 %v1934, %v1930
        %v1975 = vpack.c.b16 %v1935, %v1931
        %v1976 = vpack.c.b16 %v1936, %v1932
        %v1977 = vpack.c.b16 %v1941, %v1937
        %v1978 = vpack.c.b16 %v1942, %v1938
        %v1979 = vpack.c.b16 %v1943, %v1939
        %v1980 = vpack.c.b16 %v1944, %v1940
        %v1981 = vpack.c.b16 %v1949, %v1945
        %v1982 = vpack.c.b16 %v1950, %v1946
        %v1983 = vpack.c.b16 %v1951, %v1947
        %v1984 = vpack.c.b16 %v1952, %v1948
        %v1985 = vpack.c.b16 %v1957, %v1953
        %v1986 = vpack.c.b16 %v1958, %v1954
        %v1987 = vpack.c.b16 %v1959, %v1955
        %v1988 = vpack.c.b16 %v1960, %v1956
        %v1989 = vpack.c.b16 %v1965, %v1961
        %v1990 = vpack.c.b16 %v1966, %v1962
        %v1991 = vpack.c.b16 %v1967, %v1963
        %v1992 = vpack.c.b16 %v1968, %v1964
        %v2018 = vsel %vm355, %v1895, 0
        %v2021 = vsel %vm355, %v1896, 0
        %2023 = vmatprep.subr.bf16.mxu0 0
        %2024 = vmatpush1.bf16.msra.mxu0 0
        %2025 = vmatprep.subr.bf16.mxu0 0
        %2026 = vmatpush1.bf16.msra.mxu0 0
        %2027 = vmatprep.subr.bf16.mxu0 %v1990
        %2028 = vmatpush1.bf16.msra.mxu0 %v1989
        %2029 = vmatprep.subr.bf16.mxu0 %v1986
        %2030 = vmatpush1.bf16.msra.mxu0 %v1985
        %2031 = vmatprep.subr.bf16.mxu0 %v1982
        %2032 = vmatpush1.bf16.msra.mxu0 %v1981
        %2033 = vmatprep.subr.bf16.mxu0 %v1978
        %2034 = vmatpush1.bf16.msra.mxu0 %v1977
        %2035 = vmatprep.subr.bf16.mxu0 %v1974
        %2036 = vmatpush1.bf16.msra.mxu0 %v1973
        %2037 = vmatprep.subr.bf16.mxu0 %v1970
        %2038 = vmatpush1.bf16.msra.mxu0 %v1969
        %2039 = vmatprep.subr.bf16.mxu0 0
        %2040 = vmatpush2.bf16.msra.mxu0 0
        %2041 = vmatprep.subr.bf16.mxu0 0
        %2042 = vmatpush2.bf16.msra.mxu0 0
        %2043 = vmatprep.subr.bf16.mxu0 0
        %2044 = vmatpush2.bf16.msra.mxu0 0
        %2045 = vmatprep.subr.bf16.mxu0 0
        %2046 = vmatpush2.bf16.msra.mxu0 0
        %2047 = vmatprep.subr.bf16.mxu0 0
        %2048 = vmatpush2.bf16.msra.mxu0 0
        %2049 = vmatprep.subr.bf16.mxu0 0
        %2050 = vmatpush2.bf16.msra.mxu0 0
        %2051 = vmatprep.subr.bf16.mxu0 0
        %2052 = vmatpush2.bf16.msra.mxu0 0
        %2053 = vmatprep.subr.bf16.mxu0 0
        %2054 = vmatpush2.bf16.msra.mxu0 0
        %2055 = vmatprep.mubr.bf16.mxu0 0
        %2056 = vmatmul.mubr.bf16.gmra.mxu0 %v2018
        %v2057 = vpop.f32.mrf.mxu0
        %v2058 = vadd.f32 0.0, %v2057
        %v2059 = vpop.f32.mrf.mxu0
        %v2060 = vadd.f32 0.0, %v2059
        %v2061 = vpop.f32.mrf.mxu0
        %v2062 = vadd.f32 0.0, %v2061
        %v2063 = vpop.f32.mrf.mxu0
        %v2064 = vadd.f32 0.0, %v2063
        %2065 = vmatprep.mubr.bf16.mxu0 0
        %2066 = vmatmul.mubr.bf16.gmra.mxu0 %v2021
        %v2067 = vpop.f32.mrf.mxu0
        %v2068 = vadd.f32 0.0, %v2067
        %v2069 = vpop.f32.mrf.mxu0
        %v2070 = vadd.f32 0.0, %v2069
        %v2071 = vpop.f32.mrf.mxu0
        %v2072 = vadd.f32 0.0, %v2071
        %v2073 = vpop.f32.mrf.mxu0
        %v2074 = vadd.f32 0.0, %v2073
        %2075 = vdwg.mxu0
        %2076 = vmatprep.subr.bf16.mxu0 0
        %2077 = vmatpush1.bf16.msra.mxu0 0
        %2078 = vmatprep.subr.bf16.mxu0 0
        %2079 = vmatpush1.bf16.msra.mxu0 0
        %2080 = vmatprep.subr.bf16.mxu0 %v1992
        %2081 = vmatpush1.bf16.msra.mxu0 %v1991
        %2082 = vmatprep.subr.bf16.mxu0 %v1988
        %2083 = vmatpush1.bf16.msra.mxu0 %v1987
        %2084 = vmatprep.subr.bf16.mxu0 %v1984
        %2085 = vmatpush1.bf16.msra.mxu0 %v1983
        %2086 = vmatprep.subr.bf16.mxu0 %v1980
        %2087 = vmatpush1.bf16.msra.mxu0 %v1979
        %2088 = vmatprep.subr.bf16.mxu0 %v1976
        %2089 = vmatpush1.bf16.msra.mxu0 %v1975
        %2090 = vmatprep.subr.bf16.mxu0 %v1972
        %2091 = vmatpush1.bf16.msra.mxu0 %v1971
        %2092 = vmatprep.subr.bf16.mxu0 0
        %2093 = vmatpush2.bf16.msra.mxu0 0
        %2094 = vmatprep.subr.bf16.mxu0 0
        %2095 = vmatpush2.bf16.msra.mxu0 0
        %2096 = vmatprep.subr.bf16.mxu0 0
        %2097 = vmatpush2.bf16.msra.mxu0 0
        %2098 = vmatprep.subr.bf16.mxu0 0
        %2099 = vmatpush2.bf16.msra.mxu0 0
        %2100 = vmatprep.subr.bf16.mxu0 0
        %2101 = vmatpush2.bf16.msra.mxu0 0
        %2102 = vmatprep.subr.bf16.mxu0 0
        %2103 = vmatpush2.bf16.msra.mxu0 0
        %2104 = vmatprep.subr.bf16.mxu0 0
        %2105 = vmatpush2.bf16.msra.mxu0 0
        %2106 = vmatprep.subr.bf16.mxu0 0
        %2107 = vmatpush2.bf16.msra.mxu0 0
        %2108 = vmatprep.mubr.bf16.mxu0 0
        %2109 = vmatmul.mubr.bf16.gmra.mxu0 %v2018
        %v2110 = vpop.f32.mrf.mxu0
        %v2111 = vadd.f32 0.0, %v2110
        %v2112 = vpop.f32.mrf.mxu0
        %v2113 = vadd.f32 0.0, %v2112
        %v2114 = vpop.f32.mrf.mxu0
        %v2115 = vadd.f32 0.0, %v2114
        %v2116 = vpop.f32.mrf.mxu0
        %v2117 = vadd.f32 0.0, %v2116
        %2118 = vmatprep.mubr.bf16.mxu0 0
        %2119 = vmatmul.mubr.bf16.gmra.mxu0 %v2021
        %v2120 = vpop.f32.mrf.mxu0
        %v2121 = vadd.f32 0.0, %v2120
        %v2122 = vpop.f32.mrf.mxu0
        %v2123 = vadd.f32 0.0, %v2122
        %v2124 = vpop.f32.mrf.mxu0
        %v2125 = vadd.f32 0.0, %v2124
        %v2126 = vpop.f32.mrf.mxu0
        %v2127 = vadd.f32 0.0, %v2126
        %2128 = vdwg.mxu0
        %v2129 = vadd.f32 %v1842, %v2058
        %v2130 = vadd.f32 %v1843, %v2060
        %v2131 = vadd.f32 %v1844, %v2111
        %v2132 = vadd.f32 %v1845, %v2113
        %v2133 = vadd.f32 %v1846, %v2062
        %v2134 = vadd.f32 %v1847, %v2064
        %v2135 = vadd.f32 %v1848, %v2115
        %v2136 = vadd.f32 %v1849, %v2117
        %v2137 = vadd.f32 %v1850, %v2068
        %v2138 = vadd.f32 %v1851, %v2070
        %v2139 = vadd.f32 %v1852, %v2121
        %v2140 = vadd.f32 %v1853, %v2123
        %v2141 = vadd.f32 %v1854, %v2072
        %v2142 = vadd.f32 %v1855, %v2074
        %v2143 = vadd.f32 %v1856, %v2125
        %v2144 = vadd.f32 %v1857, %v2127
        %v2145 = vld [vmem:[%s195 + $0xc] sm:$0xff]
        %v2146 = vld [vmem:[%s195 + $0x14] sm:$0xff]
        %v2147 = vld [vmem:[%s195 + $0x2c] sm:$0xff]
        %v2148 = vld [vmem:[%s195 + $0x34] sm:$0xff]
        %v2149 = vld [vmem:[%s195 + $0x4c] sm:$0xff]
        %v2150 = vld [vmem:[%s195 + $0x54] sm:$0xff]
        %v2151 = vld [vmem:[%s195 + $0x6c] sm:$0xff]
        %v2152 = vld [vmem:[%s195 + $0x74] sm:$0xff]
        %v2153 = vld [vmem:[%s195 + $0x8c] sm:$0xff]
        %v2154 = vld [vmem:[%s195 + $0x94] sm:$0xff]
        %v2155 = vld [vmem:[%s195 + $0xac] sm:$0xff]
        %v2156 = vld [vmem:[%s195 + $0xb4] sm:$0xff]
        %v2157 = vld [vmem:[%s195 + $0xcc] sm:$0xff]
        %v2158 = vld [vmem:[%s195 + $0xd4] sm:$0xff]
        %v2159 = vld [vmem:[%s195 + $0xec] sm:$0xff]
        %v2160 = vld [vmem:[%s195 + $0xf4] sm:$0xff]
        %v2161 = vld [vmem:[%s195 + $0x10c] sm:$0xff]
        %v2162 = vld [vmem:[%s195 + $0x114] sm:$0xff]
        %v2163 = vld [vmem:[%s195 + $0x12c] sm:$0xff]
        %v2164 = vld [vmem:[%s195 + $0x134] sm:$0xff]
        %v2165 = vld [vmem:[%s195 + $0x14c] sm:$0xff]
        %v2166 = vld [vmem:[%s195 + $0x154] sm:$0xff]
        %v2167 = vld [vmem:[%s195 + $0x16c] sm:$0xff]
        %v2168 = vld [vmem:[%s195 + $0x174] sm:$0xff]
        %s2169 = scalar_lea.vmem %s1, 112
        %v2170 = vld [vmem:[%s2169] sm:$0xf]
        %v2171 = vld [vmem:[%s2169 + $0x4] sm:$0xf]
        %v2172 = vld [vmem:[%s2169 + $0x8] sm:$0xf]
        %v2173 = vld [vmem:[%s2169 + $0xc] sm:$0xf]
        %v2178 = vunpack.c.l.b16 %v2170
        %v2179 = vunpack.c.l.b16 %v2171
        %v2180 = vunpack.c.l.b16 %v2172
        %v2181 = vunpack.c.l.b16 %v2173
        %v2182 = vpack.c.b16 %v2179, %v2178
        %v2183 = vpack.c.b16 %v2181, %v2180
        %v2208 = vunpack.c.l.b16 %v2145
        %v2209 = vunpack.c.h.b16 %v2145
        %v2210 = vunpack.c.l.b16 %v2146
        %v2211 = vunpack.c.h.b16 %v2146
        %v2212 = vunpack.c.l.b16 %v2147
        %v2213 = vunpack.c.h.b16 %v2147
        %v2214 = vunpack.c.l.b16 %v2148
        %v2215 = vunpack.c.h.b16 %v2148
        %v2216 = vunpack.c.l.b16 %v2149
        %v2217 = vunpack.c.h.b16 %v2149
        %v2218 = vunpack.c.l.b16 %v2150
        %v2219 = vunpack.c.h.b16 %v2150
        %v2220 = vunpack.c.l.b16 %v2151
        %v2221 = vunpack.c.h.b16 %v2151
        %v2222 = vunpack.c.l.b16 %v2152
        %v2223 = vunpack.c.h.b16 %v2152
        %v2224 = vunpack.c.l.b16 %v2153
        %v2225 = vunpack.c.h.b16 %v2153
        %v2226 = vunpack.c.l.b16 %v2154
        %v2227 = vunpack.c.h.b16 %v2154
        %v2228 = vunpack.c.l.b16 %v2155
        %v2229 = vunpack.c.h.b16 %v2155
        %v2230 = vunpack.c.l.b16 %v2156
        %v2231 = vunpack.c.h.b16 %v2156
        %v2232 = vunpack.c.l.b16 %v2157
        %v2233 = vunpack.c.h.b16 %v2157
        %v2234 = vunpack.c.l.b16 %v2158
        %v2235 = vunpack.c.h.b16 %v2158
        %v2236 = vunpack.c.l.b16 %v2159
        %v2237 = vunpack.c.h.b16 %v2159
        %v2238 = vunpack.c.l.b16 %v2160
        %v2239 = vunpack.c.h.b16 %v2160
        %v2240 = vunpack.c.l.b16 %v2161
        %v2241 = vunpack.c.h.b16 %v2161
        %v2242 = vunpack.c.l.b16 %v2162
        %v2243 = vunpack.c.h.b16 %v2162
        %v2244 = vunpack.c.l.b16 %v2163
        %v2245 = vunpack.c.h.b16 %v2163
        %v2246 = vunpack.c.l.b16 %v2164
        %v2247 = vunpack.c.h.b16 %v2164
        %v2248 = vunpack.c.l.b16 %v2165
        %v2249 = vunpack.c.h.b16 %v2165
        %v2250 = vunpack.c.l.b16 %v2166
        %v2251 = vunpack.c.h.b16 %v2166
        %v2252 = vunpack.c.l.b16 %v2167
        %v2253 = vunpack.c.h.b16 %v2167
        %v2254 = vunpack.c.l.b16 %v2168
        %v2255 = vunpack.c.h.b16 %v2168
        %v2256 = vpack.c.b16 %v2212, %v2208
        %v2257 = vpack.c.b16 %v2213, %v2209
        %v2258 = vpack.c.b16 %v2214, %v2210
        %v2259 = vpack.c.b16 %v2215, %v2211
        %v2260 = vpack.c.b16 %v2220, %v2216
        %v2261 = vpack.c.b16 %v2221, %v2217
        %v2262 = vpack.c.b16 %v2222, %v2218
        %v2263 = vpack.c.b16 %v2223, %v2219
        %v2264 = vpack.c.b16 %v2228, %v2224
        %v2265 = vpack.c.b16 %v2229, %v2225
        %v2266 = vpack.c.b16 %v2230, %v2226
        %v2267 = vpack.c.b16 %v2231, %v2227
        %v2268 = vpack.c.b16 %v2236, %v2232
        %v2269 = vpack.c.b16 %v2237, %v2233
        %v2270 = vpack.c.b16 %v2238, %v2234
        %v2271 = vpack.c.b16 %v2239, %v2235
        %v2272 = vpack.c.b16 %v2244, %v2240
        %v2273 = vpack.c.b16 %v2245, %v2241
        %v2274 = vpack.c.b16 %v2246, %v2242
        %v2275 = vpack.c.b16 %v2247, %v2243
        %v2276 = vpack.c.b16 %v2252, %v2248
        %v2277 = vpack.c.b16 %v2253, %v2249
        %v2278 = vpack.c.b16 %v2254, %v2250
        %v2279 = vpack.c.b16 %v2255, %v2251
        %v2305 = vsel %vm355, %v2182, 0
        %v2308 = vsel %vm355, %v2183, 0
        %2310 = vmatprep.subr.bf16.mxu0 0
        %2311 = vmatpush1.bf16.msra.mxu0 0
        %2312 = vmatprep.subr.bf16.mxu0 0
        %2313 = vmatpush1.bf16.msra.mxu0 0
        %2314 = vmatprep.subr.bf16.mxu0 %v2277
        %2315 = vmatpush1.bf16.msra.mxu0 %v2276
        %2316 = vmatprep.subr.bf16.mxu0 %v2273
        %2317 = vmatpush1.bf16.msra.mxu0 %v2272
        %2318 = vmatprep.subr.bf16.mxu0 %v2269
        %2319 = vmatpush1.bf16.msra.mxu0 %v2268
        %2320 = vmatprep.subr.bf16.mxu0 %v2265
        %2321 = vmatpush1.bf16.msra.mxu0 %v2264
        %2322 = vmatprep.subr.bf16.mxu0 %v2261
        %2323 = vmatpush1.bf16.msra.mxu0 %v2260
        %2324 = vmatprep.subr.bf16.mxu0 %v2257
        %2325 = vmatpush1.bf16.msra.mxu0 %v2256
        %2326 = vmatprep.subr.bf16.mxu0 0
        %2327 = vmatpush2.bf16.msra.mxu0 0
        %2328 = vmatprep.subr.bf16.mxu0 0
        %2329 = vmatpush2.bf16.msra.mxu0 0
        %2330 = vmatprep.subr.bf16.mxu0 0
        %2331 = vmatpush2.bf16.msra.mxu0 0
        %2332 = vmatprep.subr.bf16.mxu0 0
        %2333 = vmatpush2.bf16.msra.mxu0 0
        %2334 = vmatprep.subr.bf16.mxu0 0
        %2335 = vmatpush2.bf16.msra.mxu0 0
        %2336 = vmatprep.subr.bf16.mxu0 0
        %2337 = vmatpush2.bf16.msra.mxu0 0
        %2338 = vmatprep.subr.bf16.mxu0 0
        %2339 = vmatpush2.bf16.msra.mxu0 0
        %2340 = vmatprep.subr.bf16.mxu0 0
        %2341 = vmatpush2.bf16.msra.mxu0 0
        %2342 = vmatprep.mubr.bf16.mxu0 0
        %2343 = vmatmul.mubr.bf16.gmra.mxu0 %v2305
        %v2344 = vpop.f32.mrf.mxu0
        %v2345 = vadd.f32 0.0, %v2344
        %v2346 = vpop.f32.mrf.mxu0
        %v2347 = vadd.f32 0.0, %v2346
        %v2348 = vpop.f32.mrf.mxu0
        %v2349 = vadd.f32 0.0, %v2348
        %v2350 = vpop.f32.mrf.mxu0
        %v2351 = vadd.f32 0.0, %v2350
        %2352 = vmatprep.mubr.bf16.mxu0 0
        %2353 = vmatmul.mubr.bf16.gmra.mxu0 %v2308
        %v2354 = vpop.f32.mrf.mxu0
        %v2355 = vadd.f32 0.0, %v2354
        %v2356 = vpop.f32.mrf.mxu0
        %v2357 = vadd.f32 0.0, %v2356
        %v2358 = vpop.f32.mrf.mxu0
        %v2359 = vadd.f32 0.0, %v2358
        %v2360 = vpop.f32.mrf.mxu0
        %v2361 = vadd.f32 0.0, %v2360
        %2362 = vdwg.mxu0
        %2363 = vmatprep.subr.bf16.mxu0 0
        %2364 = vmatpush1.bf16.msra.mxu0 0
        %2365 = vmatprep.subr.bf16.mxu0 0
        %2366 = vmatpush1.bf16.msra.mxu0 0
        %2367 = vmatprep.subr.bf16.mxu0 %v2279
        %2368 = vmatpush1.bf16.msra.mxu0 %v2278
        %2369 = vmatprep.subr.bf16.mxu0 %v2275
        %2370 = vmatpush1.bf16.msra.mxu0 %v2274
        %2371 = vmatprep.subr.bf16.mxu0 %v2271
        %2372 = vmatpush1.bf16.msra.mxu0 %v2270
        %2373 = vmatprep.subr.bf16.mxu0 %v2267
        %2374 = vmatpush1.bf16.msra.mxu0 %v2266
        %2375 = vmatprep.subr.bf16.mxu0 %v2263
        %2376 = vmatpush1.bf16.msra.mxu0 %v2262
        %2377 = vmatprep.subr.bf16.mxu0 %v2259
        %2378 = vmatpush1.bf16.msra.mxu0 %v2258
        %2379 = vmatprep.subr.bf16.mxu0 0
        %2380 = vmatpush2.bf16.msra.mxu0 0
        %2381 = vmatprep.subr.bf16.mxu0 0
        %2382 = vmatpush2.bf16.msra.mxu0 0
        %2383 = vmatprep.subr.bf16.mxu0 0
        %2384 = vmatpush2.bf16.msra.mxu0 0
        %2385 = vmatprep.subr.bf16.mxu0 0
        %2386 = vmatpush2.bf16.msra.mxu0 0
        %2387 = vmatprep.subr.bf16.mxu0 0
        %2388 = vmatpush2.bf16.msra.mxu0 0
        %2389 = vmatprep.subr.bf16.mxu0 0
        %2390 = vmatpush2.bf16.msra.mxu0 0
        %2391 = vmatprep.subr.bf16.mxu0 0
        %2392 = vmatpush2.bf16.msra.mxu0 0
        %2393 = vmatprep.subr.bf16.mxu0 0
        %2394 = vmatpush2.bf16.msra.mxu0 0
        %2395 = vmatprep.mubr.bf16.mxu0 0
        %2396 = vmatmul.mubr.bf16.gmra.mxu0 %v2305
        %v2397 = vpop.f32.mrf.mxu0
        %v2398 = vadd.f32 0.0, %v2397
        %v2399 = vpop.f32.mrf.mxu0
        %v2400 = vadd.f32 0.0, %v2399
        %v2401 = vpop.f32.mrf.mxu0
        %v2402 = vadd.f32 0.0, %v2401
        %v2403 = vpop.f32.mrf.mxu0
        %v2404 = vadd.f32 0.0, %v2403
        %2405 = vmatprep.mubr.bf16.mxu0 0
        %2406 = vmatmul.mubr.bf16.gmra.mxu0 %v2308
        %v2407 = vpop.f32.mrf.mxu0
        %v2408 = vadd.f32 0.0, %v2407
        %v2409 = vpop.f32.mrf.mxu0
        %v2410 = vadd.f32 0.0, %v2409
        %v2411 = vpop.f32.mrf.mxu0
        %v2412 = vadd.f32 0.0, %v2411
        %v2413 = vpop.f32.mrf.mxu0
        %v2414 = vadd.f32 0.0, %v2413
        %2415 = vdwg.mxu0
        %v2416 = vadd.f32 %v2129, %v2345
        %v2417 = vadd.f32 %v2130, %v2347
        %v2418 = vadd.f32 %v2131, %v2398
        %v2419 = vadd.f32 %v2132, %v2400
        %v2420 = vadd.f32 %v2133, %v2349
        %v2421 = vadd.f32 %v2134, %v2351
        %v2422 = vadd.f32 %v2135, %v2402
        %v2423 = vadd.f32 %v2136, %v2404
        %v2424 = vadd.f32 %v2137, %v2355
        %v2425 = vadd.f32 %v2138, %v2357
        %v2426 = vadd.f32 %v2139, %v2408
        %v2427 = vadd.f32 %v2140, %v2410
        %v2428 = vadd.f32 %v2141, %v2359
        %v2429 = vadd.f32 %v2142, %v2361
        %v2430 = vadd.f32 %v2143, %v2412
        %v2431 = vadd.f32 %v2144, %v2414
        %v2432 = vld [vmem:[%s164 + $0x10] sm:$0xff]
        %v2433 = vld [vmem:[%s164 + $0x18] sm:$0xff]
        %v2434 = vld [vmem:[%s164 + $0x30] sm:$0xff]
        %v2435 = vld [vmem:[%s164 + $0x38] sm:$0xff]
        %v2436 = vld [vmem:[%s164 + $0x50] sm:$0xff]
        %v2437 = vld [vmem:[%s164 + $0x58] sm:$0xff]
        %v2438 = vld [vmem:[%s164 + $0x70] sm:$0xff]
        %v2439 = vld [vmem:[%s164 + $0x78] sm:$0xff]
        %v2440 = vld [vmem:[%s164 + $0x90] sm:$0xff]
        %v2441 = vld [vmem:[%s164 + $0x98] sm:$0xff]
        %v2442 = vld [vmem:[%s164 + $0xb0] sm:$0xff]
        %v2443 = vld [vmem:[%s164 + $0xb8] sm:$0xff]
        %v2444 = vld [vmem:[%s164 + $0xd0] sm:$0xff]
        %v2445 = vld [vmem:[%s164 + $0xd8] sm:$0xff]
        %v2446 = vld [vmem:[%s164 + $0xf0] sm:$0xff]
        %v2447 = vld [vmem:[%s164 + $0xf8] sm:$0xff]
        %v2448 = vld [vmem:[%s164 + $0x110] sm:$0xff]
        %v2449 = vld [vmem:[%s164 + $0x118] sm:$0xff]
        %v2450 = vld [vmem:[%s164 + $0x130] sm:$0xff]
        %v2451 = vld [vmem:[%s164 + $0x138] sm:$0xff]
        %v2452 = vld [vmem:[%s164 + $0x150] sm:$0xff]
        %v2453 = vld [vmem:[%s164 + $0x158] sm:$0xff]
        %v2454 = vld [vmem:[%s164 + $0x170] sm:$0xff]
        %v2455 = vld [vmem:[%s164 + $0x178] sm:$0xff]
        %s2456 = scalar_lea.vmem %s1, 128
        %v2457 = vld [vmem:[%s2456] sm:$0xf]
        %v2458 = vld [vmem:[%s2456 + $0x4] sm:$0xf]
        %v2459 = vld [vmem:[%s2456 + $0x8] sm:$0xf]
        %v2460 = vld [vmem:[%s2456 + $0xc] sm:$0xf]
        %v2465 = vunpack.c.l.b16 %v2457
        %v2466 = vunpack.c.l.b16 %v2458
        %v2467 = vunpack.c.l.b16 %v2459
        %v2468 = vunpack.c.l.b16 %v2460
        %v2469 = vpack.c.b16 %v2466, %v2465
        %v2470 = vpack.c.b16 %v2468, %v2467
        %v2495 = vunpack.c.l.b16 %v2432
        %v2496 = vunpack.c.h.b16 %v2432
        %v2497 = vunpack.c.l.b16 %v2433
        %v2498 = vunpack.c.h.b16 %v2433
        %v2499 = vunpack.c.l.b16 %v2434
        %v2500 = vunpack.c.h.b16 %v2434
        %v2501 = vunpack.c.l.b16 %v2435
        %v2502 = vunpack.c.h.b16 %v2435
        %v2503 = vunpack.c.l.b16 %v2436
        %v2504 = vunpack.c.h.b16 %v2436
        %v2505 = vunpack.c.l.b16 %v2437
        %v2506 = vunpack.c.h.b16 %v2437
        %v2507 = vunpack.c.l.b16 %v2438
        %v2508 = vunpack.c.h.b16 %v2438
        %v2509 = vunpack.c.l.b16 %v2439
        %v2510 = vunpack.c.h.b16 %v2439
        %v2511 = vunpack.c.l.b16 %v2440
        %v2512 = vunpack.c.h.b16 %v2440
        %v2513 = vunpack.c.l.b16 %v2441
        %v2514 = vunpack.c.h.b16 %v2441
        %v2515 = vunpack.c.l.b16 %v2442
        %v2516 = vunpack.c.h.b16 %v2442
        %v2517 = vunpack.c.l.b16 %v2443
        %v2518 = vunpack.c.h.b16 %v2443
        %v2519 = vunpack.c.l.b16 %v2444
        %v2520 = vunpack.c.h.b16 %v2444
        %v2521 = vunpack.c.l.b16 %v2445
        %v2522 = vunpack.c.h.b16 %v2445
        %v2523 = vunpack.c.l.b16 %v2446
        %v2524 = vunpack.c.h.b16 %v2446
        %v2525 = vunpack.c.l.b16 %v2447
        %v2526 = vunpack.c.h.b16 %v2447
        %v2527 = vunpack.c.l.b16 %v2448
        %v2528 = vunpack.c.h.b16 %v2448
        %v2529 = vunpack.c.l.b16 %v2449
        %v2530 = vunpack.c.h.b16 %v2449
        %v2531 = vunpack.c.l.b16 %v2450
        %v2532 = vunpack.c.h.b16 %v2450
        %v2533 = vunpack.c.l.b16 %v2451
        %v2534 = vunpack.c.h.b16 %v2451
        %v2535 = vunpack.c.l.b16 %v2452
        %v2536 = vunpack.c.h.b16 %v2452
        %v2537 = vunpack.c.l.b16 %v2453
        %v2538 = vunpack.c.h.b16 %v2453
        %v2539 = vunpack.c.l.b16 %v2454
        %v2540 = vunpack.c.h.b16 %v2454
        %v2541 = vunpack.c.l.b16 %v2455
        %v2542 = vunpack.c.h.b16 %v2455
        %v2543 = vpack.c.b16 %v2499, %v2495
        %v2544 = vpack.c.b16 %v2500, %v2496
        %v2545 = vpack.c.b16 %v2501, %v2497
        %v2546 = vpack.c.b16 %v2502, %v2498
        %v2547 = vpack.c.b16 %v2507, %v2503
        %v2548 = vpack.c.b16 %v2508, %v2504
        %v2549 = vpack.c.b16 %v2509, %v2505
        %v2550 = vpack.c.b16 %v2510, %v2506
        %v2551 = vpack.c.b16 %v2515, %v2511
        %v2552 = vpack.c.b16 %v2516, %v2512
        %v2553 = vpack.c.b16 %v2517, %v2513
        %v2554 = vpack.c.b16 %v2518, %v2514
        %v2555 = vpack.c.b16 %v2523, %v2519
        %v2556 = vpack.c.b16 %v2524, %v2520
        %v2557 = vpack.c.b16 %v2525, %v2521
        %v2558 = vpack.c.b16 %v2526, %v2522
        %v2559 = vpack.c.b16 %v2531, %v2527
        %v2560 = vpack.c.b16 %v2532, %v2528
        %v2561 = vpack.c.b16 %v2533, %v2529
        %v2562 = vpack.c.b16 %v2534, %v2530
        %v2563 = vpack.c.b16 %v2539, %v2535
        %v2564 = vpack.c.b16 %v2540, %v2536
        %v2565 = vpack.c.b16 %v2541, %v2537
        %v2566 = vpack.c.b16 %v2542, %v2538
        %v2592 = vsel %vm355, %v2469, 0
        %v2595 = vsel %vm355, %v2470, 0
        %2597 = vmatprep.subr.bf16.mxu0 0
        %2598 = vmatpush1.bf16.msra.mxu0 0
        %2599 = vmatprep.subr.bf16.mxu0 0
        %2600 = vmatpush1.bf16.msra.mxu0 0
        %2601 = vmatprep.subr.bf16.mxu0 %v2564
        %2602 = vmatpush1.bf16.msra.mxu0 %v2563
        %2603 = vmatprep.subr.bf16.mxu0 %v2560
        %2604 = vmatpush1.bf16.msra.mxu0 %v2559
        %2605 = vmatprep.subr.bf16.mxu0 %v2556
        %2606 = vmatpush1.bf16.msra.mxu0 %v2555
        %2607 = vmatprep.subr.bf16.mxu0 %v2552
        %2608 = vmatpush1.bf16.msra.mxu0 %v2551
        %2609 = vmatprep.subr.bf16.mxu0 %v2548
        %2610 = vmatpush1.bf16.msra.mxu0 %v2547
        %2611 = vmatprep.subr.bf16.mxu0 %v2544
        %2612 = vmatpush1.bf16.msra.mxu0 %v2543
        %2613 = vmatprep.subr.bf16.mxu0 0
        %2614 = vmatpush2.bf16.msra.mxu0 0
        %2615 = vmatprep.subr.bf16.mxu0 0
        %2616 = vmatpush2.bf16.msra.mxu0 0
        %2617 = vmatprep.subr.bf16.mxu0 0
        %2618 = vmatpush2.bf16.msra.mxu0 0
        %2619 = vmatprep.subr.bf16.mxu0 0
        %2620 = vmatpush2.bf16.msra.mxu0 0
        %2621 = vmatprep.subr.bf16.mxu0 0
        %2622 = vmatpush2.bf16.msra.mxu0 0
        %2623 = vmatprep.subr.bf16.mxu0 0
        %2624 = vmatpush2.bf16.msra.mxu0 0
        %2625 = vmatprep.subr.bf16.mxu0 0
        %2626 = vmatpush2.bf16.msra.mxu0 0
        %2627 = vmatprep.subr.bf16.mxu0 0
        %2628 = vmatpush2.bf16.msra.mxu0 0
        %2629 = vmatprep.mubr.bf16.mxu0 0
        %2630 = vmatmul.mubr.bf16.gmra.mxu0 %v2592
        %v2631 = vpop.f32.mrf.mxu0
        %v2632 = vadd.f32 0.0, %v2631
        %v2633 = vpop.f32.mrf.mxu0
        %v2634 = vadd.f32 0.0, %v2633
        %v2635 = vpop.f32.mrf.mxu0
        %v2636 = vadd.f32 0.0, %v2635
        %v2637 = vpop.f32.mrf.mxu0
        %v2638 = vadd.f32 0.0, %v2637
        %2639 = vmatprep.mubr.bf16.mxu0 0
        %2640 = vmatmul.mubr.bf16.gmra.mxu0 %v2595
        %v2641 = vpop.f32.mrf.mxu0
        %v2642 = vadd.f32 0.0, %v2641
        %v2643 = vpop.f32.mrf.mxu0
        %v2644 = vadd.f32 0.0, %v2643
        %v2645 = vpop.f32.mrf.mxu0
        %v2646 = vadd.f32 0.0, %v2645
        %v2647 = vpop.f32.mrf.mxu0
        %v2648 = vadd.f32 0.0, %v2647
        %2649 = vdwg.mxu0
        %2650 = vmatprep.subr.bf16.mxu0 0
        %2651 = vmatpush1.bf16.msra.mxu0 0
        %2652 = vmatprep.subr.bf16.mxu0 0
        %2653 = vmatpush1.bf16.msra.mxu0 0
        %2654 = vmatprep.subr.bf16.mxu0 %v2566
        %2655 = vmatpush1.bf16.msra.mxu0 %v2565
        %2656 = vmatprep.subr.bf16.mxu0 %v2562
        %2657 = vmatpush1.bf16.msra.mxu0 %v2561
        %2658 = vmatprep.subr.bf16.mxu0 %v2558
        %2659 = vmatpush1.bf16.msra.mxu0 %v2557
        %2660 = vmatprep.subr.bf16.mxu0 %v2554
        %2661 = vmatpush1.bf16.msra.mxu0 %v2553
        %2662 = vmatprep.subr.bf16.mxu0 %v2550
        %2663 = vmatpush1.bf16.msra.mxu0 %v2549
        %2664 = vmatprep.subr.bf16.mxu0 %v2546
        %2665 = vmatpush1.bf16.msra.mxu0 %v2545
        %2666 = vmatprep.subr.bf16.mxu0 0
        %2667 = vmatpush2.bf16.msra.mxu0 0
        %2668 = vmatprep.subr.bf16.mxu0 0
        %2669 = vmatpush2.bf16.msra.mxu0 0
        %2670 = vmatprep.subr.bf16.mxu0 0
        %2671 = vmatpush2.bf16.msra.mxu0 0
        %2672 = vmatprep.subr.bf16.mxu0 0
        %2673 = vmatpush2.bf16.msra.mxu0 0
        %2674 = vmatprep.subr.bf16.mxu0 0
        %2675 = vmatpush2.bf16.msra.mxu0 0
        %2676 = vmatprep.subr.bf16.mxu0 0
        %2677 = vmatpush2.bf16.msra.mxu0 0
        %2678 = vmatprep.subr.bf16.mxu0 0
        %2679 = vmatpush2.bf16.msra.mxu0 0
        %2680 = vmatprep.subr.bf16.mxu0 0
        %2681 = vmatpush2.bf16.msra.mxu0 0
        %2682 = vmatprep.mubr.bf16.mxu0 0
        %2683 = vmatmul.mubr.bf16.gmra.mxu0 %v2592
        %v2684 = vpop.f32.mrf.mxu0
        %v2685 = vadd.f32 0.0, %v2684
        %v2686 = vpop.f32.mrf.mxu0
        %v2687 = vadd.f32 0.0, %v2686
        %v2688 = vpop.f32.mrf.mxu0
        %v2689 = vadd.f32 0.0, %v2688
        %v2690 = vpop.f32.mrf.mxu0
        %v2691 = vadd.f32 0.0, %v2690
        %2692 = vmatprep.mubr.bf16.mxu0 0
        %2693 = vmatmul.mubr.bf16.gmra.mxu0 %v2595
        %v2694 = vpop.f32.mrf.mxu0
        %v2695 = vadd.f32 0.0, %v2694
        %v2696 = vpop.f32.mrf.mxu0
        %v2697 = vadd.f32 0.0, %v2696
        %v2698 = vpop.f32.mrf.mxu0
        %v2699 = vadd.f32 0.0, %v2698
        %v2700 = vpop.f32.mrf.mxu0
        %v2701 = vadd.f32 0.0, %v2700
        %2702 = vdwg.mxu0
        %v2703 = vadd.f32 %v2416, %v2632
        %v2704 = vadd.f32 %v2417, %v2634
        %v2705 = vadd.f32 %v2418, %v2685
        %v2706 = vadd.f32 %v2419, %v2687
        %v2707 = vadd.f32 %v2420, %v2636
        %v2708 = vadd.f32 %v2421, %v2638
        %v2709 = vadd.f32 %v2422, %v2689
        %v2710 = vadd.f32 %v2423, %v2691
        %v2711 = vadd.f32 %v2424, %v2642
        %v2712 = vadd.f32 %v2425, %v2644
        %v2713 = vadd.f32 %v2426, %v2695
        %v2714 = vadd.f32 %v2427, %v2697
        %v2715 = vadd.f32 %v2428, %v2646
        %v2716 = vadd.f32 %v2429, %v2648
        %v2717 = vadd.f32 %v2430, %v2699
        %v2718 = vadd.f32 %v2431, %v2701
        %v2719 = vld [vmem:[%s2] sm:$0xff]
        %v2720 = vld [vmem:[%s2 + $0x8] sm:$0xff]
        %v2721 = vld [vmem:[%s2 + $0x10] sm:$0xff]
        %v2722 = vld [vmem:[%s2 + $0x18] sm:$0xff]
        %2724 = vset.pattern.permute.xlu0 0
        %2725 = vperm.xlu0 %2724, %v2719
        %v2726 = vpop.permute.xlu0 %2725
        %2729 = vset.pattern.permute.xlu0 0
        %2730 = vperm.xlu0 %2729, %v2720
        %v2731 = vpop.permute.xlu0 %2730
        %2734 = vset.pattern.permute.xlu0 0
        %2735 = vperm.xlu0 %2734, %v2721
        %v2736 = vpop.permute.xlu0 %2735
        %2739 = vset.pattern.permute.xlu0 0
        %2740 = vperm.xlu0 %2739, %v2722
        %v2741 = vpop.permute.xlu0 %2740
        %v2743 = vadd.f32 %v2703, %v2726
        %v2744 = vadd.f32 %v2704, %v2726
        %v2745 = vadd.f32 %v2705, %v2726
        %v2746 = vadd.f32 %v2706, %v2726
        %v2747 = vadd.f32 %v2707, %v2731
        %v2748 = vadd.f32 %v2708, %v2731
        %v2749 = vadd.f32 %v2709, %v2731
        %v2750 = vadd.f32 %v2710, %v2731
        %v2751 = vadd.f32 %v2711, %v2736
        %v2752 = vadd.f32 %v2712, %v2736
        %v2753 = vadd.f32 %v2713, %v2736
        %v2754 = vadd.f32 %v2714, %v2736
        %v2755 = vadd.f32 %v2715, %v2741
        %v2756 = vadd.f32 %v2716, %v2741
        %v2757 = vadd.f32 %v2717, %v2741
        %v2758 = vadd.f32 %v2718, %v2741
        %vm2759 = vcmp.ge.f32.partialorder %v2743, 0.0
        %vm2760 = vcmp.ge.f32.partialorder %v2744, 0.0
        %vm2761 = vcmp.ge.f32.partialorder %v2745, 0.0
        %vm2762 = vcmp.ge.f32.partialorder %v2746, 0.0
        %vm2763 = vcmp.ge.f32.partialorder %v2747, 0.0
        %vm2764 = vcmp.ge.f32.partialorder %v2748, 0.0
        %vm2765 = vcmp.ge.f32.partialorder %v2749, 0.0
        %vm2766 = vcmp.ge.f32.partialorder %v2750, 0.0
        %vm2767 = vcmp.ge.f32.partialorder %v2751, 0.0
        %vm2768 = vcmp.ge.f32.partialorder %v2752, 0.0
        %vm2769 = vcmp.ge.f32.partialorder %v2753, 0.0
        %vm2770 = vcmp.ge.f32.partialorder %v2754, 0.0
        %vm2771 = vcmp.ge.f32.partialorder %v2755, 0.0
        %vm2772 = vcmp.ge.f32.partialorder %v2756, 0.0
        %vm2773 = vcmp.ge.f32.partialorder %v2757, 0.0
        %vm2774 = vcmp.ge.f32.partialorder %v2758, 0.0
        %v2775 = vmul.f32 %v2743, 0.2
        %v2776 = vmul.f32 %v2744, 0.2
        %v2777 = vmul.f32 %v2745, 0.2
        %v2778 = vmul.f32 %v2746, 0.2
        %v2779 = vmul.f32 %v2747, 0.2
        %v2780 = vmul.f32 %v2748, 0.2
        %v2781 = vmul.f32 %v2749, 0.2
        %v2782 = vmul.f32 %v2750, 0.2
        %v2783 = vmul.f32 %v2751, 0.2
        %v2784 = vmul.f32 %v2752, 0.2
        %v2785 = vmul.f32 %v2753, 0.2
        %v2786 = vmul.f32 %v2754, 0.2
        %v2787 = vmul.f32 %v2755, 0.2
        %v2788 = vmul.f32 %v2756, 0.2
        %v2789 = vmul.f32 %v2757, 0.2
        %v2790 = vmul.f32 %v2758, 0.2
        %v2791 = vsel %vm2759, %v2743, %v2775
        %v2792 = vsel %vm2760, %v2744, %v2776
        %v2793 = vsel %vm2761, %v2745, %v2777
        %v2794 = vsel %vm2762, %v2746, %v2778
        %v2795 = vsel %vm2763, %v2747, %v2779
        %v2796 = vsel %vm2764, %v2748, %v2780
        %v2797 = vsel %vm2765, %v2749, %v2781
        %v2798 = vsel %vm2766, %v2750, %v2782
        %v2799 = vsel %vm2767, %v2751, %v2783
        %v2800 = vsel %vm2768, %v2752, %v2784
        %v2801 = vsel %vm2769, %v2753, %v2785
        %v2802 = vsel %vm2770, %v2754, %v2786
        %v2803 = vsel %vm2771, %v2755, %v2787
        %v2804 = vsel %vm2772, %v2756, %v2788
        %v2805 = vsel %vm2773, %v2757, %v2789
        %v2806 = vsel %vm2774, %v2758, %v2790
        %v2807 = vpack.c.bf16 %v2795, %v2791
        %v2808 = vpack.c.bf16 %v2796, %v2792
        %v2809 = vpack.c.bf16 %v2797, %v2793
        %v2810 = vpack.c.bf16 %v2798, %v2794
        %v2811 = vpack.c.bf16 %v2803, %v2799
        %v2812 = vpack.c.bf16 %v2804, %v2800
        %v2813 = vpack.c.bf16 %v2805, %v2801
        %v2814 = vpack.c.bf16 %v2806, %v2802
        %v2823 = vunpack.c.l.b16 %v2807
        %v2824 = vunpack.c.l.b16 %v2808
        %v2825 = vunpack.c.l.b16 %v2809
        %v2826 = vunpack.c.l.b16 %v2810
        %v2827 = vunpack.c.h.b16 %v2807
        %v2828 = vunpack.c.h.b16 %v2808
        %v2829 = vunpack.c.h.b16 %v2809
        %v2830 = vunpack.c.h.b16 %v2810
        %v2831 = vunpack.c.l.b16 %v2811
        %v2832 = vunpack.c.l.b16 %v2812
        %v2833 = vunpack.c.l.b16 %v2813
        %v2834 = vunpack.c.l.b16 %v2814
        %v2835 = vunpack.c.h.b16 %v2811
        %v2836 = vunpack.c.h.b16 %v2812
        %v2837 = vunpack.c.h.b16 %v2813
        %v2838 = vunpack.c.h.b16 %v2814
        %v2839 = vpack.c.b16 %v2824, %v2823
        %v2840 = vpack.c.b16 %v2826, %v2825
        %v2841 = vpack.c.b16 %v2828, %v2827
        %v2842 = vpack.c.b16 %v2830, %v2829
        %v2843 = vpack.c.b16 %v2832, %v2831
        %v2844 = vpack.c.b16 %v2834, %v2833
        %v2845 = vpack.c.b16 %v2836, %v2835
        %v2846 = vpack.c.b16 %v2838, %v2837
        %2855 = vst [vmem:[%s159] sm:$0xff] %v2839
        %2856 = vst [vmem:[%s159 + $0x8] sm:$0xff] %v2840
        %2857 = vst [vmem:[%s159 + $0x10] sm:$0xff] %v2841
        %2858 = vst [vmem:[%s159 + $0x18] sm:$0xff] %v2842
        %2859 = vst [vmem:[%s159 + $0x20] sm:$0xff] %v2843
        %2860 = vst [vmem:[%s159 + $0x28] sm:$0xff] %v2844
        %2861 = vst [vmem:[%s159 + $0x30] sm:$0xff] %v2845
        %2862 = vst [vmem:[%s159 + $0x38] sm:$0xff] %v2846
        %s2863 = sand.u32 %s90, 1
        %s2864 = sand.u32 %s90, 1
        %s2865 = smul.addr %s2864, 64
        %s2866 = scalar_lea.vmem [#allocation2], %s2865
        // Predicated region
        $region33: #{a_call__.9} parent=31 // pred_check
          %p2867 = pneg %p100
        $region34: #{a_call__.9} parent=31 // pred_check_branch
          %2869 = sbr.rel (%p2867) target = $region36
        $region35: #{a_call__.9} parent=31 // pred_region
          %s2870 = smul.u32 4, %s14
          %s2871 = smul.addr %s2870, 4
          %s2872 = scalar_lea.vmem %s3, %s2871
          // Predicated region
          $region37: #{a_call__.9} parent=35 // pred_check
            _
          $region38: #{a_call__.9} parent=35 // pred_check_branch
            %2874 = sbr.rel (0) target = $region40
          $region39: #{a_call__.9} parent=35 // pred_region
            // Predicated region
            $region41: #{a_call__.9} parent=39 // pred_check
              _
            $region42: #{a_call__.9} parent=39 // pred_check_branch
              %2876 = sbr.rel (0) target = $region44
            $region43: #{a_call__.9} parent=39 // pred_region
              loop: start=0, step=1, limit=1
              $region45: #{a_call__.9} parent=43 // loop_pre_header
                _
              $region46: #{a_call__.9} parent=43 // loop_header
                %s2878 = sphi 0, %s2882
                %p2879 = scmp.ge.s32.totalorder %s2878, 1
                %s2883 = sphi %s2866, %s2866
                %s2884 = sphi %s2872, %s2872
              $region47: #{a_call__.9} parent=43 // loop_header_branch
                %2881 = sbr.rel (%p2879) target = $region51
              $region48: #{a_call__.9} parent=43 // loop_body
                %v2885 = vld [vmem:[%s2883] sm:$0xff]
                %2886 = vst [vmem:[%s2884] sm:$0xff] %v2885
                %v2887 = vld [vmem:[%s2883 + $0x8] sm:$0xff]
                %2888 = vst [vmem:[%s2884 + $0x8] sm:$0xff] %v2887
                %v2889 = vld [vmem:[%s2883 + $0x10] sm:$0xff]
                %2890 = vst [vmem:[%s2884 + $0x20] sm:$0xff] %v2889
                %v2891 = vld [vmem:[%s2883 + $0x18] sm:$0xff]
                %2892 = vst [vmem:[%s2884 + $0x28] sm:$0xff] %v2891
                %v2893 = vld [vmem:[%s2883 + $0x20] sm:$0xff]
                %2894 = vst [vmem:[%s2884 + $0x40] sm:$0xff] %v2893
                %v2895 = vld [vmem:[%s2883 + $0x28] sm:$0xff]
                %2896 = vst [vmem:[%s2884 + $0x48] sm:$0xff] %v2895
                %v2897 = vld [vmem:[%s2883 + $0x30] sm:$0xff]
                %2898 = vst [vmem:[%s2884 + $0x60] sm:$0xff] %v2897
                %v2899 = vld [vmem:[%s2883 + $0x38] sm:$0xff]
                %2900 = vst [vmem:[%s2884 + $0x68] sm:$0xff] %v2899
              $region49: #{a_call__.9} parent=43 // loop_footer
                %s2882 = sadd.s32 1, %s2878
              $region50: #{a_call__.9} parent=43 // loop_footer_branch
                %2877 = sbr.rel target = $region46
              $region51: #{a_call__.9} parent=43 // loop_exit
                _
            $region44: #{a_call__.9} parent=39 // pred_fallthru
              _
            // Predicated region
            $region52: #{a_call__.9} parent=39 // pred_check
              _
            $region53: #{a_call__.9} parent=39 // pred_check_branch
              %2902 = sbr.rel target = $region55
            $region54: #{a_call__.9} parent=39 // pred_region
              _
            $region55: #{a_call__.9} parent=39 // pred_fallthru
              _
          $region40: #{a_call__.9} parent=35 // pred_fallthru
            _
          %2903 = vnop
        $region36: #{a_call__.9} parent=31 // pred_fallthru
          _
      $region32: #{a_call__.9} parent=5 // pred_fallthru
        _
      %p2904 = scmp.le.s32.totalorder 2, %s9
      // Predicated region
      $region56: #{a_call__.9} parent=5 // pred_check
        %p2905 = pneg %p2904
      $region57: #{a_call__.9} parent=5 // pred_check_branch
        %2907 = sbr.rel (%p2905) target = $region59
      $region58: #{a_call__.9} parent=5 // pred_region
        %s2908 = ssub.s32 %s9, 2
        // Predicated region
        $region60: #{a_call__.9} parent=58 // pred_check
          %p2909 = pneg %p106
        $region61: #{a_call__.9} parent=58 // pred_check_branch
          %2911 = sbr.rel (%p2909) target = $region63
        $region62: #{a_call__.9} parent=58 // pred_region
          %s2912 = sand.u32 %s91, 1
          %s2913 = sand.u32 %s91, 1
          %s2914 = smul.addr %s2913, 64
          %s2915 = scalar_lea.vmem [#allocation2], %s2914
        $region63: #{a_call__.9} parent=58 // pred_fallthru
          _
      $region59: #{a_call__.9} parent=5 // pred_fallthru
        _
    $region6: #{a_call__.9} parent=1 // loop_footer
      %s13 = sadd.s32 1, %s9
    $region7: #{a_call__.9} parent=1 // loop_footer_branch
      %8 = sbr.rel target = $region3
    $region8: #{a_call__.9} parent=1 // loop_exit
      _

// kernel: a_call__.10
$region0: #{a_call__.10}
  #allocation0 [shape = 'u32[]', space=smem, size = 0x4, offset = 0x4, fixed_abs, tag = 'smem constant byte address 0x4 - core index']
  #allocation1 [shape = 'u32[144,128]{1,0:T(1,128)}', space=vmem, size = 0x12000, scoped, tag = 'internal scratch']
  %s0 = inlined_call_operand.vmem [shape: bf16[2,2,96,768], index: 0, kind: input, shape index: {}]
  %s1 = inlined_call_operand.vmem [shape: bf16[9,32,96], index: 1, kind: input, shape index: {}]
  %s2 = inlined_call_operand.vmem [shape: f32[32,1], index: 2, kind: input, shape index: {}]
  %s3 = inlined_call_operand.vmem [shape: bf16[32,512], index: 3, kind: output, shape index: {}]
  %s4 = sld [smem:[#allocation0]]
  $region79: #{a_call__.10} parent=0
    _
  %s6 = ssub.s32 1, %s4
  %s7 = scalar_select 0, %s6, %s4
  $region1: #{a_call__.10} parent=0
    #allocation2 [shape = 'u8[32768]{0}', space=vmem, size = 0x8000, scoped, tag = 'output window, operand 0']
    loop: start=0, step=1, limit=4
    $region2: #{a_call__.10} parent=1 // loop_pre_header
      _
    $region3: #{a_call__.10} parent=1 // loop_header
      %s9 = sphi 0, %s13
      %p10 = scmp.ge.s32.totalorder %s9, 4
      %s19 = sphi 0, %s21
      %s22 = sphi 0, %s19
      %s23 = sphi 0, %s22
      %s39 = sphi 0, %s23
      %s43 = sphi 0, %s43
      %s45 = sphi 0, %s43
      %s46 = sphi 0, %s45
      %s60 = sphi 0, %s46
      %s64 = sphi 0, %s64
      %s66 = sphi 0, %s64
      %s67 = sphi 0, %s66
      %s81 = sphi 0, %s67
      %s87 = sphi 0, %s89
      %s90 = sphi 0, %s87
      %s91 = sphi 0, %s90
      %s107 = sphi 0, %s91
    $region4: #{a_call__.10} parent=1 // loop_header_branch
      %12 = sbr.rel (%p10) target = $region8
    $region5: #{a_call__.10} parent=1 // loop_body
      %s14 = ssub.s32 %s9, 1
      %s15 = ssub.s32 %s9, 2
      %s16 = sadd.s32 %s9, 1
      %s17 = ssub.s32 %s9, %s16
      %p18 = scmp.eq.s32.totalorder %s17, 0
      %s20 = sadd.s32 %s19, 1
      %s21 = scalar_select %p18, %s19, %s20
      %p24 = pneg %p18
      %p25 = scmp.eq.s32.totalorder %s9, 1
      %p26 = por %p24, %p25
      %p27 = scmp.ne.s32.totalorder %s19, %s22
      %p28 = scmp.eq.s32.totalorder %s9, 0
      %p29 = por %p27, %p28
      %p30 = scmp.ne.s32.totalorder %s19, %s22
      %p31 = scmp.eq.s32.totalorder %s14, 1
      %p32 = por %p30, %p31
      %p33 = scmp.ne.s32.totalorder %s22, %s23
      %p34 = scmp.eq.s32.totalorder %s14, 0
      %p35 = por %p33, %p34
      %p36 = scmp.ne.s32.totalorder %s22, %s23
      %p37 = scmp.eq.s32.totalorder %s15, 1
      %p38 = por %p36, %p37
      %p40 = scmp.ne.s32.totalorder %s23, %s39
      %p41 = scmp.eq.s32.totalorder %s15, 0
      %p42 = por %p40, %p41
      %s44 = sadd.s32 %s43, 1
      %p47 = scmp.eq.s32.totalorder %s9, 1
      %p48 = scmp.ne.s32.totalorder %s43, %s45
      %p49 = scmp.eq.s32.totalorder %s9, 0
      %p50 = por %p48, %p49
      %p51 = scmp.ne.s32.totalorder %s43, %s45
      %p52 = scmp.eq.s32.totalorder %s14, 1
      %p53 = por %p51, %p52
      %p54 = scmp.ne.s32.totalorder %s45, %s46
      %p55 = scmp.eq.s32.totalorder %s14, 0
      %p56 = por %p54, %p55
      %p57 = scmp.ne.s32.totalorder %s45, %s46
      %p58 = scmp.eq.s32.totalorder %s15, 1
      %p59 = por %p57, %p58
      %p61 = scmp.ne.s32.totalorder %s46, %s60
      %p62 = scmp.eq.s32.totalorder %s15, 0
      %p63 = por %p61, %p62
      %s65 = sadd.s32 %s64, 1
      %p68 = scmp.eq.s32.totalorder %s9, 1
      %p69 = scmp.ne.s32.totalorder %s64, %s66
      %p70 = scmp.eq.s32.totalorder %s9, 0
      %p71 = por %p69, %p70
      %p72 = scmp.ne.s32.totalorder %s64, %s66
      %p73 = scmp.eq.s32.totalorder %s14, 1
      %p74 = por %p72, %p73
      %p75 = scmp.ne.s32.totalorder %s66, %s67
      %p76 = scmp.eq.s32.totalorder %s14, 0
      %p77 = por %p75, %p76
      %p78 = scmp.ne.s32.totalorder %s66, %s67
      %p79 = scmp.eq.s32.totalorder %s15, 1
      %p80 = por %p78, %p79
      %p82 = scmp.ne.s32.totalorder %s67, %s81
      %p83 = scmp.eq.s32.totalorder %s15, 0
      %p84 = por %p82, %p83
      %s85 = ssub.s32 %s9, %s16
      %p86 = scmp.eq.s32.totalorder %s85, 0
      %s88 = sadd.s32 %s87, 1
      %s89 = scalar_select %p86, %s87, %s88
      %p92 = pneg %p86
      %p93 = scmp.eq.s32.totalorder %s9, 1
      %p94 = por %p92, %p93
      %p95 = scmp.ne.s32.totalorder %s87, %s90
      %p96 = scmp.eq.s32.totalorder %s9, 0
      %p97 = por %p95, %p96
      %p98 = scmp.ne.s32.totalorder %s87, %s90
      %p99 = scmp.eq.s32.totalorder %s14, 1
      %p100 = por %p98, %p99
      %p101 = scmp.ne.s32.totalorder %s90, %s91
      %p102 = scmp.eq.s32.totalorder %s14, 0
      %p103 = por %p101, %p102
      %p104 = scmp.ne.s32.totalorder %s90, %s91
      %p105 = scmp.eq.s32.totalorder %s15, 1
      %p106 = por %p104, %p105
      %p108 = scmp.ne.s32.totalorder %s91, %s107
      %p109 = scmp.eq.s32.totalorder %s15, 0
      %p110 = por %p108, %p109
      %p111 = scmp.le.s32.totalorder 1, %s9
      %p112 = scmp.lt.s32.totalorder %s9, 3
      %p113 = pnand %p111, %p112
      %p114 = pneg %p113
      // Predicated region
      $region9: #{a_call__.10} parent=5 // pred_check
        _
      $region10: #{a_call__.10} parent=5 // pred_check_branch
        %116 = sbr.rel (%p113) target = $region12
      $region11: #{a_call__.10} parent=5 // pred_region
        %s117 = ssub.s32 %s9, 1
        // Predicated region
        $region13: #{a_call__.10} parent=11 // pred_check
          %p118 = pneg %p56
        $region14: #{a_call__.10} parent=11 // pred_check_branch
          %120 = sbr.rel (%p118) target = $region16
        $region15: #{a_call__.10} parent=11 // pred_region
          _
        $region16: #{a_call__.10} parent=11 // pred_fallthru
          _
        // Predicated region
        $region17: #{a_call__.10} parent=11 // pred_check
          %p121 = pneg %p77
        $region18: #{a_call__.10} parent=11 // pred_check_branch
          %123 = sbr.rel (%p121) target = $region20
        $region19: #{a_call__.10} parent=11 // pred_region
          _
        $region20: #{a_call__.10} parent=11 // pred_fallthru
          _
      $region12: #{a_call__.10} parent=5 // pred_fallthru
        _
      %p124 = scmp.lt.s32.totalorder %s9, 2
      // Predicated region
      $region21: #{a_call__.10} parent=5 // pred_check
        %p125 = pneg %p124
      $region22: #{a_call__.10} parent=5 // pred_check_branch
        %127 = sbr.rel (%p125) target = $region24
      $region23: #{a_call__.10} parent=5 // pred_region
        // Predicated region
        $region25: #{a_call__.10} parent=23 // pred_check
          %p128 = pneg %p29
        $region26: #{a_call__.10} parent=23 // pred_check_branch
          %130 = sbr.rel (%p128) target = $region28
        $region27: #{a_call__.10} parent=23 // pred_region
          %p131 = scmp.lt.s32.totalorder %s9, 1
          %s132 = scalar_select %p131, %s9, 1
          %s133 = smul.addr %s132, 144
          %s134 = smul.addr %s133, 4
          %s135 = scalar_lea.vmem %s0, %s134
        $region28: #{a_call__.10} parent=23 // pred_fallthru
          _
      $region24: #{a_call__.10} parent=5 // pred_fallthru
        _
      %p136 = scmp.le.s32.totalorder 1, %s9
      %p137 = scmp.lt.s32.totalorder %s9, 3
      %p138 = pnand %p136, %p137
      %p139 = pneg %p138
      // Predicated region
      $region29: #{a_call__.10} parent=5 // pred_check
        _
      $region30: #{a_call__.10} parent=5 // pred_check_branch
        %141 = sbr.rel (%p138) target = $region32
      $region31: #{a_call__.10} parent=5 // pred_region
        %s142 = ssub.s32 %s9, 1
        %p143 = scmp.lt.s32.totalorder %s14, 1
        %s144 = scalar_select %p143, %s14, 1
        %s145 = smul.addr %s144, 144
        %s146 = smul.addr %s145, 4
        %s147 = scalar_lea.vmem %s0, %s146
        %p148 = pneg %p35
        %p149 = pneg %p32
        %p150 = pneg %p56
        %p151 = pneg %p53
        %p152 = pneg %p77
        %p153 = pneg %p74
        %p154 = pneg %p103
        %p155 = pneg %p100
        %s156 = sand.u32 %s90, 1
        %s157 = sand.u32 %s90, 1
        %s158 = smul.addr %s157, 32
        %s159 = scalar_lea.vmem [#allocation2], %s158
        %p160 = scmp.lt.s32.totalorder %s14, 1
        %s161 = scalar_select %p160, %s14, 1
        %s162 = smul.addr %s161, 144
        %s163 = smul.addr %s162, 4
        %s164 = scalar_lea.vmem %s0, %s163
        %s165 = smul.u32 2, %s14
        %v167 = vld [vmem:[%s164] sm:$0xff]
        %v168 = vld [vmem:[%s164 + $0x18] sm:$0xff]
        %v169 = vld [vmem:[%s164 + $0x30] sm:$0xff]
        %v170 = vld [vmem:[%s164 + $0x48] sm:$0xff]
        %v171 = vld [vmem:[%s164 + $0x60] sm:$0xff]
        %v172 = vld [vmem:[%s164 + $0x78] sm:$0xff]
        %v173 = vld [vmem:[%s164 + $0x90] sm:$0xff]
        %v174 = vld [vmem:[%s164 + $0xa8] sm:$0xff]
        %v175 = vld [vmem:[%s164 + $0xc0] sm:$0xff]
        %v176 = vld [vmem:[%s164 + $0xd8] sm:$0xff]
        %v177 = vld [vmem:[%s164 + $0xf0] sm:$0xff]
        %v178 = vld [vmem:[%s164 + $0x108] sm:$0xff]
        %v179 = vld [vmem:[%s1] sm:$0xf]
        %v180 = vld [vmem:[%s1 + $0x4] sm:$0xf]
        %v181 = vld [vmem:[%s1 + $0x8] sm:$0xf]
        %v182 = vld [vmem:[%s1 + $0xc] sm:$0xf]
        %s183 = scalar_lea.vmem %s164, 288
        %v184 = vld [vmem:[%s183] sm:$0xff]
        %v185 = vld [vmem:[%s183 + $0x18] sm:$0xff]
        %v186 = vld [vmem:[%s183 + $0x30] sm:$0xff]
        %v187 = vld [vmem:[%s183 + $0x48] sm:$0xff]
        %v188 = vld [vmem:[%s183 + $0x60] sm:$0xff]
        %v189 = vld [vmem:[%s183 + $0x78] sm:$0xff]
        %v190 = vld [vmem:[%s183 + $0x90] sm:$0xff]
        %v191 = vld [vmem:[%s183 + $0xa8] sm:$0xff]
        %v192 = vld [vmem:[%s183 + $0xc0] sm:$0xff]
        %v193 = vld [vmem:[%s183 + $0xd8] sm:$0xff]
        %v194 = vld [vmem:[%s183 + $0xf0] sm:$0xff]
        %v195 = vld [vmem:[%s183 + $0x108] sm:$0xff]
        %s196 = scalar_lea.vmem %s1, 16
        %v197 = vld [vmem:[%s196] sm:$0xf]
        %v198 = vld [vmem:[%s196 + $0x4] sm:$0xf]
        %v199 = vld [vmem:[%s196 + $0x8] sm:$0xf]
        %v200 = vld [vmem:[%s196 + $0xc] sm:$0xf]
        %v205 = vunpack.c.l.b16 %v197
        %v206 = vunpack.c.l.b16 %v198
        %v207 = vunpack.c.l.b16 %v199
        %v208 = vunpack.c.l.b16 %v200
        %v209 = vpack.c.b16 %v206, %v205
        %v210 = vpack.c.b16 %v208, %v207
        %v223 = vunpack.c.l.b16 %v184
        %v224 = vunpack.c.h.b16 %v184
        %v225 = vunpack.c.l.b16 %v185
        %v226 = vunpack.c.h.b16 %v185
        %v227 = vunpack.c.l.b16 %v186
        %v228 = vunpack.c.h.b16 %v186
        %v229 = vunpack.c.l.b16 %v187
        %v230 = vunpack.c.h.b16 %v187
        %v231 = vunpack.c.l.b16 %v188
        %v232 = vunpack.c.h.b16 %v188
        %v233 = vunpack.c.l.b16 %v189
        %v234 = vunpack.c.h.b16 %v189
        %v235 = vunpack.c.l.b16 %v190
        %v236 = vunpack.c.h.b16 %v190
        %v237 = vunpack.c.l.b16 %v191
        %v238 = vunpack.c.h.b16 %v191
        %v239 = vunpack.c.l.b16 %v192
        %v240 = vunpack.c.h.b16 %v192
        %v241 = vunpack.c.l.b16 %v193
        %v242 = vunpack.c.h.b16 %v193
        %v243 = vunpack.c.l.b16 %v194
        %v244 = vunpack.c.h.b16 %v194
        %v245 = vunpack.c.l.b16 %v195
        %v246 = vunpack.c.h.b16 %v195
        %v247 = vpack.c.b16 %v225, %v223
        %v248 = vpack.c.b16 %v226, %v224
        %v249 = vpack.c.b16 %v229, %v227
        %v250 = vpack.c.b16 %v230, %v228
        %v251 = vpack.c.b16 %v233, %v231
        %v252 = vpack.c.b16 %v234, %v232
        %v253 = vpack.c.b16 %v237, %v235
        %v254 = vpack.c.b16 %v238, %v236
        %v255 = vpack.c.b16 %v241, %v239
        %v256 = vpack.c.b16 %v242, %v240
        %v257 = vpack.c.b16 %v245, %v243
        %v258 = vpack.c.b16 %v246, %v244
        %vm271 = vcmask 785408
        %v273 = vsel %vm271, %v209, 0
        %v276 = vsel %vm271, %v210, 0
        %278 = vmatprep.subr.bf16.mxu0 0
        %279 = vmatpush1.bf16.msra.mxu0 0
        %280 = vmatprep.subr.bf16.mxu0 0
        %281 = vmatpush1.bf16.msra.mxu0 0
        %282 = vmatprep.subr.bf16.mxu0 %v258
        %283 = vmatpush1.bf16.msra.mxu0 %v257
        %284 = vmatprep.subr.bf16.mxu0 %v256
        %285 = vmatpush1.bf16.msra.mxu0 %v255
        %286 = vmatprep.subr.bf16.mxu0 %v254
        %287 = vmatpush1.bf16.msra.mxu0 %v253
        %288 = vmatprep.subr.bf16.mxu0 %v252
        %289 = vmatpush1.bf16.msra.mxu0 %v251
        %290 = vmatprep.subr.bf16.mxu0 %v250
        %291 = vmatpush1.bf16.msra.mxu0 %v249
        %292 = vmatprep.subr.bf16.mxu0 %v248
        %293 = vmatpush1.bf16.msra.mxu0 %v247
        %294 = vmatprep.subr.bf16.mxu0 0
        %295 = vmatpush2.bf16.msra.mxu0 0
        %296 = vmatprep.subr.bf16.mxu0 0
        %297 = vmatpush2.bf16.msra.mxu0 0
        %298 = vmatprep.subr.bf16.mxu0 0
        %299 = vmatpush2.bf16.msra.mxu0 0
        %300 = vmatprep.subr.bf16.mxu0 0
        %301 = vmatpush2.bf16.msra.mxu0 0
        %302 = vmatprep.subr.bf16.mxu0 0
        %303 = vmatpush2.bf16.msra.mxu0 0
        %304 = vmatprep.subr.bf16.mxu0 0
        %305 = vmatpush2.bf16.msra.mxu0 0
        %306 = vmatprep.subr.bf16.mxu0 0
        %307 = vmatpush2.bf16.msra.mxu0 0
        %308 = vmatprep.subr.bf16.mxu0 0
        %309 = vmatpush2.bf16.msra.mxu0 0
        %310 = vmatprep.mubr.bf16.mxu0 0
        %311 = vmatmul.mubr.bf16.gmra.mxu0 %v273
        %v312 = vpop.f32.mrf.mxu0
        %v313 = vadd.f32 0.0, %v312
        %v314 = vpop.f32.mrf.mxu0
        %v315 = vadd.f32 0.0, %v314
        %v316 = vpop.f32.mrf.mxu0
        %v317 = vadd.f32 0.0, %v316
        %v318 = vpop.f32.mrf.mxu0
        %v319 = vadd.f32 0.0, %v318
        %320 = vmatprep.mubr.bf16.mxu0 0
        %321 = vmatmul.mubr.bf16.gmra.mxu0 %v276
        %v322 = vpop.f32.mrf.mxu0
        %v323 = vadd.f32 0.0, %v322
        %v324 = vpop.f32.mrf.mxu0
        %v325 = vadd.f32 0.0, %v324
        %v326 = vpop.f32.mrf.mxu0
        %v327 = vadd.f32 0.0, %v326
        %v328 = vpop.f32.mrf.mxu0
        %v329 = vadd.f32 0.0, %v328
        %330 = vdwg.mxu0
        %v335 = vunpack.c.l.b16 %v179
        %v336 = vunpack.c.l.b16 %v180
        %v337 = vunpack.c.l.b16 %v181
        %v338 = vunpack.c.l.b16 %v182
        %v339 = vpack.c.b16 %v336, %v335
        %v340 = vpack.c.b16 %v338, %v337
        %v353 = vunpack.c.l.b16 %v167
        %v354 = vunpack.c.h.b16 %v167
        %v355 = vunpack.c.l.b16 %v168
        %v356 = vunpack.c.h.b16 %v168
        %v357 = vunpack.c.l.b16 %v169
        %v358 = vunpack.c.h.b16 %v169
        %v359 = vunpack.c.l.b16 %v170
        %v360 = vunpack.c.h.b16 %v170
        %v361 = vunpack.c.l.b16 %v171
        %v362 = vunpack.c.h.b16 %v171
        %v363 = vunpack.c.l.b16 %v172
        %v364 = vunpack.c.h.b16 %v172
        %v365 = vunpack.c.l.b16 %v173
        %v366 = vunpack.c.h.b16 %v173
        %v367 = vunpack.c.l.b16 %v174
        %v368 = vunpack.c.h.b16 %v174
        %v369 = vunpack.c.l.b16 %v175
        %v370 = vunpack.c.h.b16 %v175
        %v371 = vunpack.c.l.b16 %v176
        %v372 = vunpack.c.h.b16 %v176
        %v373 = vunpack.c.l.b16 %v177
        %v374 = vunpack.c.h.b16 %v177
        %v375 = vunpack.c.l.b16 %v178
        %v376 = vunpack.c.h.b16 %v178
        %v377 = vpack.c.b16 %v355, %v353
        %v378 = vpack.c.b16 %v356, %v354
        %v379 = vpack.c.b16 %v359, %v357
        %v380 = vpack.c.b16 %v360, %v358
        %v381 = vpack.c.b16 %v363, %v361
        %v382 = vpack.c.b16 %v364, %v362
        %v383 = vpack.c.b16 %v367, %v365
        %v384 = vpack.c.b16 %v368, %v366
        %v385 = vpack.c.b16 %v371, %v369
        %v386 = vpack.c.b16 %v372, %v370
        %v387 = vpack.c.b16 %v375, %v373
        %v388 = vpack.c.b16 %v376, %v374
        %v402 = vsel %vm271, %v339, 0
        %v405 = vsel %vm271, %v340, 0
        %407 = vmatprep.subr.bf16.mxu0 0
        %408 = vmatpush1.bf16.msra.mxu0 0
        %409 = vmatprep.subr.bf16.mxu0 0
        %410 = vmatpush1.bf16.msra.mxu0 0
        %411 = vmatprep.subr.bf16.mxu0 %v388
        %412 = vmatpush1.bf16.msra.mxu0 %v387
        %413 = vmatprep.subr.bf16.mxu0 %v386
        %414 = vmatpush1.bf16.msra.mxu0 %v385
        %415 = vmatprep.subr.bf16.mxu0 %v384
        %416 = vmatpush1.bf16.msra.mxu0 %v383
        %417 = vmatprep.subr.bf16.mxu0 %v382
        %418 = vmatpush1.bf16.msra.mxu0 %v381
        %419 = vmatprep.subr.bf16.mxu0 %v380
        %420 = vmatpush1.bf16.msra.mxu0 %v379
        %421 = vmatprep.subr.bf16.mxu0 %v378
        %422 = vmatpush1.bf16.msra.mxu0 %v377
        %423 = vmatprep.subr.bf16.mxu0 0
        %424 = vmatpush2.bf16.msra.mxu0 0
        %425 = vmatprep.subr.bf16.mxu0 0
        %426 = vmatpush2.bf16.msra.mxu0 0
        %427 = vmatprep.subr.bf16.mxu0 0
        %428 = vmatpush2.bf16.msra.mxu0 0
        %429 = vmatprep.subr.bf16.mxu0 0
        %430 = vmatpush2.bf16.msra.mxu0 0
        %431 = vmatprep.subr.bf16.mxu0 0
        %432 = vmatpush2.bf16.msra.mxu0 0
        %433 = vmatprep.subr.bf16.mxu0 0
        %434 = vmatpush2.bf16.msra.mxu0 0
        %435 = vmatprep.subr.bf16.mxu0 0
        %436 = vmatpush2.bf16.msra.mxu0 0
        %437 = vmatprep.subr.bf16.mxu0 0
        %438 = vmatpush2.bf16.msra.mxu0 0
        %439 = vmatprep.mubr.bf16.mxu0 0
        %440 = vmatmul.mubr.bf16.gmra.mxu0 %v402
        %v441 = vpop.f32.mrf.mxu0
        %v442 = vadd.f32 %v313, %v441
        %v443 = vpop.f32.mrf.mxu0
        %v444 = vadd.f32 %v315, %v443
        %v445 = vpop.f32.mrf.mxu0
        %v446 = vadd.f32 %v317, %v445
        %v447 = vpop.f32.mrf.mxu0
        %v448 = vadd.f32 %v319, %v447
        %449 = vmatprep.mubr.bf16.mxu0 0
        %450 = vmatmul.mubr.bf16.gmra.mxu0 %v405
        %v451 = vpop.f32.mrf.mxu0
        %v452 = vadd.f32 %v323, %v451
        %v453 = vpop.f32.mrf.mxu0
        %v454 = vadd.f32 %v325, %v453
        %v455 = vpop.f32.mrf.mxu0
        %v456 = vadd.f32 %v327, %v455
        %v457 = vpop.f32.mrf.mxu0
        %v458 = vadd.f32 %v329, %v457
        %459 = vdwg.mxu0
        %v460 = vld [vmem:[%s164 + $0x4] sm:$0xff]
        %v461 = vld [vmem:[%s164 + $0x1c] sm:$0xff]
        %v462 = vld [vmem:[%s164 + $0x34] sm:$0xff]
        %v463 = vld [vmem:[%s164 + $0x4c] sm:$0xff]
        %v464 = vld [vmem:[%s164 + $0x64] sm:$0xff]
        %v465 = vld [vmem:[%s164 + $0x7c] sm:$0xff]
        %v466 = vld [vmem:[%s164 + $0x94] sm:$0xff]
        %v467 = vld [vmem:[%s164 + $0xac] sm:$0xff]
        %v468 = vld [vmem:[%s164 + $0xc4] sm:$0xff]
        %v469 = vld [vmem:[%s164 + $0xdc] sm:$0xff]
        %v470 = vld [vmem:[%s164 + $0xf4] sm:$0xff]
        %v471 = vld [vmem:[%s164 + $0x10c] sm:$0xff]
        %s472 = scalar_lea.vmem %s1, 32
        %v473 = vld [vmem:[%s472] sm:$0xf]
        %v474 = vld [vmem:[%s472 + $0x4] sm:$0xf]
        %v475 = vld [vmem:[%s472 + $0x8] sm:$0xf]
        %v476 = vld [vmem:[%s472 + $0xc] sm:$0xf]
        %v481 = vunpack.c.l.b16 %v473
        %v482 = vunpack.c.l.b16 %v474
        %v483 = vunpack.c.l.b16 %v475
        %v484 = vunpack.c.l.b16 %v476
        %v485 = vpack.c.b16 %v482, %v481
        %v486 = vpack.c.b16 %v484, %v483
        %v499 = vunpack.c.l.b16 %v460
        %v500 = vunpack.c.h.b16 %v460
        %v501 = vunpack.c.l.b16 %v461
        %v502 = vunpack.c.h.b16 %v461
        %v503 = vunpack.c.l.b16 %v462
        %v504 = vunpack.c.h.b16 %v462
        %v505 = vunpack.c.l.b16 %v463
        %v506 = vunpack.c.h.b16 %v463
        %v507 = vunpack.c.l.b16 %v464
        %v508 = vunpack.c.h.b16 %v464
        %v509 = vunpack.c.l.b16 %v465
        %v510 = vunpack.c.h.b16 %v465
        %v511 = vunpack.c.l.b16 %v466
        %v512 = vunpack.c.h.b16 %v466
        %v513 = vunpack.c.l.b16 %v467
        %v514 = vunpack.c.h.b16 %v467
        %v515 = vunpack.c.l.b16 %v468
        %v516 = vunpack.c.h.b16 %v468
        %v517 = vunpack.c.l.b16 %v469
        %v518 = vunpack.c.h.b16 %v469
        %v519 = vunpack.c.l.b16 %v470
        %v520 = vunpack.c.h.b16 %v470
        %v521 = vunpack.c.l.b16 %v471
        %v522 = vunpack.c.h.b16 %v471
        %v523 = vpack.c.b16 %v501, %v499
        %v524 = vpack.c.b16 %v502, %v500
        %v525 = vpack.c.b16 %v505, %v503
        %v526 = vpack.c.b16 %v506, %v504
        %v527 = vpack.c.b16 %v509, %v507
        %v528 = vpack.c.b16 %v510, %v508
        %v529 = vpack.c.b16 %v513, %v511
        %v530 = vpack.c.b16 %v514, %v512
        %v531 = vpack.c.b16 %v517, %v515
        %v532 = vpack.c.b16 %v518, %v516
        %v533 = vpack.c.b16 %v521, %v519
        %v534 = vpack.c.b16 %v522, %v520
        %v548 = vsel %vm271, %v485, 0
        %v551 = vsel %vm271, %v486, 0
        %553 = vmatprep.subr.bf16.mxu0 0
        %554 = vmatpush1.bf16.msra.mxu0 0
        %555 = vmatprep.subr.bf16.mxu0 0
        %556 = vmatpush1.bf16.msra.mxu0 0
        %557 = vmatprep.subr.bf16.mxu0 %v534
        %558 = vmatpush1.bf16.msra.mxu0 %v533
        %559 = vmatprep.subr.bf16.mxu0 %v532
        %560 = vmatpush1.bf16.msra.mxu0 %v531
        %561 = vmatprep.subr.bf16.mxu0 %v530
        %562 = vmatpush1.bf16.msra.mxu0 %v529
        %563 = vmatprep.subr.bf16.mxu0 %v528
        %564 = vmatpush1.bf16.msra.mxu0 %v527
        %565 = vmatprep.subr.bf16.mxu0 %v526
        %566 = vmatpush1.bf16.msra.mxu0 %v525
        %567 = vmatprep.subr.bf16.mxu0 %v524
        %568 = vmatpush1.bf16.msra.mxu0 %v523
        %569 = vmatprep.subr.bf16.mxu0 0
        %570 = vmatpush2.bf16.msra.mxu0 0
        %571 = vmatprep.subr.bf16.mxu0 0
        %572 = vmatpush2.bf16.msra.mxu0 0
        %573 = vmatprep.subr.bf16.mxu0 0
        %574 = vmatpush2.bf16.msra.mxu0 0
        %575 = vmatprep.subr.bf16.mxu0 0
        %576 = vmatpush2.bf16.msra.mxu0 0
        %577 = vmatprep.subr.bf16.mxu0 0
        %578 = vmatpush2.bf16.msra.mxu0 0
        %579 = vmatprep.subr.bf16.mxu0 0
        %580 = vmatpush2.bf16.msra.mxu0 0
        %581 = vmatprep.subr.bf16.mxu0 0
        %582 = vmatpush2.bf16.msra.mxu0 0
        %583 = vmatprep.subr.bf16.mxu0 0
        %584 = vmatpush2.bf16.msra.mxu0 0
        %585 = vmatprep.mubr.bf16.mxu0 0
        %586 = vmatmul.mubr.bf16.gmra.mxu0 %v548
        %v587 = vpop.f32.mrf.mxu0
        %v588 = vadd.f32 0.0, %v587
        %v589 = vpop.f32.mrf.mxu0
        %v590 = vadd.f32 0.0, %v589
        %v591 = vpop.f32.mrf.mxu0
        %v592 = vadd.f32 0.0, %v591
        %v593 = vpop.f32.mrf.mxu0
        %v594 = vadd.f32 0.0, %v593
        %595 = vmatprep.mubr.bf16.mxu0 0
        %596 = vmatmul.mubr.bf16.gmra.mxu0 %v551
        %v597 = vpop.f32.mrf.mxu0
        %v598 = vadd.f32 0.0, %v597
        %v599 = vpop.f32.mrf.mxu0
        %v600 = vadd.f32 0.0, %v599
        %v601 = vpop.f32.mrf.mxu0
        %v602 = vadd.f32 0.0, %v601
        %v603 = vpop.f32.mrf.mxu0
        %v604 = vadd.f32 0.0, %v603
        %605 = vdwg.mxu0
        %v606 = vadd.f32 %v442, %v588
        %v607 = vadd.f32 %v444, %v590
        %v608 = vadd.f32 %v446, %v592
        %v609 = vadd.f32 %v448, %v594
        %v610 = vadd.f32 %v452, %v598
        %v611 = vadd.f32 %v454, %v600
        %v612 = vadd.f32 %v456, %v602
        %v613 = vadd.f32 %v458, %v604
        %v614 = vld [vmem:[%s183 + $0x4] sm:$0xff]
        %v615 = vld [vmem:[%s183 + $0x1c] sm:$0xff]
        %v616 = vld [vmem:[%s183 + $0x34] sm:$0xff]
        %v617 = vld [vmem:[%s183 + $0x4c] sm:$0xff]
        %v618 = vld [vmem:[%s183 + $0x64] sm:$0xff]
        %v619 = vld [vmem:[%s183 + $0x7c] sm:$0xff]
        %v620 = vld [vmem:[%s183 + $0x94] sm:$0xff]
        %v621 = vld [vmem:[%s183 + $0xac] sm:$0xff]
        %v622 = vld [vmem:[%s183 + $0xc4] sm:$0xff]
        %v623 = vld [vmem:[%s183 + $0xdc] sm:$0xff]
        %v624 = vld [vmem:[%s183 + $0xf4] sm:$0xff]
        %v625 = vld [vmem:[%s183 + $0x10c] sm:$0xff]
        %s626 = scalar_lea.vmem %s1, 48
        %v627 = vld [vmem:[%s626] sm:$0xf]
        %v628 = vld [vmem:[%s626 + $0x4] sm:$0xf]
        %v629 = vld [vmem:[%s626 + $0x8] sm:$0xf]
        %v630 = vld [vmem:[%s626 + $0xc] sm:$0xf]
        %v635 = vunpack.c.l.b16 %v627
        %v636 = vunpack.c.l.b16 %v628
        %v637 = vunpack.c.l.b16 %v629
        %v638 = vunpack.c.l.b16 %v630
        %v639 = vpack.c.b16 %v636, %v635
        %v640 = vpack.c.b16 %v638, %v637
        %v653 = vunpack.c.l.b16 %v614
        %v654 = vunpack.c.h.b16 %v614
        %v655 = vunpack.c.l.b16 %v615
        %v656 = vunpack.c.h.b16 %v615
        %v657 = vunpack.c.l.b16 %v616
        %v658 = vunpack.c.h.b16 %v616
        %v659 = vunpack.c.l.b16 %v617
        %v660 = vunpack.c.h.b16 %v617
        %v661 = vunpack.c.l.b16 %v618
        %v662 = vunpack.c.h.b16 %v618
        %v663 = vunpack.c.l.b16 %v619
        %v664 = vunpack.c.h.b16 %v619
        %v665 = vunpack.c.l.b16 %v620
        %v666 = vunpack.c.h.b16 %v620
        %v667 = vunpack.c.l.b16 %v621
        %v668 = vunpack.c.h.b16 %v621
        %v669 = vunpack.c.l.b16 %v622
        %v670 = vunpack.c.h.b16 %v622
        %v671 = vunpack.c.l.b16 %v623
        %v672 = vunpack.c.h.b16 %v623
        %v673 = vunpack.c.l.b16 %v624
        %v674 = vunpack.c.h.b16 %v624
        %v675 = vunpack.c.l.b16 %v625
        %v676 = vunpack.c.h.b16 %v625
        %v677 = vpack.c.b16 %v655, %v653
        %v678 = vpack.c.b16 %v656, %v654
        %v679 = vpack.c.b16 %v659, %v657
        %v680 = vpack.c.b16 %v660, %v658
        %v681 = vpack.c.b16 %v663, %v661
        %v682 = vpack.c.b16 %v664, %v662
        %v683 = vpack.c.b16 %v667, %v665
        %v684 = vpack.c.b16 %v668, %v666
        %v685 = vpack.c.b16 %v671, %v669
        %v686 = vpack.c.b16 %v672, %v670
        %v687 = vpack.c.b16 %v675, %v673
        %v688 = vpack.c.b16 %v676, %v674
        %v702 = vsel %vm271, %v639, 0
        %v705 = vsel %vm271, %v640, 0
        %707 = vmatprep.subr.bf16.mxu0 0
        %708 = vmatpush1.bf16.msra.mxu0 0
        %709 = vmatprep.subr.bf16.mxu0 0
        %710 = vmatpush1.bf16.msra.mxu0 0
        %711 = vmatprep.subr.bf16.mxu0 %v688
        %712 = vmatpush1.bf16.msra.mxu0 %v687
        %713 = vmatprep.subr.bf16.mxu0 %v686
        %714 = vmatpush1.bf16.msra.mxu0 %v685
        %715 = vmatprep.subr.bf16.mxu0 %v684
        %716 = vmatpush1.bf16.msra.mxu0 %v683
        %717 = vmatprep.subr.bf16.mxu0 %v682
        %718 = vmatpush1.bf16.msra.mxu0 %v681
        %719 = vmatprep.subr.bf16.mxu0 %v680
        %720 = vmatpush1.bf16.msra.mxu0 %v679
        %721 = vmatprep.subr.bf16.mxu0 %v678
        %722 = vmatpush1.bf16.msra.mxu0 %v677
        %723 = vmatprep.subr.bf16.mxu0 0
        %724 = vmatpush2.bf16.msra.mxu0 0
        %725 = vmatprep.subr.bf16.mxu0 0
        %726 = vmatpush2.bf16.msra.mxu0 0
        %727 = vmatprep.subr.bf16.mxu0 0
        %728 = vmatpush2.bf16.msra.mxu0 0
        %729 = vmatprep.subr.bf16.mxu0 0
        %730 = vmatpush2.bf16.msra.mxu0 0
        %731 = vmatprep.subr.bf16.mxu0 0
        %732 = vmatpush2.bf16.msra.mxu0 0
        %733 = vmatprep.subr.bf16.mxu0 0
        %734 = vmatpush2.bf16.msra.mxu0 0
        %735 = vmatprep.subr.bf16.mxu0 0
        %736 = vmatpush2.bf16.msra.mxu0 0
        %737 = vmatprep.subr.bf16.mxu0 0
        %738 = vmatpush2.bf16.msra.mxu0 0
        %739 = vmatprep.mubr.bf16.mxu0 0
        %740 = vmatmul.mubr.bf16.gmra.mxu0 %v702
        %v741 = vpop.f32.mrf.mxu0
        %v742 = vadd.f32 0.0, %v741
        %v743 = vpop.f32.mrf.mxu0
        %v744 = vadd.f32 0.0, %v743
        %v745 = vpop.f32.mrf.mxu0
        %v746 = vadd.f32 0.0, %v745
        %v747 = vpop.f32.mrf.mxu0
        %v748 = vadd.f32 0.0, %v747
        %749 = vmatprep.mubr.bf16.mxu0 0
        %750 = vmatmul.mubr.bf16.gmra.mxu0 %v705
        %v751 = vpop.f32.mrf.mxu0
        %v752 = vadd.f32 0.0, %v751
        %v753 = vpop.f32.mrf.mxu0
        %v754 = vadd.f32 0.0, %v753
        %v755 = vpop.f32.mrf.mxu0
        %v756 = vadd.f32 0.0, %v755
        %v757 = vpop.f32.mrf.mxu0
        %v758 = vadd.f32 0.0, %v757
        %759 = vdwg.mxu0
        %v760 = vadd.f32 %v606, %v742
        %v761 = vadd.f32 %v607, %v744
        %v762 = vadd.f32 %v608, %v746
        %v763 = vadd.f32 %v609, %v748
        %v764 = vadd.f32 %v610, %v752
        %v765 = vadd.f32 %v611, %v754
        %v766 = vadd.f32 %v612, %v756
        %v767 = vadd.f32 %v613, %v758
        %v768 = vld [vmem:[%s164 + $0x8] sm:$0xff]
        %v769 = vld [vmem:[%s164 + $0x20] sm:$0xff]
        %v770 = vld [vmem:[%s164 + $0x38] sm:$0xff]
        %v771 = vld [vmem:[%s164 + $0x50] sm:$0xff]
        %v772 = vld [vmem:[%s164 + $0x68] sm:$0xff]
        %v773 = vld [vmem:[%s164 + $0x80] sm:$0xff]
        %v774 = vld [vmem:[%s164 + $0x98] sm:$0xff]
        %v775 = vld [vmem:[%s164 + $0xb0] sm:$0xff]
        %v776 = vld [vmem:[%s164 + $0xc8] sm:$0xff]
        %v777 = vld [vmem:[%s164 + $0xe0] sm:$0xff]
        %v778 = vld [vmem:[%s164 + $0xf8] sm:$0xff]
        %v779 = vld [vmem:[%s164 + $0x110] sm:$0xff]
        %s780 = scalar_lea.vmem %s1, 64
        %v781 = vld [vmem:[%s780] sm:$0xf]
        %v782 = vld [vmem:[%s780 + $0x4] sm:$0xf]
        %v783 = vld [vmem:[%s780 + $0x8] sm:$0xf]
        %v784 = vld [vmem:[%s780 + $0xc] sm:$0xf]
        %v789 = vunpack.c.l.b16 %v781
        %v790 = vunpack.c.l.b16 %v782
        %v791 = vunpack.c.l.b16 %v783
        %v792 = vunpack.c.l.b16 %v784
        %v793 = vpack.c.b16 %v790, %v789
        %v794 = vpack.c.b16 %v792, %v791
        %v807 = vunpack.c.l.b16 %v768
        %v808 = vunpack.c.h.b16 %v768
        %v809 = vunpack.c.l.b16 %v769
        %v810 = vunpack.c.h.b16 %v769
        %v811 = vunpack.c.l.b16 %v770
        %v812 = vunpack.c.h.b16 %v770
        %v813 = vunpack.c.l.b16 %v771
        %v814 = vunpack.c.h.b16 %v771
        %v815 = vunpack.c.l.b16 %v772
        %v816 = vunpack.c.h.b16 %v772
        %v817 = vunpack.c.l.b16 %v773
        %v818 = vunpack.c.h.b16 %v773
        %v819 = vunpack.c.l.b16 %v774
        %v820 = vunpack.c.h.b16 %v774
        %v821 = vunpack.c.l.b16 %v775
        %v822 = vunpack.c.h.b16 %v775
        %v823 = vunpack.c.l.b16 %v776
        %v824 = vunpack.c.h.b16 %v776
        %v825 = vunpack.c.l.b16 %v777
        %v826 = vunpack.c.h.b16 %v777
        %v827 = vunpack.c.l.b16 %v778
        %v828 = vunpack.c.h.b16 %v778
        %v829 = vunpack.c.l.b16 %v779
        %v830 = vunpack.c.h.b16 %v779
        %v831 = vpack.c.b16 %v809, %v807
        %v832 = vpack.c.b16 %v810, %v808
        %v833 = vpack.c.b16 %v813, %v811
        %v834 = vpack.c.b16 %v814, %v812
        %v835 = vpack.c.b16 %v817, %v815
        %v836 = vpack.c.b16 %v818, %v816
        %v837 = vpack.c.b16 %v821, %v819
        %v838 = vpack.c.b16 %v822, %v820
        %v839 = vpack.c.b16 %v825, %v823
        %v840 = vpack.c.b16 %v826, %v824
        %v841 = vpack.c.b16 %v829, %v827
        %v842 = vpack.c.b16 %v830, %v828
        %v856 = vsel %vm271, %v793, 0
        %v859 = vsel %vm271, %v794, 0
        %861 = vmatprep.subr.bf16.mxu0 0
        %862 = vmatpush1.bf16.msra.mxu0 0
        %863 = vmatprep.subr.bf16.mxu0 0
        %864 = vmatpush1.bf16.msra.mxu0 0
        %865 = vmatprep.subr.bf16.mxu0 %v842
        %866 = vmatpush1.bf16.msra.mxu0 %v841
        %867 = vmatprep.subr.bf16.mxu0 %v840
        %868 = vmatpush1.bf16.msra.mxu0 %v839
        %869 = vmatprep.subr.bf16.mxu0 %v838
        %870 = vmatpush1.bf16.msra.mxu0 %v837
        %871 = vmatprep.subr.bf16.mxu0 %v836
        %872 = vmatpush1.bf16.msra.mxu0 %v835
        %873 = vmatprep.subr.bf16.mxu0 %v834
        %874 = vmatpush1.bf16.msra.mxu0 %v833
        %875 = vmatprep.subr.bf16.mxu0 %v832
        %876 = vmatpush1.bf16.msra.mxu0 %v831
        %877 = vmatprep.subr.bf16.mxu0 0
        %878 = vmatpush2.bf16.msra.mxu0 0
        %879 = vmatprep.subr.bf16.mxu0 0
        %880 = vmatpush2.bf16.msra.mxu0 0
        %881 = vmatprep.subr.bf16.mxu0 0
        %882 = vmatpush2.bf16.msra.mxu0 0
        %883 = vmatprep.subr.bf16.mxu0 0
        %884 = vmatpush2.bf16.msra.mxu0 0
        %885 = vmatprep.subr.bf16.mxu0 0
        %886 = vmatpush2.bf16.msra.mxu0 0
        %887 = vmatprep.subr.bf16.mxu0 0
        %888 = vmatpush2.bf16.msra.mxu0 0
        %889 = vmatprep.subr.bf16.mxu0 0
        %890 = vmatpush2.bf16.msra.mxu0 0
        %891 = vmatprep.subr.bf16.mxu0 0
        %892 = vmatpush2.bf16.msra.mxu0 0
        %893 = vmatprep.mubr.bf16.mxu0 0
        %894 = vmatmul.mubr.bf16.gmra.mxu0 %v856
        %v895 = vpop.f32.mrf.mxu0
        %v896 = vadd.f32 0.0, %v895
        %v897 = vpop.f32.mrf.mxu0
        %v898 = vadd.f32 0.0, %v897
        %v899 = vpop.f32.mrf.mxu0
        %v900 = vadd.f32 0.0, %v899
        %v901 = vpop.f32.mrf.mxu0
        %v902 = vadd.f32 0.0, %v901
        %903 = vmatprep.mubr.bf16.mxu0 0
        %904 = vmatmul.mubr.bf16.gmra.mxu0 %v859
        %v905 = vpop.f32.mrf.mxu0
        %v906 = vadd.f32 0.0, %v905
        %v907 = vpop.f32.mrf.mxu0
        %v908 = vadd.f32 0.0, %v907
        %v909 = vpop.f32.mrf.mxu0
        %v910 = vadd.f32 0.0, %v909
        %v911 = vpop.f32.mrf.mxu0
        %v912 = vadd.f32 0.0, %v911
        %913 = vdwg.mxu0
        %v914 = vadd.f32 %v760, %v896
        %v915 = vadd.f32 %v761, %v898
        %v916 = vadd.f32 %v762, %v900
        %v917 = vadd.f32 %v763, %v902
        %v918 = vadd.f32 %v764, %v906
        %v919 = vadd.f32 %v765, %v908
        %v920 = vadd.f32 %v766, %v910
        %v921 = vadd.f32 %v767, %v912
        %v922 = vld [vmem:[%s183 + $0x8] sm:$0xff]
        %v923 = vld [vmem:[%s183 + $0x20] sm:$0xff]
        %v924 = vld [vmem:[%s183 + $0x38] sm:$0xff]
        %v925 = vld [vmem:[%s183 + $0x50] sm:$0xff]
        %v926 = vld [vmem:[%s183 + $0x68] sm:$0xff]
        %v927 = vld [vmem:[%s183 + $0x80] sm:$0xff]
        %v928 = vld [vmem:[%s183 + $0x98] sm:$0xff]
        %v929 = vld [vmem:[%s183 + $0xb0] sm:$0xff]
        %v930 = vld [vmem:[%s183 + $0xc8] sm:$0xff]
        %v931 = vld [vmem:[%s183 + $0xe0] sm:$0xff]
        %v932 = vld [vmem:[%s183 + $0xf8] sm:$0xff]
        %v933 = vld [vmem:[%s183 + $0x110] sm:$0xff]
        %s934 = scalar_lea.vmem %s1, 80
        %v935 = vld [vmem:[%s934] sm:$0xf]
        %v936 = vld [vmem:[%s934 + $0x4] sm:$0xf]
        %v937 = vld [vmem:[%s934 + $0x8] sm:$0xf]
        %v938 = vld [vmem:[%s934 + $0xc] sm:$0xf]
        %v943 = vunpack.c.l.b16 %v935
        %v944 = vunpack.c.l.b16 %v936
        %v945 = vunpack.c.l.b16 %v937
        %v946 = vunpack.c.l.b16 %v938
        %v947 = vpack.c.b16 %v944, %v943
        %v948 = vpack.c.b16 %v946, %v945
        %v961 = vunpack.c.l.b16 %v922
        %v962 = vunpack.c.h.b16 %v922
        %v963 = vunpack.c.l.b16 %v923
        %v964 = vunpack.c.h.b16 %v923
        %v965 = vunpack.c.l.b16 %v924
        %v966 = vunpack.c.h.b16 %v924
        %v967 = vunpack.c.l.b16 %v925
        %v968 = vunpack.c.h.b16 %v925
        %v969 = vunpack.c.l.b16 %v926
        %v970 = vunpack.c.h.b16 %v926
        %v971 = vunpack.c.l.b16 %v927
        %v972 = vunpack.c.h.b16 %v927
        %v973 = vunpack.c.l.b16 %v928
        %v974 = vunpack.c.h.b16 %v928
        %v975 = vunpack.c.l.b16 %v929
        %v976 = vunpack.c.h.b16 %v929
        %v977 = vunpack.c.l.b16 %v930
        %v978 = vunpack.c.h.b16 %v930
        %v979 = vunpack.c.l.b16 %v931
        %v980 = vunpack.c.h.b16 %v931
        %v981 = vunpack.c.l.b16 %v932
        %v982 = vunpack.c.h.b16 %v932
        %v983 = vunpack.c.l.b16 %v933
        %v984 = vunpack.c.h.b16 %v933
        %v985 = vpack.c.b16 %v963, %v961
        %v986 = vpack.c.b16 %v964, %v962
        %v987 = vpack.c.b16 %v967, %v965
        %v988 = vpack.c.b16 %v968, %v966
        %v989 = vpack.c.b16 %v971, %v969
        %v990 = vpack.c.b16 %v972, %v970
        %v991 = vpack.c.b16 %v975, %v973
        %v992 = vpack.c.b16 %v976, %v974
        %v993 = vpack.c.b16 %v979, %v977
        %v994 = vpack.c.b16 %v980, %v978
        %v995 = vpack.c.b16 %v983, %v981
        %v996 = vpack.c.b16 %v984, %v982
        %v1010 = vsel %vm271, %v947, 0
        %v1013 = vsel %vm271, %v948, 0
        %1015 = vmatprep.subr.bf16.mxu0 0
        %1016 = vmatpush1.bf16.msra.mxu0 0
        %1017 = vmatprep.subr.bf16.mxu0 0
        %1018 = vmatpush1.bf16.msra.mxu0 0
        %1019 = vmatprep.subr.bf16.mxu0 %v996
        %1020 = vmatpush1.bf16.msra.mxu0 %v995
        %1021 = vmatprep.subr.bf16.mxu0 %v994
        %1022 = vmatpush1.bf16.msra.mxu0 %v993
        %1023 = vmatprep.subr.bf16.mxu0 %v992
        %1024 = vmatpush1.bf16.msra.mxu0 %v991
        %1025 = vmatprep.subr.bf16.mxu0 %v990
        %1026 = vmatpush1.bf16.msra.mxu0 %v989
        %1027 = vmatprep.subr.bf16.mxu0 %v988
        %1028 = vmatpush1.bf16.msra.mxu0 %v987
        %1029 = vmatprep.subr.bf16.mxu0 %v986
        %1030 = vmatpush1.bf16.msra.mxu0 %v985
        %1031 = vmatprep.subr.bf16.mxu0 0
        %1032 = vmatpush2.bf16.msra.mxu0 0
        %1033 = vmatprep.subr.bf16.mxu0 0
        %1034 = vmatpush2.bf16.msra.mxu0 0
        %1035 = vmatprep.subr.bf16.mxu0 0
        %1036 = vmatpush2.bf16.msra.mxu0 0
        %1037 = vmatprep.subr.bf16.mxu0 0
        %1038 = vmatpush2.bf16.msra.mxu0 0
        %1039 = vmatprep.subr.bf16.mxu0 0
        %1040 = vmatpush2.bf16.msra.mxu0 0
        %1041 = vmatprep.subr.bf16.mxu0 0
        %1042 = vmatpush2.bf16.msra.mxu0 0
        %1043 = vmatprep.subr.bf16.mxu0 0
        %1044 = vmatpush2.bf16.msra.mxu0 0
        %1045 = vmatprep.subr.bf16.mxu0 0
        %1046 = vmatpush2.bf16.msra.mxu0 0
        %1047 = vmatprep.mubr.bf16.mxu0 0
        %1048 = vmatmul.mubr.bf16.gmra.mxu0 %v1010
        %v1049 = vpop.f32.mrf.mxu0
        %v1050 = vadd.f32 0.0, %v1049
        %v1051 = vpop.f32.mrf.mxu0
        %v1052 = vadd.f32 0.0, %v1051
        %v1053 = vpop.f32.mrf.mxu0
        %v1054 = vadd.f32 0.0, %v1053
        %v1055 = vpop.f32.mrf.mxu0
        %v1056 = vadd.f32 0.0, %v1055
        %1057 = vmatprep.mubr.bf16.mxu0 0
        %1058 = vmatmul.mubr.bf16.gmra.mxu0 %v1013
        %v1059 = vpop.f32.mrf.mxu0
        %v1060 = vadd.f32 0.0, %v1059
        %v1061 = vpop.f32.mrf.mxu0
        %v1062 = vadd.f32 0.0, %v1061
        %v1063 = vpop.f32.mrf.mxu0
        %v1064 = vadd.f32 0.0, %v1063
        %v1065 = vpop.f32.mrf.mxu0
        %v1066 = vadd.f32 0.0, %v1065
        %1067 = vdwg.mxu0
        %v1068 = vadd.f32 %v914, %v1050
        %v1069 = vadd.f32 %v915, %v1052
        %v1070 = vadd.f32 %v916, %v1054
        %v1071 = vadd.f32 %v917, %v1056
        %v1072 = vadd.f32 %v918, %v1060
        %v1073 = vadd.f32 %v919, %v1062
        %v1074 = vadd.f32 %v920, %v1064
        %v1075 = vadd.f32 %v921, %v1066
        %v1076 = vld [vmem:[%s164 + $0xc] sm:$0xff]
        %v1077 = vld [vmem:[%s164 + $0x24] sm:$0xff]
        %v1078 = vld [vmem:[%s164 + $0x3c] sm:$0xff]
        %v1079 = vld [vmem:[%s164 + $0x54] sm:$0xff]
        %v1080 = vld [vmem:[%s164 + $0x6c] sm:$0xff]
        %v1081 = vld [vmem:[%s164 + $0x84] sm:$0xff]
        %v1082 = vld [vmem:[%s164 + $0x9c] sm:$0xff]
        %v1083 = vld [vmem:[%s164 + $0xb4] sm:$0xff]
        %v1084 = vld [vmem:[%s164 + $0xcc] sm:$0xff]
        %v1085 = vld [vmem:[%s164 + $0xe4] sm:$0xff]
        %v1086 = vld [vmem:[%s164 + $0xfc] sm:$0xff]
        %v1087 = vld [vmem:[%s164 + $0x114] sm:$0xff]
        %s1088 = scalar_lea.vmem %s1, 96
        %v1089 = vld [vmem:[%s1088] sm:$0xf]
        %v1090 = vld [vmem:[%s1088 + $0x4] sm:$0xf]
        %v1091 = vld [vmem:[%s1088 + $0x8] sm:$0xf]
        %v1092 = vld [vmem:[%s1088 + $0xc] sm:$0xf]
        %v1097 = vunpack.c.l.b16 %v1089
        %v1098 = vunpack.c.l.b16 %v1090
        %v1099 = vunpack.c.l.b16 %v1091
        %v1100 = vunpack.c.l.b16 %v1092
        %v1101 = vpack.c.b16 %v1098, %v1097
        %v1102 = vpack.c.b16 %v1100, %v1099
        %v1115 = vunpack.c.l.b16 %v1076
        %v1116 = vunpack.c.h.b16 %v1076
        %v1117 = vunpack.c.l.b16 %v1077
        %v1118 = vunpack.c.h.b16 %v1077
        %v1119 = vunpack.c.l.b16 %v1078
        %v1120 = vunpack.c.h.b16 %v1078
        %v1121 = vunpack.c.l.b16 %v1079
        %v1122 = vunpack.c.h.b16 %v1079
        %v1123 = vunpack.c.l.b16 %v1080
        %v1124 = vunpack.c.h.b16 %v1080
        %v1125 = vunpack.c.l.b16 %v1081
        %v1126 = vunpack.c.h.b16 %v1081
        %v1127 = vunpack.c.l.b16 %v1082
        %v1128 = vunpack.c.h.b16 %v1082
        %v1129 = vunpack.c.l.b16 %v1083
        %v1130 = vunpack.c.h.b16 %v1083
        %v1131 = vunpack.c.l.b16 %v1084
        %v1132 = vunpack.c.h.b16 %v1084
        %v1133 = vunpack.c.l.b16 %v1085
        %v1134 = vunpack.c.h.b16 %v1085
        %v1135 = vunpack.c.l.b16 %v1086
        %v1136 = vunpack.c.h.b16 %v1086
        %v1137 = vunpack.c.l.b16 %v1087
        %v1138 = vunpack.c.h.b16 %v1087
        %v1139 = vpack.c.b16 %v1117, %v1115
        %v1140 = vpack.c.b16 %v1118, %v1116
        %v1141 = vpack.c.b16 %v1121, %v1119
        %v1142 = vpack.c.b16 %v1122, %v1120
        %v1143 = vpack.c.b16 %v1125, %v1123
        %v1144 = vpack.c.b16 %v1126, %v1124
        %v1145 = vpack.c.b16 %v1129, %v1127
        %v1146 = vpack.c.b16 %v1130, %v1128
        %v1147 = vpack.c.b16 %v1133, %v1131
        %v1148 = vpack.c.b16 %v1134, %v1132
        %v1149 = vpack.c.b16 %v1137, %v1135
        %v1150 = vpack.c.b16 %v1138, %v1136
        %v1164 = vsel %vm271, %v1101, 0
        %v1167 = vsel %vm271, %v1102, 0
        %1169 = vmatprep.subr.bf16.mxu0 0
        %1170 = vmatpush1.bf16.msra.mxu0 0
        %1171 = vmatprep.subr.bf16.mxu0 0
        %1172 = vmatpush1.bf16.msra.mxu0 0
        %1173 = vmatprep.subr.bf16.mxu0 %v1150
        %1174 = vmatpush1.bf16.msra.mxu0 %v1149
        %1175 = vmatprep.subr.bf16.mxu0 %v1148
        %1176 = vmatpush1.bf16.msra.mxu0 %v1147
        %1177 = vmatprep.subr.bf16.mxu0 %v1146
        %1178 = vmatpush1.bf16.msra.mxu0 %v1145
        %1179 = vmatprep.subr.bf16.mxu0 %v1144
        %1180 = vmatpush1.bf16.msra.mxu0 %v1143
        %1181 = vmatprep.subr.bf16.mxu0 %v1142
        %1182 = vmatpush1.bf16.msra.mxu0 %v1141
        %1183 = vmatprep.subr.bf16.mxu0 %v1140
        %1184 = vmatpush1.bf16.msra.mxu0 %v1139
        %1185 = vmatprep.subr.bf16.mxu0 0
        %1186 = vmatpush2.bf16.msra.mxu0 0
        %1187 = vmatprep.subr.bf16.mxu0 0
        %1188 = vmatpush2.bf16.msra.mxu0 0
        %1189 = vmatprep.subr.bf16.mxu0 0
        %1190 = vmatpush2.bf16.msra.mxu0 0
        %1191 = vmatprep.subr.bf16.mxu0 0
        %1192 = vmatpush2.bf16.msra.mxu0 0
        %1193 = vmatprep.subr.bf16.mxu0 0
        %1194 = vmatpush2.bf16.msra.mxu0 0
        %1195 = vmatprep.subr.bf16.mxu0 0
        %1196 = vmatpush2.bf16.msra.mxu0 0
        %1197 = vmatprep.subr.bf16.mxu0 0
        %1198 = vmatpush2.bf16.msra.mxu0 0
        %1199 = vmatprep.subr.bf16.mxu0 0
        %1200 = vmatpush2.bf16.msra.mxu0 0
        %1201 = vmatprep.mubr.bf16.mxu0 0
        %1202 = vmatmul.mubr.bf16.gmra.mxu0 %v1164
        %v1203 = vpop.f32.mrf.mxu0
        %v1204 = vadd.f32 0.0, %v1203
        %v1205 = vpop.f32.mrf.mxu0
        %v1206 = vadd.f32 0.0, %v1205
        %v1207 = vpop.f32.mrf.mxu0
        %v1208 = vadd.f32 0.0, %v1207
        %v1209 = vpop.f32.mrf.mxu0
        %v1210 = vadd.f32 0.0, %v1209
        %1211 = vmatprep.mubr.bf16.mxu0 0
        %1212 = vmatmul.mubr.bf16.gmra.mxu0 %v1167
        %v1213 = vpop.f32.mrf.mxu0
        %v1214 = vadd.f32 0.0, %v1213
        %v1215 = vpop.f32.mrf.mxu0
        %v1216 = vadd.f32 0.0, %v1215
        %v1217 = vpop.f32.mrf.mxu0
        %v1218 = vadd.f32 0.0, %v1217
        %v1219 = vpop.f32.mrf.mxu0
        %v1220 = vadd.f32 0.0, %v1219
        %1221 = vdwg.mxu0
        %v1222 = vadd.f32 %v1068, %v1204
        %v1223 = vadd.f32 %v1069, %v1206
        %v1224 = vadd.f32 %v1070, %v1208
        %v1225 = vadd.f32 %v1071, %v1210
        %v1226 = vadd.f32 %v1072, %v1214
        %v1227 = vadd.f32 %v1073, %v1216
        %v1228 = vadd.f32 %v1074, %v1218
        %v1229 = vadd.f32 %v1075, %v1220
        %v1230 = vld [vmem:[%s183 + $0xc] sm:$0xff]
        %v1231 = vld [vmem:[%s183 + $0x24] sm:$0xff]
        %v1232 = vld [vmem:[%s183 + $0x3c] sm:$0xff]
        %v1233 = vld [vmem:[%s183 + $0x54] sm:$0xff]
        %v1234 = vld [vmem:[%s183 + $0x6c] sm:$0xff]
        %v1235 = vld [vmem:[%s183 + $0x84] sm:$0xff]
        %v1236 = vld [vmem:[%s183 + $0x9c] sm:$0xff]
        %v1237 = vld [vmem:[%s183 + $0xb4] sm:$0xff]
        %v1238 = vld [vmem:[%s183 + $0xcc] sm:$0xff]
        %v1239 = vld [vmem:[%s183 + $0xe4] sm:$0xff]
        %v1240 = vld [vmem:[%s183 + $0xfc] sm:$0xff]
        %v1241 = vld [vmem:[%s183 + $0x114] sm:$0xff]
        %s1242 = scalar_lea.vmem %s1, 112
        %v1243 = vld [vmem:[%s1242] sm:$0xf]
        %v1244 = vld [vmem:[%s1242 + $0x4] sm:$0xf]
        %v1245 = vld [vmem:[%s1242 + $0x8] sm:$0xf]
        %v1246 = vld [vmem:[%s1242 + $0xc] sm:$0xf]
        %v1251 = vunpack.c.l.b16 %v1243
        %v1252 = vunpack.c.l.b16 %v1244
        %v1253 = vunpack.c.l.b16 %v1245
        %v1254 = vunpack.c.l.b16 %v1246
        %v1255 = vpack.c.b16 %v1252, %v1251
        %v1256 = vpack.c.b16 %v1254, %v1253
        %v1269 = vunpack.c.l.b16 %v1230
        %v1270 = vunpack.c.h.b16 %v1230
        %v1271 = vunpack.c.l.b16 %v1231
        %v1272 = vunpack.c.h.b16 %v1231
        %v1273 = vunpack.c.l.b16 %v1232
        %v1274 = vunpack.c.h.b16 %v1232
        %v1275 = vunpack.c.l.b16 %v1233
        %v1276 = vunpack.c.h.b16 %v1233
        %v1277 = vunpack.c.l.b16 %v1234
        %v1278 = vunpack.c.h.b16 %v1234
        %v1279 = vunpack.c.l.b16 %v1235
        %v1280 = vunpack.c.h.b16 %v1235
        %v1281 = vunpack.c.l.b16 %v1236
        %v1282 = vunpack.c.h.b16 %v1236
        %v1283 = vunpack.c.l.b16 %v1237
        %v1284 = vunpack.c.h.b16 %v1237
        %v1285 = vunpack.c.l.b16 %v1238
        %v1286 = vunpack.c.h.b16 %v1238
        %v1287 = vunpack.c.l.b16 %v1239
        %v1288 = vunpack.c.h.b16 %v1239
        %v1289 = vunpack.c.l.b16 %v1240
        %v1290 = vunpack.c.h.b16 %v1240
        %v1291 = vunpack.c.l.b16 %v1241
        %v1292 = vunpack.c.h.b16 %v1241
        %v1293 = vpack.c.b16 %v1271, %v1269
        %v1294 = vpack.c.b16 %v1272, %v1270
        %v1295 = vpack.c.b16 %v1275, %v1273
        %v1296 = vpack.c.b16 %v1276, %v1274
        %v1297 = vpack.c.b16 %v1279, %v1277
        %v1298 = vpack.c.b16 %v1280, %v1278
        %v1299 = vpack.c.b16 %v1283, %v1281
        %v1300 = vpack.c.b16 %v1284, %v1282
        %v1301 = vpack.c.b16 %v1287, %v1285
        %v1302 = vpack.c.b16 %v1288, %v1286
        %v1303 = vpack.c.b16 %v1291, %v1289
        %v1304 = vpack.c.b16 %v1292, %v1290
        %v1318 = vsel %vm271, %v1255, 0
        %v1321 = vsel %vm271, %v1256, 0
        %1323 = vmatprep.subr.bf16.mxu0 0
        %1324 = vmatpush1.bf16.msra.mxu0 0
        %1325 = vmatprep.subr.bf16.mxu0 0
        %1326 = vmatpush1.bf16.msra.mxu0 0
        %1327 = vmatprep.subr.bf16.mxu0 %v1304
        %1328 = vmatpush1.bf16.msra.mxu0 %v1303
        %1329 = vmatprep.subr.bf16.mxu0 %v1302
        %1330 = vmatpush1.bf16.msra.mxu0 %v1301
        %1331 = vmatprep.subr.bf16.mxu0 %v1300
        %1332 = vmatpush1.bf16.msra.mxu0 %v1299
        %1333 = vmatprep.subr.bf16.mxu0 %v1298
        %1334 = vmatpush1.bf16.msra.mxu0 %v1297
        %1335 = vmatprep.subr.bf16.mxu0 %v1296
        %1336 = vmatpush1.bf16.msra.mxu0 %v1295
        %1337 = vmatprep.subr.bf16.mxu0 %v1294
        %1338 = vmatpush1.bf16.msra.mxu0 %v1293
        %1339 = vmatprep.subr.bf16.mxu0 0
        %1340 = vmatpush2.bf16.msra.mxu0 0
        %1341 = vmatprep.subr.bf16.mxu0 0
        %1342 = vmatpush2.bf16.msra.mxu0 0
        %1343 = vmatprep.subr.bf16.mxu0 0
        %1344 = vmatpush2.bf16.msra.mxu0 0
        %1345 = vmatprep.subr.bf16.mxu0 0
        %1346 = vmatpush2.bf16.msra.mxu0 0
        %1347 = vmatprep.subr.bf16.mxu0 0
        %1348 = vmatpush2.bf16.msra.mxu0 0
        %1349 = vmatprep.subr.bf16.mxu0 0
        %1350 = vmatpush2.bf16.msra.mxu0 0
        %1351 = vmatprep.subr.bf16.mxu0 0
        %1352 = vmatpush2.bf16.msra.mxu0 0
        %1353 = vmatprep.subr.bf16.mxu0 0
        %1354 = vmatpush2.bf16.msra.mxu0 0
        %1355 = vmatprep.mubr.bf16.mxu0 0
        %1356 = vmatmul.mubr.bf16.gmra.mxu0 %v1318
        %v1357 = vpop.f32.mrf.mxu0
        %v1358 = vadd.f32 0.0, %v1357
        %v1359 = vpop.f32.mrf.mxu0
        %v1360 = vadd.f32 0.0, %v1359
        %v1361 = vpop.f32.mrf.mxu0
        %v1362 = vadd.f32 0.0, %v1361
        %v1363 = vpop.f32.mrf.mxu0
        %v1364 = vadd.f32 0.0, %v1363
        %1365 = vmatprep.mubr.bf16.mxu0 0
        %1366 = vmatmul.mubr.bf16.gmra.mxu0 %v1321
        %v1367 = vpop.f32.mrf.mxu0
        %v1368 = vadd.f32 0.0, %v1367
        %v1369 = vpop.f32.mrf.mxu0
        %v1370 = vadd.f32 0.0, %v1369
        %v1371 = vpop.f32.mrf.mxu0
        %v1372 = vadd.f32 0.0, %v1371
        %v1373 = vpop.f32.mrf.mxu0
        %v1374 = vadd.f32 0.0, %v1373
        %1375 = vdwg.mxu0
        %v1376 = vadd.f32 %v1222, %v1358
        %v1377 = vadd.f32 %v1223, %v1360
        %v1378 = vadd.f32 %v1224, %v1362
        %v1379 = vadd.f32 %v1225, %v1364
        %v1380 = vadd.f32 %v1226, %v1368
        %v1381 = vadd.f32 %v1227, %v1370
        %v1382 = vadd.f32 %v1228, %v1372
        %v1383 = vadd.f32 %v1229, %v1374
        %v1384 = vld [vmem:[%s164 + $0x10] sm:$0xff]
        %v1385 = vld [vmem:[%s164 + $0x28] sm:$0xff]
        %v1386 = vld [vmem:[%s164 + $0x40] sm:$0xff]
        %v1387 = vld [vmem:[%s164 + $0x58] sm:$0xff]
        %v1388 = vld [vmem:[%s164 + $0x70] sm:$0xff]
        %v1389 = vld [vmem:[%s164 + $0x88] sm:$0xff]
        %v1390 = vld [vmem:[%s164 + $0xa0] sm:$0xff]
        %v1391 = vld [vmem:[%s164 + $0xb8] sm:$0xff]
        %v1392 = vld [vmem:[%s164 + $0xd0] sm:$0xff]
        %v1393 = vld [vmem:[%s164 + $0xe8] sm:$0xff]
        %v1394 = vld [vmem:[%s164 + $0x100] sm:$0xff]
        %v1395 = vld [vmem:[%s164 + $0x118] sm:$0xff]
        %s1396 = scalar_lea.vmem %s1, 128
        %v1397 = vld [vmem:[%s1396] sm:$0xf]
        %v1398 = vld [vmem:[%s1396 + $0x4] sm:$0xf]
        %v1399 = vld [vmem:[%s1396 + $0x8] sm:$0xf]
        %v1400 = vld [vmem:[%s1396 + $0xc] sm:$0xf]
        %v1405 = vunpack.c.l.b16 %v1397
        %v1406 = vunpack.c.l.b16 %v1398
        %v1407 = vunpack.c.l.b16 %v1399
        %v1408 = vunpack.c.l.b16 %v1400
        %v1409 = vpack.c.b16 %v1406, %v1405
        %v1410 = vpack.c.b16 %v1408, %v1407
        %v1423 = vunpack.c.l.b16 %v1384
        %v1424 = vunpack.c.h.b16 %v1384
        %v1425 = vunpack.c.l.b16 %v1385
        %v1426 = vunpack.c.h.b16 %v1385
        %v1427 = vunpack.c.l.b16 %v1386
        %v1428 = vunpack.c.h.b16 %v1386
        %v1429 = vunpack.c.l.b16 %v1387
        %v1430 = vunpack.c.h.b16 %v1387
        %v1431 = vunpack.c.l.b16 %v1388
        %v1432 = vunpack.c.h.b16 %v1388
        %v1433 = vunpack.c.l.b16 %v1389
        %v1434 = vunpack.c.h.b16 %v1389
        %v1435 = vunpack.c.l.b16 %v1390
        %v1436 = vunpack.c.h.b16 %v1390
        %v1437 = vunpack.c.l.b16 %v1391
        %v1438 = vunpack.c.h.b16 %v1391
        %v1439 = vunpack.c.l.b16 %v1392
        %v1440 = vunpack.c.h.b16 %v1392
        %v1441 = vunpack.c.l.b16 %v1393
        %v1442 = vunpack.c.h.b16 %v1393
        %v1443 = vunpack.c.l.b16 %v1394
        %v1444 = vunpack.c.h.b16 %v1394
        %v1445 = vunpack.c.l.b16 %v1395
        %v1446 = vunpack.c.h.b16 %v1395
        %v1447 = vpack.c.b16 %v1425, %v1423
        %v1448 = vpack.c.b16 %v1426, %v1424
        %v1449 = vpack.c.b16 %v1429, %v1427
        %v1450 = vpack.c.b16 %v1430, %v1428
        %v1451 = vpack.c.b16 %v1433, %v1431
        %v1452 = vpack.c.b16 %v1434, %v1432
        %v1453 = vpack.c.b16 %v1437, %v1435
        %v1454 = vpack.c.b16 %v1438, %v1436
        %v1455 = vpack.c.b16 %v1441, %v1439
        %v1456 = vpack.c.b16 %v1442, %v1440
        %v1457 = vpack.c.b16 %v1445, %v1443
        %v1458 = vpack.c.b16 %v1446, %v1444
        %v1472 = vsel %vm271, %v1409, 0
        %v1475 = vsel %vm271, %v1410, 0
        %1477 = vmatprep.subr.bf16.mxu0 0
        %1478 = vmatpush1.bf16.msra.mxu0 0
        %1479 = vmatprep.subr.bf16.mxu0 0
        %1480 = vmatpush1.bf16.msra.mxu0 0
        %1481 = vmatprep.subr.bf16.mxu0 %v1458
        %1482 = vmatpush1.bf16.msra.mxu0 %v1457
        %1483 = vmatprep.subr.bf16.mxu0 %v1456
        %1484 = vmatpush1.bf16.msra.mxu0 %v1455
        %1485 = vmatprep.subr.bf16.mxu0 %v1454
        %1486 = vmatpush1.bf16.msra.mxu0 %v1453
        %1487 = vmatprep.subr.bf16.mxu0 %v1452
        %1488 = vmatpush1.bf16.msra.mxu0 %v1451
        %1489 = vmatprep.subr.bf16.mxu0 %v1450
        %1490 = vmatpush1.bf16.msra.mxu0 %v1449
        %1491 = vmatprep.subr.bf16.mxu0 %v1448
        %1492 = vmatpush1.bf16.msra.mxu0 %v1447
        %1493 = vmatprep.subr.bf16.mxu0 0
        %1494 = vmatpush2.bf16.msra.mxu0 0
        %1495 = vmatprep.subr.bf16.mxu0 0
        %1496 = vmatpush2.bf16.msra.mxu0 0
        %1497 = vmatprep.subr.bf16.mxu0 0
        %1498 = vmatpush2.bf16.msra.mxu0 0
        %1499 = vmatprep.subr.bf16.mxu0 0
        %1500 = vmatpush2.bf16.msra.mxu0 0
        %1501 = vmatprep.subr.bf16.mxu0 0
        %1502 = vmatpush2.bf16.msra.mxu0 0
        %1503 = vmatprep.subr.bf16.mxu0 0
        %1504 = vmatpush2.bf16.msra.mxu0 0
        %1505 = vmatprep.subr.bf16.mxu0 0
        %1506 = vmatpush2.bf16.msra.mxu0 0
        %1507 = vmatprep.subr.bf16.mxu0 0
        %1508 = vmatpush2.bf16.msra.mxu0 0
        %1509 = vmatprep.mubr.bf16.mxu0 0
        %1510 = vmatmul.mubr.bf16.gmra.mxu0 %v1472
        %v1511 = vpop.f32.mrf.mxu0
        %v1512 = vadd.f32 0.0, %v1511
        %v1513 = vpop.f32.mrf.mxu0
        %v1514 = vadd.f32 0.0, %v1513
        %v1515 = vpop.f32.mrf.mxu0
        %v1516 = vadd.f32 0.0, %v1515
        %v1517 = vpop.f32.mrf.mxu0
        %v1518 = vadd.f32 0.0, %v1517
        %1519 = vmatprep.mubr.bf16.mxu0 0
        %1520 = vmatmul.mubr.bf16.gmra.mxu0 %v1475
        %v1521 = vpop.f32.mrf.mxu0
        %v1522 = vadd.f32 0.0, %v1521
        %v1523 = vpop.f32.mrf.mxu0
        %v1524 = vadd.f32 0.0, %v1523
        %v1525 = vpop.f32.mrf.mxu0
        %v1526 = vadd.f32 0.0, %v1525
        %v1527 = vpop.f32.mrf.mxu0
        %v1528 = vadd.f32 0.0, %v1527
        %1529 = vdwg.mxu0
        %v1530 = vadd.f32 %v1376, %v1512
        %v1531 = vadd.f32 %v1377, %v1514
        %v1532 = vadd.f32 %v1378, %v1516
        %v1533 = vadd.f32 %v1379, %v1518
        %v1534 = vadd.f32 %v1380, %v1522
        %v1535 = vadd.f32 %v1381, %v1524
        %v1536 = vadd.f32 %v1382, %v1526
        %v1537 = vadd.f32 %v1383, %v1528
        %v1538 = vld [vmem:[%s2] sm:$0xff]
        %v1539 = vld [vmem:[%s2 + $0x8] sm:$0xff]
        %v1540 = vld [vmem:[%s2 + $0x10] sm:$0xff]
        %v1541 = vld [vmem:[%s2 + $0x18] sm:$0xff]
        %1543 = vset.pattern.permute.xlu0 0
        %1544 = vperm.xlu0 %1543, %v1538
        %v1545 = vpop.permute.xlu0 %1544
        %1548 = vset.pattern.permute.xlu0 0
        %1549 = vperm.xlu0 %1548, %v1539
        %v1550 = vpop.permute.xlu0 %1549
        %1553 = vset.pattern.permute.xlu0 0
        %1554 = vperm.xlu0 %1553, %v1540
        %v1555 = vpop.permute.xlu0 %1554
        %1558 = vset.pattern.permute.xlu0 0
        %1559 = vperm.xlu0 %1558, %v1541
        %v1560 = vpop.permute.xlu0 %1559
        %v1562 = vadd.f32 %v1530, %v1545
        %v1563 = vadd.f32 %v1531, %v1545
        %v1564 = vadd.f32 %v1532, %v1550
        %v1565 = vadd.f32 %v1533, %v1550
        %v1566 = vadd.f32 %v1534, %v1555
        %v1567 = vadd.f32 %v1535, %v1555
        %v1568 = vadd.f32 %v1536, %v1560
        %v1569 = vadd.f32 %v1537, %v1560
        %vm1570 = vcmp.ge.f32.partialorder %v1562, 0.0
        %vm1571 = vcmp.ge.f32.partialorder %v1563, 0.0
        %vm1572 = vcmp.ge.f32.partialorder %v1564, 0.0
        %vm1573 = vcmp.ge.f32.partialorder %v1565, 0.0
        %vm1574 = vcmp.ge.f32.partialorder %v1566, 0.0
        %vm1575 = vcmp.ge.f32.partialorder %v1567, 0.0
        %vm1576 = vcmp.ge.f32.partialorder %v1568, 0.0
        %vm1577 = vcmp.ge.f32.partialorder %v1569, 0.0
        %v1578 = vmul.f32 %v1562, 0.2
        %v1579 = vmul.f32 %v1563, 0.2
        %v1580 = vmul.f32 %v1564, 0.2
        %v1581 = vmul.f32 %v1565, 0.2
        %v1582 = vmul.f32 %v1566, 0.2
        %v1583 = vmul.f32 %v1567, 0.2
        %v1584 = vmul.f32 %v1568, 0.2
        %v1585 = vmul.f32 %v1569, 0.2
        %v1586 = vsel %vm1570, %v1562, %v1578
        %v1587 = vsel %vm1571, %v1563, %v1579
        %v1588 = vsel %vm1572, %v1564, %v1580
        %v1589 = vsel %vm1573, %v1565, %v1581
        %v1590 = vsel %vm1574, %v1566, %v1582
        %v1591 = vsel %vm1575, %v1567, %v1583
        %v1592 = vsel %vm1576, %v1568, %v1584
        %v1593 = vsel %vm1577, %v1569, %v1585
        %v1594 = vpack.c.bf16 %v1588, %v1586
        %v1595 = vpack.c.bf16 %v1589, %v1587
        %v1596 = vpack.c.bf16 %v1592, %v1590
        %v1597 = vpack.c.bf16 %v1593, %v1591
        %v1602 = vunpack.c.l.b16 %v1594
        %v1603 = vunpack.c.l.b16 %v1595
        %v1604 = vunpack.c.h.b16 %v1594
        %v1605 = vunpack.c.h.b16 %v1595
        %v1606 = vunpack.c.l.b16 %v1596
        %v1607 = vunpack.c.l.b16 %v1597
        %v1608 = vunpack.c.h.b16 %v1596
        %v1609 = vunpack.c.h.b16 %v1597
        %v1610 = vpack.c.b16 %v1603, %v1602
        %v1611 = vpack.c.b16 %v1605, %v1604
        %v1612 = vpack.c.b16 %v1607, %v1606
        %v1613 = vpack.c.b16 %v1609, %v1608
        %1618 = vst [vmem:[%s159] sm:$0xff] %v1610
        %1619 = vst [vmem:[%s159 + $0x8] sm:$0xff] %v1611
        %1620 = vst [vmem:[%s159 + $0x10] sm:$0xff] %v1612
        %1621 = vst [vmem:[%s159 + $0x18] sm:$0xff] %v1613
        %s1622 = sand.u32 %s90, 1
        %s1623 = sand.u32 %s90, 1
        %s1624 = smul.addr %s1623, 32
        %s1625 = scalar_lea.vmem [#allocation2], %s1624
        // Predicated region
        $region33: #{a_call__.10} parent=31 // pred_check
          %p1626 = pneg %p100
        $region34: #{a_call__.10} parent=31 // pred_check_branch
          %1628 = sbr.rel (%p1626) target = $region36
        $region35: #{a_call__.10} parent=31 // pred_region
          %s1629 = smul.u32 2, %s14
          %s1630 = smul.addr %s1629, 4
          %s1631 = scalar_lea.vmem %s3, %s1630
          // Predicated region
          $region37: #{a_call__.10} parent=35 // pred_check
            _
          $region38: #{a_call__.10} parent=35 // pred_check_branch
            %1633 = sbr.rel (0) target = $region40
          $region39: #{a_call__.10} parent=35 // pred_region
            // Predicated region
            $region41: #{a_call__.10} parent=39 // pred_check
              _
            $region42: #{a_call__.10} parent=39 // pred_check_branch
              %1635 = sbr.rel (0) target = $region44
            $region43: #{a_call__.10} parent=39 // pred_region
              // Predicated region
              $region56: #{a_call__.10} parent=43 // pred_check
                _
              $region57: #{a_call__.10} parent=43 // pred_check_branch
                %1657 = sbr.rel (0) target = $region59
              $region58: #{a_call__.10} parent=43 // pred_region
                loop: start=0, step=1, limit=1
                $region60: #{a_call__.10} parent=58 // loop_pre_header
                  _
                $region61: #{a_call__.10} parent=58 // loop_header
                  %s1659 = sphi 0, %s1663
                  %p1660 = scmp.ge.s32.totalorder %s1659, 1
                  %s1664 = sphi %s1625, %s1625
                  %s1665 = sphi %s1631, %s1631
                $region62: #{a_call__.10} parent=58 // loop_header_branch
                  %1662 = sbr.rel (%p1660) target = $region66
                $region63: #{a_call__.10} parent=58 // loop_body
                  %v1666 = vld [vmem:[%s1664] sm:$0xff]
                  %1667 = vst [vmem:[%s1665] sm:$0xff] %v1666
                  %v1668 = vld [vmem:[%s1664 + $0x8] sm:$0xff]
                  %1669 = vst [vmem:[%s1665 + $0x10] sm:$0xff] %v1668
                  %v1670 = vld [vmem:[%s1664 + $0x10] sm:$0xff]
                  %1671 = vst [vmem:[%s1665 + $0x20] sm:$0xff] %v1670
                  %v1672 = vld [vmem:[%s1664 + $0x18] sm:$0xff]
                  %1673 = vst [vmem:[%s1665 + $0x30] sm:$0xff] %v1672
                $region64: #{a_call__.10} parent=58 // loop_footer
                  %s1663 = sadd.s32 1, %s1659
                $region65: #{a_call__.10} parent=58 // loop_footer_branch
                  %1658 = sbr.rel target = $region61
                $region66: #{a_call__.10} parent=58 // loop_exit
                  _
              $region59: #{a_call__.10} parent=43 // pred_fallthru
                _
              // Predicated region
              $region67: #{a_call__.10} parent=43 // pred_check
                _
              $region68: #{a_call__.10} parent=43 // pred_check_branch
                %1675 = sbr.rel target = $region70
              $region69: #{a_call__.10} parent=43 // pred_region
                _
              $region70: #{a_call__.10} parent=43 // pred_fallthru
                _
            $region44: #{a_call__.10} parent=39 // pred_fallthru
              _
            // Predicated region
            $region45: #{a_call__.10} parent=39 // pred_check
              _
            $region46: #{a_call__.10} parent=39 // pred_check_branch
              %1637 = sbr.rel target = $region48
            $region47: #{a_call__.10} parent=39 // pred_region
              %s1639 = ssub.s32 256, 1
              loop: start=0, step=1, limit=1
              $region49: #{a_call__.10} parent=47 // loop_pre_header
                _
              $region50: #{a_call__.10} parent=47 // loop_header
                %s1641 = sphi 0, %s1645
                %p1642 = scmp.ge.s32.totalorder %s1641, 1
                %s1646 = sphi %s1625, %s1625
                %s1647 = sphi %s1631, %s1631
              $region51: #{a_call__.10} parent=47 // loop_header_branch
                %1644 = sbr.rel (%p1642) target = $region55
              $region52: #{a_call__.10} parent=47 // loop_body
                %v1648 = vld [vmem:[%s1646] sm:%s1639]
                %1649 = vst [vmem:[%s1647] sm:%s1639] %v1648
                %v1650 = vld [vmem:[%s1646 + $0x8] sm:%s1639]
                %1651 = vst [vmem:[%s1647 + $0x10] sm:%s1639] %v1650
                %v1652 = vld [vmem:[%s1646 + $0x10] sm:%s1639]
                %1653 = vst [vmem:[%s1647 + $0x20] sm:%s1639] %v1652
                %v1654 = vld [vmem:[%s1646 + $0x18] sm:%s1639]
                %1655 = vst [vmem:[%s1647 + $0x30] sm:%s1639] %v1654
              $region53: #{a_call__.10} parent=47 // loop_footer
                %s1645 = sadd.s32 1, %s1641
              $region54: #{a_call__.10} parent=47 // loop_footer_branch
                %1640 = sbr.rel target = $region50
              $region55: #{a_call__.10} parent=47 // loop_exit
                _
            $region48: #{a_call__.10} parent=39 // pred_fallthru
              _
          $region40: #{a_call__.10} parent=35 // pred_fallthru
            _
          %1676 = vnop
        $region36: #{a_call__.10} parent=31 // pred_fallthru
          _
      $region32: #{a_call__.10} parent=5 // pred_fallthru
        _
      %p1677 = scmp.le.s32.totalorder 2, %s9
      // Predicated region
      $region71: #{a_call__.10} parent=5 // pred_check
        %p1678 = pneg %p1677
      $region72: #{a_call__.10} parent=5 // pred_check_branch
        %1680 = sbr.rel (%p1678) target = $region74
      $region73: #{a_call__.10} parent=5 // pred_region
        %s1681 = ssub.s32 %s9, 2
        // Predicated region
        $region75: #{a_call__.10} parent=73 // pred_check
          %p1682 = pneg %p106
        $region76: #{a_call__.10} parent=73 // pred_check_branch
          %1684 = sbr.rel (%p1682) target = $region78
        $region77: #{a_call__.10} parent=73 // pred_region
          %s1685 = sand.u32 %s91, 1
          %s1686 = sand.u32 %s91, 1
          %s1687 = smul.addr %s1686, 32
          %s1688 = scalar_lea.vmem [#allocation2], %s1687
        $region78: #{a_call__.10} parent=73 // pred_fallthru
          _
      $region74: #{a_call__.10} parent=5 // pred_fallthru
        _
    $region6: #{a_call__.10} parent=1 // loop_footer
      %s13 = sadd.s32 1, %s9
    $region7: #{a_call__.10} parent=1 // loop_footer_branch
      %8 = sbr.rel target = $region3
    $region8: #{a_call__.10} parent=1 // loop_exit
      _

// kernel: a_call__.11
$region0: #{a_call__.11}
  #allocation0 [shape = 'u32[]', space=smem, size = 0x4, offset = 0x4, fixed_abs, tag = 'smem constant byte address 0x4 - core index']
  #allocation1 [shape = 'u32[144,128]{1,0:T(1,128)}', space=vmem, size = 0x12000, scoped, tag = 'internal scratch']
  %s0 = inlined_call_operand.vmem [shape: bf16[2,2,96,640], index: 0, kind: input, shape index: {}]
  %s1 = inlined_call_operand.vmem [shape: bf16[9,32,96], index: 1, kind: input, shape index: {}]
  %s2 = inlined_call_operand.vmem [shape: f32[32,1], index: 2, kind: input, shape index: {}]
  %s3 = inlined_call_operand.vmem [shape: bf16[32,256], index: 3, kind: output, shape index: {}]
  %s4 = sld [smem:[#allocation0]]
  $region82: #{a_call__.11} parent=0
    _
  %s6 = ssub.s32 1, %s4
  %s7 = scalar_select 0, %s6, %s4
  $region1: #{a_call__.11} parent=0
    #allocation2 [shape = 'u8[16384]{0}', space=vmem, size = 0x4000, scoped, tag = 'output window, operand 0']
    loop: start=0, step=1, limit=4
    $region2: #{a_call__.11} parent=1 // loop_pre_header
      _
    $region3: #{a_call__.11} parent=1 // loop_header
      %s9 = sphi 0, %s13
      %p10 = scmp.ge.s32.totalorder %s9, 4
      %s19 = sphi 0, %s21
      %s22 = sphi 0, %s19
      %s23 = sphi 0, %s22
      %s39 = sphi 0, %s23
      %s43 = sphi 0, %s43
      %s45 = sphi 0, %s43
      %s46 = sphi 0, %s45
      %s60 = sphi 0, %s46
      %s64 = sphi 0, %s64
      %s66 = sphi 0, %s64
      %s67 = sphi 0, %s66
      %s81 = sphi 0, %s67
      %s87 = sphi 0, %s89
      %s90 = sphi 0, %s87
      %s91 = sphi 0, %s90
      %s107 = sphi 0, %s91
    $region4: #{a_call__.11} parent=1 // loop_header_branch
      %12 = sbr.rel (%p10) target = $region8
    $region5: #{a_call__.11} parent=1 // loop_body
      %s14 = ssub.s32 %s9, 1
      %s15 = ssub.s32 %s9, 2
      %s16 = sadd.s32 %s9, 1
      %s17 = ssub.s32 %s9, %s16
      %p18 = scmp.eq.s32.totalorder %s17, 0
      %s20 = sadd.s32 %s19, 1
      %s21 = scalar_select %p18, %s19, %s20
      %p24 = pneg %p18
      %p25 = scmp.eq.s32.totalorder %s9, 1
      %p26 = por %p24, %p25
      %p27 = scmp.ne.s32.totalorder %s19, %s22
      %p28 = scmp.eq.s32.totalorder %s9, 0
      %p29 = por %p27, %p28
      %p30 = scmp.ne.s32.totalorder %s19, %s22
      %p31 = scmp.eq.s32.totalorder %s14, 1
      %p32 = por %p30, %p31
      %p33 = scmp.ne.s32.totalorder %s22, %s23
      %p34 = scmp.eq.s32.totalorder %s14, 0
      %p35 = por %p33, %p34
      %p36 = scmp.ne.s32.totalorder %s22, %s23
      %p37 = scmp.eq.s32.totalorder %s15, 1
      %p38 = por %p36, %p37
      %p40 = scmp.ne.s32.totalorder %s23, %s39
      %p41 = scmp.eq.s32.totalorder %s15, 0
      %p42 = por %p40, %p41
      %s44 = sadd.s32 %s43, 1
      %p47 = scmp.eq.s32.totalorder %s9, 1
      %p48 = scmp.ne.s32.totalorder %s43, %s45
      %p49 = scmp.eq.s32.totalorder %s9, 0
      %p50 = por %p48, %p49
      %p51 = scmp.ne.s32.totalorder %s43, %s45
      %p52 = scmp.eq.s32.totalorder %s14, 1
      %p53 = por %p51, %p52
      %p54 = scmp.ne.s32.totalorder %s45, %s46
      %p55 = scmp.eq.s32.totalorder %s14, 0
      %p56 = por %p54, %p55
      %p57 = scmp.ne.s32.totalorder %s45, %s46
      %p58 = scmp.eq.s32.totalorder %s15, 1
      %p59 = por %p57, %p58
      %p61 = scmp.ne.s32.totalorder %s46, %s60
      %p62 = scmp.eq.s32.totalorder %s15, 0
      %p63 = por %p61, %p62
      %s65 = sadd.s32 %s64, 1
      %p68 = scmp.eq.s32.totalorder %s9, 1
      %p69 = scmp.ne.s32.totalorder %s64, %s66
      %p70 = scmp.eq.s32.totalorder %s9, 0
      %p71 = por %p69, %p70
      %p72 = scmp.ne.s32.totalorder %s64, %s66
      %p73 = scmp.eq.s32.totalorder %s14, 1
      %p74 = por %p72, %p73
      %p75 = scmp.ne.s32.totalorder %s66, %s67
      %p76 = scmp.eq.s32.totalorder %s14, 0
      %p77 = por %p75, %p76
      %p78 = scmp.ne.s32.totalorder %s66, %s67
      %p79 = scmp.eq.s32.totalorder %s15, 1
      %p80 = por %p78, %p79
      %p82 = scmp.ne.s32.totalorder %s67, %s81
      %p83 = scmp.eq.s32.totalorder %s15, 0
      %p84 = por %p82, %p83
      %s85 = ssub.s32 %s9, %s16
      %p86 = scmp.eq.s32.totalorder %s85, 0
      %s88 = sadd.s32 %s87, 1
      %s89 = scalar_select %p86, %s87, %s88
      %p92 = pneg %p86
      %p93 = scmp.eq.s32.totalorder %s9, 1
      %p94 = por %p92, %p93
      %p95 = scmp.ne.s32.totalorder %s87, %s90
      %p96 = scmp.eq.s32.totalorder %s9, 0
      %p97 = por %p95, %p96
      %p98 = scmp.ne.s32.totalorder %s87, %s90
      %p99 = scmp.eq.s32.totalorder %s14, 1
      %p100 = por %p98, %p99
      %p101 = scmp.ne.s32.totalorder %s90, %s91
      %p102 = scmp.eq.s32.totalorder %s14, 0
      %p103 = por %p101, %p102
      %p104 = scmp.ne.s32.totalorder %s90, %s91
      %p105 = scmp.eq.s32.totalorder %s15, 1
      %p106 = por %p104, %p105
      %p108 = scmp.ne.s32.totalorder %s91, %s107
      %p109 = scmp.eq.s32.totalorder %s15, 0
      %p110 = por %p108, %p109
      %p111 = scmp.le.s32.totalorder 1, %s9
      %p112 = scmp.lt.s32.totalorder %s9, 3
      %p113 = pnand %p111, %p112
      %p114 = pneg %p113
      // Predicated region
      $region9: #{a_call__.11} parent=5 // pred_check
        _
      $region10: #{a_call__.11} parent=5 // pred_check_branch
        %116 = sbr.rel (%p113) target = $region12
      $region11: #{a_call__.11} parent=5 // pred_region
        %s117 = ssub.s32 %s9, 1
        // Predicated region
        $region13: #{a_call__.11} parent=11 // pred_check
          %p118 = pneg %p56
        $region14: #{a_call__.11} parent=11 // pred_check_branch
          %120 = sbr.rel (%p118) target = $region16
        $region15: #{a_call__.11} parent=11 // pred_region
          _
        $region16: #{a_call__.11} parent=11 // pred_fallthru
          _
        // Predicated region
        $region17: #{a_call__.11} parent=11 // pred_check
          %p121 = pneg %p77
        $region18: #{a_call__.11} parent=11 // pred_check_branch
          %123 = sbr.rel (%p121) target = $region20
        $region19: #{a_call__.11} parent=11 // pred_region
          _
        $region20: #{a_call__.11} parent=11 // pred_fallthru
          _
      $region12: #{a_call__.11} parent=5 // pred_fallthru
        _
      %p124 = scmp.lt.s32.totalorder %s9, 2
      // Predicated region
      $region21: #{a_call__.11} parent=5 // pred_check
        %p125 = pneg %p124
      $region22: #{a_call__.11} parent=5 // pred_check_branch
        %127 = sbr.rel (%p125) target = $region24
      $region23: #{a_call__.11} parent=5 // pred_region
        // Predicated region
        $region25: #{a_call__.11} parent=23 // pred_check
          %p128 = pneg %p29
        $region26: #{a_call__.11} parent=23 // pred_check_branch
          %130 = sbr.rel (%p128) target = $region28
        $region27: #{a_call__.11} parent=23 // pred_region
          %p131 = scmp.lt.s32.totalorder %s9, 1
          %s132 = scalar_select %p131, %s9, 1
          %s133 = smul.addr %s132, 120
          %s134 = smul.addr %s133, 4
          %s135 = scalar_lea.vmem %s0, %s134
        $region28: #{a_call__.11} parent=23 // pred_fallthru
          _
      $region24: #{a_call__.11} parent=5 // pred_fallthru
        _
      %p136 = scmp.le.s32.totalorder 1, %s9
      %p137 = scmp.lt.s32.totalorder %s9, 3
      %p138 = pnand %p136, %p137
      %p139 = pneg %p138
      // Predicated region
      $region29: #{a_call__.11} parent=5 // pred_check
        _
      $region30: #{a_call__.11} parent=5 // pred_check_branch
        %141 = sbr.rel (%p138) target = $region32
      $region31: #{a_call__.11} parent=5 // pred_region
        %s142 = ssub.s32 %s9, 1
        %p143 = scmp.lt.s32.totalorder %s14, 1
        %s144 = scalar_select %p143, %s14, 1
        %s145 = smul.addr %s144, 120
        %s146 = smul.addr %s145, 4
        %s147 = scalar_lea.vmem %s0, %s146
        %p148 = pneg %p35
        %p149 = pneg %p32
        %p150 = pneg %p56
        %p151 = pneg %p53
        %p152 = pneg %p77
        %p153 = pneg %p74
        %p154 = pneg %p103
        %p155 = pneg %p100
        %s156 = sand.u32 %s90, 1
        %s157 = sand.u32 %s90, 1
        %s158 = smul.addr %s157, 16
        %s159 = scalar_lea.vmem [#allocation2], %s158
        %p160 = scmp.lt.s32.totalorder %s14, 1
        %s161 = scalar_select %p160, %s14, 1
        %s162 = smul.addr %s161, 120
        %s163 = smul.addr %s162, 4
        %s164 = scalar_lea.vmem %s0, %s163
        %v166 = vld [vmem:[%s164] sm:$0xf]
        %v167 = vld [vmem:[%s164 + $0x14] sm:$0xf]
        %v168 = vld [vmem:[%s164 + $0x28] sm:$0xf]
        %v169 = vld [vmem:[%s164 + $0x3c] sm:$0xf]
        %v170 = vld [vmem:[%s164 + $0x50] sm:$0xf]
        %v171 = vld [vmem:[%s164 + $0x64] sm:$0xf]
        %v172 = vld [vmem:[%s164 + $0x78] sm:$0xf]
        %v173 = vld [vmem:[%s164 + $0x8c] sm:$0xf]
        %v174 = vld [vmem:[%s164 + $0xa0] sm:$0xf]
        %v175 = vld [vmem:[%s164 + $0xb4] sm:$0xf]
        %v176 = vld [vmem:[%s164 + $0xc8] sm:$0xf]
        %v177 = vld [vmem:[%s164 + $0xdc] sm:$0xf]
        %v178 = vld [vmem:[%s1] sm:$0xf]
        %v179 = vld [vmem:[%s1 + $0x4] sm:$0xf]
        %v180 = vld [vmem:[%s1 + $0x8] sm:$0xf]
        %v181 = vld [vmem:[%s1 + $0xc] sm:$0xf]
        %s182 = scalar_lea.vmem %s164, 240
        %v183 = vld [vmem:[%s182] sm:$0xf]
        %v184 = vld [vmem:[%s182 + $0x14] sm:$0xf]
        %v185 = vld [vmem:[%s182 + $0x28] sm:$0xf]
        %v186 = vld [vmem:[%s182 + $0x3c] sm:$0xf]
        %v187 = vld [vmem:[%s182 + $0x50] sm:$0xf]
        %v188 = vld [vmem:[%s182 + $0x64] sm:$0xf]
        %v189 = vld [vmem:[%s182 + $0x78] sm:$0xf]
        %v190 = vld [vmem:[%s182 + $0x8c] sm:$0xf]
        %v191 = vld [vmem:[%s182 + $0xa0] sm:$0xf]
        %v192 = vld [vmem:[%s182 + $0xb4] sm:$0xf]
        %v193 = vld [vmem:[%s182 + $0xc8] sm:$0xf]
        %v194 = vld [vmem:[%s182 + $0xdc] sm:$0xf]
        %s195 = scalar_lea.vmem %s1, 16
        %v196 = vld [vmem:[%s195] sm:$0xf]
        %v197 = vld [vmem:[%s195 + $0x4] sm:$0xf]
        %v198 = vld [vmem:[%s195 + $0x8] sm:$0xf]
        %v199 = vld [vmem:[%s195 + $0xc] sm:$0xf]
        %v204 = vunpack.c.l.b16 %v196
        %v205 = vunpack.c.l.b16 %v197
        %v206 = vunpack.c.l.b16 %v198
        %v207 = vunpack.c.l.b16 %v199
        %v208 = vpack.c.b16 %v205, %v204
        %v209 = vpack.c.b16 %v207, %v206
        %v222 = vunpack.c.l.b16 %v183
        %v223 = vunpack.c.l.b16 %v184
        %v224 = vunpack.c.l.b16 %v185
        %v225 = vunpack.c.l.b16 %v186
        %v226 = vunpack.c.l.b16 %v187
        %v227 = vunpack.c.l.b16 %v188
        %v228 = vunpack.c.l.b16 %v189
        %v229 = vunpack.c.l.b16 %v190
        %v230 = vunpack.c.l.b16 %v191
        %v231 = vunpack.c.l.b16 %v192
        %v232 = vunpack.c.l.b16 %v193
        %v233 = vunpack.c.l.b16 %v194
        %v234 = vpack.c.b16 %v223, %v222
        %v235 = vpack.c.b16 %v225, %v224
        %v236 = vpack.c.b16 %v227, %v226
        %v237 = vpack.c.b16 %v229, %v228
        %v238 = vpack.c.b16 %v231, %v230
        %v239 = vpack.c.b16 %v233, %v232
        %vm246 = vcmask 785408
        %v248 = vsel %vm246, %v208, 0
        %v251 = vsel %vm246, %v209, 0
        %253 = vmatprep.subr.bf16.mxu0 0
        %254 = vmatpush1.bf16.msra.mxu0 0
        %255 = vmatprep.subr.bf16.mxu0 0
        %256 = vmatpush1.bf16.msra.mxu0 0
        %257 = vmatprep.subr.bf16.mxu0 0
        %258 = vmatpush1.bf16.msra.mxu0 %v239
        %259 = vmatprep.subr.bf16.mxu0 0
        %260 = vmatpush1.bf16.msra.mxu0 %v238
        %261 = vmatprep.subr.bf16.mxu0 0
        %262 = vmatpush1.bf16.msra.mxu0 %v237
        %263 = vmatprep.subr.bf16.mxu0 0
        %264 = vmatpush1.bf16.msra.mxu0 %v236
        %265 = vmatprep.subr.bf16.mxu0 0
        %266 = vmatpush1.bf16.msra.mxu0 %v235
        %267 = vmatprep.subr.bf16.mxu0 0
        %268 = vmatpush1.bf16.msra.mxu0 %v234
        %269 = vmatprep.subr.bf16.mxu0 0
        %270 = vmatpush2.bf16.msra.mxu0 0
        %271 = vmatprep.subr.bf16.mxu0 0
        %272 = vmatpush2.bf16.msra.mxu0 0
        %273 = vmatprep.subr.bf16.mxu0 0
        %274 = vmatpush2.bf16.msra.mxu0 0
        %275 = vmatprep.subr.bf16.mxu0 0
        %276 = vmatpush2.bf16.msra.mxu0 0
        %277 = vmatprep.subr.bf16.mxu0 0
        %278 = vmatpush2.bf16.msra.mxu0 0
        %279 = vmatprep.subr.bf16.mxu0 0
        %280 = vmatpush2.bf16.msra.mxu0 0
        %281 = vmatprep.subr.bf16.mxu0 0
        %282 = vmatpush2.bf16.msra.mxu0 0
        %283 = vmatprep.subr.bf16.mxu0 0
        %284 = vmatpush2.bf16.msra.mxu0 0
        %285 = vmatprep.mubr.bf16.mxu0 0
        %286 = vmatmul.mubr.bf16.gmra.mxu0 %v248
        %v287 = vpop.f32.mrf.mxu0
        %v288 = vadd.f32 0.0, %v287
        %v289 = vpop.f32.mrf.mxu0
        %v290 = vpop.f32.mrf.mxu0
        %v291 = vadd.f32 0.0, %v290
        %v292 = vpop.f32.mrf.mxu0
        %293 = vmatprep.mubr.bf16.mxu0 0
        %294 = vmatmul.mubr.bf16.gmra.mxu0 %v251
        %v295 = vpop.f32.mrf.mxu0
        %v296 = vadd.f32 0.0, %v295
        %v297 = vpop.f32.mrf.mxu0
        %v298 = vpop.f32.mrf.mxu0
        %v299 = vadd.f32 0.0, %v298
        %v300 = vpop.f32.mrf.mxu0
        %301 = vdwg.mxu0
        %v306 = vunpack.c.l.b16 %v178
        %v307 = vunpack.c.l.b16 %v179
        %v308 = vunpack.c.l.b16 %v180
        %v309 = vunpack.c.l.b16 %v181
        %v310 = vpack.c.b16 %v307, %v306
        %v311 = vpack.c.b16 %v309, %v308
        %v324 = vunpack.c.l.b16 %v166
        %v325 = vunpack.c.l.b16 %v167
        %v326 = vunpack.c.l.b16 %v168
        %v327 = vunpack.c.l.b16 %v169
        %v328 = vunpack.c.l.b16 %v170
        %v329 = vunpack.c.l.b16 %v171
        %v330 = vunpack.c.l.b16 %v172
        %v331 = vunpack.c.l.b16 %v173
        %v332 = vunpack.c.l.b16 %v174
        %v333 = vunpack.c.l.b16 %v175
        %v334 = vunpack.c.l.b16 %v176
        %v335 = vunpack.c.l.b16 %v177
        %v336 = vpack.c.b16 %v325, %v324
        %v337 = vpack.c.b16 %v327, %v326
        %v338 = vpack.c.b16 %v329, %v328
        %v339 = vpack.c.b16 %v331, %v330
        %v340 = vpack.c.b16 %v333, %v332
        %v341 = vpack.c.b16 %v335, %v334
        %v349 = vsel %vm246, %v310, 0
        %v352 = vsel %vm246, %v311, 0
        %354 = vmatprep.subr.bf16.mxu0 0
        %355 = vmatpush1.bf16.msra.mxu0 0
        %356 = vmatprep.subr.bf16.mxu0 0
        %357 = vmatpush1.bf16.msra.mxu0 0
        %358 = vmatprep.subr.bf16.mxu0 0
        %359 = vmatpush1.bf16.msra.mxu0 %v341
        %360 = vmatprep.subr.bf16.mxu0 0
        %361 = vmatpush1.bf16.msra.mxu0 %v340
        %362 = vmatprep.subr.bf16.mxu0 0
        %363 = vmatpush1.bf16.msra.mxu0 %v339
        %364 = vmatprep.subr.bf16.mxu0 0
        %365 = vmatpush1.bf16.msra.mxu0 %v338
        %366 = vmatprep.subr.bf16.mxu0 0
        %367 = vmatpush1.bf16.msra.mxu0 %v337
        %368 = vmatprep.subr.bf16.mxu0 0
        %369 = vmatpush1.bf16.msra.mxu0 %v336
        %370 = vmatprep.subr.bf16.mxu0 0
        %371 = vmatpush2.bf16.msra.mxu0 0
        %372 = vmatprep.subr.bf16.mxu0 0
        %373 = vmatpush2.bf16.msra.mxu0 0
        %374 = vmatprep.subr.bf16.mxu0 0
        %375 = vmatpush2.bf16.msra.mxu0 0
        %376 = vmatprep.subr.bf16.mxu0 0
        %377 = vmatpush2.bf16.msra.mxu0 0
        %378 = vmatprep.subr.bf16.mxu0 0
        %379 = vmatpush2.bf16.msra.mxu0 0
        %380 = vmatprep.subr.bf16.mxu0 0
        %381 = vmatpush2.bf16.msra.mxu0 0
        %382 = vmatprep.subr.bf16.mxu0 0
        %383 = vmatpush2.bf16.msra.mxu0 0
        %384 = vmatprep.subr.bf16.mxu0 0
        %385 = vmatpush2.bf16.msra.mxu0 0
        %386 = vmatprep.mubr.bf16.mxu0 0
        %387 = vmatmul.mubr.bf16.gmra.mxu0 %v349
        %v388 = vpop.f32.mrf.mxu0
        %v389 = vadd.f32 %v288, %v388
        %v390 = vpop.f32.mrf.mxu0
        %v391 = vpop.f32.mrf.mxu0
        %v392 = vadd.f32 %v291, %v391
        %v393 = vpop.f32.mrf.mxu0
        %394 = vmatprep.mubr.bf16.mxu0 0
        %395 = vmatmul.mubr.bf16.gmra.mxu0 %v352
        %v396 = vpop.f32.mrf.mxu0
        %v397 = vadd.f32 %v296, %v396
        %v398 = vpop.f32.mrf.mxu0
        %v399 = vpop.f32.mrf.mxu0
        %v400 = vadd.f32 %v299, %v399
        %v401 = vpop.f32.mrf.mxu0
        %402 = vdwg.mxu0
        %v403 = vld [vmem:[%s164 + $0x4] sm:$0xf]
        %v404 = vld [vmem:[%s164 + $0x18] sm:$0xf]
        %v405 = vld [vmem:[%s164 + $0x2c] sm:$0xf]
        %v406 = vld [vmem:[%s164 + $0x40] sm:$0xf]
        %v407 = vld [vmem:[%s164 + $0x54] sm:$0xf]
        %v408 = vld [vmem:[%s164 + $0x68] sm:$0xf]
        %v409 = vld [vmem:[%s164 + $0x7c] sm:$0xf]
        %v410 = vld [vmem:[%s164 + $0x90] sm:$0xf]
        %v411 = vld [vmem:[%s164 + $0xa4] sm:$0xf]
        %v412 = vld [vmem:[%s164 + $0xb8] sm:$0xf]
        %v413 = vld [vmem:[%s164 + $0xcc] sm:$0xf]
        %v414 = vld [vmem:[%s164 + $0xe0] sm:$0xf]
        %s415 = scalar_lea.vmem %s1, 32
        %v416 = vld [vmem:[%s415] sm:$0xf]
        %v417 = vld [vmem:[%s415 + $0x4] sm:$0xf]
        %v418 = vld [vmem:[%s415 + $0x8] sm:$0xf]
        %v419 = vld [vmem:[%s415 + $0xc] sm:$0xf]
        %v424 = vunpack.c.l.b16 %v416
        %v425 = vunpack.c.l.b16 %v417
        %v426 = vunpack.c.l.b16 %v418
        %v427 = vunpack.c.l.b16 %v419
        %v428 = vpack.c.b16 %v425, %v424
        %v429 = vpack.c.b16 %v427, %v426
        %v442 = vunpack.c.l.b16 %v403
        %v443 = vunpack.c.l.b16 %v404
        %v444 = vunpack.c.l.b16 %v405
        %v445 = vunpack.c.l.b16 %v406
        %v446 = vunpack.c.l.b16 %v407
        %v447 = vunpack.c.l.b16 %v408
        %v448 = vunpack.c.l.b16 %v409
        %v449 = vunpack.c.l.b16 %v410
        %v450 = vunpack.c.l.b16 %v411
        %v451 = vunpack.c.l.b16 %v412
        %v452 = vunpack.c.l.b16 %v413
        %v453 = vunpack.c.l.b16 %v414
        %v454 = vpack.c.b16 %v443, %v442
        %v455 = vpack.c.b16 %v445, %v444
        %v456 = vpack.c.b16 %v447, %v446
        %v457 = vpack.c.b16 %v449, %v448
        %v458 = vpack.c.b16 %v451, %v450
        %v459 = vpack.c.b16 %v453, %v452
        %v467 = vsel %vm246, %v428, 0
        %v470 = vsel %vm246, %v429, 0
        %472 = vmatprep.subr.bf16.mxu0 0
        %473 = vmatpush1.bf16.msra.mxu0 0
        %474 = vmatprep.subr.bf16.mxu0 0
        %475 = vmatpush1.bf16.msra.mxu0 0
        %476 = vmatprep.subr.bf16.mxu0 0
        %477 = vmatpush1.bf16.msra.mxu0 %v459
        %478 = vmatprep.subr.bf16.mxu0 0
        %479 = vmatpush1.bf16.msra.mxu0 %v458
        %480 = vmatprep.subr.bf16.mxu0 0
        %481 = vmatpush1.bf16.msra.mxu0 %v457
        %482 = vmatprep.subr.bf16.mxu0 0
        %483 = vmatpush1.bf16.msra.mxu0 %v456
        %484 = vmatprep.subr.bf16.mxu0 0
        %485 = vmatpush1.bf16.msra.mxu0 %v455
        %486 = vmatprep.subr.bf16.mxu0 0
        %487 = vmatpush1.bf16.msra.mxu0 %v454
        %488 = vmatprep.subr.bf16.mxu0 0
        %489 = vmatpush2.bf16.msra.mxu0 0
        %490 = vmatprep.subr.bf16.mxu0 0
        %491 = vmatpush2.bf16.msra.mxu0 0
        %492 = vmatprep.subr.bf16.mxu0 0
        %493 = vmatpush2.bf16.msra.mxu0 0
        %494 = vmatprep.subr.bf16.mxu0 0
        %495 = vmatpush2.bf16.msra.mxu0 0
        %496 = vmatprep.subr.bf16.mxu0 0
        %497 = vmatpush2.bf16.msra.mxu0 0
        %498 = vmatprep.subr.bf16.mxu0 0
        %499 = vmatpush2.bf16.msra.mxu0 0
        %500 = vmatprep.subr.bf16.mxu0 0
        %501 = vmatpush2.bf16.msra.mxu0 0
        %502 = vmatprep.subr.bf16.mxu0 0
        %503 = vmatpush2.bf16.msra.mxu0 0
        %504 = vmatprep.mubr.bf16.mxu0 0
        %505 = vmatmul.mubr.bf16.gmra.mxu0 %v467
        %v506 = vpop.f32.mrf.mxu0
        %v507 = vadd.f32 0.0, %v506
        %v508 = vpop.f32.mrf.mxu0
        %v509 = vpop.f32.mrf.mxu0
        %v510 = vadd.f32 0.0, %v509
        %v511 = vpop.f32.mrf.mxu0
        %512 = vmatprep.mubr.bf16.mxu0 0
        %513 = vmatmul.mubr.bf16.gmra.mxu0 %v470
        %v514 = vpop.f32.mrf.mxu0
        %v515 = vadd.f32 0.0, %v514
        %v516 = vpop.f32.mrf.mxu0
        %v517 = vpop.f32.mrf.mxu0
        %v518 = vadd.f32 0.0, %v517
        %v519 = vpop.f32.mrf.mxu0
        %520 = vdwg.mxu0
        %v521 = vadd.f32 %v389, %v507
        %v522 = vadd.f32 %v392, %v510
        %v523 = vadd.f32 %v397, %v515
        %v524 = vadd.f32 %v400, %v518
        %v525 = vld [vmem:[%s182 + $0x4] sm:$0xf]
        %v526 = vld [vmem:[%s182 + $0x18] sm:$0xf]
        %v527 = vld [vmem:[%s182 + $0x2c] sm:$0xf]
        %v528 = vld [vmem:[%s182 + $0x40] sm:$0xf]
        %v529 = vld [vmem:[%s182 + $0x54] sm:$0xf]
        %v530 = vld [vmem:[%s182 + $0x68] sm:$0xf]
        %v531 = vld [vmem:[%s182 + $0x7c] sm:$0xf]
        %v532 = vld [vmem:[%s182 + $0x90] sm:$0xf]
        %v533 = vld [vmem:[%s182 + $0xa4] sm:$0xf]
        %v534 = vld [vmem:[%s182 + $0xb8] sm:$0xf]
        %v535 = vld [vmem:[%s182 + $0xcc] sm:$0xf]
        %v536 = vld [vmem:[%s182 + $0xe0] sm:$0xf]
        %s537 = scalar_lea.vmem %s1, 48
        %v538 = vld [vmem:[%s537] sm:$0xf]
        %v539 = vld [vmem:[%s537 + $0x4] sm:$0xf]
        %v540 = vld [vmem:[%s537 + $0x8] sm:$0xf]
        %v541 = vld [vmem:[%s537 + $0xc] sm:$0xf]
        %v546 = vunpack.c.l.b16 %v538
        %v547 = vunpack.c.l.b16 %v539
        %v548 = vunpack.c.l.b16 %v540
        %v549 = vunpack.c.l.b16 %v541
        %v550 = vpack.c.b16 %v547, %v546
        %v551 = vpack.c.b16 %v549, %v548
        %v564 = vunpack.c.l.b16 %v525
        %v565 = vunpack.c.l.b16 %v526
        %v566 = vunpack.c.l.b16 %v527
        %v567 = vunpack.c.l.b16 %v528
        %v568 = vunpack.c.l.b16 %v529
        %v569 = vunpack.c.l.b16 %v530
        %v570 = vunpack.c.l.b16 %v531
        %v571 = vunpack.c.l.b16 %v532
        %v572 = vunpack.c.l.b16 %v533
        %v573 = vunpack.c.l.b16 %v534
        %v574 = vunpack.c.l.b16 %v535
        %v575 = vunpack.c.l.b16 %v536
        %v576 = vpack.c.b16 %v565, %v564
        %v577 = vpack.c.b16 %v567, %v566
        %v578 = vpack.c.b16 %v569, %v568
        %v579 = vpack.c.b16 %v571, %v570
        %v580 = vpack.c.b16 %v573, %v572
        %v581 = vpack.c.b16 %v575, %v574
        %v589 = vsel %vm246, %v550, 0
        %v592 = vsel %vm246, %v551, 0
        %594 = vmatprep.subr.bf16.mxu0 0
        %595 = vmatpush1.bf16.msra.mxu0 0
        %596 = vmatprep.subr.bf16.mxu0 0
        %597 = vmatpush1.bf16.msra.mxu0 0
        %598 = vmatprep.subr.bf16.mxu0 0
        %599 = vmatpush1.bf16.msra.mxu0 %v581
        %600 = vmatprep.subr.bf16.mxu0 0
        %601 = vmatpush1.bf16.msra.mxu0 %v580
        %602 = vmatprep.subr.bf16.mxu0 0
        %603 = vmatpush1.bf16.msra.mxu0 %v579
        %604 = vmatprep.subr.bf16.mxu0 0
        %605 = vmatpush1.bf16.msra.mxu0 %v578
        %606 = vmatprep.subr.bf16.mxu0 0
        %607 = vmatpush1.bf16.msra.mxu0 %v577
        %608 = vmatprep.subr.bf16.mxu0 0
        %609 = vmatpush1.bf16.msra.mxu0 %v576
        %610 = vmatprep.subr.bf16.mxu0 0
        %611 = vmatpush2.bf16.msra.mxu0 0
        %612 = vmatprep.subr.bf16.mxu0 0
        %613 = vmatpush2.bf16.msra.mxu0 0
        %614 = vmatprep.subr.bf16.mxu0 0
        %615 = vmatpush2.bf16.msra.mxu0 0
        %616 = vmatprep.subr.bf16.mxu0 0
        %617 = vmatpush2.bf16.msra.mxu0 0
        %618 = vmatprep.subr.bf16.mxu0 0
        %619 = vmatpush2.bf16.msra.mxu0 0
        %620 = vmatprep.subr.bf16.mxu0 0
        %621 = vmatpush2.bf16.msra.mxu0 0
        %622 = vmatprep.subr.bf16.mxu0 0
        %623 = vmatpush2.bf16.msra.mxu0 0
        %624 = vmatprep.subr.bf16.mxu0 0
        %625 = vmatpush2.bf16.msra.mxu0 0
        %626 = vmatprep.mubr.bf16.mxu0 0
        %627 = vmatmul.mubr.bf16.gmra.mxu0 %v589
        %v628 = vpop.f32.mrf.mxu0
        %v629 = vadd.f32 0.0, %v628
        %v630 = vpop.f32.mrf.mxu0
        %v631 = vpop.f32.mrf.mxu0
        %v632 = vadd.f32 0.0, %v631
        %v633 = vpop.f32.mrf.mxu0
        %634 = vmatprep.mubr.bf16.mxu0 0
        %635 = vmatmul.mubr.bf16.gmra.mxu0 %v592
        %v636 = vpop.f32.mrf.mxu0
        %v637 = vadd.f32 0.0, %v636
        %v638 = vpop.f32.mrf.mxu0
        %v639 = vpop.f32.mrf.mxu0
        %v640 = vadd.f32 0.0, %v639
        %v641 = vpop.f32.mrf.mxu0
        %642 = vdwg.mxu0
        %v643 = vadd.f32 %v521, %v629
        %v644 = vadd.f32 %v522, %v632
        %v645 = vadd.f32 %v523, %v637
        %v646 = vadd.f32 %v524, %v640
        %v647 = vld [vmem:[%s164 + $0x8] sm:$0xf]
        %v648 = vld [vmem:[%s164 + $0x1c] sm:$0xf]
        %v649 = vld [vmem:[%s164 + $0x30] sm:$0xf]
        %v650 = vld [vmem:[%s164 + $0x44] sm:$0xf]
        %v651 = vld [vmem:[%s164 + $0x58] sm:$0xf]
        %v652 = vld [vmem:[%s164 + $0x6c] sm:$0xf]
        %v653 = vld [vmem:[%s164 + $0x80] sm:$0xf]
        %v654 = vld [vmem:[%s164 + $0x94] sm:$0xf]
        %v655 = vld [vmem:[%s164 + $0xa8] sm:$0xf]
        %v656 = vld [vmem:[%s164 + $0xbc] sm:$0xf]
        %v657 = vld [vmem:[%s164 + $0xd0] sm:$0xf]
        %v658 = vld [vmem:[%s164 + $0xe4] sm:$0xf]
        %s659 = scalar_lea.vmem %s1, 64
        %v660 = vld [vmem:[%s659] sm:$0xf]
        %v661 = vld [vmem:[%s659 + $0x4] sm:$0xf]
        %v662 = vld [vmem:[%s659 + $0x8] sm:$0xf]
        %v663 = vld [vmem:[%s659 + $0xc] sm:$0xf]
        %v668 = vunpack.c.l.b16 %v660
        %v669 = vunpack.c.l.b16 %v661
        %v670 = vunpack.c.l.b16 %v662
        %v671 = vunpack.c.l.b16 %v663
        %v672 = vpack.c.b16 %v669, %v668
        %v673 = vpack.c.b16 %v671, %v670
        %v686 = vunpack.c.l.b16 %v647
        %v687 = vunpack.c.l.b16 %v648
        %v688 = vunpack.c.l.b16 %v649
        %v689 = vunpack.c.l.b16 %v650
        %v690 = vunpack.c.l.b16 %v651
        %v691 = vunpack.c.l.b16 %v652
        %v692 = vunpack.c.l.b16 %v653
        %v693 = vunpack.c.l.b16 %v654
        %v694 = vunpack.c.l.b16 %v655
        %v695 = vunpack.c.l.b16 %v656
        %v696 = vunpack.c.l.b16 %v657
        %v697 = vunpack.c.l.b16 %v658
        %v698 = vpack.c.b16 %v687, %v686
        %v699 = vpack.c.b16 %v689, %v688
        %v700 = vpack.c.b16 %v691, %v690
        %v701 = vpack.c.b16 %v693, %v692
        %v702 = vpack.c.b16 %v695, %v694
        %v703 = vpack.c.b16 %v697, %v696
        %v711 = vsel %vm246, %v672, 0
        %v714 = vsel %vm246, %v673, 0
        %716 = vmatprep.subr.bf16.mxu0 0
        %717 = vmatpush1.bf16.msra.mxu0 0
        %718 = vmatprep.subr.bf16.mxu0 0
        %719 = vmatpush1.bf16.msra.mxu0 0
        %720 = vmatprep.subr.bf16.mxu0 0
        %721 = vmatpush1.bf16.msra.mxu0 %v703
        %722 = vmatprep.subr.bf16.mxu0 0
        %723 = vmatpush1.bf16.msra.mxu0 %v702
        %724 = vmatprep.subr.bf16.mxu0 0
        %725 = vmatpush1.bf16.msra.mxu0 %v701
        %726 = vmatprep.subr.bf16.mxu0 0
        %727 = vmatpush1.bf16.msra.mxu0 %v700
        %728 = vmatprep.subr.bf16.mxu0 0
        %729 = vmatpush1.bf16.msra.mxu0 %v699
        %730 = vmatprep.subr.bf16.mxu0 0
        %731 = vmatpush1.bf16.msra.mxu0 %v698
        %732 = vmatprep.subr.bf16.mxu0 0
        %733 = vmatpush2.bf16.msra.mxu0 0
        %734 = vmatprep.subr.bf16.mxu0 0
        %735 = vmatpush2.bf16.msra.mxu0 0
        %736 = vmatprep.subr.bf16.mxu0 0
        %737 = vmatpush2.bf16.msra.mxu0 0
        %738 = vmatprep.subr.bf16.mxu0 0
        %739 = vmatpush2.bf16.msra.mxu0 0
        %740 = vmatprep.subr.bf16.mxu0 0
        %741 = vmatpush2.bf16.msra.mxu0 0
        %742 = vmatprep.subr.bf16.mxu0 0
        %743 = vmatpush2.bf16.msra.mxu0 0
        %744 = vmatprep.subr.bf16.mxu0 0
        %745 = vmatpush2.bf16.msra.mxu0 0
        %746 = vmatprep.subr.bf16.mxu0 0
        %747 = vmatpush2.bf16.msra.mxu0 0
        %748 = vmatprep.mubr.bf16.mxu0 0
        %749 = vmatmul.mubr.bf16.gmra.mxu0 %v711
        %v750 = vpop.f32.mrf.mxu0
        %v751 = vadd.f32 0.0, %v750
        %v752 = vpop.f32.mrf.mxu0
        %v753 = vpop.f32.mrf.mxu0
        %v754 = vadd.f32 0.0, %v753
        %v755 = vpop.f32.mrf.mxu0
        %756 = vmatprep.mubr.bf16.mxu0 0
        %757 = vmatmul.mubr.bf16.gmra.mxu0 %v714
        %v758 = vpop.f32.mrf.mxu0
        %v759 = vadd.f32 0.0, %v758
        %v760 = vpop.f32.mrf.mxu0
        %v761 = vpop.f32.mrf.mxu0
        %v762 = vadd.f32 0.0, %v761
        %v763 = vpop.f32.mrf.mxu0
        %764 = vdwg.mxu0
        %v765 = vadd.f32 %v643, %v751
        %v766 = vadd.f32 %v644, %v754
        %v767 = vadd.f32 %v645, %v759
        %v768 = vadd.f32 %v646, %v762
        %v769 = vld [vmem:[%s182 + $0x8] sm:$0xf]
        %v770 = vld [vmem:[%s182 + $0x1c] sm:$0xf]
        %v771 = vld [vmem:[%s182 + $0x30] sm:$0xf]
        %v772 = vld [vmem:[%s182 + $0x44] sm:$0xf]
        %v773 = vld [vmem:[%s182 + $0x58] sm:$0xf]
        %v774 = vld [vmem:[%s182 + $0x6c] sm:$0xf]
        %v775 = vld [vmem:[%s182 + $0x80] sm:$0xf]
        %v776 = vld [vmem:[%s182 + $0x94] sm:$0xf]
        %v777 = vld [vmem:[%s182 + $0xa8] sm:$0xf]
        %v778 = vld [vmem:[%s182 + $0xbc] sm:$0xf]
        %v779 = vld [vmem:[%s182 + $0xd0] sm:$0xf]
        %v780 = vld [vmem:[%s182 + $0xe4] sm:$0xf]
        %s781 = scalar_lea.vmem %s1, 80
        %v782 = vld [vmem:[%s781] sm:$0xf]
        %v783 = vld [vmem:[%s781 + $0x4] sm:$0xf]
        %v784 = vld [vmem:[%s781 + $0x8] sm:$0xf]
        %v785 = vld [vmem:[%s781 + $0xc] sm:$0xf]
        %v790 = vunpack.c.l.b16 %v782
        %v791 = vunpack.c.l.b16 %v783
        %v792 = vunpack.c.l.b16 %v784
        %v793 = vunpack.c.l.b16 %v785
        %v794 = vpack.c.b16 %v791, %v790
        %v795 = vpack.c.b16 %v793, %v792
        %v808 = vunpack.c.l.b16 %v769
        %v809 = vunpack.c.l.b16 %v770
        %v810 = vunpack.c.l.b16 %v771
        %v811 = vunpack.c.l.b16 %v772
        %v812 = vunpack.c.l.b16 %v773
        %v813 = vunpack.c.l.b16 %v774
        %v814 = vunpack.c.l.b16 %v775
        %v815 = vunpack.c.l.b16 %v776
        %v816 = vunpack.c.l.b16 %v777
        %v817 = vunpack.c.l.b16 %v778
        %v818 = vunpack.c.l.b16 %v779
        %v819 = vunpack.c.l.b16 %v780
        %v820 = vpack.c.b16 %v809, %v808
        %v821 = vpack.c.b16 %v811, %v810
        %v822 = vpack.c.b16 %v813, %v812
        %v823 = vpack.c.b16 %v815, %v814
        %v824 = vpack.c.b16 %v817, %v816
        %v825 = vpack.c.b16 %v819, %v818
        %v833 = vsel %vm246, %v794, 0
        %v836 = vsel %vm246, %v795, 0
        %838 = vmatprep.subr.bf16.mxu0 0
        %839 = vmatpush1.bf16.msra.mxu0 0
        %840 = vmatprep.subr.bf16.mxu0 0
        %841 = vmatpush1.bf16.msra.mxu0 0
        %842 = vmatprep.subr.bf16.mxu0 0
        %843 = vmatpush1.bf16.msra.mxu0 %v825
        %844 = vmatprep.subr.bf16.mxu0 0
        %845 = vmatpush1.bf16.msra.mxu0 %v824
        %846 = vmatprep.subr.bf16.mxu0 0
        %847 = vmatpush1.bf16.msra.mxu0 %v823
        %848 = vmatprep.subr.bf16.mxu0 0
        %849 = vmatpush1.bf16.msra.mxu0 %v822
        %850 = vmatprep.subr.bf16.mxu0 0
        %851 = vmatpush1.bf16.msra.mxu0 %v821
        %852 = vmatprep.subr.bf16.mxu0 0
        %853 = vmatpush1.bf16.msra.mxu0 %v820
        %854 = vmatprep.subr.bf16.mxu0 0
        %855 = vmatpush2.bf16.msra.mxu0 0
        %856 = vmatprep.subr.bf16.mxu0 0
        %857 = vmatpush2.bf16.msra.mxu0 0
        %858 = vmatprep.subr.bf16.mxu0 0
        %859 = vmatpush2.bf16.msra.mxu0 0
        %860 = vmatprep.subr.bf16.mxu0 0
        %861 = vmatpush2.bf16.msra.mxu0 0
        %862 = vmatprep.subr.bf16.mxu0 0
        %863 = vmatpush2.bf16.msra.mxu0 0
        %864 = vmatprep.subr.bf16.mxu0 0
        %865 = vmatpush2.bf16.msra.mxu0 0
        %866 = vmatprep.subr.bf16.mxu0 0
        %867 = vmatpush2.bf16.msra.mxu0 0
        %868 = vmatprep.subr.bf16.mxu0 0
        %869 = vmatpush2.bf16.msra.mxu0 0
        %870 = vmatprep.mubr.bf16.mxu0 0
        %871 = vmatmul.mubr.bf16.gmra.mxu0 %v833
        %v872 = vpop.f32.mrf.mxu0
        %v873 = vadd.f32 0.0, %v872
        %v874 = vpop.f32.mrf.mxu0
        %v875 = vpop.f32.mrf.mxu0
        %v876 = vadd.f32 0.0, %v875
        %v877 = vpop.f32.mrf.mxu0
        %878 = vmatprep.mubr.bf16.mxu0 0
        %879 = vmatmul.mubr.bf16.gmra.mxu0 %v836
        %v880 = vpop.f32.mrf.mxu0
        %v881 = vadd.f32 0.0, %v880
        %v882 = vpop.f32.mrf.mxu0
        %v883 = vpop.f32.mrf.mxu0
        %v884 = vadd.f32 0.0, %v883
        %v885 = vpop.f32.mrf.mxu0
        %886 = vdwg.mxu0
        %v887 = vadd.f32 %v765, %v873
        %v888 = vadd.f32 %v766, %v876
        %v889 = vadd.f32 %v767, %v881
        %v890 = vadd.f32 %v768, %v884
        %v891 = vld [vmem:[%s164 + $0xc] sm:$0xf]
        %v892 = vld [vmem:[%s164 + $0x20] sm:$0xf]
        %v893 = vld [vmem:[%s164 + $0x34] sm:$0xf]
        %v894 = vld [vmem:[%s164 + $0x48] sm:$0xf]
        %v895 = vld [vmem:[%s164 + $0x5c] sm:$0xf]
        %v896 = vld [vmem:[%s164 + $0x70] sm:$0xf]
        %v897 = vld [vmem:[%s164 + $0x84] sm:$0xf]
        %v898 = vld [vmem:[%s164 + $0x98] sm:$0xf]
        %v899 = vld [vmem:[%s164 + $0xac] sm:$0xf]
        %v900 = vld [vmem:[%s164 + $0xc0] sm:$0xf]
        %v901 = vld [vmem:[%s164 + $0xd4] sm:$0xf]
        %v902 = vld [vmem:[%s164 + $0xe8] sm:$0xf]
        %s903 = scalar_lea.vmem %s1, 96
        %v904 = vld [vmem:[%s903] sm:$0xf]
        %v905 = vld [vmem:[%s903 + $0x4] sm:$0xf]
        %v906 = vld [vmem:[%s903 + $0x8] sm:$0xf]
        %v907 = vld [vmem:[%s903 + $0xc] sm:$0xf]
        %v912 = vunpack.c.l.b16 %v904
        %v913 = vunpack.c.l.b16 %v905
        %v914 = vunpack.c.l.b16 %v906
        %v915 = vunpack.c.l.b16 %v907
        %v916 = vpack.c.b16 %v913, %v912
        %v917 = vpack.c.b16 %v915, %v914
        %v930 = vunpack.c.l.b16 %v891
        %v931 = vunpack.c.l.b16 %v892
        %v932 = vunpack.c.l.b16 %v893
        %v933 = vunpack.c.l.b16 %v894
        %v934 = vunpack.c.l.b16 %v895
        %v935 = vunpack.c.l.b16 %v896
        %v936 = vunpack.c.l.b16 %v897
        %v937 = vunpack.c.l.b16 %v898
        %v938 = vunpack.c.l.b16 %v899
        %v939 = vunpack.c.l.b16 %v900
        %v940 = vunpack.c.l.b16 %v901
        %v941 = vunpack.c.l.b16 %v902
        %v942 = vpack.c.b16 %v931, %v930
        %v943 = vpack.c.b16 %v933, %v932
        %v944 = vpack.c.b16 %v935, %v934
        %v945 = vpack.c.b16 %v937, %v936
        %v946 = vpack.c.b16 %v939, %v938
        %v947 = vpack.c.b16 %v941, %v940
        %v955 = vsel %vm246, %v916, 0
        %v958 = vsel %vm246, %v917, 0
        %960 = vmatprep.subr.bf16.mxu0 0
        %961 = vmatpush1.bf16.msra.mxu0 0
        %962 = vmatprep.subr.bf16.mxu0 0
        %963 = vmatpush1.bf16.msra.mxu0 0
        %964 = vmatprep.subr.bf16.mxu0 0
        %965 = vmatpush1.bf16.msra.mxu0 %v947
        %966 = vmatprep.subr.bf16.mxu0 0
        %967 = vmatpush1.bf16.msra.mxu0 %v946
        %968 = vmatprep.subr.bf16.mxu0 0
        %969 = vmatpush1.bf16.msra.mxu0 %v945
        %970 = vmatprep.subr.bf16.mxu0 0
        %971 = vmatpush1.bf16.msra.mxu0 %v944
        %972 = vmatprep.subr.bf16.mxu0 0
        %973 = vmatpush1.bf16.msra.mxu0 %v943
        %974 = vmatprep.subr.bf16.mxu0 0
        %975 = vmatpush1.bf16.msra.mxu0 %v942
        %976 = vmatprep.subr.bf16.mxu0 0
        %977 = vmatpush2.bf16.msra.mxu0 0
        %978 = vmatprep.subr.bf16.mxu0 0
        %979 = vmatpush2.bf16.msra.mxu0 0
        %980 = vmatprep.subr.bf16.mxu0 0
        %981 = vmatpush2.bf16.msra.mxu0 0
        %982 = vmatprep.subr.bf16.mxu0 0
        %983 = vmatpush2.bf16.msra.mxu0 0
        %984 = vmatprep.subr.bf16.mxu0 0
        %985 = vmatpush2.bf16.msra.mxu0 0
        %986 = vmatprep.subr.bf16.mxu0 0
        %987 = vmatpush2.bf16.msra.mxu0 0
        %988 = vmatprep.subr.bf16.mxu0 0
        %989 = vmatpush2.bf16.msra.mxu0 0
        %990 = vmatprep.subr.bf16.mxu0 0
        %991 = vmatpush2.bf16.msra.mxu0 0
        %992 = vmatprep.mubr.bf16.mxu0 0
        %993 = vmatmul.mubr.bf16.gmra.mxu0 %v955
        %v994 = vpop.f32.mrf.mxu0
        %v995 = vadd.f32 0.0, %v994
        %v996 = vpop.f32.mrf.mxu0
        %v997 = vpop.f32.mrf.mxu0
        %v998 = vadd.f32 0.0, %v997
        %v999 = vpop.f32.mrf.mxu0
        %1000 = vmatprep.mubr.bf16.mxu0 0
        %1001 = vmatmul.mubr.bf16.gmra.mxu0 %v958
        %v1002 = vpop.f32.mrf.mxu0
        %v1003 = vadd.f32 0.0, %v1002
        %v1004 = vpop.f32.mrf.mxu0
        %v1005 = vpop.f32.mrf.mxu0
        %v1006 = vadd.f32 0.0, %v1005
        %v1007 = vpop.f32.mrf.mxu0
        %1008 = vdwg.mxu0
        %v1009 = vadd.f32 %v887, %v995
        %v1010 = vadd.f32 %v888, %v998
        %v1011 = vadd.f32 %v889, %v1003
        %v1012 = vadd.f32 %v890, %v1006
        %v1013 = vld [vmem:[%s182 + $0xc] sm:$0xf]
        %v1014 = vld [vmem:[%s182 + $0x20] sm:$0xf]
        %v1015 = vld [vmem:[%s182 + $0x34] sm:$0xf]
        %v1016 = vld [vmem:[%s182 + $0x48] sm:$0xf]
        %v1017 = vld [vmem:[%s182 + $0x5c] sm:$0xf]
        %v1018 = vld [vmem:[%s182 + $0x70] sm:$0xf]
        %v1019 = vld [vmem:[%s182 + $0x84] sm:$0xf]
        %v1020 = vld [vmem:[%s182 + $0x98] sm:$0xf]
        %v1021 = vld [vmem:[%s182 + $0xac] sm:$0xf]
        %v1022 = vld [vmem:[%s182 + $0xc0] sm:$0xf]
        %v1023 = vld [vmem:[%s182 + $0xd4] sm:$0xf]
        %v1024 = vld [vmem:[%s182 + $0xe8] sm:$0xf]
        %s1025 = scalar_lea.vmem %s1, 112
        %v1026 = vld [vmem:[%s1025] sm:$0xf]
        %v1027 = vld [vmem:[%s1025 + $0x4] sm:$0xf]
        %v1028 = vld [vmem:[%s1025 + $0x8] sm:$0xf]
        %v1029 = vld [vmem:[%s1025 + $0xc] sm:$0xf]
        %v1034 = vunpack.c.l.b16 %v1026
        %v1035 = vunpack.c.l.b16 %v1027
        %v1036 = vunpack.c.l.b16 %v1028
        %v1037 = vunpack.c.l.b16 %v1029
        %v1038 = vpack.c.b16 %v1035, %v1034
        %v1039 = vpack.c.b16 %v1037, %v1036
        %v1052 = vunpack.c.l.b16 %v1013
        %v1053 = vunpack.c.l.b16 %v1014
        %v1054 = vunpack.c.l.b16 %v1015
        %v1055 = vunpack.c.l.b16 %v1016
        %v1056 = vunpack.c.l.b16 %v1017
        %v1057 = vunpack.c.l.b16 %v1018
        %v1058 = vunpack.c.l.b16 %v1019
        %v1059 = vunpack.c.l.b16 %v1020
        %v1060 = vunpack.c.l.b16 %v1021
        %v1061 = vunpack.c.l.b16 %v1022
        %v1062 = vunpack.c.l.b16 %v1023
        %v1063 = vunpack.c.l.b16 %v1024
        %v1064 = vpack.c.b16 %v1053, %v1052
        %v1065 = vpack.c.b16 %v1055, %v1054
        %v1066 = vpack.c.b16 %v1057, %v1056
        %v1067 = vpack.c.b16 %v1059, %v1058
        %v1068 = vpack.c.b16 %v1061, %v1060
        %v1069 = vpack.c.b16 %v1063, %v1062
        %v1077 = vsel %vm246, %v1038, 0
        %v1080 = vsel %vm246, %v1039, 0
        %1082 = vmatprep.subr.bf16.mxu0 0
        %1083 = vmatpush1.bf16.msra.mxu0 0
        %1084 = vmatprep.subr.bf16.mxu0 0
        %1085 = vmatpush1.bf16.msra.mxu0 0
        %1086 = vmatprep.subr.bf16.mxu0 0
        %1087 = vmatpush1.bf16.msra.mxu0 %v1069
        %1088 = vmatprep.subr.bf16.mxu0 0
        %1089 = vmatpush1.bf16.msra.mxu0 %v1068
        %1090 = vmatprep.subr.bf16.mxu0 0
        %1091 = vmatpush1.bf16.msra.mxu0 %v1067
        %1092 = vmatprep.subr.bf16.mxu0 0
        %1093 = vmatpush1.bf16.msra.mxu0 %v1066
        %1094 = vmatprep.subr.bf16.mxu0 0
        %1095 = vmatpush1.bf16.msra.mxu0 %v1065
        %1096 = vmatprep.subr.bf16.mxu0 0
        %1097 = vmatpush1.bf16.msra.mxu0 %v1064
        %1098 = vmatprep.subr.bf16.mxu0 0
        %1099 = vmatpush2.bf16.msra.mxu0 0
        %1100 = vmatprep.subr.bf16.mxu0 0
        %1101 = vmatpush2.bf16.msra.mxu0 0
        %1102 = vmatprep.subr.bf16.mxu0 0
        %1103 = vmatpush2.bf16.msra.mxu0 0
        %1104 = vmatprep.subr.bf16.mxu0 0
        %1105 = vmatpush2.bf16.msra.mxu0 0
        %1106 = vmatprep.subr.bf16.mxu0 0
        %1107 = vmatpush2.bf16.msra.mxu0 0
        %1108 = vmatprep.subr.bf16.mxu0 0
        %1109 = vmatpush2.bf16.msra.mxu0 0
        %1110 = vmatprep.subr.bf16.mxu0 0
        %1111 = vmatpush2.bf16.msra.mxu0 0
        %1112 = vmatprep.subr.bf16.mxu0 0
        %1113 = vmatpush2.bf16.msra.mxu0 0
        %1114 = vmatprep.mubr.bf16.mxu0 0
        %1115 = vmatmul.mubr.bf16.gmra.mxu0 %v1077
        %v1116 = vpop.f32.mrf.mxu0
        %v1117 = vadd.f32 0.0, %v1116
        %v1118 = vpop.f32.mrf.mxu0
        %v1119 = vpop.f32.mrf.mxu0
        %v1120 = vadd.f32 0.0, %v1119
        %v1121 = vpop.f32.mrf.mxu0
        %1122 = vmatprep.mubr.bf16.mxu0 0
        %1123 = vmatmul.mubr.bf16.gmra.mxu0 %v1080
        %v1124 = vpop.f32.mrf.mxu0
        %v1125 = vadd.f32 0.0, %v1124
        %v1126 = vpop.f32.mrf.mxu0
        %v1127 = vpop.f32.mrf.mxu0
        %v1128 = vadd.f32 0.0, %v1127
        %v1129 = vpop.f32.mrf.mxu0
        %1130 = vdwg.mxu0
        %v1131 = vadd.f32 %v1009, %v1117
        %v1132 = vadd.f32 %v1010, %v1120
        %v1133 = vadd.f32 %v1011, %v1125
        %v1134 = vadd.f32 %v1012, %v1128
        %v1135 = vld [vmem:[%s164 + $0x10] sm:$0xf]
        %v1136 = vld [vmem:[%s164 + $0x24] sm:$0xf]
        %v1137 = vld [vmem:[%s164 + $0x38] sm:$0xf]
        %v1138 = vld [vmem:[%s164 + $0x4c] sm:$0xf]
        %v1139 = vld [vmem:[%s164 + $0x60] sm:$0xf]
        %v1140 = vld [vmem:[%s164 + $0x74] sm:$0xf]
        %v1141 = vld [vmem:[%s164 + $0x88] sm:$0xf]
        %v1142 = vld [vmem:[%s164 + $0x9c] sm:$0xf]
        %v1143 = vld [vmem:[%s164 + $0xb0] sm:$0xf]
        %v1144 = vld [vmem:[%s164 + $0xc4] sm:$0xf]
        %v1145 = vld [vmem:[%s164 + $0xd8] sm:$0xf]
        %v1146 = vld [vmem:[%s164 + $0xec] sm:$0xf]
        %s1147 = scalar_lea.vmem %s1, 128
        %v1148 = vld [vmem:[%s1147] sm:$0xf]
        %v1149 = vld [vmem:[%s1147 + $0x4] sm:$0xf]
        %v1150 = vld [vmem:[%s1147 + $0x8] sm:$0xf]
        %v1151 = vld [vmem:[%s1147 + $0xc] sm:$0xf]
        %v1156 = vunpack.c.l.b16 %v1148
        %v1157 = vunpack.c.l.b16 %v1149
        %v1158 = vunpack.c.l.b16 %v1150
        %v1159 = vunpack.c.l.b16 %v1151
        %v1160 = vpack.c.b16 %v1157, %v1156
        %v1161 = vpack.c.b16 %v1159, %v1158
        %v1174 = vunpack.c.l.b16 %v1135
        %v1175 = vunpack.c.l.b16 %v1136
        %v1176 = vunpack.c.l.b16 %v1137
        %v1177 = vunpack.c.l.b16 %v1138
        %v1178 = vunpack.c.l.b16 %v1139
        %v1179 = vunpack.c.l.b16 %v1140
        %v1180 = vunpack.c.l.b16 %v1141
        %v1181 = vunpack.c.l.b16 %v1142
        %v1182 = vunpack.c.l.b16 %v1143
        %v1183 = vunpack.c.l.b16 %v1144
        %v1184 = vunpack.c.l.b16 %v1145
        %v1185 = vunpack.c.l.b16 %v1146
        %v1186 = vpack.c.b16 %v1175, %v1174
        %v1187 = vpack.c.b16 %v1177, %v1176
        %v1188 = vpack.c.b16 %v1179, %v1178
        %v1189 = vpack.c.b16 %v1181, %v1180
        %v1190 = vpack.c.b16 %v1183, %v1182
        %v1191 = vpack.c.b16 %v1185, %v1184
        %v1199 = vsel %vm246, %v1160, 0
        %v1202 = vsel %vm246, %v1161, 0
        %1204 = vmatprep.subr.bf16.mxu0 0
        %1205 = vmatpush1.bf16.msra.mxu0 0
        %1206 = vmatprep.subr.bf16.mxu0 0
        %1207 = vmatpush1.bf16.msra.mxu0 0
        %1208 = vmatprep.subr.bf16.mxu0 0
        %1209 = vmatpush1.bf16.msra.mxu0 %v1191
        %1210 = vmatprep.subr.bf16.mxu0 0
        %1211 = vmatpush1.bf16.msra.mxu0 %v1190
        %1212 = vmatprep.subr.bf16.mxu0 0
        %1213 = vmatpush1.bf16.msra.mxu0 %v1189
        %1214 = vmatprep.subr.bf16.mxu0 0
        %1215 = vmatpush1.bf16.msra.mxu0 %v1188
        %1216 = vmatprep.subr.bf16.mxu0 0
        %1217 = vmatpush1.bf16.msra.mxu0 %v1187
        %1218 = vmatprep.subr.bf16.mxu0 0
        %1219 = vmatpush1.bf16.msra.mxu0 %v1186
        %1220 = vmatprep.subr.bf16.mxu0 0
        %1221 = vmatpush2.bf16.msra.mxu0 0
        %1222 = vmatprep.subr.bf16.mxu0 0
        %1223 = vmatpush2.bf16.msra.mxu0 0
        %1224 = vmatprep.subr.bf16.mxu0 0
        %1225 = vmatpush2.bf16.msra.mxu0 0
        %1226 = vmatprep.subr.bf16.mxu0 0
        %1227 = vmatpush2.bf16.msra.mxu0 0
        %1228 = vmatprep.subr.bf16.mxu0 0
        %1229 = vmatpush2.bf16.msra.mxu0 0
        %1230 = vmatprep.subr.bf16.mxu0 0
        %1231 = vmatpush2.bf16.msra.mxu0 0
        %1232 = vmatprep.subr.bf16.mxu0 0
        %1233 = vmatpush2.bf16.msra.mxu0 0
        %1234 = vmatprep.subr.bf16.mxu0 0
        %1235 = vmatpush2.bf16.msra.mxu0 0
        %1236 = vmatprep.mubr.bf16.mxu0 0
        %1237 = vmatmul.mubr.bf16.gmra.mxu0 %v1199
        %v1238 = vpop.f32.mrf.mxu0
        %v1239 = vadd.f32 0.0, %v1238
        %v1240 = vpop.f32.mrf.mxu0
        %v1241 = vpop.f32.mrf.mxu0
        %v1242 = vadd.f32 0.0, %v1241
        %v1243 = vpop.f32.mrf.mxu0
        %1244 = vmatprep.mubr.bf16.mxu0 0
        %1245 = vmatmul.mubr.bf16.gmra.mxu0 %v1202
        %v1246 = vpop.f32.mrf.mxu0
        %v1247 = vadd.f32 0.0, %v1246
        %v1248 = vpop.f32.mrf.mxu0
        %v1249 = vpop.f32.mrf.mxu0
        %v1250 = vadd.f32 0.0, %v1249
        %v1251 = vpop.f32.mrf.mxu0
        %1252 = vdwg.mxu0
        %v1253 = vadd.f32 %v1131, %v1239
        %v1254 = vadd.f32 %v1132, %v1242
        %v1255 = vadd.f32 %v1133, %v1247
        %v1256 = vadd.f32 %v1134, %v1250
        %v1257 = vld [vmem:[%s2] sm:$0xff]
        %v1258 = vld [vmem:[%s2 + $0x8] sm:$0xff]
        %v1259 = vld [vmem:[%s2 + $0x10] sm:$0xff]
        %v1260 = vld [vmem:[%s2 + $0x18] sm:$0xff]
        %1262 = vset.pattern.permute.xlu0 0
        %1263 = vperm.xlu0 %1262, %v1257
        %v1264 = vpop.permute.xlu0 %1263
        %1267 = vset.pattern.permute.xlu0 0
        %1268 = vperm.xlu0 %1267, %v1258
        %v1269 = vpop.permute.xlu0 %1268
        %1272 = vset.pattern.permute.xlu0 0
        %1273 = vperm.xlu0 %1272, %v1259
        %v1274 = vpop.permute.xlu0 %1273
        %1277 = vset.pattern.permute.xlu0 0
        %1278 = vperm.xlu0 %1277, %v1260
        %v1279 = vpop.permute.xlu0 %1278
        %v1281 = vadd.f32 %v1253, %v1264
        %v1282 = vadd.f32 %v1254, %v1269
        %v1283 = vadd.f32 %v1255, %v1274
        %v1284 = vadd.f32 %v1256, %v1279
        %vm1285 = vcmp.ge.f32.partialorder %v1281, 0.0
        %vm1286 = vcmp.ge.f32.partialorder %v1282, 0.0
        %vm1287 = vcmp.ge.f32.partialorder %v1283, 0.0
        %vm1288 = vcmp.ge.f32.partialorder %v1284, 0.0
        %v1289 = vmul.f32 %v1281, 0.2
        %v1290 = vmul.f32 %v1282, 0.2
        %v1291 = vmul.f32 %v1283, 0.2
        %v1292 = vmul.f32 %v1284, 0.2
        %v1293 = vsel %vm1285, %v1281, %v1289
        %v1294 = vsel %vm1286, %v1282, %v1290
        %v1295 = vsel %vm1287, %v1283, %v1291
        %v1296 = vsel %vm1288, %v1284, %v1292
        %v1297 = vpack.c.bf16 %v1294, %v1293
        %v1298 = vpack.c.bf16 %v1296, %v1295
        %v1301 = vunpack.c.l.b16 %v1297
        %v1302 = vunpack.c.h.b16 %v1297
        %v1303 = vunpack.c.l.b16 %v1298
        %v1304 = vunpack.c.h.b16 %v1298
        %v1305 = vpack.c.b16 %v1301, %v1301
        %v1306 = vpack.c.b16 %v1302, %v1302
        %v1307 = vpack.c.b16 %v1303, %v1303
        %v1308 = vpack.c.b16 %v1304, %v1304
        %1313 = vst [vmem:[%s159] sm:$0xf] %v1305
        %1314 = vst [vmem:[%s159 + $0x4] sm:$0xf] %v1306
        %1315 = vst [vmem:[%s159 + $0x8] sm:$0xf] %v1307
        %1316 = vst [vmem:[%s159 + $0xc] sm:$0xf] %v1308
        %s1317 = sand.u32 %s90, 1
        %s1318 = sand.u32 %s90, 1
        %s1319 = smul.addr %s1318, 16
        %s1320 = scalar_lea.vmem [#allocation2], %s1319
        // Predicated region
        $region33: #{a_call__.11} parent=31 // pred_check
          %p1321 = pneg %p100
        $region34: #{a_call__.11} parent=31 // pred_check_branch
          %1323 = sbr.rel (%p1321) target = $region36
        $region35: #{a_call__.11} parent=31 // pred_region
          %s1324 = smul.addr %s14, 4
          %s1325 = scalar_lea.vmem %s3, %s1324
          // Predicated region
          $region37: #{a_call__.11} parent=35 // pred_check
            _
          $region38: #{a_call__.11} parent=35 // pred_check_branch
            %1327 = sbr.rel (0) target = $region40
          $region39: #{a_call__.11} parent=35 // pred_region
            // Predicated region
            $region41: #{a_call__.11} parent=39 // pred_check
              _
            $region42: #{a_call__.11} parent=39 // pred_check_branch
              %1329 = sbr.rel target = $region44
            $region43: #{a_call__.11} parent=39 // pred_region
              // Predicated region
              $region56: #{a_call__.11} parent=43 // pred_check
                _
              $region57: #{a_call__.11} parent=43 // pred_check_branch
                %1351 = sbr.rel (0) target = $region59
              $region58: #{a_call__.11} parent=43 // pred_region
                loop: start=0, step=1, limit=1
                $region60: #{a_call__.11} parent=58 // loop_pre_header
                  _
                $region61: #{a_call__.11} parent=58 // loop_header
                  %s1353 = sphi 0, %s1357
                  %p1354 = scmp.ge.s32.totalorder %s1353, 1
                  %s1358 = sphi %s1320, %s1320
                  %s1359 = sphi %s1325, %s1325
                $region62: #{a_call__.11} parent=58 // loop_header_branch
                  %1356 = sbr.rel (%p1354) target = $region66
                $region63: #{a_call__.11} parent=58 // loop_body
                  _
                $region64: #{a_call__.11} parent=58 // loop_footer
                  %s1357 = sadd.s32 1, %s1353
                $region65: #{a_call__.11} parent=58 // loop_footer_branch
                  %1352 = sbr.rel target = $region61
                $region66: #{a_call__.11} parent=58 // loop_exit
                  _
                %s1361 = ssub.s32 16, 1
                loop: start=0, step=1, limit=1
                $region67: #{a_call__.11} parent=58 // loop_pre_header
                  _
                $region68: #{a_call__.11} parent=58 // loop_header
                  %s1363 = sphi 0, %s1367
                  %p1364 = scmp.ge.s32.totalorder %s1363, 1
                  %s1368 = sphi %s1320, %s1320
                  %s1369 = sphi %s1325, %s1325
                $region69: #{a_call__.11} parent=58 // loop_header_branch
                  %1366 = sbr.rel (%p1364) target = $region73
                $region70: #{a_call__.11} parent=58 // loop_body
                  %v1370 = vld [vmem:[%s1368] sm:%s1361]
                  %1371 = vst [vmem:[%s1369] sm:%s1361] %v1370
                  %v1372 = vld [vmem:[%s1368 + $0x4] sm:%s1361]
                  %1373 = vst [vmem:[%s1369 + $0x8] sm:%s1361] %v1372
                  %v1374 = vld [vmem:[%s1368 + $0x8] sm:%s1361]
                  %1375 = vst [vmem:[%s1369 + $0x10] sm:%s1361] %v1374
                  %v1376 = vld [vmem:[%s1368 + $0xc] sm:%s1361]
                  %1377 = vst [vmem:[%s1369 + $0x18] sm:%s1361] %v1376
                $region71: #{a_call__.11} parent=58 // loop_footer
                  %s1367 = sadd.s32 1, %s1363
                $region72: #{a_call__.11} parent=58 // loop_footer_branch
                  %1362 = sbr.rel target = $region68
                $region73: #{a_call__.11} parent=58 // loop_exit
                  _
              $region59: #{a_call__.11} parent=43 // pred_fallthru
                _
            $region44: #{a_call__.11} parent=39 // pred_fallthru
              _
            // Predicated region
            $region45: #{a_call__.11} parent=39 // pred_check
              _
            $region46: #{a_call__.11} parent=39 // pred_check_branch
              %1331 = sbr.rel (0) target = $region48
            $region47: #{a_call__.11} parent=39 // pred_region
              %s1333 = ssub.s32 16, 1
              loop: start=0, step=1, limit=1
              $region49: #{a_call__.11} parent=47 // loop_pre_header
                _
              $region50: #{a_call__.11} parent=47 // loop_header
                %s1335 = sphi 0, %s1339
                %p1336 = scmp.ge.s32.totalorder %s1335, 1
                %s1340 = sphi %s1320, %s1320
                %s1341 = sphi %s1325, %s1325
              $region51: #{a_call__.11} parent=47 // loop_header_branch
                %1338 = sbr.rel (%p1336) target = $region55
              $region52: #{a_call__.11} parent=47 // loop_body
                %v1342 = vld [vmem:[%s1340] sm:%s1333]
                %1343 = vst [vmem:[%s1341] sm:%s1333] %v1342
                %v1344 = vld [vmem:[%s1340 + $0x4] sm:%s1333]
                %1345 = vst [vmem:[%s1341 + $0x8] sm:%s1333] %v1344
                %v1346 = vld [vmem:[%s1340 + $0x8] sm:%s1333]
                %1347 = vst [vmem:[%s1341 + $0x10] sm:%s1333] %v1346
                %v1348 = vld [vmem:[%s1340 + $0xc] sm:%s1333]
                %1349 = vst [vmem:[%s1341 + $0x18] sm:%s1333] %v1348
              $region53: #{a_call__.11} parent=47 // loop_footer
                %s1339 = sadd.s32 1, %s1335
              $region54: #{a_call__.11} parent=47 // loop_footer_branch
                %1334 = sbr.rel target = $region50
              $region55: #{a_call__.11} parent=47 // loop_exit
                _
            $region48: #{a_call__.11} parent=39 // pred_fallthru
              _
          $region40: #{a_call__.11} parent=35 // pred_fallthru
            _
          %1378 = vnop
        $region36: #{a_call__.11} parent=31 // pred_fallthru
          _
      $region32: #{a_call__.11} parent=5 // pred_fallthru
        _
      %p1379 = scmp.le.s32.totalorder 2, %s9
      // Predicated region
      $region74: #{a_call__.11} parent=5 // pred_check
        %p1380 = pneg %p1379
      $region75: #{a_call__.11} parent=5 // pred_check_branch
        %1382 = sbr.rel (%p1380) target = $region77
      $region76: #{a_call__.11} parent=5 // pred_region
        %s1383 = ssub.s32 %s9, 2
        // Predicated region
        $region78: #{a_call__.11} parent=76 // pred_check
          %p1384 = pneg %p106
        $region79: #{a_call__.11} parent=76 // pred_check_branch
          %1386 = sbr.rel (%p1384) target = $region81
        $region80: #{a_call__.11} parent=76 // pred_region
          %s1387 = sand.u32 %s91, 1
          %s1388 = sand.u32 %s91, 1
          %s1389 = smul.addr %s1388, 16
          %s1390 = scalar_lea.vmem [#allocation2], %s1389
        $region81: #{a_call__.11} parent=76 // pred_fallthru
          _
      $region77: #{a_call__.11} parent=5 // pred_fallthru
        _
    $region6: #{a_call__.11} parent=1 // loop_footer
      %s13 = sadd.s32 1, %s9
    $region7: #{a_call__.11} parent=1 // loop_footer_branch
      %8 = sbr.rel target = $region3
    $region8: #{a_call__.11} parent=1 // loop_exit
      _

// kernel: a_call__.13
$region0: #{a_call__.13}
  #allocation0 [shape = 'u32[]', space=smem, size = 0x4, offset = 0x4, fixed_abs, tag = 'smem constant byte address 0x4 - core index']
  #allocation1 [shape = 'u32[144,128]{1,0:T(1,128)}', space=vmem, size = 0x12000, scoped, tag = 'internal scratch']
  #allocation2 [shape = 'f32[1,1]{1,0:T(1,128)S(1)}', space=vmem, size = 0x200, scoped, tag = 'scoped memory for a_call__.13']
  %s0 = inlined_call_operand.vmem [shape: bf16[2,1,96,384], index: 0, kind: input, shape index: {}]
  %s1 = inlined_call_operand.vmem [shape: bf16[3,1,96], index: 1, kind: input, shape index: {}]
  %s2 = inlined_call_operand.<no memory space> [shape: f32[1,1], index: 2, kind: input, shape index: {}]
  %s3 = inlined_call_operand.vmem [shape: bf16[1,256], index: 3, kind: output, shape index: {}]
  %s4 = sld [smem:[#allocation0]]
  $region45: #{a_call__.13} parent=0
    _
  %s6 = ssub.s32 1, %s4
  %s7 = scalar_select 0, %s6, %s4
  %v8 = vstv %s2
  %9 = vst [vmem:[#allocation2] sm:$0x1] %v8
  loop: start=0, step=1, limit=4
  $region2: #{a_call__.13} parent=0 // loop_pre_header
    _
  $region3: #{a_call__.13} parent=0 // loop_header
    %s11 = sphi 0, %s15
    %p12 = scmp.ge.s32.totalorder %s11, 4
    %s21 = sphi 0, %s23
    %s24 = sphi 0, %s21
    %s25 = sphi 0, %s24
    %s41 = sphi 0, %s25
    %s45 = sphi 0, %s45
    %s47 = sphi 0, %s45
    %s48 = sphi 0, %s47
    %s62 = sphi 0, %s48
    %s66 = sphi 0, %s66
    %s68 = sphi 0, %s66
    %s69 = sphi 0, %s68
    %s83 = sphi 0, %s69
    %s89 = sphi 0, %s91
    %s92 = sphi 0, %s89
    %s93 = sphi 0, %s92
    %s109 = sphi 0, %s93
  $region4: #{a_call__.13} parent=0 // loop_header_branch
    %14 = sbr.rel (%p12) target = $region8
  $region5: #{a_call__.13} parent=0 // loop_body
    %s16 = ssub.s32 %s11, 1
    %s17 = ssub.s32 %s11, 2
    %s18 = sadd.s32 %s11, 1
    %s19 = ssub.s32 %s11, %s18
    %p20 = scmp.eq.s32.totalorder %s19, 0
    %s22 = sadd.s32 %s21, 1
    %s23 = scalar_select %p20, %s21, %s22
    %p26 = pneg %p20
    %p27 = scmp.eq.s32.totalorder %s11, 1
    %p28 = por %p26, %p27
    %p29 = scmp.ne.s32.totalorder %s21, %s24
    %p30 = scmp.eq.s32.totalorder %s11, 0
    %p31 = por %p29, %p30
    %p32 = scmp.ne.s32.totalorder %s21, %s24
    %p33 = scmp.eq.s32.totalorder %s16, 1
    %p34 = por %p32, %p33
    %p35 = scmp.ne.s32.totalorder %s24, %s25
    %p36 = scmp.eq.s32.totalorder %s16, 0
    %p37 = por %p35, %p36
    %p38 = scmp.ne.s32.totalorder %s24, %s25
    %p39 = scmp.eq.s32.totalorder %s17, 1
    %p40 = por %p38, %p39
    %p42 = scmp.ne.s32.totalorder %s25, %s41
    %p43 = scmp.eq.s32.totalorder %s17, 0
    %p44 = por %p42, %p43
    %s46 = sadd.s32 %s45, 1
    %p49 = scmp.eq.s32.totalorder %s11, 1
    %p50 = scmp.ne.s32.totalorder %s45, %s47
    %p51 = scmp.eq.s32.totalorder %s11, 0
    %p52 = por %p50, %p51
    %p53 = scmp.ne.s32.totalorder %s45, %s47
    %p54 = scmp.eq.s32.totalorder %s16, 1
    %p55 = por %p53, %p54
    %p56 = scmp.ne.s32.totalorder %s47, %s48
    %p57 = scmp.eq.s32.totalorder %s16, 0
    %p58 = por %p56, %p57
    %p59 = scmp.ne.s32.totalorder %s47, %s48
    %p60 = scmp.eq.s32.totalorder %s17, 1
    %p61 = por %p59, %p60
    %p63 = scmp.ne.s32.totalorder %s48, %s62
    %p64 = scmp.eq.s32.totalorder %s17, 0
    %p65 = por %p63, %p64
    %s67 = sadd.s32 %s66, 1
    %p70 = scmp.eq.s32.totalorder %s11, 1
    %p71 = scmp.ne.s32.totalorder %s66, %s68
    %p72 = scmp.eq.s32.totalorder %s11, 0
    %p73 = por %p71, %p72
    %p74 = scmp.ne.s32.totalorder %s66, %s68
    %p75 = scmp.eq.s32.totalorder %s16, 1
    %p76 = por %p74, %p75
    %p77 = scmp.ne.s32.totalorder %s68, %s69
    %p78 = scmp.eq.s32.totalorder %s16, 0
    %p79 = por %p77, %p78
    %p80 = scmp.ne.s32.totalorder %s68, %s69
    %p81 = scmp.eq.s32.totalorder %s17, 1
    %p82 = por %p80, %p81
    %p84 = scmp.ne.s32.totalorder %s69, %s83
    %p85 = scmp.eq.s32.totalorder %s17, 0
    %p86 = por %p84, %p85
    %s87 = ssub.s32 %s11, %s18
    %p88 = scmp.eq.s32.totalorder %s87, 0
    %s90 = sadd.s32 %s89, 1
    %s91 = scalar_select %p88, %s89, %s90
    %p94 = pneg %p88
    %p95 = scmp.eq.s32.totalorder %s11, 1
    %p96 = por %p94, %p95
    %p97 = scmp.ne.s32.totalorder %s89, %s92
    %p98 = scmp.eq.s32.totalorder %s11, 0
    %p99 = por %p97, %p98
    %p100 = scmp.ne.s32.totalorder %s89, %s92
    %p101 = scmp.eq.s32.totalorder %s16, 1
    %p102 = por %p100, %p101
    %p103 = scmp.ne.s32.totalorder %s92, %s93
    %p104 = scmp.eq.s32.totalorder %s16, 0
    %p105 = por %p103, %p104
    %p106 = scmp.ne.s32.totalorder %s92, %s93
    %p107 = scmp.eq.s32.totalorder %s17, 1
    %p108 = por %p106, %p107
    %p110 = scmp.ne.s32.totalorder %s93, %s109
    %p111 = scmp.eq.s32.totalorder %s17, 0
    %p112 = por %p110, %p111
    %p113 = scmp.le.s32.totalorder 1, %s11
    %p114 = scmp.lt.s32.totalorder %s11, 3
    %p115 = pnand %p113, %p114
    %p116 = pneg %p115
    // Predicated region
    $region9: #{a_call__.13} parent=5 // pred_check
      _
    $region10: #{a_call__.13} parent=5 // pred_check_branch
      %118 = sbr.rel (%p115) target = $region12
    $region11: #{a_call__.13} parent=5 // pred_region
      %s119 = ssub.s32 %s11, 1
      // Predicated region
      $region13: #{a_call__.13} parent=11 // pred_check
        %p120 = pneg %p58
      $region14: #{a_call__.13} parent=11 // pred_check_branch
        %122 = sbr.rel (%p120) target = $region16
      $region15: #{a_call__.13} parent=11 // pred_region
        _
      $region16: #{a_call__.13} parent=11 // pred_fallthru
        _
      // Predicated region
      $region17: #{a_call__.13} parent=11 // pred_check
        %p123 = pneg %p79
      $region18: #{a_call__.13} parent=11 // pred_check_branch
        %125 = sbr.rel (%p123) target = $region20
      $region19: #{a_call__.13} parent=11 // pred_region
        _
      $region20: #{a_call__.13} parent=11 // pred_fallthru
        _
    $region12: #{a_call__.13} parent=5 // pred_fallthru
      _
    %p126 = scmp.lt.s32.totalorder %s11, 2
    // Predicated region
    $region21: #{a_call__.13} parent=5 // pred_check
      %p127 = pneg %p126
    $region22: #{a_call__.13} parent=5 // pred_check_branch
      %129 = sbr.rel (%p127) target = $region24
    $region23: #{a_call__.13} parent=5 // pred_region
      // Predicated region
      $region25: #{a_call__.13} parent=23 // pred_check
        %p130 = pneg %p31
      $region26: #{a_call__.13} parent=23 // pred_check_branch
        %132 = sbr.rel (%p130) target = $region28
      $region27: #{a_call__.13} parent=23 // pred_region
        %p133 = scmp.lt.s32.totalorder %s11, 1
        %s134 = scalar_select %p133, %s11, 1
        %s135 = smul.addr %s134, 36
        %s136 = smul.addr %s135, 4
        %s137 = scalar_lea.vmem %s0, %s136
      $region28: #{a_call__.13} parent=23 // pred_fallthru
        _
    $region24: #{a_call__.13} parent=5 // pred_fallthru
      _
    %p138 = scmp.le.s32.totalorder 1, %s11
    %p139 = scmp.lt.s32.totalorder %s11, 3
    %p140 = pnand %p138, %p139
    %p141 = pneg %p140
    // Predicated region
    $region29: #{a_call__.13} parent=5 // pred_check
      _
    $region30: #{a_call__.13} parent=5 // pred_check_branch
      %143 = sbr.rel (%p140) target = $region32
    $region31: #{a_call__.13} parent=5 // pred_region
      %s144 = ssub.s32 %s11, 1
      %p145 = scmp.lt.s32.totalorder %s16, 1
      %s146 = scalar_select %p145, %s16, 1
      %s147 = smul.addr %s146, 36
      %s148 = smul.addr %s147, 4
      %s149 = scalar_lea.vmem %s0, %s148
      %p150 = pneg %p37
      %p151 = pneg %p34
      %p152 = pneg %p58
      %p153 = pneg %p55
      %p154 = pneg %p79
      %p155 = pneg %p76
      %p156 = pneg %p105
      %p157 = pneg %p102
      %p158 = scmp.lt.s32.totalorder %s16, 1
      %s159 = scalar_select %p158, %s16, 1
      %s160 = scalar_lea.vmem %s3, %s159
      %p161 = scmp.lt.s32.totalorder %s16, 1
      %s162 = scalar_select %p161, %s16, 1
      %s163 = smul.addr %s162, 36
      %s164 = smul.addr %s163, 4
      %s165 = scalar_lea.vmem %s0, %s164
      %p166 = scmp.lt.s32.totalorder %s16, 1
      %s167 = scalar_select %p166, %s16, 1
      %s168 = scalar_lea.vmem %s3, %s167
      %v170 = vld [vmem:[%s165] sm:$0xf]
      %v171 = vld [vmem:[%s165 + $0xc] sm:$0xf]
      %v172 = vld [vmem:[%s165 + $0x18] sm:$0xf]
      %v173 = vld [vmem:[%s165 + $0x24] sm:$0xf]
      %v174 = vld [vmem:[%s165 + $0x30] sm:$0xf]
      %v175 = vld [vmem:[%s165 + $0x3c] sm:$0xf]
      %v176 = vld [vmem:[%s165 + $0x48] sm:$0xf]
      %v177 = vld [vmem:[%s165 + $0x54] sm:$0xf]
      %v178 = vld [vmem:[%s165 + $0x60] sm:$0xf]
      %v179 = vld [vmem:[%s165 + $0x6c] sm:$0xf]
      %v180 = vld [vmem:[%s165 + $0x78] sm:$0xf]
      %v181 = vld [vmem:[%s165 + $0x84] sm:$0xf]
      %v182 = vld [vmem:[%s1] sm:$0x1]
      %v183 = vld [vmem:[%s165 + $0x4] sm:$0xf]
      %v184 = vld [vmem:[%s165 + $0x10] sm:$0xf]
      %v185 = vld [vmem:[%s165 + $0x1c] sm:$0xf]
      %v186 = vld [vmem:[%s165 + $0x28] sm:$0xf]
      %v187 = vld [vmem:[%s165 + $0x34] sm:$0xf]
      %v188 = vld [vmem:[%s165 + $0x40] sm:$0xf]
      %v189 = vld [vmem:[%s165 + $0x4c] sm:$0xf]
      %v190 = vld [vmem:[%s165 + $0x58] sm:$0xf]
      %v191 = vld [vmem:[%s165 + $0x64] sm:$0xf]
      %v192 = vld [vmem:[%s165 + $0x70] sm:$0xf]
      %v193 = vld [vmem:[%s165 + $0x7c] sm:$0xf]
      %v194 = vld [vmem:[%s165 + $0x88] sm:$0xf]
      %s195 = scalar_lea.vmem %s1, 1
      %v196 = vld [vmem:[%s195] sm:$0x1]
      %v209 = vunpack.c.l.b16 %v183
      %v210 = vunpack.c.l.b16 %v184
      %v211 = vunpack.c.l.b16 %v185
      %v212 = vunpack.c.l.b16 %v186
      %v213 = vunpack.c.l.b16 %v187
      %v214 = vunpack.c.l.b16 %v188
      %v215 = vunpack.c.l.b16 %v189
      %v216 = vunpack.c.l.b16 %v190
      %v217 = vunpack.c.l.b16 %v191
      %v218 = vunpack.c.l.b16 %v192
      %v219 = vunpack.c.l.b16 %v193
      %v220 = vunpack.c.l.b16 %v194
      %v221 = vpack.c.b16 %v210, %v209
      %v222 = vpack.c.b16 %v212, %v211
      %v223 = vpack.c.b16 %v214, %v213
      %v224 = vpack.c.b16 %v216, %v215
      %v225 = vpack.c.b16 %v218, %v217
      %v226 = vpack.c.b16 %v220, %v219
      %vm233 = vcmask 785408
      %v235 = vsel %vm233, %v196, 0
      %237 = vmatprep.subr.bf16.mxu0 0
      %238 = vmatpush1.bf16.msra.mxu0 0
      %239 = vmatprep.subr.bf16.mxu0 0
      %240 = vmatpush1.bf16.msra.mxu0 0
      %241 = vmatprep.subr.bf16.mxu0 0
      %242 = vmatpush1.bf16.msra.mxu0 %v226
      %243 = vmatprep.subr.bf16.mxu0 0
      %244 = vmatpush1.bf16.msra.mxu0 %v225
      %245 = vmatprep.subr.bf16.mxu0 0
      %246 = vmatpush1.bf16.msra.mxu0 %v224
      %247 = vmatprep.subr.bf16.mxu0 0
      %248 = vmatpush1.bf16.msra.mxu0 %v223
      %249 = vmatprep.subr.bf16.mxu0 0
      %250 = vmatpush1.bf16.msra.mxu0 %v222
      %251 = vmatprep.subr.bf16.mxu0 0
      %252 = vmatpush1.bf16.msra.mxu0 %v221
      %253 = vmatprep.subr.bf16.mxu0 0
      %254 = vmatpush2.bf16.msra.mxu0 0
      %255 = vmatprep.subr.bf16.mxu0 0
      %256 = vmatpush2.bf16.msra.mxu0 0
      %257 = vmatprep.subr.bf16.mxu0 0
      %258 = vmatpush2.bf16.msra.mxu0 0
      %259 = vmatprep.subr.bf16.mxu0 0
      %260 = vmatpush2.bf16.msra.mxu0 0
      %261 = vmatprep.subr.bf16.mxu0 0
      %262 = vmatpush2.bf16.msra.mxu0 0
      %263 = vmatprep.subr.bf16.mxu0 0
      %264 = vmatpush2.bf16.msra.mxu0 0
      %265 = vmatprep.subr.bf16.mxu0 0
      %266 = vmatpush2.bf16.msra.mxu0 0
      %267 = vmatprep.subr.bf16.mxu0 0
      %268 = vmatpush2.bf16.msra.mxu0 0
      %269 = vmatprep.mubr.bf16.mxu0 0
      %270 = vmatmul.mubr.bf16.gmra.mxu0 %v235
      %v271 = vpop.f32.mrf.mxu0
      %v272 = vadd.f32 0.0, %v271
      %v273 = vpop.f32.mrf.mxu0
      %v274 = vpop.f32.mrf.mxu0
      %v275 = vpop.f32.mrf.mxu0
      %276 = vdwg.mxu0
      %v289 = vunpack.c.l.b16 %v170
      %v290 = vunpack.c.l.b16 %v171
      %v291 = vunpack.c.l.b16 %v172
      %v292 = vunpack.c.l.b16 %v173
      %v293 = vunpack.c.l.b16 %v174
      %v294 = vunpack.c.l.b16 %v175
      %v295 = vunpack.c.l.b16 %v176
      %v296 = vunpack.c.l.b16 %v177
      %v297 = vunpack.c.l.b16 %v178
      %v298 = vunpack.c.l.b16 %v179
      %v299 = vunpack.c.l.b16 %v180
      %v300 = vunpack.c.l.b16 %v181
      %v301 = vpack.c.b16 %v290, %v289
      %v302 = vpack.c.b16 %v292, %v291
      %v303 = vpack.c.b16 %v294, %v293
      %v304 = vpack.c.b16 %v296, %v295
      %v305 = vpack.c.b16 %v298, %v297
      %v306 = vpack.c.b16 %v300, %v299
      %v314 = vsel %vm233, %v182, 0
      %316 = vmatprep.subr.bf16.mxu0 0
      %317 = vmatpush1.bf16.msra.mxu0 0
      %318 = vmatprep.subr.bf16.mxu0 0
      %319 = vmatpush1.bf16.msra.mxu0 0
      %320 = vmatprep.subr.bf16.mxu0 0
      %321 = vmatpush1.bf16.msra.mxu0 %v306
      %322 = vmatprep.subr.bf16.mxu0 0
      %323 = vmatpush1.bf16.msra.mxu0 %v305
      %324 = vmatprep.subr.bf16.mxu0 0
      %325 = vmatpush1.bf16.msra.mxu0 %v304
      %326 = vmatprep.subr.bf16.mxu0 0
      %327 = vmatpush1.bf16.msra.mxu0 %v303
      %328 = vmatprep.subr.bf16.mxu0 0
      %329 = vmatpush1.bf16.msra.mxu0 %v302
      %330 = vmatprep.subr.bf16.mxu0 0
      %331 = vmatpush1.bf16.msra.mxu0 %v301
      %332 = vmatprep.subr.bf16.mxu0 0
      %333 = vmatpush2.bf16.msra.mxu0 0
      %334 = vmatprep.subr.bf16.mxu0 0
      %335 = vmatpush2.bf16.msra.mxu0 0
      %336 = vmatprep.subr.bf16.mxu0 0
      %337 = vmatpush2.bf16.msra.mxu0 0
      %338 = vmatprep.subr.bf16.mxu0 0
      %339 = vmatpush2.bf16.msra.mxu0 0
      %340 = vmatprep.subr.bf16.mxu0 0
      %341 = vmatpush2.bf16.msra.mxu0 0
      %342 = vmatprep.subr.bf16.mxu0 0
      %343 = vmatpush2.bf16.msra.mxu0 0
      %344 = vmatprep.subr.bf16.mxu0 0
      %345 = vmatpush2.bf16.msra.mxu0 0
      %346 = vmatprep.subr.bf16.mxu0 0
      %347 = vmatpush2.bf16.msra.mxu0 0
      %348 = vmatprep.mubr.bf16.mxu0 0
      %349 = vmatmul.mubr.bf16.gmra.mxu0 %v314
      %v350 = vpop.f32.mrf.mxu0
      %v351 = vadd.f32 %v272, %v350
      %v352 = vpop.f32.mrf.mxu0
      %v353 = vpop.f32.mrf.mxu0
      %v354 = vpop.f32.mrf.mxu0
      %355 = vdwg.mxu0
      %v356 = vld [vmem:[%s165 + $0x8] sm:$0xf]
      %v357 = vld [vmem:[%s165 + $0x14] sm:$0xf]
      %v358 = vld [vmem:[%s165 + $0x20] sm:$0xf]
      %v359 = vld [vmem:[%s165 + $0x2c] sm:$0xf]
      %v360 = vld [vmem:[%s165 + $0x38] sm:$0xf]
      %v361 = vld [vmem:[%s165 + $0x44] sm:$0xf]
      %v362 = vld [vmem:[%s165 + $0x50] sm:$0xf]
      %v363 = vld [vmem:[%s165 + $0x5c] sm:$0xf]
      %v364 = vld [vmem:[%s165 + $0x68] sm:$0xf]
      %v365 = vld [vmem:[%s165 + $0x74] sm:$0xf]
      %v366 = vld [vmem:[%s165 + $0x80] sm:$0xf]
      %v367 = vld [vmem:[%s165 + $0x8c] sm:$0xf]
      %s368 = scalar_lea.vmem %s1, 2
      %v369 = vld [vmem:[%s368] sm:$0x1]
      %v382 = vunpack.c.l.b16 %v356
      %v383 = vunpack.c.l.b16 %v357
      %v384 = vunpack.c.l.b16 %v358
      %v385 = vunpack.c.l.b16 %v359
      %v386 = vunpack.c.l.b16 %v360
      %v387 = vunpack.c.l.b16 %v361
      %v388 = vunpack.c.l.b16 %v362
      %v389 = vunpack.c.l.b16 %v363
      %v390 = vunpack.c.l.b16 %v364
      %v391 = vunpack.c.l.b16 %v365
      %v392 = vunpack.c.l.b16 %v366
      %v393 = vunpack.c.l.b16 %v367
      %v394 = vpack.c.b16 %v383, %v382
      %v395 = vpack.c.b16 %v385, %v384
      %v396 = vpack.c.b16 %v387, %v386
      %v397 = vpack.c.b16 %v389, %v388
      %v398 = vpack.c.b16 %v391, %v390
      %v399 = vpack.c.b16 %v393, %v392
      %v407 = vsel %vm233, %v369, 0
      %409 = vmatprep.subr.bf16.mxu0 0
      %410 = vmatpush1.bf16.msra.mxu0 0
      %411 = vmatprep.subr.bf16.mxu0 0
      %412 = vmatpush1.bf16.msra.mxu0 0
      %413 = vmatprep.subr.bf16.mxu0 0
      %414 = vmatpush1.bf16.msra.mxu0 %v399
      %415 = vmatprep.subr.bf16.mxu0 0
      %416 = vmatpush1.bf16.msra.mxu0 %v398
      %417 = vmatprep.subr.bf16.mxu0 0
      %418 = vmatpush1.bf16.msra.mxu0 %v397
      %419 = vmatprep.subr.bf16.mxu0 0
      %420 = vmatpush1.bf16.msra.mxu0 %v396
      %421 = vmatprep.subr.bf16.mxu0 0
      %422 = vmatpush1.bf16.msra.mxu0 %v395
      %423 = vmatprep.subr.bf16.mxu0 0
      %424 = vmatpush1.bf16.msra.mxu0 %v394
      %425 = vmatprep.subr.bf16.mxu0 0
      %426 = vmatpush2.bf16.msra.mxu0 0
      %427 = vmatprep.subr.bf16.mxu0 0
      %428 = vmatpush2.bf16.msra.mxu0 0
      %429 = vmatprep.subr.bf16.mxu0 0
      %430 = vmatpush2.bf16.msra.mxu0 0
      %431 = vmatprep.subr.bf16.mxu0 0
      %432 = vmatpush2.bf16.msra.mxu0 0
      %433 = vmatprep.subr.bf16.mxu0 0
      %434 = vmatpush2.bf16.msra.mxu0 0
      %435 = vmatprep.subr.bf16.mxu0 0
      %436 = vmatpush2.bf16.msra.mxu0 0
      %437 = vmatprep.subr.bf16.mxu0 0
      %438 = vmatpush2.bf16.msra.mxu0 0
      %439 = vmatprep.subr.bf16.mxu0 0
      %440 = vmatpush2.bf16.msra.mxu0 0
      %441 = vmatprep.mubr.bf16.mxu0 0
      %442 = vmatmul.mubr.bf16.gmra.mxu0 %v407
      %v443 = vpop.f32.mrf.mxu0
      %v444 = vadd.f32 0.0, %v443
      %v445 = vpop.f32.mrf.mxu0
      %v446 = vpop.f32.mrf.mxu0
      %v447 = vpop.f32.mrf.mxu0
      %448 = vdwg.mxu0
      %v449 = vadd.f32 %v351, %v444
      %v450 = vld [vmem:[#allocation2] sm:$0x1]
      %452 = vset.pattern.permute.xlu0 0
      %453 = vperm.xlu0 %452, %v450
      %v454 = vpop.permute.xlu0 %453
      %v456 = vlaneseq
      %v457 = vshrl.u32 %v456, 7
      %v458 = vsub.s32 0, %v457
      %v459 = vrot.slane %v454, %v458
      %v460 = vadd.f32 %v449, %v459
      %v461 = vpack.c.bf16 %v460, %v460
      %vm462 = vcmask 1040384
      %vm463 = vsmask.f32 256
      %vm464 = vmand %vm462, %vm463
      %v465 = vld [vmem:[%s168] sm:$0x1]
      %v466 = vsel %vm464, %v461, %v465
      %467 = vst [vmem:[%s168] sm:$0x1] %v466
      %p468 = scmp.lt.s32.totalorder %s16, 1
      %s469 = scalar_select %p468, %s16, 1
      %s470 = scalar_lea.vmem %s3, %s469
      // Predicated region
      $region33: #{a_call__.13} parent=31 // pred_check
        %p471 = pneg %p102
      $region34: #{a_call__.13} parent=31 // pred_check_branch
        %473 = sbr.rel (%p471) target = $region36
      $region35: #{a_call__.13} parent=31 // pred_region
        _
      $region36: #{a_call__.13} parent=31 // pred_fallthru
        _
    $region32: #{a_call__.13} parent=5 // pred_fallthru
      _
    %p474 = scmp.le.s32.totalorder 2, %s11
    // Predicated region
    $region37: #{a_call__.13} parent=5 // pred_check
      %p475 = pneg %p474
    $region38: #{a_call__.13} parent=5 // pred_check_branch
      %477 = sbr.rel (%p475) target = $region40
    $region39: #{a_call__.13} parent=5 // pred_region
      %s478 = ssub.s32 %s11, 2
      // Predicated region
      $region41: #{a_call__.13} parent=39 // pred_check
        %p479 = pneg %p108
      $region42: #{a_call__.13} parent=39 // pred_check_branch
        %481 = sbr.rel (%p479) target = $region44
      $region43: #{a_call__.13} parent=39 // pred_region
        %p482 = scmp.lt.s32.totalorder %s17, 1
        %s483 = scalar_select %p482, %s17, 1
        %s484 = scalar_lea.vmem %s3, %s483
      $region44: #{a_call__.13} parent=39 // pred_fallthru
        _
    $region40: #{a_call__.13} parent=5 // pred_fallthru
      _
  $region6: #{a_call__.13} parent=0 // loop_footer
    %s15 = sadd.s32 1, %s11
  $region7: #{a_call__.13} parent=0 // loop_footer_branch
    %10 = sbr.rel target = $region3
  $region8: #{a_call__.13} parent=0 // loop_exit
    _

// kernel: a_call__.12
$region0: #{a_call__.12}
  #allocation0 [shape = 'u32[]', space=smem, size = 0x4, offset = 0x4, fixed_abs, tag = 'smem constant byte address 0x4 - core index']
  #allocation1 [shape = 'u32[144,128]{1,0:T(1,128)}', space=vmem, size = 0x12000, scoped, tag = 'internal scratch']
  %s0 = inlined_call_operand.vmem [shape: bf16[2,1,96,384], index: 0, kind: input, shape index: {}]
  %s1 = inlined_call_operand.vmem [shape: bf16[3,32,96], index: 1, kind: input, shape index: {}]
  %s2 = inlined_call_operand.vmem [shape: f32[32,1], index: 2, kind: input, shape index: {}]
  %s3 = inlined_call_operand.vmem [shape: bf16[32,256], index: 3, kind: output, shape index: {}]
  %s4 = sld [smem:[#allocation0]]
  $region82: #{a_call__.12} parent=0
    _
  %s6 = ssub.s32 1, %s4
  %s7 = scalar_select 0, %s6, %s4
  $region1: #{a_call__.12} parent=0
    #allocation2 [shape = 'u8[16384]{0}', space=vmem, size = 0x4000, scoped, tag = 'output window, operand 0']
    loop: start=0, step=1, limit=4
    $region2: #{a_call__.12} parent=1 // loop_pre_header
      _
    $region3: #{a_call__.12} parent=1 // loop_header
      %s9 = sphi 0, %s13
      %p10 = scmp.ge.s32.totalorder %s9, 4
      %s19 = sphi 0, %s21
      %s22 = sphi 0, %s19
      %s23 = sphi 0, %s22
      %s39 = sphi 0, %s23
      %s43 = sphi 0, %s43
      %s45 = sphi 0, %s43
      %s46 = sphi 0, %s45
      %s60 = sphi 0, %s46
      %s64 = sphi 0, %s64
      %s66 = sphi 0, %s64
      %s67 = sphi 0, %s66
      %s81 = sphi 0, %s67
      %s87 = sphi 0, %s89
      %s90 = sphi 0, %s87
      %s91 = sphi 0, %s90
      %s107 = sphi 0, %s91
    $region4: #{a_call__.12} parent=1 // loop_header_branch
      %12 = sbr.rel (%p10) target = $region8
    $region5: #{a_call__.12} parent=1 // loop_body
      %s14 = ssub.s32 %s9, 1
      %s15 = ssub.s32 %s9, 2
      %s16 = sadd.s32 %s9, 1
      %s17 = ssub.s32 %s9, %s16
      %p18 = scmp.eq.s32.totalorder %s17, 0
      %s20 = sadd.s32 %s19, 1
      %s21 = scalar_select %p18, %s19, %s20
      %p24 = pneg %p18
      %p25 = scmp.eq.s32.totalorder %s9, 1
      %p26 = por %p24, %p25
      %p27 = scmp.ne.s32.totalorder %s19, %s22
      %p28 = scmp.eq.s32.totalorder %s9, 0
      %p29 = por %p27, %p28
      %p30 = scmp.ne.s32.totalorder %s19, %s22
      %p31 = scmp.eq.s32.totalorder %s14, 1
      %p32 = por %p30, %p31
      %p33 = scmp.ne.s32.totalorder %s22, %s23
      %p34 = scmp.eq.s32.totalorder %s14, 0
      %p35 = por %p33, %p34
      %p36 = scmp.ne.s32.totalorder %s22, %s23
      %p37 = scmp.eq.s32.totalorder %s15, 1
      %p38 = por %p36, %p37
      %p40 = scmp.ne.s32.totalorder %s23, %s39
      %p41 = scmp.eq.s32.totalorder %s15, 0
      %p42 = por %p40, %p41
      %s44 = sadd.s32 %s43, 1
      %p47 = scmp.eq.s32.totalorder %s9, 1
      %p48 = scmp.ne.s32.totalorder %s43, %s45
      %p49 = scmp.eq.s32.totalorder %s9, 0
      %p50 = por %p48, %p49
      %p51 = scmp.ne.s32.totalorder %s43, %s45
      %p52 = scmp.eq.s32.totalorder %s14, 1
      %p53 = por %p51, %p52
      %p54 = scmp.ne.s32.totalorder %s45, %s46
      %p55 = scmp.eq.s32.totalorder %s14, 0
      %p56 = por %p54, %p55
      %p57 = scmp.ne.s32.totalorder %s45, %s46
      %p58 = scmp.eq.s32.totalorder %s15, 1
      %p59 = por %p57, %p58
      %p61 = scmp.ne.s32.totalorder %s46, %s60
      %p62 = scmp.eq.s32.totalorder %s15, 0
      %p63 = por %p61, %p62
      %s65 = sadd.s32 %s64, 1
      %p68 = scmp.eq.s32.totalorder %s9, 1
      %p69 = scmp.ne.s32.totalorder %s64, %s66
      %p70 = scmp.eq.s32.totalorder %s9, 0
      %p71 = por %p69, %p70
      %p72 = scmp.ne.s32.totalorder %s64, %s66
      %p73 = scmp.eq.s32.totalorder %s14, 1
      %p74 = por %p72, %p73
      %p75 = scmp.ne.s32.totalorder %s66, %s67
      %p76 = scmp.eq.s32.totalorder %s14, 0
      %p77 = por %p75, %p76
      %p78 = scmp.ne.s32.totalorder %s66, %s67
      %p79 = scmp.eq.s32.totalorder %s15, 1
      %p80 = por %p78, %p79
      %p82 = scmp.ne.s32.totalorder %s67, %s81
      %p83 = scmp.eq.s32.totalorder %s15, 0
      %p84 = por %p82, %p83
      %s85 = ssub.s32 %s9, %s16
      %p86 = scmp.eq.s32.totalorder %s85, 0
      %s88 = sadd.s32 %s87, 1
      %s89 = scalar_select %p86, %s87, %s88
      %p92 = pneg %p86
      %p93 = scmp.eq.s32.totalorder %s9, 1
      %p94 = por %p92, %p93
      %p95 = scmp.ne.s32.totalorder %s87, %s90
      %p96 = scmp.eq.s32.totalorder %s9, 0
      %p97 = por %p95, %p96
      %p98 = scmp.ne.s32.totalorder %s87, %s90
      %p99 = scmp.eq.s32.totalorder %s14, 1
      %p100 = por %p98, %p99
      %p101 = scmp.ne.s32.totalorder %s90, %s91
      %p102 = scmp.eq.s32.totalorder %s14, 0
      %p103 = por %p101, %p102
      %p104 = scmp.ne.s32.totalorder %s90, %s91
      %p105 = scmp.eq.s32.totalorder %s15, 1
      %p106 = por %p104, %p105
      %p108 = scmp.ne.s32.totalorder %s91, %s107
      %p109 = scmp.eq.s32.totalorder %s15, 0
      %p110 = por %p108, %p109
      %p111 = scmp.le.s32.totalorder 1, %s9
      %p112 = scmp.lt.s32.totalorder %s9, 3
      %p113 = pnand %p111, %p112
      %p114 = pneg %p113
      // Predicated region
      $region9: #{a_call__.12} parent=5 // pred_check
        _
      $region10: #{a_call__.12} parent=5 // pred_check_branch
        %116 = sbr.rel (%p113) target = $region12
      $region11: #{a_call__.12} parent=5 // pred_region
        %s117 = ssub.s32 %s9, 1
        // Predicated region
        $region13: #{a_call__.12} parent=11 // pred_check
          %p118 = pneg %p56
        $region14: #{a_call__.12} parent=11 // pred_check_branch
          %120 = sbr.rel (%p118) target = $region16
        $region15: #{a_call__.12} parent=11 // pred_region
          _
        $region16: #{a_call__.12} parent=11 // pred_fallthru
          _
        // Predicated region
        $region17: #{a_call__.12} parent=11 // pred_check
          %p121 = pneg %p77
        $region18: #{a_call__.12} parent=11 // pred_check_branch
          %123 = sbr.rel (%p121) target = $region20
        $region19: #{a_call__.12} parent=11 // pred_region
          _
        $region20: #{a_call__.12} parent=11 // pred_fallthru
          _
      $region12: #{a_call__.12} parent=5 // pred_fallthru
        _
      %p124 = scmp.lt.s32.totalorder %s9, 2
      // Predicated region
      $region21: #{a_call__.12} parent=5 // pred_check
        %p125 = pneg %p124
      $region22: #{a_call__.12} parent=5 // pred_check_branch
        %127 = sbr.rel (%p125) target = $region24
      $region23: #{a_call__.12} parent=5 // pred_region
        // Predicated region
        $region25: #{a_call__.12} parent=23 // pred_check
          %p128 = pneg %p29
        $region26: #{a_call__.12} parent=23 // pred_check_branch
          %130 = sbr.rel (%p128) target = $region28
        $region27: #{a_call__.12} parent=23 // pred_region
          %p131 = scmp.lt.s32.totalorder %s9, 1
          %s132 = scalar_select %p131, %s9, 1
          %s133 = smul.addr %s132, 36
          %s134 = smul.addr %s133, 4
          %s135 = scalar_lea.vmem %s0, %s134
        $region28: #{a_call__.12} parent=23 // pred_fallthru
          _
      $region24: #{a_call__.12} parent=5 // pred_fallthru
        _
      %p136 = scmp.le.s32.totalorder 1, %s9
      %p137 = scmp.lt.s32.totalorder %s9, 3
      %p138 = pnand %p136, %p137
      %p139 = pneg %p138
      // Predicated region
      $region29: #{a_call__.12} parent=5 // pred_check
        _
      $region30: #{a_call__.12} parent=5 // pred_check_branch
        %141 = sbr.rel (%p138) target = $region32
      $region31: #{a_call__.12} parent=5 // pred_region
        %s142 = ssub.s32 %s9, 1
        %p143 = scmp.lt.s32.totalorder %s14, 1
        %s144 = scalar_select %p143, %s14, 1
        %s145 = smul.addr %s144, 36
        %s146 = smul.addr %s145, 4
        %s147 = scalar_lea.vmem %s0, %s146
        %p148 = pneg %p35
        %p149 = pneg %p32
        %p150 = pneg %p56
        %p151 = pneg %p53
        %p152 = pneg %p77
        %p153 = pneg %p74
        %p154 = pneg %p103
        %p155 = pneg %p100
        %s156 = sand.u32 %s90, 1
        %s157 = sand.u32 %s90, 1
        %s158 = smul.addr %s157, 16
        %s159 = scalar_lea.vmem [#allocation2], %s158
        %p160 = scmp.lt.s32.totalorder %s14, 1
        %s161 = scalar_select %p160, %s14, 1
        %s162 = smul.addr %s161, 36
        %s163 = smul.addr %s162, 4
        %s164 = scalar_lea.vmem %s0, %s163
        %v166 = vld [vmem:[%s164] sm:$0xf]
        %v167 = vld [vmem:[%s164 + $0xc] sm:$0xf]
        %v168 = vld [vmem:[%s164 + $0x18] sm:$0xf]
        %v169 = vld [vmem:[%s164 + $0x24] sm:$0xf]
        %v170 = vld [vmem:[%s164 + $0x30] sm:$0xf]
        %v171 = vld [vmem:[%s164 + $0x3c] sm:$0xf]
        %v172 = vld [vmem:[%s164 + $0x48] sm:$0xf]
        %v173 = vld [vmem:[%s164 + $0x54] sm:$0xf]
        %v174 = vld [vmem:[%s164 + $0x60] sm:$0xf]
        %v175 = vld [vmem:[%s164 + $0x6c] sm:$0xf]
        %v176 = vld [vmem:[%s164 + $0x78] sm:$0xf]
        %v177 = vld [vmem:[%s164 + $0x84] sm:$0xf]
        %v178 = vld [vmem:[%s1] sm:$0xf]
        %v179 = vld [vmem:[%s1 + $0x4] sm:$0xf]
        %v180 = vld [vmem:[%s1 + $0x8] sm:$0xf]
        %v181 = vld [vmem:[%s1 + $0xc] sm:$0xf]
        %v182 = vld [vmem:[%s164 + $0x4] sm:$0xf]
        %v183 = vld [vmem:[%s164 + $0x10] sm:$0xf]
        %v184 = vld [vmem:[%s164 + $0x1c] sm:$0xf]
        %v185 = vld [vmem:[%s164 + $0x28] sm:$0xf]
        %v186 = vld [vmem:[%s164 + $0x34] sm:$0xf]
        %v187 = vld [vmem:[%s164 + $0x40] sm:$0xf]
        %v188 = vld [vmem:[%s164 + $0x4c] sm:$0xf]
        %v189 = vld [vmem:[%s164 + $0x58] sm:$0xf]
        %v190 = vld [vmem:[%s164 + $0x64] sm:$0xf]
        %v191 = vld [vmem:[%s164 + $0x70] sm:$0xf]
        %v192 = vld [vmem:[%s164 + $0x7c] sm:$0xf]
        %v193 = vld [vmem:[%s164 + $0x88] sm:$0xf]
        %s194 = scalar_lea.vmem %s1, 16
        %v195 = vld [vmem:[%s194] sm:$0xf]
        %v196 = vld [vmem:[%s194 + $0x4] sm:$0xf]
        %v197 = vld [vmem:[%s194 + $0x8] sm:$0xf]
        %v198 = vld [vmem:[%s194 + $0xc] sm:$0xf]
        %v203 = vunpack.c.l.b16 %v195
        %v204 = vunpack.c.l.b16 %v196
        %v205 = vunpack.c.l.b16 %v197
        %v206 = vunpack.c.l.b16 %v198
        %v207 = vpack.c.b16 %v204, %v203
        %v208 = vpack.c.b16 %v206, %v205
        %v221 = vunpack.c.l.b16 %v182
        %v222 = vunpack.c.l.b16 %v183
        %v223 = vunpack.c.l.b16 %v184
        %v224 = vunpack.c.l.b16 %v185
        %v225 = vunpack.c.l.b16 %v186
        %v226 = vunpack.c.l.b16 %v187
        %v227 = vunpack.c.l.b16 %v188
        %v228 = vunpack.c.l.b16 %v189
        %v229 = vunpack.c.l.b16 %v190
        %v230 = vunpack.c.l.b16 %v191
        %v231 = vunpack.c.l.b16 %v192
        %v232 = vunpack.c.l.b16 %v193
        %v233 = vpack.c.b16 %v222, %v221
        %v234 = vpack.c.b16 %v224, %v223
        %v235 = vpack.c.b16 %v226, %v225
        %v236 = vpack.c.b16 %v228, %v227
        %v237 = vpack.c.b16 %v230, %v229
        %v238 = vpack.c.b16 %v232, %v231
        %vm245 = vcmask 785408
        %v247 = vsel %vm245, %v207, 0
        %v250 = vsel %vm245, %v208, 0
        %252 = vmatprep.subr.bf16.mxu0 0
        %253 = vmatpush1.bf16.msra.mxu0 0
        %254 = vmatprep.subr.bf16.mxu0 0
        %255 = vmatpush1.bf16.msra.mxu0 0
        %256 = vmatprep.subr.bf16.mxu0 0
        %257 = vmatpush1.bf16.msra.mxu0 %v238
        %258 = vmatprep.subr.bf16.mxu0 0
        %259 = vmatpush1.bf16.msra.mxu0 %v237
        %260 = vmatprep.subr.bf16.mxu0 0
        %261 = vmatpush1.bf16.msra.mxu0 %v236
        %262 = vmatprep.subr.bf16.mxu0 0
        %263 = vmatpush1.bf16.msra.mxu0 %v235
        %264 = vmatprep.subr.bf16.mxu0 0
        %265 = vmatpush1.bf16.msra.mxu0 %v234
        %266 = vmatprep.subr.bf16.mxu0 0
        %267 = vmatpush1.bf16.msra.mxu0 %v233
        %268 = vmatprep.subr.bf16.mxu0 0
        %269 = vmatpush2.bf16.msra.mxu0 0
        %270 = vmatprep.subr.bf16.mxu0 0
        %271 = vmatpush2.bf16.msra.mxu0 0
        %272 = vmatprep.subr.bf16.mxu0 0
        %273 = vmatpush2.bf16.msra.mxu0 0
        %274 = vmatprep.subr.bf16.mxu0 0
        %275 = vmatpush2.bf16.msra.mxu0 0
        %276 = vmatprep.subr.bf16.mxu0 0
        %277 = vmatpush2.bf16.msra.mxu0 0
        %278 = vmatprep.subr.bf16.mxu0 0
        %279 = vmatpush2.bf16.msra.mxu0 0
        %280 = vmatprep.subr.bf16.mxu0 0
        %281 = vmatpush2.bf16.msra.mxu0 0
        %282 = vmatprep.subr.bf16.mxu0 0
        %283 = vmatpush2.bf16.msra.mxu0 0
        %284 = vmatprep.mubr.bf16.mxu0 0
        %285 = vmatmul.mubr.bf16.gmra.mxu0 %v247
        %v286 = vpop.f32.mrf.mxu0
        %v287 = vadd.f32 0.0, %v286
        %v288 = vpop.f32.mrf.mxu0
        %v289 = vpop.f32.mrf.mxu0
        %v290 = vadd.f32 0.0, %v289
        %v291 = vpop.f32.mrf.mxu0
        %292 = vmatprep.mubr.bf16.mxu0 0
        %293 = vmatmul.mubr.bf16.gmra.mxu0 %v250
        %v294 = vpop.f32.mrf.mxu0
        %v295 = vadd.f32 0.0, %v294
        %v296 = vpop.f32.mrf.mxu0
        %v297 = vpop.f32.mrf.mxu0
        %v298 = vadd.f32 0.0, %v297
        %v299 = vpop.f32.mrf.mxu0
        %300 = vdwg.mxu0
        %v305 = vunpack.c.l.b16 %v178
        %v306 = vunpack.c.l.b16 %v179
        %v307 = vunpack.c.l.b16 %v180
        %v308 = vunpack.c.l.b16 %v181
        %v309 = vpack.c.b16 %v306, %v305
        %v310 = vpack.c.b16 %v308, %v307
        %v323 = vunpack.c.l.b16 %v166
        %v324 = vunpack.c.l.b16 %v167
        %v325 = vunpack.c.l.b16 %v168
        %v326 = vunpack.c.l.b16 %v169
        %v327 = vunpack.c.l.b16 %v170
        %v328 = vunpack.c.l.b16 %v171
        %v329 = vunpack.c.l.b16 %v172
        %v330 = vunpack.c.l.b16 %v173
        %v331 = vunpack.c.l.b16 %v174
        %v332 = vunpack.c.l.b16 %v175
        %v333 = vunpack.c.l.b16 %v176
        %v334 = vunpack.c.l.b16 %v177
        %v335 = vpack.c.b16 %v324, %v323
        %v336 = vpack.c.b16 %v326, %v325
        %v337 = vpack.c.b16 %v328, %v327
        %v338 = vpack.c.b16 %v330, %v329
        %v339 = vpack.c.b16 %v332, %v331
        %v340 = vpack.c.b16 %v334, %v333
        %v348 = vsel %vm245, %v309, 0
        %v351 = vsel %vm245, %v310, 0
        %353 = vmatprep.subr.bf16.mxu0 0
        %354 = vmatpush1.bf16.msra.mxu0 0
        %355 = vmatprep.subr.bf16.mxu0 0
        %356 = vmatpush1.bf16.msra.mxu0 0
        %357 = vmatprep.subr.bf16.mxu0 0
        %358 = vmatpush1.bf16.msra.mxu0 %v340
        %359 = vmatprep.subr.bf16.mxu0 0
        %360 = vmatpush1.bf16.msra.mxu0 %v339
        %361 = vmatprep.subr.bf16.mxu0 0
        %362 = vmatpush1.bf16.msra.mxu0 %v338
        %363 = vmatprep.subr.bf16.mxu0 0
        %364 = vmatpush1.bf16.msra.mxu0 %v337
        %365 = vmatprep.subr.bf16.mxu0 0
        %366 = vmatpush1.bf16.msra.mxu0 %v336
        %367 = vmatprep.subr.bf16.mxu0 0
        %368 = vmatpush1.bf16.msra.mxu0 %v335
        %369 = vmatprep.subr.bf16.mxu0 0
        %370 = vmatpush2.bf16.msra.mxu0 0
        %371 = vmatprep.subr.bf16.mxu0 0
        %372 = vmatpush2.bf16.msra.mxu0 0
        %373 = vmatprep.subr.bf16.mxu0 0
        %374 = vmatpush2.bf16.msra.mxu0 0
        %375 = vmatprep.subr.bf16.mxu0 0
        %376 = vmatpush2.bf16.msra.mxu0 0
        %377 = vmatprep.subr.bf16.mxu0 0
        %378 = vmatpush2.bf16.msra.mxu0 0
        %379 = vmatprep.subr.bf16.mxu0 0
        %380 = vmatpush2.bf16.msra.mxu0 0
        %381 = vmatprep.subr.bf16.mxu0 0
        %382 = vmatpush2.bf16.msra.mxu0 0
        %383 = vmatprep.subr.bf16.mxu0 0
        %384 = vmatpush2.bf16.msra.mxu0 0
        %385 = vmatprep.mubr.bf16.mxu0 0
        %386 = vmatmul.mubr.bf16.gmra.mxu0 %v348
        %v387 = vpop.f32.mrf.mxu0
        %v388 = vadd.f32 %v287, %v387
        %v389 = vpop.f32.mrf.mxu0
        %v390 = vpop.f32.mrf.mxu0
        %v391 = vadd.f32 %v290, %v390
        %v392 = vpop.f32.mrf.mxu0
        %393 = vmatprep.mubr.bf16.mxu0 0
        %394 = vmatmul.mubr.bf16.gmra.mxu0 %v351
        %v395 = vpop.f32.mrf.mxu0
        %v396 = vadd.f32 %v295, %v395
        %v397 = vpop.f32.mrf.mxu0
        %v398 = vpop.f32.mrf.mxu0
        %v399 = vadd.f32 %v298, %v398
        %v400 = vpop.f32.mrf.mxu0
        %401 = vdwg.mxu0
        %v402 = vld [vmem:[%s164 + $0x8] sm:$0xf]
        %v403 = vld [vmem:[%s164 + $0x14] sm:$0xf]
        %v404 = vld [vmem:[%s164 + $0x20] sm:$0xf]
        %v405 = vld [vmem:[%s164 + $0x2c] sm:$0xf]
        %v406 = vld [vmem:[%s164 + $0x38] sm:$0xf]
        %v407 = vld [vmem:[%s164 + $0x44] sm:$0xf]
        %v408 = vld [vmem:[%s164 + $0x50] sm:$0xf]
        %v409 = vld [vmem:[%s164 + $0x5c] sm:$0xf]
        %v410 = vld [vmem:[%s164 + $0x68] sm:$0xf]
        %v411 = vld [vmem:[%s164 + $0x74] sm:$0xf]
        %v412 = vld [vmem:[%s164 + $0x80] sm:$0xf]
        %v413 = vld [vmem:[%s164 + $0x8c] sm:$0xf]
        %s414 = scalar_lea.vmem %s1, 32
        %v415 = vld [vmem:[%s414] sm:$0xf]
        %v416 = vld [vmem:[%s414 + $0x4] sm:$0xf]
        %v417 = vld [vmem:[%s414 + $0x8] sm:$0xf]
        %v418 = vld [vmem:[%s414 + $0xc] sm:$0xf]
        %v423 = vunpack.c.l.b16 %v415
        %v424 = vunpack.c.l.b16 %v416
        %v425 = vunpack.c.l.b16 %v417
        %v426 = vunpack.c.l.b16 %v418
        %v427 = vpack.c.b16 %v424, %v423
        %v428 = vpack.c.b16 %v426, %v425
        %v441 = vunpack.c.l.b16 %v402
        %v442 = vunpack.c.l.b16 %v403
        %v443 = vunpack.c.l.b16 %v404
        %v444 = vunpack.c.l.b16 %v405
        %v445 = vunpack.c.l.b16 %v406
        %v446 = vunpack.c.l.b16 %v407
        %v447 = vunpack.c.l.b16 %v408
        %v448 = vunpack.c.l.b16 %v409
        %v449 = vunpack.c.l.b16 %v410
        %v450 = vunpack.c.l.b16 %v411
        %v451 = vunpack.c.l.b16 %v412
        %v452 = vunpack.c.l.b16 %v413
        %v453 = vpack.c.b16 %v442, %v441
        %v454 = vpack.c.b16 %v444, %v443
        %v455 = vpack.c.b16 %v446, %v445
        %v456 = vpack.c.b16 %v448, %v447
        %v457 = vpack.c.b16 %v450, %v449
        %v458 = vpack.c.b16 %v452, %v451
        %v466 = vsel %vm245, %v427, 0
        %v469 = vsel %vm245, %v428, 0
        %471 = vmatprep.subr.bf16.mxu0 0
        %472 = vmatpush1.bf16.msra.mxu0 0
        %473 = vmatprep.subr.bf16.mxu0 0
        %474 = vmatpush1.bf16.msra.mxu0 0
        %475 = vmatprep.subr.bf16.mxu0 0
        %476 = vmatpush1.bf16.msra.mxu0 %v458
        %477 = vmatprep.subr.bf16.mxu0 0
        %478 = vmatpush1.bf16.msra.mxu0 %v457
        %479 = vmatprep.subr.bf16.mxu0 0
        %480 = vmatpush1.bf16.msra.mxu0 %v456
        %481 = vmatprep.subr.bf16.mxu0 0
        %482 = vmatpush1.bf16.msra.mxu0 %v455
        %483 = vmatprep.subr.bf16.mxu0 0
        %484 = vmatpush1.bf16.msra.mxu0 %v454
        %485 = vmatprep.subr.bf16.mxu0 0
        %486 = vmatpush1.bf16.msra.mxu0 %v453
        %487 = vmatprep.subr.bf16.mxu0 0
        %488 = vmatpush2.bf16.msra.mxu0 0
        %489 = vmatprep.subr.bf16.mxu0 0
        %490 = vmatpush2.bf16.msra.mxu0 0
        %491 = vmatprep.subr.bf16.mxu0 0
        %492 = vmatpush2.bf16.msra.mxu0 0
        %493 = vmatprep.subr.bf16.mxu0 0
        %494 = vmatpush2.bf16.msra.mxu0 0
        %495 = vmatprep.subr.bf16.mxu0 0
        %496 = vmatpush2.bf16.msra.mxu0 0
        %497 = vmatprep.subr.bf16.mxu0 0
        %498 = vmatpush2.bf16.msra.mxu0 0
        %499 = vmatprep.subr.bf16.mxu0 0
        %500 = vmatpush2.bf16.msra.mxu0 0
        %501 = vmatprep.subr.bf16.mxu0 0
        %502 = vmatpush2.bf16.msra.mxu0 0
        %503 = vmatprep.mubr.bf16.mxu0 0
        %504 = vmatmul.mubr.bf16.gmra.mxu0 %v466
        %v505 = vpop.f32.mrf.mxu0
        %v506 = vadd.f32 0.0, %v505
        %v507 = vpop.f32.mrf.mxu0
        %v508 = vpop.f32.mrf.mxu0
        %v509 = vadd.f32 0.0, %v508
        %v510 = vpop.f32.mrf.mxu0
        %511 = vmatprep.mubr.bf16.mxu0 0
        %512 = vmatmul.mubr.bf16.gmra.mxu0 %v469
        %v513 = vpop.f32.mrf.mxu0
        %v514 = vadd.f32 0.0, %v513
        %v515 = vpop.f32.mrf.mxu0
        %v516 = vpop.f32.mrf.mxu0
        %v517 = vadd.f32 0.0, %v516
        %v518 = vpop.f32.mrf.mxu0
        %519 = vdwg.mxu0
        %v520 = vadd.f32 %v388, %v506
        %v521 = vadd.f32 %v391, %v509
        %v522 = vadd.f32 %v396, %v514
        %v523 = vadd.f32 %v399, %v517
        %v524 = vld [vmem:[%s2] sm:$0xff]
        %v525 = vld [vmem:[%s2 + $0x8] sm:$0xff]
        %v526 = vld [vmem:[%s2 + $0x10] sm:$0xff]
        %v527 = vld [vmem:[%s2 + $0x18] sm:$0xff]
        %529 = vset.pattern.permute.xlu0 0
        %530 = vperm.xlu0 %529, %v524
        %v531 = vpop.permute.xlu0 %530
        %534 = vset.pattern.permute.xlu0 0
        %535 = vperm.xlu0 %534, %v525
        %v536 = vpop.permute.xlu0 %535
        %539 = vset.pattern.permute.xlu0 0
        %540 = vperm.xlu0 %539, %v526
        %v541 = vpop.permute.xlu0 %540
        %544 = vset.pattern.permute.xlu0 0
        %545 = vperm.xlu0 %544, %v527
        %v546 = vpop.permute.xlu0 %545
        %v548 = vadd.f32 %v520, %v531
        %v549 = vadd.f32 %v521, %v536
        %v550 = vadd.f32 %v522, %v541
        %v551 = vadd.f32 %v523, %v546
        %vm552 = vcmp.ge.f32.partialorder %v548, 0.0
        %vm553 = vcmp.ge.f32.partialorder %v549, 0.0
        %vm554 = vcmp.ge.f32.partialorder %v550, 0.0
        %vm555 = vcmp.ge.f32.partialorder %v551, 0.0
        %v556 = vmul.f32 %v548, 0.2
        %v557 = vmul.f32 %v549, 0.2
        %v558 = vmul.f32 %v550, 0.2
        %v559 = vmul.f32 %v551, 0.2
        %v560 = vsel %vm552, %v548, %v556
        %v561 = vsel %vm553, %v549, %v557
        %v562 = vsel %vm554, %v550, %v558
        %v563 = vsel %vm555, %v551, %v559
        %v564 = vpack.c.bf16 %v561, %v560
        %v565 = vpack.c.bf16 %v563, %v562
        %v568 = vunpack.c.l.b16 %v564
        %v569 = vunpack.c.h.b16 %v564
        %v570 = vunpack.c.l.b16 %v565
        %v571 = vunpack.c.h.b16 %v565
        %v572 = vpack.c.b16 %v568, %v568
        %v573 = vpack.c.b16 %v569, %v569
        %v574 = vpack.c.b16 %v570, %v570
        %v575 = vpack.c.b16 %v571, %v571
        %580 = vst [vmem:[%s159] sm:$0xf] %v572
        %581 = vst [vmem:[%s159 + $0x4] sm:$0xf] %v573
        %582 = vst [vmem:[%s159 + $0x8] sm:$0xf] %v574
        %583 = vst [vmem:[%s159 + $0xc] sm:$0xf] %v575
        %s584 = sand.u32 %s90, 1
        %s585 = sand.u32 %s90, 1
        %s586 = smul.addr %s585, 16
        %s587 = scalar_lea.vmem [#allocation2], %s586
        // Predicated region
        $region33: #{a_call__.12} parent=31 // pred_check
          %p588 = pneg %p100
        $region34: #{a_call__.12} parent=31 // pred_check_branch
          %590 = sbr.rel (%p588) target = $region36
        $region35: #{a_call__.12} parent=31 // pred_region
          %s591 = smul.addr %s14, 4
          %s592 = scalar_lea.vmem %s3, %s591
          // Predicated region
          $region37: #{a_call__.12} parent=35 // pred_check
            _
          $region38: #{a_call__.12} parent=35 // pred_check_branch
            %594 = sbr.rel (0) target = $region40
          $region39: #{a_call__.12} parent=35 // pred_region
            // Predicated region
            $region41: #{a_call__.12} parent=39 // pred_check
              _
            $region42: #{a_call__.12} parent=39 // pred_check_branch
              %596 = sbr.rel target = $region44
            $region43: #{a_call__.12} parent=39 // pred_region
              // Predicated region
              $region56: #{a_call__.12} parent=43 // pred_check
                _
              $region57: #{a_call__.12} parent=43 // pred_check_branch
                %618 = sbr.rel (0) target = $region59
              $region58: #{a_call__.12} parent=43 // pred_region
                loop: start=0, step=1, limit=1
                $region60: #{a_call__.12} parent=58 // loop_pre_header
                  _
                $region61: #{a_call__.12} parent=58 // loop_header
                  %s620 = sphi 0, %s624
                  %p621 = scmp.ge.s32.totalorder %s620, 1
                  %s625 = sphi %s587, %s587
                  %s626 = sphi %s592, %s592
                $region62: #{a_call__.12} parent=58 // loop_header_branch
                  %623 = sbr.rel (%p621) target = $region66
                $region63: #{a_call__.12} parent=58 // loop_body
                  _
                $region64: #{a_call__.12} parent=58 // loop_footer
                  %s624 = sadd.s32 1, %s620
                $region65: #{a_call__.12} parent=58 // loop_footer_branch
                  %619 = sbr.rel target = $region61
                $region66: #{a_call__.12} parent=58 // loop_exit
                  _
                %s628 = ssub.s32 16, 1
                loop: start=0, step=1, limit=1
                $region67: #{a_call__.12} parent=58 // loop_pre_header
                  _
                $region68: #{a_call__.12} parent=58 // loop_header
                  %s630 = sphi 0, %s634
                  %p631 = scmp.ge.s32.totalorder %s630, 1
                  %s635 = sphi %s587, %s587
                  %s636 = sphi %s592, %s592
                $region69: #{a_call__.12} parent=58 // loop_header_branch
                  %633 = sbr.rel (%p631) target = $region73
                $region70: #{a_call__.12} parent=58 // loop_body
                  %v637 = vld [vmem:[%s635] sm:%s628]
                  %638 = vst [vmem:[%s636] sm:%s628] %v637
                  %v639 = vld [vmem:[%s635 + $0x4] sm:%s628]
                  %640 = vst [vmem:[%s636 + $0x8] sm:%s628] %v639
                  %v641 = vld [vmem:[%s635 + $0x8] sm:%s628]
                  %642 = vst [vmem:[%s636 + $0x10] sm:%s628] %v641
                  %v643 = vld [vmem:[%s635 + $0xc] sm:%s628]
                  %644 = vst [vmem:[%s636 + $0x18] sm:%s628] %v643
                $region71: #{a_call__.12} parent=58 // loop_footer
                  %s634 = sadd.s32 1, %s630
                $region72: #{a_call__.12} parent=58 // loop_footer_branch
                  %629 = sbr.rel target = $region68
                $region73: #{a_call__.12} parent=58 // loop_exit
                  _
              $region59: #{a_call__.12} parent=43 // pred_fallthru
                _
            $region44: #{a_call__.12} parent=39 // pred_fallthru
              _
            // Predicated region
            $region45: #{a_call__.12} parent=39 // pred_check
              _
            $region46: #{a_call__.12} parent=39 // pred_check_branch
              %598 = sbr.rel (0) target = $region48
            $region47: #{a_call__.12} parent=39 // pred_region
              %s600 = ssub.s32 16, 1
              loop: start=0, step=1, limit=1
              $region49: #{a_call__.12} parent=47 // loop_pre_header
                _
              $region50: #{a_call__.12} parent=47 // loop_header
                %s602 = sphi 0, %s606
                %p603 = scmp.ge.s32.totalorder %s602, 1
                %s607 = sphi %s587, %s587
                %s608 = sphi %s592, %s592
              $region51: #{a_call__.12} parent=47 // loop_header_branch
                %605 = sbr.rel (%p603) target = $region55
              $region52: #{a_call__.12} parent=47 // loop_body
                %v609 = vld [vmem:[%s607] sm:%s600]
                %610 = vst [vmem:[%s608] sm:%s600] %v609
                %v611 = vld [vmem:[%s607 + $0x4] sm:%s600]
                %612 = vst [vmem:[%s608 + $0x8] sm:%s600] %v611
                %v613 = vld [vmem:[%s607 + $0x8] sm:%s600]
                %614 = vst [vmem:[%s608 + $0x10] sm:%s600] %v613
                %v615 = vld [vmem:[%s607 + $0xc] sm:%s600]
                %616 = vst [vmem:[%s608 + $0x18] sm:%s600] %v615
              $region53: #{a_call__.12} parent=47 // loop_footer
                %s606 = sadd.s32 1, %s602
              $region54: #{a_call__.12} parent=47 // loop_footer_branch
                %601 = sbr.rel target = $region50
              $region55: #{a_call__.12} parent=47 // loop_exit
                _
            $region48: #{a_call__.12} parent=39 // pred_fallthru
              _
          $region40: #{a_call__.12} parent=35 // pred_fallthru
            _
          %645 = vnop
        $region36: #{a_call__.12} parent=31 // pred_fallthru
          _
      $region32: #{a_call__.12} parent=5 // pred_fallthru
        _
      %p646 = scmp.le.s32.totalorder 2, %s9
      // Predicated region
      $region74: #{a_call__.12} parent=5 // pred_check
        %p647 = pneg %p646
      $region75: #{a_call__.12} parent=5 // pred_check_branch
        %649 = sbr.rel (%p647) target = $region77
      $region76: #{a_call__.12} parent=5 // pred_region
        %s650 = ssub.s32 %s9, 2
        // Predicated region
        $region78: #{a_call__.12} parent=76 // pred_check
          %p651 = pneg %p106
        $region79: #{a_call__.12} parent=76 // pred_check_branch
          %653 = sbr.rel (%p651) target = $region81
        $region80: #{a_call__.12} parent=76 // pred_region
          %s654 = sand.u32 %s91, 1
          %s655 = sand.u32 %s91, 1
          %s656 = smul.addr %s655, 16
          %s657 = scalar_lea.vmem [#allocation2], %s656
        $region81: #{a_call__.12} parent=76 // pred_fallthru
          _
      $region77: #{a_call__.12} parent=5 // pred_fallthru
        _
    $region6: #{a_call__.12} parent=1 // loop_footer
      %s13 = sadd.s32 1, %s9
    $region7: #{a_call__.12} parent=1 // loop_footer_branch
      %8 = sbr.rel target = $region3
    $region8: #{a_call__.12} parent=1 // loop_exit
      _

</llo_original>
